<compile_context>
chip_gen: v7x
topology: tpu7x:2x2x1
jax: 0.10.0
libtpu: 0.0.40
codegen_flags: <defaults>
</compile_context>

<pallas_src>
import jax
import jax.numpy as jnp
import numpy as np
from jax.experimental import pallas as pl
from jax.experimental.pallas import tpu as pltpu

N_BATCH = 8
SEQ = 100            # seq_len
DIM = 500            # num_dim (also the attention "temperature")
DIM2 = 256
N_CLASSES = 3
OUT_PAD = 128        # class dim padded to one full lane tile
TEMP = float(DIM)
INV_TEMP = 1.0 / TEMP
NEG_SLOPE = 0.01     # nn.LeakyReLU default slope
BN_EPS = 1e-5
BATCH_TILE = 8       # samples per grid step (capped so grid >= 2 when N >= 2)


# --------------------------- Pallas kernel ----------------------------------

def _attn_mlp_kernel(data_ref, w1a_ref, w1b_ref, b1_ref, w2_ref, b2_ref,
                     out_ref, o1_sc, o2_sc):
    """One batch tile: 2*B pooled scaled-dot attentions + (BN-folded) MLP.

    data_ref: (B, 3, SEQ, DIM) f32   merged chunks [s1, s2, ref] for B samples
    w1a/w1b:  (DIM, DIM2)      f32   BN-folded fc1 weight halves (o1 / o2 features)
    b1_ref:   (1, DIM2)        f32   BN-folded fc1 bias
    w2_ref:   (DIM2, OUT_PAD)  f32   fc2 weight padded to 128 lanes
    b2_ref:   (1, OUT_PAD)     f32
    out_ref:  (1, B, OUT_PAD)  f32   logits (first N_CLASSES lanes valid)
    o1_sc/o2_sc: (B, DIM)      f32   VMEM scratch for pooled attention rows
    """
    bt = data_ref.shape[0]
    ones_row = jnp.ones((1, SEQ), jnp.float32)

    def pooled_attention(q16, kv):
        kv16 = kv.astype(jnp.bfloat16)
        # scores = q @ kv.T / TEMP  (bf16 MXU operands, f32 accumulation)
        s = jax.lax.dot_general(q16, kv16, (((1,), (1,)), ((), ())),
                                preferred_element_type=jnp.float32) * INV_TEMP  # (SEQ, SEQ)
        m = jnp.max(s, axis=-1, keepdims=True)
        e = jnp.exp(s - m)
        r = jnp.sum(e, axis=-1, keepdims=True)
        inv = pl.reciprocal(r, approx=True)                 # EUP, not a VPU divide
        a = e * inv                                         # row softmax (SEQ, SEQ)
        # sum over queries of (a @ kv) == colsum(a) @ kv ; colsum done on the MXU
        colw = jnp.dot(ones_row, a, preferred_element_type=jnp.float32)   # (1, SEQ)
        return jnp.dot(colw, kv, preferred_element_type=jnp.float32)      # (1, DIM)

    # Statically unrolled per-sample loop (bt is a compile-time block constant).
    for b in range(bt):
        q16 = data_ref[b, 2].astype(jnp.bfloat16)                          # queries
        o1_sc[pl.ds(b, 1), :] = pooled_attention(q16, data_ref[b, 0])
        o2_sc[pl.ds(b, 1), :] = pooled_attention(q16, data_ref[b, 1])

    # feat = cat([o1, o2]); fc1 weight pre-split at trace time => no in-kernel concat
    h = (jnp.dot(o1_sc[...], w1a_ref[...], preferred_element_type=jnp.float32)
         + jnp.dot(o2_sc[...], w1b_ref[...], preferred_element_type=jnp.float32)
         + b1_ref[...])                                                    # (B, DIM2)
    h = jnp.where(h > 0, h, NEG_SLOPE * h)                                 # LeakyReLU
    out_ref[0] = (jnp.dot(h, w2_ref[...], preferred_element_type=jnp.float32)
                  + b2_ref[...])                                           # (B, OUT_PAD)


# --------------------------- pallas_call wrapper -----------------------------

def attn_mlp_pallas(d4, w1a, w1b, b1, w2p, b2p, batch_tile=BATCH_TILE):
    n = d4.shape[0]
    # Keep at least 2 grid steps when n >= 2 so ("parallel",) spans both v7x cores.
    bt = max(1, min(batch_tile, -(-n // 2)))
    steps = -(-n // bt)
    n_pad = steps * bt
    if n_pad != n:
        d4 = jnp.pad(d4, ((0, n_pad - n), (0, 0), (0, 0), (0, 0)))

    out = pl.pallas_call(
        _attn_mlp_kernel,
        out_shape=jax.ShapeDtypeStruct((steps, bt, OUT_PAD), jnp.float32),
        grid=(steps,),
        in_specs=[
            pl.BlockSpec((bt, 3, SEQ, DIM), lambda i: (i, 0, 0, 0)),   # merged s1|s2|ref
            pl.BlockSpec((DIM, DIM2), lambda i: (0, 0)),               # fc1 half for o1
            pl.BlockSpec((DIM, DIM2), lambda i: (0, 0)),               # fc1 half for o2
            pl.BlockSpec((1, DIM2), lambda i: (0, 0)),                 # fc1 bias (BN folded)
            pl.BlockSpec((DIM2, OUT_PAD), lambda i: (0, 0)),           # fc2 weight (padded)
            pl.BlockSpec((1, OUT_PAD), lambda i: (0, 0)),              # fc2 bias (padded)
        ],
        out_specs=pl.BlockSpec((1, bt, OUT_PAD), lambda i: (i, 0, 0)),
        scratch_shapes=[pltpu.VMEM((bt, DIM), jnp.float32),
                        pltpu.VMEM((bt, DIM), jnp.float32)],
        compiler_params=pltpu.CompilerParams(
            dimension_semantics=("parallel",),
            vmem_limit_bytes=32 * 1024 * 1024),
    )(d4, w1a, w1b, b1, w2p, b2p)

    return out.reshape(n_pad, OUT_PAD)[:n, :N_CLASSES]


# --------------------------- model forward (glue + kernel) -------------------

@jax.jit
def forward(params, data_in):
    n = data_in.shape[0]
    d4 = data_in.reshape(n, 3, SEQ, DIM)          # free view; chunks = [s1, s2, ref]

    # Fold eval-mode BatchNorm1d into fc1 (trace-time, free).
    scale = params["bn_gamma"] / jnp.sqrt(params["bn_var"] + BN_EPS)
    w1t = (params["fc1_w"] * scale[:, None]).T                        # (1000, 256)
    b1 = (params["fc1_b"] - params["bn_mean"]) * scale + params["bn_beta"]

    # Pad class dim to a full 128-lane tile (sliced back after the kernel).
    w2p = jnp.zeros((DIM2, OUT_PAD), jnp.float32).at[:, :N_CLASSES].set(params["fc2_w"].T)
    b2p = jnp.zeros((1, OUT_PAD), jnp.float32).at[0, :N_CLASSES].set(params["fc2_b"])

    return attn_mlp_pallas(d4, w1t[:DIM], w1t[DIM:], b1.reshape(1, DIM2), w2p, b2p)


# --------------------------- pure-JAX reference ------------------------------

def reference(params, data_in):
    hp = jax.lax.Precision.HIGHEST
    s1 = data_in[:, 0:SEQ]
    s2 = data_in[:, SEQ:2 * SEQ]
    rf = data_in[:, 2 * SEQ:3 * SEQ]

    def attn(q, kv):
        scores = jnp.einsum('bqd,bkd->bqk', q, kv, precision=hp) / TEMP
        a = jax.nn.softmax(scores, axis=-1)
        return jnp.einsum('bqk,bkd->bqd', a, kv, precision=hp)

    o1 = jnp.sum(attn(rf, s1), axis=1)
    o2 = jnp.sum(attn(rf, s2), axis=1)
    feat = jnp.concatenate([o1, o2], axis=1)
    h = jnp.dot(feat, params["fc1_w"].T, precision=hp) + params["fc1_b"]
    h = ((h - params["bn_mean"]) / jnp.sqrt(params["bn_var"] + BN_EPS)
         * params["bn_gamma"] + params["bn_beta"])
    h = jnp.where(h > 0, h, NEG_SLOPE * h)
    return jnp.dot(h, params["fc2_w"].T, precision=hp) + params["fc2_b"]


# --------------------------- main --------------------------------------------

if __name__ == "__main__":
    key = jax.random.PRNGKey(0)
    ks = jax.random.split(key, 9)
    params = {
        "fc1_w": 0.02 * jax.random.normal(ks[0], (DIM2, 2 * DIM), jnp.float32),
        "fc1_b": 0.02 * jax.random.normal(ks[1], (DIM2,), jnp.float32),
        "bn_gamma": 1.0 + 0.1 * jax.random.normal(ks[2], (DIM2,), jnp.float32),
        "bn_beta": 0.1 * jax.random.normal(ks[3], (DIM2,), jnp.float32),
        "bn_mean": 0.1 * jax.random.normal(ks[4], (DIM2,), jnp.float32),
        "bn_var": 0.5 + jax.random.uniform(ks[5], (DIM2,), jnp.float32),
        "fc2_w": 0.05 * jax.random.normal(ks[6], (N_CLASSES, DIM2), jnp.float32),
        "fc2_b": 0.02 * jax.random.normal(ks[7], (N_CLASSES,), jnp.float32),
    }
    data_in = jax.random.normal(ks[8], (N_BATCH, 3 * SEQ, DIM), jnp.float32)

    out = jax.block_until_ready(forward(params, data_in))

    expected = reference(params, data_in)
    np.testing.assert_allclose(np.asarray(out), np.asarray(expected),
                               rtol=2e-2, atol=2e-2)
    assert out.shape == (N_BATCH, N_CLASSES)
    print("KERNEL_OK")
</pallas_src>

<mosaic_0001>
module attributes {stable_mosaic.version = 11 : i64} {
  func.func @_attn_mlp_kernel(%arg0: i32, %arg1: memref<4x3x100x500xf32, #tpu.memory_space<vmem>>, %arg2: memref<500x256xf32, #tpu.memory_space<vmem>>, %arg3: memref<500x256xf32, #tpu.memory_space<vmem>>, %arg4: memref<1x256xf32, #tpu.memory_space<vmem>>, %arg5: memref<256x128xf32, #tpu.memory_space<vmem>>, %arg6: memref<1x128xf32, #tpu.memory_space<vmem>>, %arg7: memref<1x4x128xf32, #tpu.memory_space<vmem>>, %arg8: memref<4x500xf32, #tpu.memory_space<vmem>>, %arg9: memref<4x500xf32, #tpu.memory_space<vmem>>) attributes {dimension_semantics = [#tpu.dimension_semantics<parallel>], iteration_bounds = array<i64: 2>, scalar_prefetch = 0 : i64, scratch_operands = 2 : i64, tpu.core_type = #tpu.core_type<tc>, window_params = [{transform_indices = @transform_0, window_bounds = array<i64: 4, 3, 100, 500>}, {pipeline_mode = #tpu.pipeline_mode<synchronous>, transform_indices = @transform_1, window_bounds = array<i64: 500, 256>}, {pipeline_mode = #tpu.pipeline_mode<synchronous>, transform_indices = @transform_2, window_bounds = array<i64: 500, 256>}, {pipeline_mode = #tpu.pipeline_mode<synchronous>, transform_indices = @transform_3, window_bounds = array<i64: 1, 256>}, {pipeline_mode = #tpu.pipeline_mode<synchronous>, transform_indices = @transform_4, window_bounds = array<i64: 256, 128>}, {pipeline_mode = #tpu.pipeline_mode<synchronous>, transform_indices = @transform_5, window_bounds = array<i64: 1, 128>}, {transform_indices = @transform_6, window_bounds = array<i64: 1, 4, 128>}]} {
    %cst = arith.constant 1.000000e+00 : f32
    %0 = vector.broadcast %cst : f32 to vector<1x100xf32>
    %c0 = arith.constant 0 : index
    %c2 = arith.constant 2 : index
    %c0_0 = arith.constant 0 : index
    %c0_1 = arith.constant 0 : index
    %1 = vector.load %arg1[%c0, %c2, %c0_0, %c0_1] : memref<4x3x100x500xf32, #tpu.memory_space<vmem>>, vector<1x1x100x500xf32>
    %2 = vector.shape_cast %1 : vector<1x1x100x500xf32> to vector<100x500xf32>
    %3 = arith.truncf %2 : vector<100x500xf32> to vector<100x500xbf16>
    %c0_2 = arith.constant 0 : index
    %c0_3 = arith.constant 0 : index
    %c0_4 = arith.constant 0 : index
    %c0_5 = arith.constant 0 : index
    %4 = vector.load %arg1[%c0_2, %c0_3, %c0_4, %c0_5] : memref<4x3x100x500xf32, #tpu.memory_space<vmem>>, vector<1x1x100x500xf32>
    %5 = vector.shape_cast %4 : vector<1x1x100x500xf32> to vector<100x500xf32>
    %6 = arith.truncf %5 : vector<100x500xf32> to vector<100x500xbf16>
    %cst_6 = arith.constant dense<0.000000e+00> : vector<100x100xf32>
    %7 = tpu.matmul %3, %6, %cst_6 {dimension_numbers = #tpu.dot_dimension_numbers<[1], [1], [0], [0], [0, 0, 1, 0], [], []>} : vector<100x500xbf16>, vector<100x500xbf16>, vector<100x100xf32> -> vector<100x100xf32>
    %cst_7 = arith.constant 2.000000e-03 : f32
    %8 = vector.broadcast %cst_7 : f32 to vector<100x100xf32>
    %9 = arith.mulf %7, %8 : vector<100x100xf32>
    %cst_8 = arith.constant dense<0xFF800000> : vector<100xf32>
    %10 = vector.multi_reduction <maximumf>, %9, %cst_8 [1] : vector<100x100xf32> to vector<100xf32>
    %11 = vector.shape_cast %10 : vector<100xf32> to vector<100x1xf32>
    %12 = vector.broadcast %11 : vector<100x1xf32> to vector<100x100xf32>
    %13 = arith.subf %9, %12 : vector<100x100xf32>
    %14 = math.exp %13 : vector<100x100xf32>
    %cst_9 = arith.constant dense<0.000000e+00> : vector<100xf32>
    %15 = vector.multi_reduction <add>, %14, %cst_9 [1] : vector<100x100xf32> to vector<100xf32>
    %16 = vector.shape_cast %15 : vector<100xf32> to vector<100x1xf32>
    %17 = tpu.reciprocal %16 {approx = true} : vector<100x1xf32> -> vector<100x1xf32>
    %18 = vector.broadcast %17 : vector<100x1xf32> to vector<100x100xf32>
    %19 = arith.mulf %14, %18 : vector<100x100xf32>
    %cst_10 = arith.constant dense<0.000000e+00> : vector<1x100xf32>
    %20 = tpu.matmul %0, %19, %cst_10 {dimension_numbers = #tpu.dot_dimension_numbers<[1], [0], [0], [1], [0, 0, 1, 1], [], []>} : vector<1x100xf32>, vector<100x100xf32>, vector<1x100xf32> -> vector<1x100xf32>
    %cst_11 = arith.constant dense<0.000000e+00> : vector<1x500xf32>
    %21 = tpu.matmul %20, %5, %cst_11 {dimension_numbers = #tpu.dot_dimension_numbers<[1], [0], [0], [1], [0, 0, 1, 1], [], []>} : vector<1x100xf32>, vector<100x500xf32>, vector<1x500xf32> -> vector<1x500xf32>
    %c0_12 = arith.constant 0 : index
    %c0_13 = arith.constant 0 : index
    %22 = vector.load %arg8[%c0_12, %c0_13] : memref<4x500xf32, #tpu.memory_space<vmem>>, vector<1x500xf32>
    tpu.vector_store %arg8[%c0_12, %c0_13], %21 {strides = array<i32>} : memref<4x500xf32, #tpu.memory_space<vmem>>, vector<1x500xf32>,
    %c0_14 = arith.constant 0 : index
    %c1 = arith.constant 1 : index
    %c0_15 = arith.constant 0 : index
    %c0_16 = arith.constant 0 : index
    %23 = vector.load %arg1[%c0_14, %c1, %c0_15, %c0_16] : memref<4x3x100x500xf32, #tpu.memory_space<vmem>>, vector<1x1x100x500xf32>
    %24 = vector.shape_cast %23 : vector<1x1x100x500xf32> to vector<100x500xf32>
    %25 = arith.truncf %24 : vector<100x500xf32> to vector<100x500xbf16>
    %cst_17 = arith.constant dense<0.000000e+00> : vector<100x100xf32>
    %26 = tpu.matmul %3, %25, %cst_17 {dimension_numbers = #tpu.dot_dimension_numbers<[1], [1], [0], [0], [0, 0, 1, 0], [], []>} : vector<100x500xbf16>, vector<100x500xbf16>, vector<100x100xf32> -> vector<100x100xf32>
    %cst_18 = arith.constant 2.000000e-03 : f32
    %27 = vector.broadcast %cst_18 : f32 to vector<100x100xf32>
    %28 = arith.mulf %26, %27 : vector<100x100xf32>
    %cst_19 = arith.constant dense<0xFF800000> : vector<100xf32>
    %29 = vector.multi_reduction <maximumf>, %28, %cst_19 [1] : vector<100x100xf32> to vector<100xf32>
    %30 = vector.shape_cast %29 : vector<100xf32> to vector<100x1xf32>
    %31 = vector.broadcast %30 : vector<100x1xf32> to vector<100x100xf32>
    %32 = arith.subf %28, %31 : vector<100x100xf32>
    %33 = math.exp %32 : vector<100x100xf32>
    %cst_20 = arith.constant dense<0.000000e+00> : vector<100xf32>
    %34 = vector.multi_reduction <add>, %33, %cst_20 [1] : vector<100x100xf32> to vector<100xf32>
    %35 = vector.shape_cast %34 : vector<100xf32> to vector<100x1xf32>
    %36 = tpu.reciprocal %35 {approx = true} : vector<100x1xf32> -> vector<100x1xf32>
    %37 = vector.broadcast %36 : vector<100x1xf32> to vector<100x100xf32>
    %38 = arith.mulf %33, %37 : vector<100x100xf32>
    %cst_21 = arith.constant dense<0.000000e+00> : vector<1x100xf32>
    %39 = tpu.matmul %0, %38, %cst_21 {dimension_numbers = #tpu.dot_dimension_numbers<[1], [0], [0], [1], [0, 0, 1, 1], [], []>} : vector<1x100xf32>, vector<100x100xf32>, vector<1x100xf32> -> vector<1x100xf32>
    %cst_22 = arith.constant dense<0.000000e+00> : vector<1x500xf32>
    %40 = tpu.matmul %39, %24, %cst_22 {dimension_numbers = #tpu.dot_dimension_numbers<[1], [0], [0], [1], [0, 0, 1, 1], [], []>} : vector<1x100xf32>, vector<100x500xf32>, vector<1x500xf32> -> vector<1x500xf32>
    %c0_23 = arith.constant 0 : index
    %c0_24 = arith.constant 0 : index
    %41 = vector.load %arg9[%c0_23, %c0_24] : memref<4x500xf32, #tpu.memory_space<vmem>>, vector<1x500xf32>
    tpu.vector_store %arg9[%c0_23, %c0_24], %40 {strides = array<i32>} : memref<4x500xf32, #tpu.memory_space<vmem>>, vector<1x500xf32>,
    %c1_25 = arith.constant 1 : index
    %c2_26 = arith.constant 2 : index
    %c0_27 = arith.constant 0 : index
    %c0_28 = arith.constant 0 : index
    %42 = vector.load %arg1[%c1_25, %c2_26, %c0_27, %c0_28] : memref<4x3x100x500xf32, #tpu.memory_space<vmem>>, vector<1x1x100x500xf32>
    %43 = vector.shape_cast %42 : vector<1x1x100x500xf32> to vector<100x500xf32>
    %44 = arith.truncf %43 : vector<100x500xf32> to vector<100x500xbf16>
    %c1_29 = arith.constant 1 : index
    %c0_30 = arith.constant 0 : index
    %c0_31 = arith.constant 0 : index
    %c0_32 = arith.constant 0 : index
    %45 = vector.load %arg1[%c1_29, %c0_30, %c0_31, %c0_32] : memref<4x3x100x500xf32, #tpu.memory_space<vmem>>, vector<1x1x100x500xf32>
    %46 = vector.shape_cast %45 : vector<1x1x100x500xf32> to vector<100x500xf32>
    %47 = arith.truncf %46 : vector<100x500xf32> to vector<100x500xbf16>
    %cst_33 = arith.constant dense<0.000000e+00> : vector<100x100xf32>
    %48 = tpu.matmul %44, %47, %cst_33 {dimension_numbers = #tpu.dot_dimension_numbers<[1], [1], [0], [0], [0, 0, 1, 0], [], []>} : vector<100x500xbf16>, vector<100x500xbf16>, vector<100x100xf32> -> vector<100x100xf32>
    %cst_34 = arith.constant 2.000000e-03 : f32
    %49 = vector.broadcast %cst_34 : f32 to vector<100x100xf32>
    %50 = arith.mulf %48, %49 : vector<100x100xf32>
    %cst_35 = arith.constant dense<0xFF800000> : vector<100xf32>
    %51 = vector.multi_reduction <maximumf>, %50, %cst_35 [1] : vector<100x100xf32> to vector<100xf32>
    %52 = vector.shape_cast %51 : vector<100xf32> to vector<100x1xf32>
    %53 = vector.broadcast %52 : vector<100x1xf32> to vector<100x100xf32>
    %54 = arith.subf %50, %53 : vector<100x100xf32>
    %55 = math.exp %54 : vector<100x100xf32>
    %cst_36 = arith.constant dense<0.000000e+00> : vector<100xf32>
    %56 = vector.multi_reduction <add>, %55, %cst_36 [1] : vector<100x100xf32> to vector<100xf32>
    %57 = vector.shape_cast %56 : vector<100xf32> to vector<100x1xf32>
    %58 = tpu.reciprocal %57 {approx = true} : vector<100x1xf32> -> vector<100x1xf32>
    %59 = vector.broadcast %58 : vector<100x1xf32> to vector<100x100xf32>
    %60 = arith.mulf %55, %59 : vector<100x100xf32>
    %cst_37 = arith.constant dense<0.000000e+00> : vector<1x100xf32>
    %61 = tpu.matmul %0, %60, %cst_37 {dimension_numbers = #tpu.dot_dimension_numbers<[1], [0], [0], [1], [0, 0, 1, 1], [], []>} : vector<1x100xf32>, vector<100x100xf32>, vector<1x100xf32> -> vector<1x100xf32>
    %cst_38 = arith.constant dense<0.000000e+00> : vector<1x500xf32>
    %62 = tpu.matmul %61, %46, %cst_38 {dimension_numbers = #tpu.dot_dimension_numbers<[1], [0], [0], [1], [0, 0, 1, 1], [], []>} : vector<1x100xf32>, vector<100x500xf32>, vector<1x500xf32> -> vector<1x500xf32>
    %c1_39 = arith.constant 1 : index
    %c0_40 = arith.constant 0 : index
    %63 = vector.load %arg8[%c1_39, %c0_40] : memref<4x500xf32, #tpu.memory_space<vmem>>, vector<1x500xf32>
    tpu.vector_store %arg8[%c1_39, %c0_40], %62 {strides = array<i32>} : memref<4x500xf32, #tpu.memory_space<vmem>>, vector<1x500xf32>,
    %c1_41 = arith.constant 1 : index
    %c1_42 = arith.constant 1 : index
    %c0_43 = arith.constant 0 : index
    %c0_44 = arith.constant 0 : index
    %64 = vector.load %arg1[%c1_41, %c1_42, %c0_43, %c0_44] : memref<4x3x100x500xf32, #tpu.memory_space<vmem>>, vector<1x1x100x500xf32>
    %65 = vector.shape_cast %64 : vector<1x1x100x500xf32> to vector<100x500xf32>
    %66 = arith.truncf %65 : vector<100x500xf32> to vector<100x500xbf16>
    %cst_45 = arith.constant dense<0.000000e+00> : vector<100x100xf32>
    %67 = tpu.matmul %44, %66, %cst_45 {dimension_numbers = #tpu.dot_dimension_numbers<[1], [1], [0], [0], [0, 0, 1, 0], [], []>} : vector<100x500xbf16>, vector<100x500xbf16>, vector<100x100xf32> -> vector<100x100xf32>
    %cst_46 = arith.constant 2.000000e-03 : f32
    %68 = vector.broadcast %cst_46 : f32 to vector<100x100xf32>
    %69 = arith.mulf %67, %68 : vector<100x100xf32>
    %cst_47 = arith.constant dense<0xFF800000> : vector<100xf32>
    %70 = vector.multi_reduction <maximumf>, %69, %cst_47 [1] : vector<100x100xf32> to vector<100xf32>
    %71 = vector.shape_cast %70 : vector<100xf32> to vector<100x1xf32>
    %72 = vector.broadcast %71 : vector<100x1xf32> to vector<100x100xf32>
    %73 = arith.subf %69, %72 : vector<100x100xf32>
    %74 = math.exp %73 : vector<100x100xf32>
    %cst_48 = arith.constant dense<0.000000e+00> : vector<100xf32>
    %75 = vector.multi_reduction <add>, %74, %cst_48 [1] : vector<100x100xf32> to vector<100xf32>
    %76 = vector.shape_cast %75 : vector<100xf32> to vector<100x1xf32>
    %77 = tpu.reciprocal %76 {approx = true} : vector<100x1xf32> -> vector<100x1xf32>
    %78 = vector.broadcast %77 : vector<100x1xf32> to vector<100x100xf32>
    %79 = arith.mulf %74, %78 : vector<100x100xf32>
    %cst_49 = arith.constant dense<0.000000e+00> : vector<1x100xf32>
    %80 = tpu.matmul %0, %79, %cst_49 {dimension_numbers = #tpu.dot_dimension_numbers<[1], [0], [0], [1], [0, 0, 1, 1], [], []>} : vector<1x100xf32>, vector<100x100xf32>, vector<1x100xf32> -> vector<1x100xf32>
    %cst_50 = arith.constant dense<0.000000e+00> : vector<1x500xf32>
    %81 = tpu.matmul %80, %65, %cst_50 {dimension_numbers = #tpu.dot_dimension_numbers<[1], [0], [0], [1], [0, 0, 1, 1], [], []>} : vector<1x100xf32>, vector<100x500xf32>, vector<1x500xf32> -> vector<1x500xf32>
    %c1_51 = arith.constant 1 : index
    %c0_52 = arith.constant 0 : index
    %82 = vector.load %arg9[%c1_51, %c0_52] : memref<4x500xf32, #tpu.memory_space<vmem>>, vector<1x500xf32>
    tpu.vector_store %arg9[%c1_51, %c0_52], %81 {strides = array<i32>} : memref<4x500xf32, #tpu.memory_space<vmem>>, vector<1x500xf32>,
    %c2_53 = arith.constant 2 : index
    %c2_54 = arith.constant 2 : index
    %c0_55 = arith.constant 0 : index
    %c0_56 = arith.constant 0 : index
    %83 = vector.load %arg1[%c2_53, %c2_54, %c0_55, %c0_56] : memref<4x3x100x500xf32, #tpu.memory_space<vmem>>, vector<1x1x100x500xf32>
    %84 = vector.shape_cast %83 : vector<1x1x100x500xf32> to vector<100x500xf32>
    %85 = arith.truncf %84 : vector<100x500xf32> to vector<100x500xbf16>
    %c2_57 = arith.constant 2 : index
    %c0_58 = arith.constant 0 : index
    %c0_59 = arith.constant 0 : index
    %c0_60 = arith.constant 0 : index
    %86 = vector.load %arg1[%c2_57, %c0_58, %c0_59, %c0_60] : memref<4x3x100x500xf32, #tpu.memory_space<vmem>>, vector<1x1x100x500xf32>
    %87 = vector.shape_cast %86 : vector<1x1x100x500xf32> to vector<100x500xf32>
    %88 = arith.truncf %87 : vector<100x500xf32> to vector<100x500xbf16>
    %cst_61 = arith.constant dense<0.000000e+00> : vector<100x100xf32>
    %89 = tpu.matmul %85, %88, %cst_61 {dimension_numbers = #tpu.dot_dimension_numbers<[1], [1], [0], [0], [0, 0, 1, 0], [], []>} : vector<100x500xbf16>, vector<100x500xbf16>, vector<100x100xf32> -> vector<100x100xf32>
    %cst_62 = arith.constant 2.000000e-03 : f32
    %90 = vector.broadcast %cst_62 : f32 to vector<100x100xf32>
    %91 = arith.mulf %89, %90 : vector<100x100xf32>
    %cst_63 = arith.constant dense<0xFF800000> : vector<100xf32>
    %92 = vector.multi_reduction <maximumf>, %91, %cst_63 [1] : vector<100x100xf32> to vector<100xf32>
    %93 = vector.shape_cast %92 : vector<100xf32> to vector<100x1xf32>
    %94 = vector.broadcast %93 : vector<100x1xf32> to vector<100x100xf32>
    %95 = arith.subf %91, %94 : vector<100x100xf32>
    %96 = math.exp %95 : vector<100x100xf32>
    %cst_64 = arith.constant dense<0.000000e+00> : vector<100xf32>
    %97 = vector.multi_reduction <add>, %96, %cst_64 [1] : vector<100x100xf32> to vector<100xf32>
    %98 = vector.shape_cast %97 : vector<100xf32> to vector<100x1xf32>
    %99 = tpu.reciprocal %98 {approx = true} : vector<100x1xf32> -> vector<100x1xf32>
    %100 = vector.broadcast %99 : vector<100x1xf32> to vector<100x100xf32>
    %101 = arith.mulf %96, %100 : vector<100x100xf32>
    %cst_65 = arith.constant dense<0.000000e+00> : vector<1x100xf32>
    %102 = tpu.matmul %0, %101, %cst_65 {dimension_numbers = #tpu.dot_dimension_numbers<[1], [0], [0], [1], [0, 0, 1, 1], [], []>} : vector<1x100xf32>, vector<100x100xf32>, vector<1x100xf32> -> vector<1x100xf32>
    %cst_66 = arith.constant dense<0.000000e+00> : vector<1x500xf32>
    %103 = tpu.matmul %102, %87, %cst_66 {dimension_numbers = #tpu.dot_dimension_numbers<[1], [0], [0], [1], [0, 0, 1, 1], [], []>} : vector<1x100xf32>, vector<100x500xf32>, vector<1x500xf32> -> vector<1x500xf32>
    %c2_67 = arith.constant 2 : index
    %c0_68 = arith.constant 0 : index
    %104 = vector.load %arg8[%c2_67, %c0_68] : memref<4x500xf32, #tpu.memory_space<vmem>>, vector<1x500xf32>
    tpu.vector_store %arg8[%c2_67, %c0_68], %103 {strides = array<i32>} : memref<4x500xf32, #tpu.memory_space<vmem>>, vector<1x500xf32>,
    %c2_69 = arith.constant 2 : index
    %c1_70 = arith.constant 1 : index
    %c0_71 = arith.constant 0 : index
    %c0_72 = arith.constant 0 : index
    %105 = vector.load %arg1[%c2_69, %c1_70, %c0_71, %c0_72] : memref<4x3x100x500xf32, #tpu.memory_space<vmem>>, vector<1x1x100x500xf32>
    %106 = vector.shape_cast %105 : vector<1x1x100x500xf32> to vector<100x500xf32>
    %107 = arith.truncf %106 : vector<100x500xf32> to vector<100x500xbf16>
    %cst_73 = arith.constant dense<0.000000e+00> : vector<100x100xf32>
    %108 = tpu.matmul %85, %107, %cst_73 {dimension_numbers = #tpu.dot_dimension_numbers<[1], [1], [0], [0], [0, 0, 1, 0], [], []>} : vector<100x500xbf16>, vector<100x500xbf16>, vector<100x100xf32> -> vector<100x100xf32>
    %cst_74 = arith.constant 2.000000e-03 : f32
    %109 = vector.broadcast %cst_74 : f32 to vector<100x100xf32>
    %110 = arith.mulf %108, %109 : vector<100x100xf32>
    %cst_75 = arith.constant dense<0xFF800000> : vector<100xf32>
    %111 = vector.multi_reduction <maximumf>, %110, %cst_75 [1] : vector<100x100xf32> to vector<100xf32>
    %112 = vector.shape_cast %111 : vector<100xf32> to vector<100x1xf32>
    %113 = vector.broadcast %112 : vector<100x1xf32> to vector<100x100xf32>
    %114 = arith.subf %110, %113 : vector<100x100xf32>
    %115 = math.exp %114 : vector<100x100xf32>
    %cst_76 = arith.constant dense<0.000000e+00> : vector<100xf32>
    %116 = vector.multi_reduction <add>, %115, %cst_76 [1] : vector<100x100xf32> to vector<100xf32>
    %117 = vector.shape_cast %116 : vector<100xf32> to vector<100x1xf32>
    %118 = tpu.reciprocal %117 {approx = true} : vector<100x1xf32> -> vector<100x1xf32>
    %119 = vector.broadcast %118 : vector<100x1xf32> to vector<100x100xf32>
    %120 = arith.mulf %115, %119 : vector<100x100xf32>
    %cst_77 = arith.constant dense<0.000000e+00> : vector<1x100xf32>
    %121 = tpu.matmul %0, %120, %cst_77 {dimension_numbers = #tpu.dot_dimension_numbers<[1], [0], [0], [1], [0, 0, 1, 1], [], []>} : vector<1x100xf32>, vector<100x100xf32>, vector<1x100xf32> -> vector<1x100xf32>
    %cst_78 = arith.constant dense<0.000000e+00> : vector<1x500xf32>
    %122 = tpu.matmul %121, %106, %cst_78 {dimension_numbers = #tpu.dot_dimension_numbers<[1], [0], [0], [1], [0, 0, 1, 1], [], []>} : vector<1x100xf32>, vector<100x500xf32>, vector<1x500xf32> -> vector<1x500xf32>
    %c2_79 = arith.constant 2 : index
    %c0_80 = arith.constant 0 : index
    %123 = vector.load %arg9[%c2_79, %c0_80] : memref<4x500xf32, #tpu.memory_space<vmem>>, vector<1x500xf32>
    tpu.vector_store %arg9[%c2_79, %c0_80], %122 {strides = array<i32>} : memref<4x500xf32, #tpu.memory_space<vmem>>, vector<1x500xf32>,
    %c3 = arith.constant 3 : index
    %c2_81 = arith.constant 2 : index
    %c0_82 = arith.constant 0 : index
    %c0_83 = arith.constant 0 : index
    %124 = vector.load %arg1[%c3, %c2_81, %c0_82, %c0_83] : memref<4x3x100x500xf32, #tpu.memory_space<vmem>>, vector<1x1x100x500xf32>
    %125 = vector.shape_cast %124 : vector<1x1x100x500xf32> to vector<100x500xf32>
    %126 = arith.truncf %125 : vector<100x500xf32> to vector<100x500xbf16>
    %c3_84 = arith.constant 3 : index
    %c0_85 = arith.constant 0 : index
    %c0_86 = arith.constant 0 : index
    %c0_87 = arith.constant 0 : index
    %127 = vector.load %arg1[%c3_84, %c0_85, %c0_86, %c0_87] : memref<4x3x100x500xf32, #tpu.memory_space<vmem>>, vector<1x1x100x500xf32>
    %128 = vector.shape_cast %127 : vector<1x1x100x500xf32> to vector<100x500xf32>
    %129 = arith.truncf %128 : vector<100x500xf32> to vector<100x500xbf16>
    %cst_88 = arith.constant dense<0.000000e+00> : vector<100x100xf32>
    %130 = tpu.matmul %126, %129, %cst_88 {dimension_numbers = #tpu.dot_dimension_numbers<[1], [1], [0], [0], [0, 0, 1, 0], [], []>} : vector<100x500xbf16>, vector<100x500xbf16>, vector<100x100xf32> -> vector<100x100xf32>
    %cst_89 = arith.constant 2.000000e-03 : f32
    %131 = vector.broadcast %cst_89 : f32 to vector<100x100xf32>
    %132 = arith.mulf %130, %131 : vector<100x100xf32>
    %cst_90 = arith.constant dense<0xFF800000> : vector<100xf32>
    %133 = vector.multi_reduction <maximumf>, %132, %cst_90 [1] : vector<100x100xf32> to vector<100xf32>
    %134 = vector.shape_cast %133 : vector<100xf32> to vector<100x1xf32>
    %135 = vector.broadcast %134 : vector<100x1xf32> to vector<100x100xf32>
    %136 = arith.subf %132, %135 : vector<100x100xf32>
    %137 = math.exp %136 : vector<100x100xf32>
    %cst_91 = arith.constant dense<0.000000e+00> : vector<100xf32>
    %138 = vector.multi_reduction <add>, %137, %cst_91 [1] : vector<100x100xf32> to vector<100xf32>
    %139 = vector.shape_cast %138 : vector<100xf32> to vector<100x1xf32>
    %140 = tpu.reciprocal %139 {approx = true} : vector<100x1xf32> -> vector<100x1xf32>
    %141 = vector.broadcast %140 : vector<100x1xf32> to vector<100x100xf32>
    %142 = arith.mulf %137, %141 : vector<100x100xf32>
    %cst_92 = arith.constant dense<0.000000e+00> : vector<1x100xf32>
    %143 = tpu.matmul %0, %142, %cst_92 {dimension_numbers = #tpu.dot_dimension_numbers<[1], [0], [0], [1], [0, 0, 1, 1], [], []>} : vector<1x100xf32>, vector<100x100xf32>, vector<1x100xf32> -> vector<1x100xf32>
    %cst_93 = arith.constant dense<0.000000e+00> : vector<1x500xf32>
    %144 = tpu.matmul %143, %128, %cst_93 {dimension_numbers = #tpu.dot_dimension_numbers<[1], [0], [0], [1], [0, 0, 1, 1], [], []>} : vector<1x100xf32>, vector<100x500xf32>, vector<1x500xf32> -> vector<1x500xf32>
    %c3_94 = arith.constant 3 : index
    %c0_95 = arith.constant 0 : index
    %145 = vector.load %arg8[%c3_94, %c0_95] : memref<4x500xf32, #tpu.memory_space<vmem>>, vector<1x500xf32>
    tpu.vector_store %arg8[%c3_94, %c0_95], %144 {strides = array<i32>} : memref<4x500xf32, #tpu.memory_space<vmem>>, vector<1x500xf32>,
    %c3_96 = arith.constant 3 : index
    %c1_97 = arith.constant 1 : index
    %c0_98 = arith.constant 0 : index
    %c0_99 = arith.constant 0 : index
    %146 = vector.load %arg1[%c3_96, %c1_97, %c0_98, %c0_99] : memref<4x3x100x500xf32, #tpu.memory_space<vmem>>, vector<1x1x100x500xf32>
    %147 = vector.shape_cast %146 : vector<1x1x100x500xf32> to vector<100x500xf32>
    %148 = arith.truncf %147 : vector<100x500xf32> to vector<100x500xbf16>
    %cst_100 = arith.constant dense<0.000000e+00> : vector<100x100xf32>
    %149 = tpu.matmul %126, %148, %cst_100 {dimension_numbers = #tpu.dot_dimension_numbers<[1], [1], [0], [0], [0, 0, 1, 0], [], []>} : vector<100x500xbf16>, vector<100x500xbf16>, vector<100x100xf32> -> vector<100x100xf32>
    %cst_101 = arith.constant 2.000000e-03 : f32
    %150 = vector.broadcast %cst_101 : f32 to vector<100x100xf32>
    %151 = arith.mulf %149, %150 : vector<100x100xf32>
    %cst_102 = arith.constant dense<0xFF800000> : vector<100xf32>
    %152 = vector.multi_reduction <maximumf>, %151, %cst_102 [1] : vector<100x100xf32> to vector<100xf32>
    %153 = vector.shape_cast %152 : vector<100xf32> to vector<100x1xf32>
    %154 = vector.broadcast %153 : vector<100x1xf32> to vector<100x100xf32>
    %155 = arith.subf %151, %154 : vector<100x100xf32>
    %156 = math.exp %155 : vector<100x100xf32>
    %cst_103 = arith.constant dense<0.000000e+00> : vector<100xf32>
    %157 = vector.multi_reduction <add>, %156, %cst_103 [1] : vector<100x100xf32> to vector<100xf32>
    %158 = vector.shape_cast %157 : vector<100xf32> to vector<100x1xf32>
    %159 = tpu.reciprocal %158 {approx = true} : vector<100x1xf32> -> vector<100x1xf32>
    %160 = vector.broadcast %159 : vector<100x1xf32> to vector<100x100xf32>
    %161 = arith.mulf %156, %160 : vector<100x100xf32>
    %cst_104 = arith.constant dense<0.000000e+00> : vector<1x100xf32>
    %162 = tpu.matmul %0, %161, %cst_104 {dimension_numbers = #tpu.dot_dimension_numbers<[1], [0], [0], [1], [0, 0, 1, 1], [], []>} : vector<1x100xf32>, vector<100x100xf32>, vector<1x100xf32> -> vector<1x100xf32>
    %cst_105 = arith.constant dense<0.000000e+00> : vector<1x500xf32>
    %163 = tpu.matmul %162, %147, %cst_105 {dimension_numbers = #tpu.dot_dimension_numbers<[1], [0], [0], [1], [0, 0, 1, 1], [], []>} : vector<1x100xf32>, vector<100x500xf32>, vector<1x500xf32> -> vector<1x500xf32>
    %c3_106 = arith.constant 3 : index
    %c0_107 = arith.constant 0 : index
    %164 = vector.load %arg9[%c3_106, %c0_107] : memref<4x500xf32, #tpu.memory_space<vmem>>, vector<1x500xf32>
    tpu.vector_store %arg9[%c3_106, %c0_107], %163 {strides = array<i32>} : memref<4x500xf32, #tpu.memory_space<vmem>>, vector<1x500xf32>,
    %c0_108 = arith.constant 0 : index
    %c0_109 = arith.constant 0 : index
    %165 = vector.load %arg8[%c0_108, %c0_109] : memref<4x500xf32, #tpu.memory_space<vmem>>, vector<4x500xf32>
    %c0_110 = arith.constant 0 : index
    %c0_111 = arith.constant 0 : index
    %166 = vector.load %arg2[%c0_110, %c0_111] : memref<500x256xf32, #tpu.memory_space<vmem>>, vector<500x256xf32>
    %cst_112 = arith.constant dense<0.000000e+00> : vector<4x256xf32>
    %167 = tpu.matmul %165, %166, %cst_112 {dimension_numbers = #tpu.dot_dimension_numbers<[1], [0], [0], [1], [0, 0, 1, 1], [], []>} : vector<4x500xf32>, vector<500x256xf32>, vector<4x256xf32> -> vector<4x256xf32>
    %c0_113 = arith.constant 0 : index
    %c0_114 = arith.constant 0 : index
    %168 = vector.load %arg9[%c0_113, %c0_114] : memref<4x500xf32, #tpu.memory_space<vmem>>, vector<4x500xf32>
    %c0_115 = arith.constant 0 : index
    %c0_116 = arith.constant 0 : index
    %169 = vector.load %arg3[%c0_115, %c0_116] : memref<500x256xf32, #tpu.memory_space<vmem>>, vector<500x256xf32>
    %cst_117 = arith.constant dense<0.000000e+00> : vector<4x256xf32>
    %170 = tpu.matmul %168, %169, %cst_117 {dimension_numbers = #tpu.dot_dimension_numbers<[1], [0], [0], [1], [0, 0, 1, 1], [], []>} : vector<4x500xf32>, vector<500x256xf32>, vector<4x256xf32> -> vector<4x256xf32>
    %171 = arith.addf %167, %170 : vector<4x256xf32>
    %c0_118 = arith.constant 0 : index
    %c0_119 = arith.constant 0 : index
    %172 = vector.load %arg4[%c0_118, %c0_119] : memref<1x256xf32, #tpu.memory_space<vmem>>, vector<1x256xf32>
    %173 = vector.broadcast %172 : vector<1x256xf32> to vector<4x256xf32>
    %174 = arith.addf %171, %173 : vector<4x256xf32>
    %cst_120 = arith.constant 0.000000e+00 : f32
    %175 = vector.broadcast %cst_120 : f32 to vector<4x256xf32>
    %176 = arith.cmpf ogt, %174, %175 : vector<4x256xf32>
    %cst_121 = arith.constant 0.00999999977 : f32
    %177 = vector.broadcast %cst_121 : f32 to vector<4x256xf32>
    %178 = arith.mulf %177, %174 : vector<4x256xf32>
    %179 = arith.select %176, %174, %178 : vector<4x256xi1>, vector<4x256xf32>
    %c0_122 = arith.constant 0 : index
    %c0_123 = arith.constant 0 : index
    %180 = vector.load %arg5[%c0_122, %c0_123] : memref<256x128xf32, #tpu.memory_space<vmem>>, vector<256x128xf32>
    %cst_124 = arith.constant dense<0.000000e+00> : vector<4x128xf32>
    %181 = tpu.matmul %179, %180, %cst_124 {dimension_numbers = #tpu.dot_dimension_numbers<[1], [0], [0], [1], [0, 0, 1, 1], [], []>} : vector<4x256xf32>, vector<256x128xf32>, vector<4x128xf32> -> vector<4x128xf32>
    %c0_125 = arith.constant 0 : index
    %c0_126 = arith.constant 0 : index
    %182 = vector.load %arg6[%c0_125, %c0_126] : memref<1x128xf32, #tpu.memory_space<vmem>>, vector<1x128xf32>
    %183 = vector.broadcast %182 : vector<1x128xf32> to vector<4x128xf32>
    %184 = arith.addf %181, %183 : vector<4x128xf32>
    %c0_127 = arith.constant 0 : index
    %c0_128 = arith.constant 0 : index
    %c0_129 = arith.constant 0 : index
    %185 = vector.load %arg7[%c0_127, %c0_128, %c0_129] : memref<1x4x128xf32, #tpu.memory_space<vmem>>, vector<1x4x128xf32>
    %186 = vector.shape_cast %185 : vector<1x4x128xf32> to vector<4x128xf32>
    %187 = vector.shape_cast %184 : vector<4x128xf32> to vector<1x4x128xf32>
    tpu.vector_store %arg7[%c0_127, %c0_128, %c0_129], %187 {strides = array<i32>} : memref<1x4x128xf32, #tpu.memory_space<vmem>>, vector<1x4x128xf32>,
    return
  }
  func.func @transform_0(%arg0: i32) -> (i32, i32, i32, i32) {
    %c0_i32 = arith.constant 0 : i32
    %c0_i32_0 = arith.constant 0 : i32
    %c0_i32_1 = arith.constant 0 : i32
    %c0_i32_2 = arith.constant 0 : i32
    return %arg0, %c0_i32, %c0_i32_0, %c0_i32_1 : i32, i32, i32, i32
  }
  func.func @transform_1(%arg0: i32) -> (i32, i32) {
    %c0_i32 = arith.constant 0 : i32
    %c0_i32_0 = arith.constant 0 : i32
    %c0_i32_1 = arith.constant 0 : i32
    return %c0_i32, %c0_i32_0 : i32, i32
  }
  func.func @transform_2(%arg0: i32) -> (i32, i32) {
    %c0_i32 = arith.constant 0 : i32
    %c0_i32_0 = arith.constant 0 : i32
    %c0_i32_1 = arith.constant 0 : i32
    return %c0_i32, %c0_i32_0 : i32, i32
  }
  func.func @transform_3(%arg0: i32) -> (i32, i32) {
    %c0_i32 = arith.constant 0 : i32
    %c0_i32_0 = arith.constant 0 : i32
    %c0_i32_1 = arith.constant 0 : i32
    return %c0_i32, %c0_i32_0 : i32, i32
  }
  func.func @transform_4(%arg0: i32) -> (i32, i32) {
    %c0_i32 = arith.constant 0 : i32
    %c0_i32_0 = arith.constant 0 : i32
    %c0_i32_1 = arith.constant 0 : i32
    return %c0_i32, %c0_i32_0 : i32, i32
  }
  func.func @transform_5(%arg0: i32) -> (i32, i32) {
    %c0_i32 = arith.constant 0 : i32
    %c0_i32_0 = arith.constant 0 : i32
    %c0_i32_1 = arith.constant 0 : i32
    return %c0_i32, %c0_i32_0 : i32, i32
  }
  func.func @transform_6(%arg0: i32) -> (i32, i32, i32) {
    %c0_i32 = arith.constant 0 : i32
    %c0_i32_0 = arith.constant 0 : i32
    %c0_i32_1 = arith.constant 0 : i32
    return %arg0, %c0_i32, %c0_i32_0 : i32, i32, i32
  }
}

</mosaic_0001>

<llo_original>
// kernel: forward.1
$region0: #{forward.1}
  #allocation0 [shape = 'u32[]', space=smem, size = 0x4, offset = 0x4, fixed_abs, tag = 'smem constant byte address 0x4 - core index']
  #allocation1 [shape = 'u32[144,128]{1,0:T(1,128)}', space=vmem, size = 0x12000, scoped, tag = 'internal scratch']
  #allocation2 [shape = 'f32[4,500]{1,0:T(4,128)}', space=vmem, size = 0x2000, scoped, tag = 'scratch operand']
  #allocation3 [shape = 'f32[4,500]{1,0:T(4,128)}', space=vmem, size = 0x2000, scoped, tag = 'scratch operand']
  %s0 = inlined_call_operand.vmem [shape: f32[8,3,100,500], index: 0, kind: input, shape index: {}]
  %s1 = inlined_call_operand.vmem [shape: f32[500,256], index: 1, kind: input, shape index: {}]
  %s2 = inlined_call_operand.vmem [shape: f32[500,256], index: 2, kind: input, shape index: {}]
  %s3 = inlined_call_operand.vmem [shape: f32[1,256], index: 3, kind: input, shape index: {}]
  %s4 = inlined_call_operand.vmem [shape: f32[256,128], index: 4, kind: input, shape index: {}]
  %s5 = inlined_call_operand.vmem [shape: f32[1,128], index: 5, kind: input, shape index: {}]
  %s6 = inlined_call_operand.vmem [shape: f32[2,4,128], index: 6, kind: output, shape index: {}]
  %s7 = sld [smem:[#allocation0]]
  $region57: #{forward.1} parent=0
    _
  %s9 = ssub.s32 1, %s7
  %s10 = scalar_select 0, %s9, %s7
  loop: start=0, step=1, limit=4
  $region2: #{forward.1} parent=0 // loop_pre_header
    _
  $region3: #{forward.1} parent=0 // loop_header
    %s12 = sphi 0, %s16
    %p13 = scmp.ge.s32.totalorder %s12, 4
    %s22 = sphi 0, %s24
    %s25 = sphi 0, %s22
    %s26 = sphi 0, %s25
    %s42 = sphi 0, %s26
    %s46 = sphi 0, %s46
    %s48 = sphi 0, %s46
    %s49 = sphi 0, %s48
    %s63 = sphi 0, %s49
    %s67 = sphi 0, %s67
    %s69 = sphi 0, %s67
    %s70 = sphi 0, %s69
    %s84 = sphi 0, %s70
    %s88 = sphi 0, %s88
    %s90 = sphi 0, %s88
    %s91 = sphi 0, %s90
    %s105 = sphi 0, %s91
    %s109 = sphi 0, %s109
    %s111 = sphi 0, %s109
    %s112 = sphi 0, %s111
    %s126 = sphi 0, %s112
    %s130 = sphi 0, %s130
    %s132 = sphi 0, %s130
    %s133 = sphi 0, %s132
    %s147 = sphi 0, %s133
    %s153 = sphi 0, %s155
    %s156 = sphi 0, %s153
    %s157 = sphi 0, %s156
    %s173 = sphi 0, %s157
  $region4: #{forward.1} parent=0 // loop_header_branch
    %15 = sbr.rel (%p13) target = $region8
  $region5: #{forward.1} parent=0 // loop_body
    %s17 = ssub.s32 %s12, 1
    %s18 = ssub.s32 %s12, 2
    %s19 = sadd.s32 %s12, 1
    %s20 = ssub.s32 %s12, %s19
    %p21 = scmp.eq.s32.totalorder %s20, 0
    %s23 = sadd.s32 %s22, 1
    %s24 = scalar_select %p21, %s22, %s23
    %p27 = pneg %p21
    %p28 = scmp.eq.s32.totalorder %s12, 1
    %p29 = por %p27, %p28
    %p30 = scmp.ne.s32.totalorder %s22, %s25
    %p31 = scmp.eq.s32.totalorder %s12, 0
    %p32 = por %p30, %p31
    %p33 = scmp.ne.s32.totalorder %s22, %s25
    %p34 = scmp.eq.s32.totalorder %s17, 1
    %p35 = por %p33, %p34
    %p36 = scmp.ne.s32.totalorder %s25, %s26
    %p37 = scmp.eq.s32.totalorder %s17, 0
    %p38 = por %p36, %p37
    %p39 = scmp.ne.s32.totalorder %s25, %s26
    %p40 = scmp.eq.s32.totalorder %s18, 1
    %p41 = por %p39, %p40
    %p43 = scmp.ne.s32.totalorder %s26, %s42
    %p44 = scmp.eq.s32.totalorder %s18, 0
    %p45 = por %p43, %p44
    %s47 = sadd.s32 %s46, 1
    %p50 = scmp.eq.s32.totalorder %s12, 1
    %p51 = scmp.ne.s32.totalorder %s46, %s48
    %p52 = scmp.eq.s32.totalorder %s12, 0
    %p53 = por %p51, %p52
    %p54 = scmp.ne.s32.totalorder %s46, %s48
    %p55 = scmp.eq.s32.totalorder %s17, 1
    %p56 = por %p54, %p55
    %p57 = scmp.ne.s32.totalorder %s48, %s49
    %p58 = scmp.eq.s32.totalorder %s17, 0
    %p59 = por %p57, %p58
    %p60 = scmp.ne.s32.totalorder %s48, %s49
    %p61 = scmp.eq.s32.totalorder %s18, 1
    %p62 = por %p60, %p61
    %p64 = scmp.ne.s32.totalorder %s49, %s63
    %p65 = scmp.eq.s32.totalorder %s18, 0
    %p66 = por %p64, %p65
    %s68 = sadd.s32 %s67, 1
    %p71 = scmp.eq.s32.totalorder %s12, 1
    %p72 = scmp.ne.s32.totalorder %s67, %s69
    %p73 = scmp.eq.s32.totalorder %s12, 0
    %p74 = por %p72, %p73
    %p75 = scmp.ne.s32.totalorder %s67, %s69
    %p76 = scmp.eq.s32.totalorder %s17, 1
    %p77 = por %p75, %p76
    %p78 = scmp.ne.s32.totalorder %s69, %s70
    %p79 = scmp.eq.s32.totalorder %s17, 0
    %p80 = por %p78, %p79
    %p81 = scmp.ne.s32.totalorder %s69, %s70
    %p82 = scmp.eq.s32.totalorder %s18, 1
    %p83 = por %p81, %p82
    %p85 = scmp.ne.s32.totalorder %s70, %s84
    %p86 = scmp.eq.s32.totalorder %s18, 0
    %p87 = por %p85, %p86
    %s89 = sadd.s32 %s88, 1
    %p92 = scmp.eq.s32.totalorder %s12, 1
    %p93 = scmp.ne.s32.totalorder %s88, %s90
    %p94 = scmp.eq.s32.totalorder %s12, 0
    %p95 = por %p93, %p94
    %p96 = scmp.ne.s32.totalorder %s88, %s90
    %p97 = scmp.eq.s32.totalorder %s17, 1
    %p98 = por %p96, %p97
    %p99 = scmp.ne.s32.totalorder %s90, %s91
    %p100 = scmp.eq.s32.totalorder %s17, 0
    %p101 = por %p99, %p100
    %p102 = scmp.ne.s32.totalorder %s90, %s91
    %p103 = scmp.eq.s32.totalorder %s18, 1
    %p104 = por %p102, %p103
    %p106 = scmp.ne.s32.totalorder %s91, %s105
    %p107 = scmp.eq.s32.totalorder %s18, 0
    %p108 = por %p106, %p107
    %s110 = sadd.s32 %s109, 1
    %p113 = scmp.eq.s32.totalorder %s12, 1
    %p114 = scmp.ne.s32.totalorder %s109, %s111
    %p115 = scmp.eq.s32.totalorder %s12, 0
    %p116 = por %p114, %p115
    %p117 = scmp.ne.s32.totalorder %s109, %s111
    %p118 = scmp.eq.s32.totalorder %s17, 1
    %p119 = por %p117, %p118
    %p120 = scmp.ne.s32.totalorder %s111, %s112
    %p121 = scmp.eq.s32.totalorder %s17, 0
    %p122 = por %p120, %p121
    %p123 = scmp.ne.s32.totalorder %s111, %s112
    %p124 = scmp.eq.s32.totalorder %s18, 1
    %p125 = por %p123, %p124
    %p127 = scmp.ne.s32.totalorder %s112, %s126
    %p128 = scmp.eq.s32.totalorder %s18, 0
    %p129 = por %p127, %p128
    %s131 = sadd.s32 %s130, 1
    %p134 = scmp.eq.s32.totalorder %s12, 1
    %p135 = scmp.ne.s32.totalorder %s130, %s132
    %p136 = scmp.eq.s32.totalorder %s12, 0
    %p137 = por %p135, %p136
    %p138 = scmp.ne.s32.totalorder %s130, %s132
    %p139 = scmp.eq.s32.totalorder %s17, 1
    %p140 = por %p138, %p139
    %p141 = scmp.ne.s32.totalorder %s132, %s133
    %p142 = scmp.eq.s32.totalorder %s17, 0
    %p143 = por %p141, %p142
    %p144 = scmp.ne.s32.totalorder %s132, %s133
    %p145 = scmp.eq.s32.totalorder %s18, 1
    %p146 = por %p144, %p145
    %p148 = scmp.ne.s32.totalorder %s133, %s147
    %p149 = scmp.eq.s32.totalorder %s18, 0
    %p150 = por %p148, %p149
    %s151 = ssub.s32 %s12, %s19
    %p152 = scmp.eq.s32.totalorder %s151, 0
    %s154 = sadd.s32 %s153, 1
    %s155 = scalar_select %p152, %s153, %s154
    %p158 = pneg %p152
    %p159 = scmp.eq.s32.totalorder %s12, 1
    %p160 = por %p158, %p159
    %p161 = scmp.ne.s32.totalorder %s153, %s156
    %p162 = scmp.eq.s32.totalorder %s12, 0
    %p163 = por %p161, %p162
    %p164 = scmp.ne.s32.totalorder %s153, %s156
    %p165 = scmp.eq.s32.totalorder %s17, 1
    %p166 = por %p164, %p165
    %p167 = scmp.ne.s32.totalorder %s156, %s157
    %p168 = scmp.eq.s32.totalorder %s17, 0
    %p169 = por %p167, %p168
    %p170 = scmp.ne.s32.totalorder %s156, %s157
    %p171 = scmp.eq.s32.totalorder %s18, 1
    %p172 = por %p170, %p171
    %p174 = scmp.ne.s32.totalorder %s157, %s173
    %p175 = scmp.eq.s32.totalorder %s18, 0
    %p176 = por %p174, %p175
    %p177 = scmp.le.s32.totalorder 1, %s12
    %p178 = scmp.lt.s32.totalorder %s12, 3
    %p179 = pnand %p177, %p178
    %p180 = pneg %p179
    // Predicated region
    $region9: #{forward.1} parent=5 // pred_check
      _
    $region10: #{forward.1} parent=5 // pred_check_branch
      %182 = sbr.rel (%p179) target = $region12
    $region11: #{forward.1} parent=5 // pred_region
      %s183 = ssub.s32 %s12, 1
      // Predicated region
      $region13: #{forward.1} parent=11 // pred_check
        %p184 = pneg %p59
      $region14: #{forward.1} parent=11 // pred_check_branch
        %186 = sbr.rel (%p184) target = $region16
      $region15: #{forward.1} parent=11 // pred_region
        _
      $region16: #{forward.1} parent=11 // pred_fallthru
        _
      // Predicated region
      $region17: #{forward.1} parent=11 // pred_check
        %p187 = pneg %p80
      $region18: #{forward.1} parent=11 // pred_check_branch
        %189 = sbr.rel (%p187) target = $region20
      $region19: #{forward.1} parent=11 // pred_region
        _
      $region20: #{forward.1} parent=11 // pred_fallthru
        _
      // Predicated region
      $region21: #{forward.1} parent=11 // pred_check
        %p190 = pneg %p101
      $region22: #{forward.1} parent=11 // pred_check_branch
        %192 = sbr.rel (%p190) target = $region24
      $region23: #{forward.1} parent=11 // pred_region
        _
      $region24: #{forward.1} parent=11 // pred_fallthru
        _
      // Predicated region
      $region25: #{forward.1} parent=11 // pred_check
        %p193 = pneg %p122
      $region26: #{forward.1} parent=11 // pred_check_branch
        %195 = sbr.rel (%p193) target = $region28
      $region27: #{forward.1} parent=11 // pred_region
        _
      $region28: #{forward.1} parent=11 // pred_fallthru
        _
      // Predicated region
      $region29: #{forward.1} parent=11 // pred_check
        %p196 = pneg %p143
      $region30: #{forward.1} parent=11 // pred_check_branch
        %198 = sbr.rel (%p196) target = $region32
      $region31: #{forward.1} parent=11 // pred_region
        _
      $region32: #{forward.1} parent=11 // pred_fallthru
        _
    $region12: #{forward.1} parent=5 // pred_fallthru
      _
    %p199 = scmp.lt.s32.totalorder %s12, 2
    // Predicated region
    $region33: #{forward.1} parent=5 // pred_check
      %p200 = pneg %p199
    $region34: #{forward.1} parent=5 // pred_check_branch
      %202 = sbr.rel (%p200) target = $region36
    $region35: #{forward.1} parent=5 // pred_region
      // Predicated region
      $region37: #{forward.1} parent=35 // pred_check
        %p203 = pneg %p32
      $region38: #{forward.1} parent=35 // pred_check_branch
        %205 = sbr.rel (%p203) target = $region40
      $region39: #{forward.1} parent=35 // pred_region
        %s206 = smul.u32 4, %s12
        %p207 = scmp.lt.s32.totalorder %s206, 7
        %s208 = scalar_select %p207, %s206, 7
        %s209 = smul.addr %s208, 156
        %s210 = smul.addr %s209, 8
        %s211 = scalar_lea.vmem %s0, %s210
        %s212 = smul.u32 4, %s12
      $region40: #{forward.1} parent=35 // pred_fallthru
        _
    $region36: #{forward.1} parent=5 // pred_fallthru
      _
    %p213 = scmp.le.s32.totalorder 1, %s12
    %p214 = scmp.lt.s32.totalorder %s12, 3
    %p215 = pnand %p213, %p214
    %p216 = pneg %p215
    // Predicated region
    $region41: #{forward.1} parent=5 // pred_check
      _
    $region42: #{forward.1} parent=5 // pred_check_branch
      %218 = sbr.rel (%p215) target = $region44
    $region43: #{forward.1} parent=5 // pred_region
      %s219 = ssub.s32 %s12, 1
      %s220 = smul.u32 4, %s17
      %p221 = scmp.lt.s32.totalorder %s220, 7
      %s222 = scalar_select %p221, %s220, 7
      %s223 = smul.addr %s222, 156
      %s224 = smul.addr %s223, 8
      %s225 = scalar_lea.vmem %s0, %s224
      %p226 = pneg %p38
      %p227 = pneg %p35
      %p228 = pneg %p59
      %p229 = pneg %p56
      %p230 = pneg %p80
      %p231 = pneg %p77
      %p232 = pneg %p101
      %p233 = pneg %p98
      %p234 = pneg %p122
      %p235 = pneg %p119
      %p236 = pneg %p143
      %p237 = pneg %p140
      %p238 = pneg %p169
      %p239 = pneg %p166
      %p240 = scmp.lt.s32.totalorder %s17, 1
      %s241 = scalar_select %p240, %s17, 1
      %s242 = smul.addr %s241, 4
      %s243 = scalar_lea.vmem %s6, %s242
      %s244 = smul.u32 4, %s17
      %p245 = scmp.lt.s32.totalorder %s244, 7
      %s246 = scalar_select %p245, %s244, 7
      %s247 = smul.addr %s246, 156
      %s248 = smul.addr %s247, 8
      %s249 = scalar_lea.vmem %s0, %s248
      %s250 = smul.u32 4, %s17
      %p251 = scmp.lt.s32.totalorder %s17, 1
      %s252 = scalar_select %p251, %s17, 1
      %s253 = smul.addr %s252, 4
      %s254 = scalar_lea.vmem %s6, %s253
      %s256 = scalar_lea.vmem %s249, 832
      %v257 = vld [vmem:[%s256] sm:$0xff]
      %v258 = vld [vmem:[%s256 + $0x8] sm:$0xff]
      %v259 = vld [vmem:[%s256 + $0x10] sm:$0xff]
      %v260 = vld [vmem:[%s256 + $0x18] sm:$0xff]
      %v261 = vld [vmem:[%s256 + $0x20] sm:$0xff]
      %v262 = vld [vmem:[%s256 + $0x28] sm:$0xff]
      %v263 = vld [vmem:[%s256 + $0x30] sm:$0xff]
      %v264 = vld [vmem:[%s256 + $0x38] sm:$0xff]
      %v265 = vld [vmem:[%s256 + $0x40] sm:$0xff]
      %v266 = vld [vmem:[%s256 + $0x48] sm:$0xff]
      %v267 = vld [vmem:[%s256 + $0x50] sm:$0xff]
      %v268 = vld [vmem:[%s256 + $0x58] sm:$0xff]
      %v269 = vld [vmem:[%s256 + $0x60] sm:$0xff]
      %v270 = vld [vmem:[%s256 + $0x68] sm:$0xff]
      %v271 = vld [vmem:[%s256 + $0x70] sm:$0xff]
      %v272 = vld [vmem:[%s256 + $0x78] sm:$0xff]
      %v273 = vld [vmem:[%s256 + $0x80] sm:$0xff]
      %v274 = vld [vmem:[%s256 + $0x88] sm:$0xff]
      %v275 = vld [vmem:[%s256 + $0x90] sm:$0xff]
      %v276 = vld [vmem:[%s256 + $0x98] sm:$0xff]
      %v277 = vld [vmem:[%s256 + $0xa0] sm:$0xff]
      %v278 = vld [vmem:[%s256 + $0xa8] sm:$0xff]
      %v279 = vld [vmem:[%s256 + $0xb0] sm:$0xff]
      %v280 = vld [vmem:[%s256 + $0xb8] sm:$0xff]
      %v281 = vld [vmem:[%s256 + $0xc0] sm:$0xff]
      %v282 = vld [vmem:[%s256 + $0xc8] sm:$0xff]
      %v283 = vld [vmem:[%s256 + $0xd0] sm:$0xff]
      %v284 = vld [vmem:[%s256 + $0xd8] sm:$0xff]
      %v285 = vld [vmem:[%s256 + $0xe0] sm:$0xff]
      %v286 = vld [vmem:[%s256 + $0xe8] sm:$0xff]
      %v287 = vld [vmem:[%s256 + $0xf0] sm:$0xff]
      %v288 = vld [vmem:[%s256 + $0xf8] sm:$0xff]
      %v289 = vld [vmem:[%s256 + $0x100] sm:$0xff]
      %v290 = vld [vmem:[%s256 + $0x108] sm:$0xff]
      %v291 = vld [vmem:[%s256 + $0x110] sm:$0xff]
      %v292 = vld [vmem:[%s256 + $0x118] sm:$0xff]
      %v293 = vld [vmem:[%s256 + $0x120] sm:$0xff]
      %v294 = vld [vmem:[%s256 + $0x128] sm:$0xff]
      %v295 = vld [vmem:[%s256 + $0x130] sm:$0xff]
      %v296 = vld [vmem:[%s256 + $0x138] sm:$0xff]
      %v297 = vld [vmem:[%s256 + $0x140] sm:$0xff]
      %v298 = vld [vmem:[%s256 + $0x148] sm:$0xff]
      %v299 = vld [vmem:[%s256 + $0x150] sm:$0xff]
      %v300 = vld [vmem:[%s256 + $0x158] sm:$0xff]
      %v301 = vld [vmem:[%s256 + $0x160] sm:$0xff]
      %v302 = vld [vmem:[%s256 + $0x168] sm:$0xff]
      %v303 = vld [vmem:[%s256 + $0x170] sm:$0xff]
      %v304 = vld [vmem:[%s256 + $0x178] sm:$0xff]
      %v305 = vld [vmem:[%s256 + $0x180] sm:$0xf]
      %v306 = vld [vmem:[%s256 + $0x188] sm:$0xf]
      %v307 = vld [vmem:[%s256 + $0x190] sm:$0xf]
      %v308 = vld [vmem:[%s256 + $0x198] sm:$0xf]
      %v309 = vpack.c.bf16 %v261, %v257
      %v310 = vpack.c.bf16 %v262, %v258
      %v311 = vpack.c.bf16 %v263, %v259
      %v312 = vpack.c.bf16 %v264, %v260
      %v313 = vpack.c.bf16 %v269, %v265
      %v314 = vpack.c.bf16 %v270, %v266
      %v315 = vpack.c.bf16 %v271, %v267
      %v316 = vpack.c.bf16 %v272, %v268
      %v317 = vpack.c.bf16 %v277, %v273
      %v318 = vpack.c.bf16 %v278, %v274
      %v319 = vpack.c.bf16 %v279, %v275
      %v320 = vpack.c.bf16 %v280, %v276
      %v321 = vpack.c.bf16 %v285, %v281
      %v322 = vpack.c.bf16 %v286, %v282
      %v323 = vpack.c.bf16 %v287, %v283
      %v324 = vpack.c.bf16 %v288, %v284
      %v325 = vpack.c.bf16 %v293, %v289
      %v326 = vpack.c.bf16 %v294, %v290
      %v327 = vpack.c.bf16 %v295, %v291
      %v328 = vpack.c.bf16 %v296, %v292
      %v329 = vpack.c.bf16 %v301, %v297
      %v330 = vpack.c.bf16 %v302, %v298
      %v331 = vpack.c.bf16 %v303, %v299
      %v332 = vpack.c.bf16 %v304, %v300
      %v333 = vpack.c.bf16 %v305, %v305
      %v334 = vpack.c.bf16 %v306, %v306
      %v335 = vpack.c.bf16 %v307, %v307
      %v336 = vpack.c.bf16 %v308, %v308
      %v337 = vld [vmem:[%s249] sm:$0xff]
      %v338 = vld [vmem:[%s249 + $0x8] sm:$0xff]
      %v339 = vld [vmem:[%s249 + $0x10] sm:$0xff]
      %v340 = vld [vmem:[%s249 + $0x18] sm:$0xff]
      %v341 = vld [vmem:[%s249 + $0x20] sm:$0xff]
      %v342 = vld [vmem:[%s249 + $0x28] sm:$0xff]
      %v343 = vld [vmem:[%s249 + $0x30] sm:$0xff]
      %v344 = vld [vmem:[%s249 + $0x38] sm:$0xff]
      %v345 = vld [vmem:[%s249 + $0x40] sm:$0xff]
      %v346 = vld [vmem:[%s249 + $0x48] sm:$0xff]
      %v347 = vld [vmem:[%s249 + $0x50] sm:$0xff]
      %v348 = vld [vmem:[%s249 + $0x58] sm:$0xff]
      %v349 = vld [vmem:[%s249 + $0x60] sm:$0xff]
      %v350 = vld [vmem:[%s249 + $0x68] sm:$0xff]
      %v351 = vld [vmem:[%s249 + $0x70] sm:$0xff]
      %v352 = vld [vmem:[%s249 + $0x78] sm:$0xff]
      %v353 = vld [vmem:[%s249 + $0x80] sm:$0xff]
      %v354 = vld [vmem:[%s249 + $0x88] sm:$0xff]
      %v355 = vld [vmem:[%s249 + $0x90] sm:$0xff]
      %v356 = vld [vmem:[%s249 + $0x98] sm:$0xff]
      %v357 = vld [vmem:[%s249 + $0xa0] sm:$0xff]
      %v358 = vld [vmem:[%s249 + $0xa8] sm:$0xff]
      %v359 = vld [vmem:[%s249 + $0xb0] sm:$0xff]
      %v360 = vld [vmem:[%s249 + $0xb8] sm:$0xff]
      %v361 = vld [vmem:[%s249 + $0xc0] sm:$0xff]
      %v362 = vld [vmem:[%s249 + $0xc8] sm:$0xff]
      %v363 = vld [vmem:[%s249 + $0xd0] sm:$0xff]
      %v364 = vld [vmem:[%s249 + $0xd8] sm:$0xff]
      %v365 = vld [vmem:[%s249 + $0xe0] sm:$0xff]
      %v366 = vld [vmem:[%s249 + $0xe8] sm:$0xff]
      %v367 = vld [vmem:[%s249 + $0xf0] sm:$0xff]
      %v368 = vld [vmem:[%s249 + $0xf8] sm:$0xff]
      %v369 = vld [vmem:[%s249 + $0x100] sm:$0xff]
      %v370 = vld [vmem:[%s249 + $0x108] sm:$0xff]
      %v371 = vld [vmem:[%s249 + $0x110] sm:$0xff]
      %v372 = vld [vmem:[%s249 + $0x118] sm:$0xff]
      %v373 = vld [vmem:[%s249 + $0x120] sm:$0xff]
      %v374 = vld [vmem:[%s249 + $0x128] sm:$0xff]
      %v375 = vld [vmem:[%s249 + $0x130] sm:$0xff]
      %v376 = vld [vmem:[%s249 + $0x138] sm:$0xff]
      %v377 = vld [vmem:[%s249 + $0x140] sm:$0xff]
      %v378 = vld [vmem:[%s249 + $0x148] sm:$0xff]
      %v379 = vld [vmem:[%s249 + $0x150] sm:$0xff]
      %v380 = vld [vmem:[%s249 + $0x158] sm:$0xff]
      %v381 = vld [vmem:[%s249 + $0x160] sm:$0xff]
      %v382 = vld [vmem:[%s249 + $0x168] sm:$0xff]
      %v383 = vld [vmem:[%s249 + $0x170] sm:$0xff]
      %v384 = vld [vmem:[%s249 + $0x178] sm:$0xff]
      %v385 = vld [vmem:[%s249 + $0x180] sm:$0xf]
      %v386 = vld [vmem:[%s249 + $0x188] sm:$0xf]
      %v387 = vld [vmem:[%s249 + $0x190] sm:$0xf]
      %v388 = vld [vmem:[%s249 + $0x198] sm:$0xf]
      %v389 = vpack.c.bf16 %v341, %v337
      %v390 = vpack.c.bf16 %v342, %v338
      %v391 = vpack.c.bf16 %v343, %v339
      %v392 = vpack.c.bf16 %v344, %v340
      %v393 = vpack.c.bf16 %v349, %v345
      %v394 = vpack.c.bf16 %v350, %v346
      %v395 = vpack.c.bf16 %v351, %v347
      %v396 = vpack.c.bf16 %v352, %v348
      %v397 = vpack.c.bf16 %v357, %v353
      %v398 = vpack.c.bf16 %v358, %v354
      %v399 = vpack.c.bf16 %v359, %v355
      %v400 = vpack.c.bf16 %v360, %v356
      %v401 = vpack.c.bf16 %v365, %v361
      %v402 = vpack.c.bf16 %v366, %v362
      %v403 = vpack.c.bf16 %v367, %v363
      %v404 = vpack.c.bf16 %v368, %v364
      %v405 = vpack.c.bf16 %v373, %v369
      %v406 = vpack.c.bf16 %v374, %v370
      %v407 = vpack.c.bf16 %v375, %v371
      %v408 = vpack.c.bf16 %v376, %v372
      %v409 = vpack.c.bf16 %v381, %v377
      %v410 = vpack.c.bf16 %v382, %v378
      %v411 = vpack.c.bf16 %v383, %v379
      %v412 = vpack.c.bf16 %v384, %v380
      %v413 = vpack.c.bf16 %v385, %v385
      %v414 = vpack.c.bf16 %v386, %v386
      %v415 = vpack.c.bf16 %v387, %v387
      %v416 = vpack.c.bf16 %v388, %v388
      %vm417 = vcmask 949248
      %v419 = vsel %vm417, %v312, 0
      %v422 = vsel %vm417, %v316, 0
      %v425 = vsel %vm417, %v320, 0
      %v428 = vsel %vm417, %v324, 0
      %v431 = vsel %vm417, %v328, 0
      %v434 = vsel %vm417, %v332, 0
      %v437 = vsel %vm417, %v336, 0
      %v440 = vsel %vm417, %v392, 0
      %v443 = vsel %vm417, %v396, 0
      %v446 = vsel %vm417, %v400, 0
      %v449 = vsel %vm417, %v404, 0
      %v452 = vsel %vm417, %v408, 0
      %v455 = vsel %vm417, %v412, 0
      %v458 = vsel %vm417, %v416, 0
      %460 = vmatprep.subr.bf16.mxu0 %v390
      %461 = vmatpush1.bf16.xpose.msra.mxu0 %v389
      %462 = vmatprep.subr.bf16.mxu0 %v394
      %463 = vmatpush1.bf16.xpose.msra.mxu0 %v393
      %464 = vmatprep.subr.bf16.mxu0 %v398
      %465 = vmatpush1.bf16.xpose.msra.mxu0 %v397
      %466 = vmatprep.subr.bf16.mxu0 %v402
      %467 = vmatpush1.bf16.xpose.msra.mxu0 %v401
      %468 = vmatprep.subr.bf16.mxu0 %v406
      %469 = vmatpush1.bf16.xpose.msra.mxu0 %v405
      %470 = vmatprep.subr.bf16.mxu0 %v410
      %471 = vmatpush1.bf16.xpose.msra.mxu0 %v409
      %472 = vmatprep.subr.bf16.mxu0 %v414
      %473 = vmatpush1.bf16.xpose.msra.mxu0 %v413
      %474 = vmatprep.subr.bf16.mxu0 0
      %475 = vmatpush1.bf16.xpose.msra.mxu0 0
      %476 = vmatprep.subr.bf16.mxu0 0
      %477 = vmatpush1.bf16.xpose.msra.mxu0 0
      %478 = vmatprep.subr.bf16.mxu0 0
      %479 = vmatpush1.bf16.xpose.msra.mxu0 0
      %480 = vmatprep.subr.bf16.mxu0 0
      %481 = vmatpush1.bf16.xpose.msra.mxu0 0
      %482 = vmatprep.subr.bf16.mxu0 0
      %483 = vmatpush1.bf16.xpose.msra.mxu0 0
      %484 = vmatprep.subr.bf16.mxu0 0
      %485 = vmatpush1.bf16.xpose.msra.mxu0 0
      %486 = vmatprep.subr.bf16.mxu0 0
      %487 = vmatpush1.bf16.xpose.msra.mxu0 0
      %488 = vmatprep.subr.bf16.mxu0 0
      %489 = vmatpush1.bf16.xpose.msra.mxu0 0
      %490 = vmatprep.subr.bf16.mxu0 0
      %491 = vmatpush1.bf16.xpose.msra.mxu0 0
      %492 = vmatprep.mubr.bf16.mxu0 %v310
      %493 = vmatmul.mubr.bf16.gmra.mrb[0].mxu0 %v309
      %v494 = vpop.f32.mrb[0].mxu0
      %v495 = vadd.f32 0.0, %v494
      %v496 = vpop.f32.mrb[0].mxu0
      %v497 = vpop.f32.mrb[0].mxu0
      %v498 = vadd.f32 0.0, %v497
      %v499 = vpop.f32.mrb[0].mxu0
      %500 = vmatprep.mubr.bf16.mxu0 %v314
      %501 = vmatmul.mubr.bf16.gmra.mrb[0].mxu0 %v313
      %v502 = vpop.f32.mrb[0].mxu0
      %v503 = vadd.f32 0.0, %v502
      %v504 = vpop.f32.mrb[0].mxu0
      %v505 = vpop.f32.mrb[0].mxu0
      %v506 = vadd.f32 0.0, %v505
      %v507 = vpop.f32.mrb[0].mxu0
      %508 = vmatprep.mubr.bf16.mxu0 %v318
      %509 = vmatmul.mubr.bf16.gmra.mrb[0].mxu0 %v317
      %v510 = vpop.f32.mrb[0].mxu0
      %v511 = vadd.f32 0.0, %v510
      %v512 = vpop.f32.mrb[0].mxu0
      %v513 = vpop.f32.mrb[0].mxu0
      %v514 = vadd.f32 0.0, %v513
      %v515 = vpop.f32.mrb[0].mxu0
      %516 = vmatprep.mubr.bf16.mxu0 %v322
      %517 = vmatmul.mubr.bf16.gmra.mrb[0].mxu0 %v321
      %v518 = vpop.f32.mrb[0].mxu0
      %v519 = vadd.f32 0.0, %v518
      %v520 = vpop.f32.mrb[0].mxu0
      %v521 = vpop.f32.mrb[0].mxu0
      %v522 = vadd.f32 0.0, %v521
      %v523 = vpop.f32.mrb[0].mxu0
      %524 = vmatprep.mubr.bf16.mxu0 %v326
      %525 = vmatmul.mubr.bf16.gmra.mrb[0].mxu0 %v325
      %v526 = vpop.f32.mrb[0].mxu0
      %v527 = vadd.f32 0.0, %v526
      %v528 = vpop.f32.mrb[0].mxu0
      %v529 = vpop.f32.mrb[0].mxu0
      %v530 = vadd.f32 0.0, %v529
      %v531 = vpop.f32.mrb[0].mxu0
      %532 = vmatprep.mubr.bf16.mxu0 %v330
      %533 = vmatmul.mubr.bf16.gmra.mrb[0].mxu0 %v329
      %v534 = vpop.f32.mrb[0].mxu0
      %v535 = vadd.f32 0.0, %v534
      %v536 = vpop.f32.mrb[0].mxu0
      %v537 = vpop.f32.mrb[0].mxu0
      %v538 = vadd.f32 0.0, %v537
      %v539 = vpop.f32.mrb[0].mxu0
      %540 = vmatprep.mubr.bf16.mxu0 %v334
      %541 = vmatmul.mubr.bf16.gmra.mrb[0].mxu0 %v333
      %v542 = vpop.f32.mrb[0].mxu0
      %v543 = vadd.f32 0.0, %v542
      %v544 = vpop.f32.mrb[0].mxu0
      %v545 = vpop.f32.mrb[0].mxu0
      %v546 = vpop.f32.mrb[0].mxu0
      %547 = vdwg.mxu0
      %548 = vmatprep.subr.bf16.mxu0 %v440
      %549 = vmatpush1.bf16.xpose.msra.mxu0 %v391
      %550 = vmatprep.subr.bf16.mxu0 %v443
      %551 = vmatpush1.bf16.xpose.msra.mxu0 %v395
      %552 = vmatprep.subr.bf16.mxu0 %v446
      %553 = vmatpush1.bf16.xpose.msra.mxu0 %v399
      %554 = vmatprep.subr.bf16.mxu0 %v449
      %555 = vmatpush1.bf16.xpose.msra.mxu0 %v403
      %556 = vmatprep.subr.bf16.mxu0 %v452
      %557 = vmatpush1.bf16.xpose.msra.mxu0 %v407
      %558 = vmatprep.subr.bf16.mxu0 %v455
      %559 = vmatpush1.bf16.xpose.msra.mxu0 %v411
      %560 = vmatprep.subr.bf16.mxu0 %v458
      %561 = vmatpush1.bf16.xpose.msra.mxu0 %v415
      %562 = vmatprep.subr.bf16.mxu0 0
      %563 = vmatpush1.bf16.xpose.msra.mxu0 0
      %564 = vmatprep.subr.bf16.mxu0 0
      %565 = vmatpush1.bf16.xpose.msra.mxu0 0
      %566 = vmatprep.subr.bf16.mxu0 0
      %567 = vmatpush1.bf16.xpose.msra.mxu0 0
      %568 = vmatprep.subr.bf16.mxu0 0
      %569 = vmatpush1.bf16.xpose.msra.mxu0 0
      %570 = vmatprep.subr.bf16.mxu0 0
      %571 = vmatpush1.bf16.xpose.msra.mxu0 0
      %572 = vmatprep.subr.bf16.mxu0 0
      %573 = vmatpush1.bf16.xpose.msra.mxu0 0
      %574 = vmatprep.subr.bf16.mxu0 0
      %575 = vmatpush1.bf16.xpose.msra.mxu0 0
      %576 = vmatprep.subr.bf16.mxu0 0
      %577 = vmatpush1.bf16.xpose.msra.mxu0 0
      %578 = vmatprep.subr.bf16.mxu0 0
      %579 = vmatpush1.bf16.xpose.msra.mxu0 0
      %580 = vmatprep.mubr.bf16.mxu0 %v419
      %581 = vmatmul.mubr.bf16.gmra.mrb[0].mxu0 %v311
      %v582 = vpop.f32.mrb[0].mxu0
      %v583 = vadd.f32 %v495, %v582
      %v584 = vpop.f32.mrb[0].mxu0
      %v585 = vpop.f32.mrb[0].mxu0
      %v586 = vadd.f32 %v498, %v585
      %v587 = vpop.f32.mrb[0].mxu0
      %588 = vmatprep.mubr.bf16.mxu0 %v422
      %589 = vmatmul.mubr.bf16.gmra.mrb[0].mxu0 %v315
      %v590 = vpop.f32.mrb[0].mxu0
      %v591 = vadd.f32 %v503, %v590
      %v592 = vpop.f32.mrb[0].mxu0
      %v593 = vpop.f32.mrb[0].mxu0
      %v594 = vadd.f32 %v506, %v593
      %v595 = vpop.f32.mrb[0].mxu0
      %596 = vmatprep.mubr.bf16.mxu0 %v425
      %597 = vmatmul.mubr.bf16.gmra.mrb[0].mxu0 %v319
      %v598 = vpop.f32.mrb[0].mxu0
      %v599 = vadd.f32 %v511, %v598
      %v600 = vpop.f32.mrb[0].mxu0
      %v601 = vpop.f32.mrb[0].mxu0
      %v602 = vadd.f32 %v514, %v601
      %v603 = vpop.f32.mrb[0].mxu0
      %604 = vmatprep.mubr.bf16.mxu0 %v428
      %605 = vmatmul.mubr.bf16.gmra.mrb[0].mxu0 %v323
      %v606 = vpop.f32.mrb[0].mxu0
      %v607 = vadd.f32 %v519, %v606
      %v608 = vpop.f32.mrb[0].mxu0
      %v609 = vpop.f32.mrb[0].mxu0
      %v610 = vadd.f32 %v522, %v609
      %v611 = vpop.f32.mrb[0].mxu0
      %612 = vmatprep.mubr.bf16.mxu0 %v431
      %613 = vmatmul.mubr.bf16.gmra.mrb[0].mxu0 %v327
      %v614 = vpop.f32.mrb[0].mxu0
      %v615 = vadd.f32 %v527, %v614
      %v616 = vpop.f32.mrb[0].mxu0
      %v617 = vpop.f32.mrb[0].mxu0
      %v618 = vadd.f32 %v530, %v617
      %v619 = vpop.f32.mrb[0].mxu0
      %620 = vmatprep.mubr.bf16.mxu0 %v434
      %621 = vmatmul.mubr.bf16.gmra.mrb[0].mxu0 %v331
      %v622 = vpop.f32.mrb[0].mxu0
      %v623 = vadd.f32 %v535, %v622
      %v624 = vpop.f32.mrb[0].mxu0
      %v625 = vpop.f32.mrb[0].mxu0
      %v626 = vadd.f32 %v538, %v625
      %v627 = vpop.f32.mrb[0].mxu0
      %628 = vmatprep.mubr.bf16.mxu0 %v437
      %629 = vmatmul.mubr.bf16.gmra.mrb[0].mxu0 %v335
      %v630 = vpop.f32.mrb[0].mxu0
      %v631 = vadd.f32 %v543, %v630
      %v632 = vpop.f32.mrb[0].mxu0
      %v633 = vpop.f32.mrb[0].mxu0
      %v634 = vpop.f32.mrb[0].mxu0
      %635 = vdwg.mxu0
      %v636 = vmul.f32 %v583, 0.002
      %v637 = vmul.f32 %v586, 0.002
      %v638 = vmul.f32 %v591, 0.002
      %v639 = vmul.f32 %v594, 0.002
      %v640 = vmul.f32 %v599, 0.002
      %v641 = vmul.f32 %v602, 0.002
      %v642 = vmul.f32 %v607, 0.002
      %v643 = vmul.f32 %v610, 0.002
      %v644 = vmul.f32 %v615, 0.002
      %v645 = vmul.f32 %v618, 0.002
      %v646 = vmul.f32 %v623, 0.002
      %v647 = vmul.f32 %v626, 0.002
      %v648 = vmul.f32 %v631, 0.002
      %vm649 = vcmask 818176
      %v650 = vsel %vm649, %v636, -inf
      %651 = vmax.xlane.f32.xlu0 %v650
      %v652 = vpop.xlane.xlu0 %651
      %v653 = vsel %vm649, %v637, -inf
      %654 = vmax.xlane.f32.xlu0 %v653
      %v655 = vpop.xlane.xlu0 %654
      %v656 = vsel %vm649, %v638, -inf
      %657 = vmax.xlane.f32.xlu0 %v656
      %v658 = vpop.xlane.xlu0 %657
      %v659 = vsel %vm649, %v639, -inf
      %660 = vmax.xlane.f32.xlu0 %v659
      %v661 = vpop.xlane.xlu0 %660
      %v662 = vsel %vm649, %v640, -inf
      %663 = vmax.xlane.f32.xlu0 %v662
      %v664 = vpop.xlane.xlu0 %663
      %v665 = vsel %vm649, %v641, -inf
      %666 = vmax.xlane.f32.xlu0 %v665
      %v667 = vpop.xlane.xlu0 %666
      %v668 = vsel %vm649, %v642, -inf
      %669 = vmax.xlane.f32.xlu0 %v668
      %v670 = vpop.xlane.xlu0 %669
      %v671 = vsel %vm649, %v643, -inf
      %672 = vmax.xlane.f32.xlu0 %v671
      %v673 = vpop.xlane.xlu0 %672
      %v674 = vsel %vm649, %v644, -inf
      %675 = vmax.xlane.f32.xlu0 %v674
      %v676 = vpop.xlane.xlu0 %675
      %v677 = vsel %vm649, %v645, -inf
      %678 = vmax.xlane.f32.xlu0 %v677
      %v679 = vpop.xlane.xlu0 %678
      %v680 = vsel %vm649, %v646, -inf
      %681 = vmax.xlane.f32.xlu0 %v680
      %v682 = vpop.xlane.xlu0 %681
      %v683 = vsel %vm649, %v647, -inf
      %684 = vmax.xlane.f32.xlu0 %v683
      %v685 = vpop.xlane.xlu0 %684
      %vm686 = vcmask 814080
      %v687 = vsel %vm686, %v648, -inf
      %688 = vmax.xlane.f32.xlu0 %v687
      %v689 = vpop.xlane.xlu0 %688
      %v690 = vsub.f32 %v636, %v652
      %v691 = vsub.f32 %v637, %v655
      %v692 = vsub.f32 %v638, %v658
      %v693 = vsub.f32 %v639, %v661
      %v694 = vsub.f32 %v640, %v664
      %v695 = vsub.f32 %v641, %v667
      %v696 = vsub.f32 %v642, %v670
      %v697 = vsub.f32 %v643, %v673
      %v698 = vsub.f32 %v644, %v676
      %v699 = vsub.f32 %v645, %v679
      %v700 = vsub.f32 %v646, %v682
      %v701 = vsub.f32 %v647, %v685
      %v702 = vsub.f32 %v648, %v689
      %v703 = vmul.f32 %v690, 1.442695
      %v704 = vpow.pop %v703
      %v705 = vmul.f32 %v691, 1.442695
      %v706 = vpow.pop %v705
      %v707 = vmul.f32 %v692, 1.442695
      %v708 = vpow.pop %v707
      %v709 = vmul.f32 %v693, 1.442695
      %v710 = vpow.pop %v709
      %v711 = vmul.f32 %v694, 1.442695
      %v712 = vpow.pop %v711
      %v713 = vmul.f32 %v695, 1.442695
      %v714 = vpow.pop %v713
      %v715 = vmul.f32 %v696, 1.442695
      %v716 = vpow.pop %v715
      %v717 = vmul.f32 %v697, 1.442695
      %v718 = vpow.pop %v717
      %v719 = vmul.f32 %v698, 1.442695
      %v720 = vpow.pop %v719
      %v721 = vmul.f32 %v699, 1.442695
      %v722 = vpow.pop %v721
      %v723 = vmul.f32 %v700, 1.442695
      %v724 = vpow.pop %v723
      %v725 = vmul.f32 %v701, 1.442695
      %v726 = vpow.pop %v725
      %v727 = vmul.f32 %v702, 1.442695
      %v728 = vpow.pop %v727
      %v729 = vsel %vm649, %v704, 0.0
      %730 = vadd.xlane.f32.xlu0 %v729
      %v731 = vpop.xlane.xlu0 %730
      %v732 = vsel %vm649, %v706, 0.0
      %733 = vadd.xlane.f32.xlu0 %v732
      %v734 = vpop.xlane.xlu0 %733
      %v735 = vsel %vm649, %v708, 0.0
      %736 = vadd.xlane.f32.xlu0 %v735
      %v737 = vpop.xlane.xlu0 %736
      %v738 = vsel %vm649, %v710, 0.0
      %739 = vadd.xlane.f32.xlu0 %v738
      %v740 = vpop.xlane.xlu0 %739
      %v741 = vsel %vm649, %v712, 0.0
      %742 = vadd.xlane.f32.xlu0 %v741
      %v743 = vpop.xlane.xlu0 %742
      %v744 = vsel %vm649, %v714, 0.0
      %745 = vadd.xlane.f32.xlu0 %v744
      %v746 = vpop.xlane.xlu0 %745
      %v747 = vsel %vm649, %v716, 0.0
      %748 = vadd.xlane.f32.xlu0 %v747
      %v749 = vpop.xlane.xlu0 %748
      %v750 = vsel %vm649, %v718, 0.0
      %751 = vadd.xlane.f32.xlu0 %v750
      %v752 = vpop.xlane.xlu0 %751
      %v753 = vsel %vm649, %v720, 0.0
      %754 = vadd.xlane.f32.xlu0 %v753
      %v755 = vpop.xlane.xlu0 %754
      %v756 = vsel %vm649, %v722, 0.0
      %757 = vadd.xlane.f32.xlu0 %v756
      %v758 = vpop.xlane.xlu0 %757
      %v759 = vsel %vm649, %v724, 0.0
      %760 = vadd.xlane.f32.xlu0 %v759
      %v761 = vpop.xlane.xlu0 %760
      %v762 = vsel %vm649, %v726, 0.0
      %763 = vadd.xlane.f32.xlu0 %v762
      %v764 = vpop.xlane.xlu0 %763
      %v765 = vsel %vm686, %v728, 0.0
      %766 = vadd.xlane.f32.xlu0 %v765
      %v767 = vpop.xlane.xlu0 %766
      %v768 = vrcp.pop %v731
      %v769 = vrcp.pop %v734
      %v770 = vrcp.pop %v737
      %v771 = vrcp.pop %v740
      %v772 = vrcp.pop %v743
      %v773 = vrcp.pop %v746
      %v774 = vrcp.pop %v749
      %v775 = vrcp.pop %v752
      %v776 = vrcp.pop %v755
      %v777 = vrcp.pop %v758
      %v778 = vrcp.pop %v761
      %v779 = vrcp.pop %v764
      %v780 = vrcp.pop %v767
      %v781 = vmul.f32 %v704, %v768
      %v782 = vmul.f32 %v706, %v769
      %v783 = vmul.f32 %v708, %v770
      %v784 = vmul.f32 %v710, %v771
      %v785 = vmul.f32 %v712, %v772
      %v786 = vmul.f32 %v714, %v773
      %v787 = vmul.f32 %v716, %v774
      %v788 = vmul.f32 %v718, %v775
      %v789 = vmul.f32 %v720, %v776
      %v790 = vmul.f32 %v722, %v777
      %v791 = vmul.f32 %v724, %v778
      %v792 = vmul.f32 %v726, %v779
      %v793 = vmul.f32 %v728, %v780
      %v795 = vsel %vm649, 1.0, 0
      %vm797 = vcmask 1043456
      %v799 = vsel %vm797, %v793, 0
      %801 = vmatprep.subr.mxu0 0.0
      %802 = vmatpush1.msra.mxu0 %v781
      %803 = vmatprep.subr.mxu0 0.0
      %804 = vmatpush1.msra.mxu0 %v782
      %805 = vmatprep.subr.mxu0 0.0
      %806 = vmatpush1.msra.mxu0 %v783
      %807 = vmatprep.subr.mxu0 0.0
      %808 = vmatpush1.msra.mxu0 %v784
      %809 = vmatprep.subr.mxu0 0.0
      %810 = vmatpush1.msra.mxu0 %v785
      %811 = vmatprep.subr.mxu0 0.0
      %812 = vmatpush1.msra.mxu0 %v786
      %813 = vmatprep.subr.mxu0 0.0
      %814 = vmatpush1.msra.mxu0 %v787
      %815 = vmatprep.subr.mxu0 0.0
      %816 = vmatpush1.msra.mxu0 %v788
      %817 = vmatprep.subr.mxu0 0.0
      %818 = vmatpush1.msra.mxu0 %v789
      %819 = vmatprep.subr.mxu0 0.0
      %820 = vmatpush1.msra.mxu0 %v790
      %821 = vmatprep.subr.mxu0 0.0
      %822 = vmatpush1.msra.mxu0 %v791
      %823 = vmatprep.subr.mxu0 0.0
      %824 = vmatpush1.msra.mxu0 %v792
      %825 = vmatprep.subr.mxu0 0.0
      %826 = vmatpush1.msra.mxu0 %v799
      %827 = vmatprep.subr.mxu0 0.0
      %828 = vmatpush1.msra.mxu0 0.0
      %829 = vmatprep.subr.mxu0 0.0
      %830 = vmatpush1.msra.mxu0 0.0
      %831 = vmatprep.subr.mxu0 0.0
      %832 = vmatpush1.msra.mxu0 0.0
      %833 = vmatprep.subr.mxu0 0.0
      %834 = vmatpush1.msra.mxu0 0.0
      %835 = vmatprep.subr.mxu0 0.0
      %836 = vmatpush1.msra.mxu0 0.0
      %837 = vmatprep.subr.mxu0 0.0
      %838 = vmatpush1.msra.mxu0 0.0
      %839 = vmatprep.subr.mxu0 0.0
      %840 = vmatpush1.msra.mxu0 0.0
      %841 = vmatprep.subr.mxu0 0.0
      %842 = vmatpush1.msra.mxu0 0.0
      %843 = vmatprep.subr.mxu0 0.0
      %844 = vmatpush1.msra.mxu0 0.0
      %845 = vmatprep.subr.mxu0 0.0
      %846 = vmatpush1.msra.mxu0 0.0
      %847 = vmatprep.subr.mxu0 0.0
      %848 = vmatpush1.msra.mxu0 0.0
      %849 = vmatprep.subr.mxu0 0.0
      %850 = vmatpush1.msra.mxu0 0.0
      %851 = vmatprep.subr.mxu0 0.0
      %852 = vmatpush1.msra.mxu0 0.0
      %853 = vmatprep.subr.mxu0 0.0
      %854 = vmatpush1.msra.mxu0 0.0
      %855 = vmatprep.subr.mxu0 0.0
      %856 = vmatpush1.msra.mxu0 0.0
      %857 = vmatprep.subr.mxu0 0.0
      %858 = vmatpush1.msra.mxu0 0.0
      %859 = vmatprep.subr.mxu0 0.0
      %860 = vmatpush1.msra.mxu0 0.0
      %861 = vmatprep.subr.mxu0 0.0
      %862 = vmatpush1.msra.mxu0 0.0
      %863 = vmatprep.subr.mxu0 0.0
      %864 = vmatpush1.msra.mxu0 0.0
      %865 = vmatprep.mubr.f32.mxu0 0.0
      %866 = vmatmul.mubr.f32.gmra.mrb[0].mxu0 %v795
      %v867 = vpop.f32.mrb[0].mxu0
      %v868 = vadd.f32 0.0, %v867
      %v869 = vpop.f32.mrb[0].mxu0
      %870 = vdwg.mxu0
      %v872 = vsel %vm649, %v868, 0
      %v875 = vsel %vm797, %v385, 0
      %v878 = vsel %vm797, %v386, 0
      %v881 = vsel %vm797, %v387, 0
      %v884 = vsel %vm797, %v388, 0
      %886 = vmatprep.subr.mxu0 %v338
      %887 = vmatpush1.msra.mxu0 %v337
      %888 = vmatprep.subr.mxu0 %v342
      %889 = vmatpush1.msra.mxu0 %v341
      %890 = vmatprep.subr.mxu0 %v346
      %891 = vmatpush1.msra.mxu0 %v345
      %892 = vmatprep.subr.mxu0 %v350
      %893 = vmatpush1.msra.mxu0 %v349
      %894 = vmatprep.subr.mxu0 %v354
      %895 = vmatpush1.msra.mxu0 %v353
      %896 = vmatprep.subr.mxu0 %v358
      %897 = vmatpush1.msra.mxu0 %v357
      %898 = vmatprep.subr.mxu0 %v362
      %899 = vmatpush1.msra.mxu0 %v361
      %900 = vmatprep.subr.mxu0 %v366
      %901 = vmatpush1.msra.mxu0 %v365
      %902 = vmatprep.subr.mxu0 %v370
      %903 = vmatpush1.msra.mxu0 %v369
      %904 = vmatprep.subr.mxu0 %v374
      %905 = vmatpush1.msra.mxu0 %v373
      %906 = vmatprep.subr.mxu0 %v378
      %907 = vmatpush1.msra.mxu0 %v377
      %908 = vmatprep.subr.mxu0 %v382
      %909 = vmatpush1.msra.mxu0 %v381
      %910 = vmatprep.subr.mxu0 %v878
      %911 = vmatpush1.msra.mxu0 %v875
      %912 = vmatprep.subr.mxu0 0.0
      %913 = vmatpush1.msra.mxu0 0.0
      %914 = vmatprep.subr.mxu0 0.0
      %915 = vmatpush1.msra.mxu0 0.0
      %916 = vmatprep.subr.mxu0 0.0
      %917 = vmatpush1.msra.mxu0 0.0
      %918 = vmatprep.subr.mxu0 0.0
      %919 = vmatpush1.msra.mxu0 0.0
      %920 = vmatprep.subr.mxu0 0.0
      %921 = vmatpush1.msra.mxu0 0.0
      %922 = vmatprep.subr.mxu0 0.0
      %923 = vmatpush1.msra.mxu0 0.0
      %924 = vmatprep.subr.mxu0 0.0
      %925 = vmatpush1.msra.mxu0 0.0
      %926 = vmatprep.subr.mxu0 0.0
      %927 = vmatpush1.msra.mxu0 0.0
      %928 = vmatprep.subr.mxu0 0.0
      %929 = vmatpush1.msra.mxu0 0.0
      %930 = vmatprep.subr.mxu0 0.0
      %931 = vmatpush1.msra.mxu0 0.0
      %932 = vmatprep.subr.mxu0 0.0
      %933 = vmatpush1.msra.mxu0 0.0
      %934 = vmatprep.subr.mxu0 0.0
      %935 = vmatpush1.msra.mxu0 0.0
      %936 = vmatprep.subr.mxu0 0.0
      %937 = vmatpush1.msra.mxu0 0.0
      %938 = vmatprep.subr.mxu0 0.0
      %939 = vmatpush1.msra.mxu0 0.0
      %940 = vmatprep.subr.mxu0 0.0
      %941 = vmatpush1.msra.mxu0 0.0
      %942 = vmatprep.subr.mxu0 0.0
      %943 = vmatpush1.msra.mxu0 0.0
      %944 = vmatprep.subr.mxu0 0.0
      %945 = vmatpush1.msra.mxu0 0.0
      %946 = vmatprep.subr.mxu0 0.0
      %947 = vmatpush1.msra.mxu0 0.0
      %948 = vmatprep.subr.mxu0 0.0
      %949 = vmatpush1.msra.mxu0 0.0
      %950 = vmatprep.mubr.f32.mxu0 0.0
      %951 = vmatmul.mubr.f32.gmra.mrb[0].mxu0 %v872
      %v952 = vpop.f32.mrb[0].mxu0
      %v953 = vadd.f32 0.0, %v952
      %v954 = vpop.f32.mrb[0].mxu0
      %v955 = vadd.f32 0.0, %v954
      %956 = vdwg.mxu0
      %957 = vmatprep.subr.mxu0 %v340
      %958 = vmatpush1.msra.mxu0 %v339
      %959 = vmatprep.subr.mxu0 %v344
      %960 = vmatpush1.msra.mxu0 %v343
      %961 = vmatprep.subr.mxu0 %v348
      %962 = vmatpush1.msra.mxu0 %v347
      %963 = vmatprep.subr.mxu0 %v352
      %964 = vmatpush1.msra.mxu0 %v351
      %965 = vmatprep.subr.mxu0 %v356
      %966 = vmatpush1.msra.mxu0 %v355
      %967 = vmatprep.subr.mxu0 %v360
      %968 = vmatpush1.msra.mxu0 %v359
      %969 = vmatprep.subr.mxu0 %v364
      %970 = vmatpush1.msra.mxu0 %v363
      %971 = vmatprep.subr.mxu0 %v368
      %972 = vmatpush1.msra.mxu0 %v367
      %973 = vmatprep.subr.mxu0 %v372
      %974 = vmatpush1.msra.mxu0 %v371
      %975 = vmatprep.subr.mxu0 %v376
      %976 = vmatpush1.msra.mxu0 %v375
      %977 = vmatprep.subr.mxu0 %v380
      %978 = vmatpush1.msra.mxu0 %v379
      %979 = vmatprep.subr.mxu0 %v384
      %980 = vmatpush1.msra.mxu0 %v383
      %981 = vmatprep.subr.mxu0 %v884
      %982 = vmatpush1.msra.mxu0 %v881
      %983 = vmatprep.subr.mxu0 0.0
      %984 = vmatpush1.msra.mxu0 0.0
      %985 = vmatprep.subr.mxu0 0.0
      %986 = vmatpush1.msra.mxu0 0.0
      %987 = vmatprep.subr.mxu0 0.0
      %988 = vmatpush1.msra.mxu0 0.0
      %989 = vmatprep.subr.mxu0 0.0
      %990 = vmatpush1.msra.mxu0 0.0
      %991 = vmatprep.subr.mxu0 0.0
      %992 = vmatpush1.msra.mxu0 0.0
      %993 = vmatprep.subr.mxu0 0.0
      %994 = vmatpush1.msra.mxu0 0.0
      %995 = vmatprep.subr.mxu0 0.0
      %996 = vmatpush1.msra.mxu0 0.0
      %997 = vmatprep.subr.mxu0 0.0
      %998 = vmatpush1.msra.mxu0 0.0
      %999 = vmatprep.subr.mxu0 0.0
      %1000 = vmatpush1.msra.mxu0 0.0
      %1001 = vmatprep.subr.mxu0 0.0
      %1002 = vmatpush1.msra.mxu0 0.0
      %1003 = vmatprep.subr.mxu0 0.0
      %1004 = vmatpush1.msra.mxu0 0.0
      %1005 = vmatprep.subr.mxu0 0.0
      %1006 = vmatpush1.msra.mxu0 0.0
      %1007 = vmatprep.subr.mxu0 0.0
      %1008 = vmatpush1.msra.mxu0 0.0
      %1009 = vmatprep.subr.mxu0 0.0
      %1010 = vmatpush1.msra.mxu0 0.0
      %1011 = vmatprep.subr.mxu0 0.0
      %1012 = vmatpush1.msra.mxu0 0.0
      %1013 = vmatprep.subr.mxu0 0.0
      %1014 = vmatpush1.msra.mxu0 0.0
      %1015 = vmatprep.subr.mxu0 0.0
      %1016 = vmatpush1.msra.mxu0 0.0
      %1017 = vmatprep.subr.mxu0 0.0
      %1018 = vmatpush1.msra.mxu0 0.0
      %1019 = vmatprep.subr.mxu0 0.0
      %1020 = vmatpush1.msra.mxu0 0.0
      %1021 = vmatprep.mubr.f32.mxu0 0.0
      %1022 = vmatmul.mubr.f32.gmra.mrb[0].mxu0 %v872
      %v1023 = vpop.f32.mrb[0].mxu0
      %v1024 = vadd.f32 0.0, %v1023
      %v1025 = vpop.f32.mrb[0].mxu0
      %v1026 = vadd.f32 0.0, %v1025
      %1027 = vdwg.mxu0
      %v1032 = vcombine.low %v953, %v955
      %v1033 = vcombine.low %v1024, %v1026
      %v1035 = vunpack.c.l.s4 1966171168
      %v1036 = vunpack.c.0.s8 %v1035
      %v1037 = vlaneseq
      %v1038 = vshrl.u32 %v1037, 7
      %v1039 = vsub.s32 %v1036, %v1038
      %v1040 = vrot.slane %v1032, %v1039
      %v1042 = vunpack.c.l.s4 1966171168
      %v1043 = vunpack.c.0.s8 %v1042
      %v1044 = vlaneseq
      %v1045 = vshrl.u32 %v1044, 7
      %v1046 = vsub.s32 %v1043, %v1045
      %v1047 = vrot.slane %v1033, %v1046
      %v1048 = vcombine.low %v1040, %v1047
      %v1050 = vunpack.c.l.s4 1966171168
      %v1051 = vunpack.c.0.s8 %v1050
      %v1052 = vlaneseq
      %v1053 = vshrl.u32 %v1052, 7
      %v1054 = vsub.s32 %v1051, %v1053
      %v1055 = vrot.slane %v1048, %v1054
      %v1057 = vlaneseq
      %vm1058 = vcmp.ge.s32.totalorder %v1057, 0
      %vm1059 = vcmp.lt.s32.totalorder %v1057, 500
      %vm1060 = vmand %vm1058, %vm1059
      %1061 = vst.msk [vmem:[#allocation2] ss:$4 sm:$0xf] %vm1060, %v1055
      %s1062 = scalar_lea.vmem %s249, 416
      %v1063 = vld [vmem:[%s1062] sm:$0xff]
      %v1064 = vld [vmem:[%s1062 + $0x8] sm:$0xff]
      %v1065 = vld [vmem:[%s1062 + $0x10] sm:$0xff]
      %v1066 = vld [vmem:[%s1062 + $0x18] sm:$0xff]
      %v1067 = vld [vmem:[%s1062 + $0x20] sm:$0xff]
      %v1068 = vld [vmem:[%s1062 + $0x28] sm:$0xff]
      %v1069 = vld [vmem:[%s1062 + $0x30] sm:$0xff]
      %v1070 = vld [vmem:[%s1062 + $0x38] sm:$0xff]
      %v1071 = vld [vmem:[%s1062 + $0x40] sm:$0xff]
      %v1072 = vld [vmem:[%s1062 + $0x48] sm:$0xff]
      %v1073 = vld [vmem:[%s1062 + $0x50] sm:$0xff]
      %v1074 = vld [vmem:[%s1062 + $0x58] sm:$0xff]
      %v1075 = vld [vmem:[%s1062 + $0x60] sm:$0xff]
      %v1076 = vld [vmem:[%s1062 + $0x68] sm:$0xff]
      %v1077 = vld [vmem:[%s1062 + $0x70] sm:$0xff]
      %v1078 = vld [vmem:[%s1062 + $0x78] sm:$0xff]
      %v1079 = vld [vmem:[%s1062 + $0x80] sm:$0xff]
      %v1080 = vld [vmem:[%s1062 + $0x88] sm:$0xff]
      %v1081 = vld [vmem:[%s1062 + $0x90] sm:$0xff]
      %v1082 = vld [vmem:[%s1062 + $0x98] sm:$0xff]
      %v1083 = vld [vmem:[%s1062 + $0xa0] sm:$0xff]
      %v1084 = vld [vmem:[%s1062 + $0xa8] sm:$0xff]
      %v1085 = vld [vmem:[%s1062 + $0xb0] sm:$0xff]
      %v1086 = vld [vmem:[%s1062 + $0xb8] sm:$0xff]
      %v1087 = vld [vmem:[%s1062 + $0xc0] sm:$0xff]
      %v1088 = vld [vmem:[%s1062 + $0xc8] sm:$0xff]
      %v1089 = vld [vmem:[%s1062 + $0xd0] sm:$0xff]
      %v1090 = vld [vmem:[%s1062 + $0xd8] sm:$0xff]
      %v1091 = vld [vmem:[%s1062 + $0xe0] sm:$0xff]
      %v1092 = vld [vmem:[%s1062 + $0xe8] sm:$0xff]
      %v1093 = vld [vmem:[%s1062 + $0xf0] sm:$0xff]
      %v1094 = vld [vmem:[%s1062 + $0xf8] sm:$0xff]
      %v1095 = vld [vmem:[%s1062 + $0x100] sm:$0xff]
      %v1096 = vld [vmem:[%s1062 + $0x108] sm:$0xff]
      %v1097 = vld [vmem:[%s1062 + $0x110] sm:$0xff]
      %v1098 = vld [vmem:[%s1062 + $0x118] sm:$0xff]
      %v1099 = vld [vmem:[%s1062 + $0x120] sm:$0xff]
      %v1100 = vld [vmem:[%s1062 + $0x128] sm:$0xff]
      %v1101 = vld [vmem:[%s1062 + $0x130] sm:$0xff]
      %v1102 = vld [vmem:[%s1062 + $0x138] sm:$0xff]
      %v1103 = vld [vmem:[%s1062 + $0x140] sm:$0xff]
      %v1104 = vld [vmem:[%s1062 + $0x148] sm:$0xff]
      %v1105 = vld [vmem:[%s1062 + $0x150] sm:$0xff]
      %v1106 = vld [vmem:[%s1062 + $0x158] sm:$0xff]
      %v1107 = vld [vmem:[%s1062 + $0x160] sm:$0xff]
      %v1108 = vld [vmem:[%s1062 + $0x168] sm:$0xff]
      %v1109 = vld [vmem:[%s1062 + $0x170] sm:$0xff]
      %v1110 = vld [vmem:[%s1062 + $0x178] sm:$0xff]
      %v1111 = vld [vmem:[%s1062 + $0x180] sm:$0xf]
      %v1112 = vld [vmem:[%s1062 + $0x188] sm:$0xf]
      %v1113 = vld [vmem:[%s1062 + $0x190] sm:$0xf]
      %v1114 = vld [vmem:[%s1062 + $0x198] sm:$0xf]
      %v1115 = vpack.c.bf16 %v1067, %v1063
      %v1116 = vpack.c.bf16 %v1068, %v1064
      %v1117 = vpack.c.bf16 %v1069, %v1065
      %v1118 = vpack.c.bf16 %v1070, %v1066
      %v1119 = vpack.c.bf16 %v1075, %v1071
      %v1120 = vpack.c.bf16 %v1076, %v1072
      %v1121 = vpack.c.bf16 %v1077, %v1073
      %v1122 = vpack.c.bf16 %v1078, %v1074
      %v1123 = vpack.c.bf16 %v1083, %v1079
      %v1124 = vpack.c.bf16 %v1084, %v1080
      %v1125 = vpack.c.bf16 %v1085, %v1081
      %v1126 = vpack.c.bf16 %v1086, %v1082
      %v1127 = vpack.c.bf16 %v1091, %v1087
      %v1128 = vpack.c.bf16 %v1092, %v1088
      %v1129 = vpack.c.bf16 %v1093, %v1089
      %v1130 = vpack.c.bf16 %v1094, %v1090
      %v1131 = vpack.c.bf16 %v1099, %v1095
      %v1132 = vpack.c.bf16 %v1100, %v1096
      %v1133 = vpack.c.bf16 %v1101, %v1097
      %v1134 = vpack.c.bf16 %v1102, %v1098
      %v1135 = vpack.c.bf16 %v1107, %v1103
      %v1136 = vpack.c.bf16 %v1108, %v1104
      %v1137 = vpack.c.bf16 %v1109, %v1105
      %v1138 = vpack.c.bf16 %v1110, %v1106
      %v1139 = vpack.c.bf16 %v1111, %v1111
      %v1140 = vpack.c.bf16 %v1112, %v1112
      %v1141 = vpack.c.bf16 %v1113, %v1113
      %v1142 = vpack.c.bf16 %v1114, %v1114
      %v1144 = vsel %vm417, %v1118, 0
      %v1147 = vsel %vm417, %v1122, 0
      %v1150 = vsel %vm417, %v1126, 0
      %v1153 = vsel %vm417, %v1130, 0
      %v1156 = vsel %vm417, %v1134, 0
      %v1159 = vsel %vm417, %v1138, 0
      %v1162 = vsel %vm417, %v1142, 0
      %1164 = vmatprep.subr.bf16.mxu0 %v1116
      %1165 = vmatpush1.bf16.xpose.msra.mxu0 %v1115
      %1166 = vmatprep.subr.bf16.mxu0 %v1120
      %1167 = vmatpush1.bf16.xpose.msra.mxu0 %v1119
      %1168 = vmatprep.subr.bf16.mxu0 %v1124
      %1169 = vmatpush1.bf16.xpose.msra.mxu0 %v1123
      %1170 = vmatprep.subr.bf16.mxu0 %v1128
      %1171 = vmatpush1.bf16.xpose.msra.mxu0 %v1127
      %1172 = vmatprep.subr.bf16.mxu0 %v1132
      %1173 = vmatpush1.bf16.xpose.msra.mxu0 %v1131
      %1174 = vmatprep.subr.bf16.mxu0 %v1136
      %1175 = vmatpush1.bf16.xpose.msra.mxu0 %v1135
      %1176 = vmatprep.subr.bf16.mxu0 %v1140
      %1177 = vmatpush1.bf16.xpose.msra.mxu0 %v1139
      %1178 = vmatprep.subr.bf16.mxu0 0
      %1179 = vmatpush1.bf16.xpose.msra.mxu0 0
      %1180 = vmatprep.subr.bf16.mxu0 0
      %1181 = vmatpush1.bf16.xpose.msra.mxu0 0
      %1182 = vmatprep.subr.bf16.mxu0 0
      %1183 = vmatpush1.bf16.xpose.msra.mxu0 0
      %1184 = vmatprep.subr.bf16.mxu0 0
      %1185 = vmatpush1.bf16.xpose.msra.mxu0 0
      %1186 = vmatprep.subr.bf16.mxu0 0
      %1187 = vmatpush1.bf16.xpose.msra.mxu0 0
      %1188 = vmatprep.subr.bf16.mxu0 0
      %1189 = vmatpush1.bf16.xpose.msra.mxu0 0
      %1190 = vmatprep.subr.bf16.mxu0 0
      %1191 = vmatpush1.bf16.xpose.msra.mxu0 0
      %1192 = vmatprep.subr.bf16.mxu0 0
      %1193 = vmatpush1.bf16.xpose.msra.mxu0 0
      %1194 = vmatprep.subr.bf16.mxu0 0
      %1195 = vmatpush1.bf16.xpose.msra.mxu0 0
      %1196 = vmatprep.mubr.bf16.mxu0 %v310
      %1197 = vmatmul.mubr.bf16.gmra.mrb[0].mxu0 %v309
      %v1198 = vpop.f32.mrb[0].mxu0
      %v1199 = vadd.f32 0.0, %v1198
      %v1200 = vpop.f32.mrb[0].mxu0
      %v1201 = vpop.f32.mrb[0].mxu0
      %v1202 = vadd.f32 0.0, %v1201
      %v1203 = vpop.f32.mrb[0].mxu0
      %1204 = vmatprep.mubr.bf16.mxu0 %v314
      %1205 = vmatmul.mubr.bf16.gmra.mrb[0].mxu0 %v313
      %v1206 = vpop.f32.mrb[0].mxu0
      %v1207 = vadd.f32 0.0, %v1206
      %v1208 = vpop.f32.mrb[0].mxu0
      %v1209 = vpop.f32.mrb[0].mxu0
      %v1210 = vadd.f32 0.0, %v1209
      %v1211 = vpop.f32.mrb[0].mxu0
      %1212 = vmatprep.mubr.bf16.mxu0 %v318
      %1213 = vmatmul.mubr.bf16.gmra.mrb[0].mxu0 %v317
      %v1214 = vpop.f32.mrb[0].mxu0
      %v1215 = vadd.f32 0.0, %v1214
      %v1216 = vpop.f32.mrb[0].mxu0
      %v1217 = vpop.f32.mrb[0].mxu0
      %v1218 = vadd.f32 0.0, %v1217
      %v1219 = vpop.f32.mrb[0].mxu0
      %1220 = vmatprep.mubr.bf16.mxu0 %v322
      %1221 = vmatmul.mubr.bf16.gmra.mrb[0].mxu0 %v321
      %v1222 = vpop.f32.mrb[0].mxu0
      %v1223 = vadd.f32 0.0, %v1222
      %v1224 = vpop.f32.mrb[0].mxu0
      %v1225 = vpop.f32.mrb[0].mxu0
      %v1226 = vadd.f32 0.0, %v1225
      %v1227 = vpop.f32.mrb[0].mxu0
      %1228 = vmatprep.mubr.bf16.mxu0 %v326
      %1229 = vmatmul.mubr.bf16.gmra.mrb[0].mxu0 %v325
      %v1230 = vpop.f32.mrb[0].mxu0
      %v1231 = vadd.f32 0.0, %v1230
      %v1232 = vpop.f32.mrb[0].mxu0
      %v1233 = vpop.f32.mrb[0].mxu0
      %v1234 = vadd.f32 0.0, %v1233
      %v1235 = vpop.f32.mrb[0].mxu0
      %1236 = vmatprep.mubr.bf16.mxu0 %v330
      %1237 = vmatmul.mubr.bf16.gmra.mrb[0].mxu0 %v329
      %v1238 = vpop.f32.mrb[0].mxu0
      %v1239 = vadd.f32 0.0, %v1238
      %v1240 = vpop.f32.mrb[0].mxu0
      %v1241 = vpop.f32.mrb[0].mxu0
      %v1242 = vadd.f32 0.0, %v1241
      %v1243 = vpop.f32.mrb[0].mxu0
      %1244 = vmatprep.mubr.bf16.mxu0 %v334
      %1245 = vmatmul.mubr.bf16.gmra.mrb[0].mxu0 %v333
      %v1246 = vpop.f32.mrb[0].mxu0
      %v1247 = vadd.f32 0.0, %v1246
      %v1248 = vpop.f32.mrb[0].mxu0
      %v1249 = vpop.f32.mrb[0].mxu0
      %v1250 = vpop.f32.mrb[0].mxu0
      %1251 = vdwg.mxu0
      %1252 = vmatprep.subr.bf16.mxu0 %v1144
      %1253 = vmatpush1.bf16.xpose.msra.mxu0 %v1117
      %1254 = vmatprep.subr.bf16.mxu0 %v1147
      %1255 = vmatpush1.bf16.xpose.msra.mxu0 %v1121
      %1256 = vmatprep.subr.bf16.mxu0 %v1150
      %1257 = vmatpush1.bf16.xpose.msra.mxu0 %v1125
      %1258 = vmatprep.subr.bf16.mxu0 %v1153
      %1259 = vmatpush1.bf16.xpose.msra.mxu0 %v1129
      %1260 = vmatprep.subr.bf16.mxu0 %v1156
      %1261 = vmatpush1.bf16.xpose.msra.mxu0 %v1133
      %1262 = vmatprep.subr.bf16.mxu0 %v1159
      %1263 = vmatpush1.bf16.xpose.msra.mxu0 %v1137
      %1264 = vmatprep.subr.bf16.mxu0 %v1162
      %1265 = vmatpush1.bf16.xpose.msra.mxu0 %v1141
      %1266 = vmatprep.subr.bf16.mxu0 0
      %1267 = vmatpush1.bf16.xpose.msra.mxu0 0
      %1268 = vmatprep.subr.bf16.mxu0 0
      %1269 = vmatpush1.bf16.xpose.msra.mxu0 0
      %1270 = vmatprep.subr.bf16.mxu0 0
      %1271 = vmatpush1.bf16.xpose.msra.mxu0 0
      %1272 = vmatprep.subr.bf16.mxu0 0
      %1273 = vmatpush1.bf16.xpose.msra.mxu0 0
      %1274 = vmatprep.subr.bf16.mxu0 0
      %1275 = vmatpush1.bf16.xpose.msra.mxu0 0
      %1276 = vmatprep.subr.bf16.mxu0 0
      %1277 = vmatpush1.bf16.xpose.msra.mxu0 0
      %1278 = vmatprep.subr.bf16.mxu0 0
      %1279 = vmatpush1.bf16.xpose.msra.mxu0 0
      %1280 = vmatprep.subr.bf16.mxu0 0
      %1281 = vmatpush1.bf16.xpose.msra.mxu0 0
      %1282 = vmatprep.subr.bf16.mxu0 0
      %1283 = vmatpush1.bf16.xpose.msra.mxu0 0
      %1284 = vmatprep.mubr.bf16.mxu0 %v419
      %1285 = vmatmul.mubr.bf16.gmra.mrb[0].mxu0 %v311
      %v1286 = vpop.f32.mrb[0].mxu0
      %v1287 = vadd.f32 %v1199, %v1286
      %v1288 = vpop.f32.mrb[0].mxu0
      %v1289 = vpop.f32.mrb[0].mxu0
      %v1290 = vadd.f32 %v1202, %v1289
      %v1291 = vpop.f32.mrb[0].mxu0
      %1292 = vmatprep.mubr.bf16.mxu0 %v422
      %1293 = vmatmul.mubr.bf16.gmra.mrb[0].mxu0 %v315
      %v1294 = vpop.f32.mrb[0].mxu0
      %v1295 = vadd.f32 %v1207, %v1294
      %v1296 = vpop.f32.mrb[0].mxu0
      %v1297 = vpop.f32.mrb[0].mxu0
      %v1298 = vadd.f32 %v1210, %v1297
      %v1299 = vpop.f32.mrb[0].mxu0
      %1300 = vmatprep.mubr.bf16.mxu0 %v425
      %1301 = vmatmul.mubr.bf16.gmra.mrb[0].mxu0 %v319
      %v1302 = vpop.f32.mrb[0].mxu0
      %v1303 = vadd.f32 %v1215, %v1302
      %v1304 = vpop.f32.mrb[0].mxu0
      %v1305 = vpop.f32.mrb[0].mxu0
      %v1306 = vadd.f32 %v1218, %v1305
      %v1307 = vpop.f32.mrb[0].mxu0
      %1308 = vmatprep.mubr.bf16.mxu0 %v428
      %1309 = vmatmul.mubr.bf16.gmra.mrb[0].mxu0 %v323
      %v1310 = vpop.f32.mrb[0].mxu0
      %v1311 = vadd.f32 %v1223, %v1310
      %v1312 = vpop.f32.mrb[0].mxu0
      %v1313 = vpop.f32.mrb[0].mxu0
      %v1314 = vadd.f32 %v1226, %v1313
      %v1315 = vpop.f32.mrb[0].mxu0
      %1316 = vmatprep.mubr.bf16.mxu0 %v431
      %1317 = vmatmul.mubr.bf16.gmra.mrb[0].mxu0 %v327
      %v1318 = vpop.f32.mrb[0].mxu0
      %v1319 = vadd.f32 %v1231, %v1318
      %v1320 = vpop.f32.mrb[0].mxu0
      %v1321 = vpop.f32.mrb[0].mxu0
      %v1322 = vadd.f32 %v1234, %v1321
      %v1323 = vpop.f32.mrb[0].mxu0
      %1324 = vmatprep.mubr.bf16.mxu0 %v434
      %1325 = vmatmul.mubr.bf16.gmra.mrb[0].mxu0 %v331
      %v1326 = vpop.f32.mrb[0].mxu0
      %v1327 = vadd.f32 %v1239, %v1326
      %v1328 = vpop.f32.mrb[0].mxu0
      %v1329 = vpop.f32.mrb[0].mxu0
      %v1330 = vadd.f32 %v1242, %v1329
      %v1331 = vpop.f32.mrb[0].mxu0
      %1332 = vmatprep.mubr.bf16.mxu0 %v437
      %1333 = vmatmul.mubr.bf16.gmra.mrb[0].mxu0 %v335
      %v1334 = vpop.f32.mrb[0].mxu0
      %v1335 = vadd.f32 %v1247, %v1334
      %v1336 = vpop.f32.mrb[0].mxu0
      %v1337 = vpop.f32.mrb[0].mxu0
      %v1338 = vpop.f32.mrb[0].mxu0
      %1339 = vdwg.mxu0
      %v1340 = vmul.f32 %v1287, 0.002
      %v1341 = vmul.f32 %v1290, 0.002
      %v1342 = vmul.f32 %v1295, 0.002
      %v1343 = vmul.f32 %v1298, 0.002
      %v1344 = vmul.f32 %v1303, 0.002
      %v1345 = vmul.f32 %v1306, 0.002
      %v1346 = vmul.f32 %v1311, 0.002
      %v1347 = vmul.f32 %v1314, 0.002
      %v1348 = vmul.f32 %v1319, 0.002
      %v1349 = vmul.f32 %v1322, 0.002
      %v1350 = vmul.f32 %v1327, 0.002
      %v1351 = vmul.f32 %v1330, 0.002
      %v1352 = vmul.f32 %v1335, 0.002
      %v1353 = vsel %vm649, %v1340, -inf
      %1354 = vmax.xlane.f32.xlu0 %v1353
      %v1355 = vpop.xlane.xlu0 %1354
      %v1356 = vsel %vm649, %v1341, -inf
      %1357 = vmax.xlane.f32.xlu0 %v1356
      %v1358 = vpop.xlane.xlu0 %1357
      %v1359 = vsel %vm649, %v1342, -inf
      %1360 = vmax.xlane.f32.xlu0 %v1359
      %v1361 = vpop.xlane.xlu0 %1360
      %v1362 = vsel %vm649, %v1343, -inf
      %1363 = vmax.xlane.f32.xlu0 %v1362
      %v1364 = vpop.xlane.xlu0 %1363
      %v1365 = vsel %vm649, %v1344, -inf
      %1366 = vmax.xlane.f32.xlu0 %v1365
      %v1367 = vpop.xlane.xlu0 %1366
      %v1368 = vsel %vm649, %v1345, -inf
      %1369 = vmax.xlane.f32.xlu0 %v1368
      %v1370 = vpop.xlane.xlu0 %1369
      %v1371 = vsel %vm649, %v1346, -inf
      %1372 = vmax.xlane.f32.xlu0 %v1371
      %v1373 = vpop.xlane.xlu0 %1372
      %v1374 = vsel %vm649, %v1347, -inf
      %1375 = vmax.xlane.f32.xlu0 %v1374
      %v1376 = vpop.xlane.xlu0 %1375
      %v1377 = vsel %vm649, %v1348, -inf
      %1378 = vmax.xlane.f32.xlu0 %v1377
      %v1379 = vpop.xlane.xlu0 %1378
      %v1380 = vsel %vm649, %v1349, -inf
      %1381 = vmax.xlane.f32.xlu0 %v1380
      %v1382 = vpop.xlane.xlu0 %1381
      %v1383 = vsel %vm649, %v1350, -inf
      %1384 = vmax.xlane.f32.xlu0 %v1383
      %v1385 = vpop.xlane.xlu0 %1384
      %v1386 = vsel %vm649, %v1351, -inf
      %1387 = vmax.xlane.f32.xlu0 %v1386
      %v1388 = vpop.xlane.xlu0 %1387
      %v1389 = vsel %vm686, %v1352, -inf
      %1390 = vmax.xlane.f32.xlu0 %v1389
      %v1391 = vpop.xlane.xlu0 %1390
      %v1392 = vsub.f32 %v1340, %v1355
      %v1393 = vsub.f32 %v1341, %v1358
      %v1394 = vsub.f32 %v1342, %v1361
      %v1395 = vsub.f32 %v1343, %v1364
      %v1396 = vsub.f32 %v1344, %v1367
      %v1397 = vsub.f32 %v1345, %v1370
      %v1398 = vsub.f32 %v1346, %v1373
      %v1399 = vsub.f32 %v1347, %v1376
      %v1400 = vsub.f32 %v1348, %v1379
      %v1401 = vsub.f32 %v1349, %v1382
      %v1402 = vsub.f32 %v1350, %v1385
      %v1403 = vsub.f32 %v1351, %v1388
      %v1404 = vsub.f32 %v1352, %v1391
      %v1405 = vmul.f32 %v1392, 1.442695
      %v1406 = vpow.pop %v1405
      %v1407 = vmul.f32 %v1393, 1.442695
      %v1408 = vpow.pop %v1407
      %v1409 = vmul.f32 %v1394, 1.442695
      %v1410 = vpow.pop %v1409
      %v1411 = vmul.f32 %v1395, 1.442695
      %v1412 = vpow.pop %v1411
      %v1413 = vmul.f32 %v1396, 1.442695
      %v1414 = vpow.pop %v1413
      %v1415 = vmul.f32 %v1397, 1.442695
      %v1416 = vpow.pop %v1415
      %v1417 = vmul.f32 %v1398, 1.442695
      %v1418 = vpow.pop %v1417
      %v1419 = vmul.f32 %v1399, 1.442695
      %v1420 = vpow.pop %v1419
      %v1421 = vmul.f32 %v1400, 1.442695
      %v1422 = vpow.pop %v1421
      %v1423 = vmul.f32 %v1401, 1.442695
      %v1424 = vpow.pop %v1423
      %v1425 = vmul.f32 %v1402, 1.442695
      %v1426 = vpow.pop %v1425
      %v1427 = vmul.f32 %v1403, 1.442695
      %v1428 = vpow.pop %v1427
      %v1429 = vmul.f32 %v1404, 1.442695
      %v1430 = vpow.pop %v1429
      %v1431 = vsel %vm649, %v1406, 0.0
      %1432 = vadd.xlane.f32.xlu0 %v1431
      %v1433 = vpop.xlane.xlu0 %1432
      %v1434 = vsel %vm649, %v1408, 0.0
      %1435 = vadd.xlane.f32.xlu0 %v1434
      %v1436 = vpop.xlane.xlu0 %1435
      %v1437 = vsel %vm649, %v1410, 0.0
      %1438 = vadd.xlane.f32.xlu0 %v1437
      %v1439 = vpop.xlane.xlu0 %1438
      %v1440 = vsel %vm649, %v1412, 0.0
      %1441 = vadd.xlane.f32.xlu0 %v1440
      %v1442 = vpop.xlane.xlu0 %1441
      %v1443 = vsel %vm649, %v1414, 0.0
      %1444 = vadd.xlane.f32.xlu0 %v1443
      %v1445 = vpop.xlane.xlu0 %1444
      %v1446 = vsel %vm649, %v1416, 0.0
      %1447 = vadd.xlane.f32.xlu0 %v1446
      %v1448 = vpop.xlane.xlu0 %1447
      %v1449 = vsel %vm649, %v1418, 0.0
      %1450 = vadd.xlane.f32.xlu0 %v1449
      %v1451 = vpop.xlane.xlu0 %1450
      %v1452 = vsel %vm649, %v1420, 0.0
      %1453 = vadd.xlane.f32.xlu0 %v1452
      %v1454 = vpop.xlane.xlu0 %1453
      %v1455 = vsel %vm649, %v1422, 0.0
      %1456 = vadd.xlane.f32.xlu0 %v1455
      %v1457 = vpop.xlane.xlu0 %1456
      %v1458 = vsel %vm649, %v1424, 0.0
      %1459 = vadd.xlane.f32.xlu0 %v1458
      %v1460 = vpop.xlane.xlu0 %1459
      %v1461 = vsel %vm649, %v1426, 0.0
      %1462 = vadd.xlane.f32.xlu0 %v1461
      %v1463 = vpop.xlane.xlu0 %1462
      %v1464 = vsel %vm649, %v1428, 0.0
      %1465 = vadd.xlane.f32.xlu0 %v1464
      %v1466 = vpop.xlane.xlu0 %1465
      %v1467 = vsel %vm686, %v1430, 0.0
      %1468 = vadd.xlane.f32.xlu0 %v1467
      %v1469 = vpop.xlane.xlu0 %1468
      %v1470 = vrcp.pop %v1433
      %v1471 = vrcp.pop %v1436
      %v1472 = vrcp.pop %v1439
      %v1473 = vrcp.pop %v1442
      %v1474 = vrcp.pop %v1445
      %v1475 = vrcp.pop %v1448
      %v1476 = vrcp.pop %v1451
      %v1477 = vrcp.pop %v1454
      %v1478 = vrcp.pop %v1457
      %v1479 = vrcp.pop %v1460
      %v1480 = vrcp.pop %v1463
      %v1481 = vrcp.pop %v1466
      %v1482 = vrcp.pop %v1469
      %v1483 = vmul.f32 %v1406, %v1470
      %v1484 = vmul.f32 %v1408, %v1471
      %v1485 = vmul.f32 %v1410, %v1472
      %v1486 = vmul.f32 %v1412, %v1473
      %v1487 = vmul.f32 %v1414, %v1474
      %v1488 = vmul.f32 %v1416, %v1475
      %v1489 = vmul.f32 %v1418, %v1476
      %v1490 = vmul.f32 %v1420, %v1477
      %v1491 = vmul.f32 %v1422, %v1478
      %v1492 = vmul.f32 %v1424, %v1479
      %v1493 = vmul.f32 %v1426, %v1480
      %v1494 = vmul.f32 %v1428, %v1481
      %v1495 = vmul.f32 %v1430, %v1482
      %v1497 = vsel %vm797, %v1495, 0
      %1499 = vmatprep.subr.mxu0 0.0
      %1500 = vmatpush1.msra.mxu0 %v1483
      %1501 = vmatprep.subr.mxu0 0.0
      %1502 = vmatpush1.msra.mxu0 %v1484
      %1503 = vmatprep.subr.mxu0 0.0
      %1504 = vmatpush1.msra.mxu0 %v1485
      %1505 = vmatprep.subr.mxu0 0.0
      %1506 = vmatpush1.msra.mxu0 %v1486
      %1507 = vmatprep.subr.mxu0 0.0
      %1508 = vmatpush1.msra.mxu0 %v1487
      %1509 = vmatprep.subr.mxu0 0.0
      %1510 = vmatpush1.msra.mxu0 %v1488
      %1511 = vmatprep.subr.mxu0 0.0
      %1512 = vmatpush1.msra.mxu0 %v1489
      %1513 = vmatprep.subr.mxu0 0.0
      %1514 = vmatpush1.msra.mxu0 %v1490
      %1515 = vmatprep.subr.mxu0 0.0
      %1516 = vmatpush1.msra.mxu0 %v1491
      %1517 = vmatprep.subr.mxu0 0.0
      %1518 = vmatpush1.msra.mxu0 %v1492
      %1519 = vmatprep.subr.mxu0 0.0
      %1520 = vmatpush1.msra.mxu0 %v1493
      %1521 = vmatprep.subr.mxu0 0.0
      %1522 = vmatpush1.msra.mxu0 %v1494
      %1523 = vmatprep.subr.mxu0 0.0
      %1524 = vmatpush1.msra.mxu0 %v1497
      %1525 = vmatprep.subr.mxu0 0.0
      %1526 = vmatpush1.msra.mxu0 0.0
      %1527 = vmatprep.subr.mxu0 0.0
      %1528 = vmatpush1.msra.mxu0 0.0
      %1529 = vmatprep.subr.mxu0 0.0
      %1530 = vmatpush1.msra.mxu0 0.0
      %1531 = vmatprep.subr.mxu0 0.0
      %1532 = vmatpush1.msra.mxu0 0.0
      %1533 = vmatprep.subr.mxu0 0.0
      %1534 = vmatpush1.msra.mxu0 0.0
      %1535 = vmatprep.subr.mxu0 0.0
      %1536 = vmatpush1.msra.mxu0 0.0
      %1537 = vmatprep.subr.mxu0 0.0
      %1538 = vmatpush1.msra.mxu0 0.0
      %1539 = vmatprep.subr.mxu0 0.0
      %1540 = vmatpush1.msra.mxu0 0.0
      %1541 = vmatprep.subr.mxu0 0.0
      %1542 = vmatpush1.msra.mxu0 0.0
      %1543 = vmatprep.subr.mxu0 0.0
      %1544 = vmatpush1.msra.mxu0 0.0
      %1545 = vmatprep.subr.mxu0 0.0
      %1546 = vmatpush1.msra.mxu0 0.0
      %1547 = vmatprep.subr.mxu0 0.0
      %1548 = vmatpush1.msra.mxu0 0.0
      %1549 = vmatprep.subr.mxu0 0.0
      %1550 = vmatpush1.msra.mxu0 0.0
      %1551 = vmatprep.subr.mxu0 0.0
      %1552 = vmatpush1.msra.mxu0 0.0
      %1553 = vmatprep.subr.mxu0 0.0
      %1554 = vmatpush1.msra.mxu0 0.0
      %1555 = vmatprep.subr.mxu0 0.0
      %1556 = vmatpush1.msra.mxu0 0.0
      %1557 = vmatprep.subr.mxu0 0.0
      %1558 = vmatpush1.msra.mxu0 0.0
      %1559 = vmatprep.subr.mxu0 0.0
      %1560 = vmatpush1.msra.mxu0 0.0
      %1561 = vmatprep.subr.mxu0 0.0
      %1562 = vmatpush1.msra.mxu0 0.0
      %1563 = vmatprep.mubr.f32.mxu0 0.0
      %1564 = vmatmul.mubr.f32.gmra.mrb[0].mxu0 %v795
      %v1565 = vpop.f32.mrb[0].mxu0
      %v1566 = vadd.f32 0.0, %v1565
      %v1567 = vpop.f32.mrb[0].mxu0
      %1568 = vdwg.mxu0
      %v1570 = vsel %vm649, %v1566, 0
      %v1573 = vsel %vm797, %v1111, 0
      %v1576 = vsel %vm797, %v1112, 0
      %v1579 = vsel %vm797, %v1113, 0
      %v1582 = vsel %vm797, %v1114, 0
      %1584 = vmatprep.subr.mxu0 %v1064
      %1585 = vmatpush1.msra.mxu0 %v1063
      %1586 = vmatprep.subr.mxu0 %v1068
      %1587 = vmatpush1.msra.mxu0 %v1067
      %1588 = vmatprep.subr.mxu0 %v1072
      %1589 = vmatpush1.msra.mxu0 %v1071
      %1590 = vmatprep.subr.mxu0 %v1076
      %1591 = vmatpush1.msra.mxu0 %v1075
      %1592 = vmatprep.subr.mxu0 %v1080
      %1593 = vmatpush1.msra.mxu0 %v1079
      %1594 = vmatprep.subr.mxu0 %v1084
      %1595 = vmatpush1.msra.mxu0 %v1083
      %1596 = vmatprep.subr.mxu0 %v1088
      %1597 = vmatpush1.msra.mxu0 %v1087
      %1598 = vmatprep.subr.mxu0 %v1092
      %1599 = vmatpush1.msra.mxu0 %v1091
      %1600 = vmatprep.subr.mxu0 %v1096
      %1601 = vmatpush1.msra.mxu0 %v1095
      %1602 = vmatprep.subr.mxu0 %v1100
      %1603 = vmatpush1.msra.mxu0 %v1099
      %1604 = vmatprep.subr.mxu0 %v1104
      %1605 = vmatpush1.msra.mxu0 %v1103
      %1606 = vmatprep.subr.mxu0 %v1108
      %1607 = vmatpush1.msra.mxu0 %v1107
      %1608 = vmatprep.subr.mxu0 %v1576
      %1609 = vmatpush1.msra.mxu0 %v1573
      %1610 = vmatprep.subr.mxu0 0.0
      %1611 = vmatpush1.msra.mxu0 0.0
      %1612 = vmatprep.subr.mxu0 0.0
      %1613 = vmatpush1.msra.mxu0 0.0
      %1614 = vmatprep.subr.mxu0 0.0
      %1615 = vmatpush1.msra.mxu0 0.0
      %1616 = vmatprep.subr.mxu0 0.0
      %1617 = vmatpush1.msra.mxu0 0.0
      %1618 = vmatprep.subr.mxu0 0.0
      %1619 = vmatpush1.msra.mxu0 0.0
      %1620 = vmatprep.subr.mxu0 0.0
      %1621 = vmatpush1.msra.mxu0 0.0
      %1622 = vmatprep.subr.mxu0 0.0
      %1623 = vmatpush1.msra.mxu0 0.0
      %1624 = vmatprep.subr.mxu0 0.0
      %1625 = vmatpush1.msra.mxu0 0.0
      %1626 = vmatprep.subr.mxu0 0.0
      %1627 = vmatpush1.msra.mxu0 0.0
      %1628 = vmatprep.subr.mxu0 0.0
      %1629 = vmatpush1.msra.mxu0 0.0
      %1630 = vmatprep.subr.mxu0 0.0
      %1631 = vmatpush1.msra.mxu0 0.0
      %1632 = vmatprep.subr.mxu0 0.0
      %1633 = vmatpush1.msra.mxu0 0.0
      %1634 = vmatprep.subr.mxu0 0.0
      %1635 = vmatpush1.msra.mxu0 0.0
      %1636 = vmatprep.subr.mxu0 0.0
      %1637 = vmatpush1.msra.mxu0 0.0
      %1638 = vmatprep.subr.mxu0 0.0
      %1639 = vmatpush1.msra.mxu0 0.0
      %1640 = vmatprep.subr.mxu0 0.0
      %1641 = vmatpush1.msra.mxu0 0.0
      %1642 = vmatprep.subr.mxu0 0.0
      %1643 = vmatpush1.msra.mxu0 0.0
      %1644 = vmatprep.subr.mxu0 0.0
      %1645 = vmatpush1.msra.mxu0 0.0
      %1646 = vmatprep.subr.mxu0 0.0
      %1647 = vmatpush1.msra.mxu0 0.0
      %1648 = vmatprep.mubr.f32.mxu0 0.0
      %1649 = vmatmul.mubr.f32.gmra.mrb[0].mxu0 %v1570
      %v1650 = vpop.f32.mrb[0].mxu0
      %v1651 = vadd.f32 0.0, %v1650
      %v1652 = vpop.f32.mrb[0].mxu0
      %v1653 = vadd.f32 0.0, %v1652
      %1654 = vdwg.mxu0
      %1655 = vmatprep.subr.mxu0 %v1066
      %1656 = vmatpush1.msra.mxu0 %v1065
      %1657 = vmatprep.subr.mxu0 %v1070
      %1658 = vmatpush1.msra.mxu0 %v1069
      %1659 = vmatprep.subr.mxu0 %v1074
      %1660 = vmatpush1.msra.mxu0 %v1073
      %1661 = vmatprep.subr.mxu0 %v1078
      %1662 = vmatpush1.msra.mxu0 %v1077
      %1663 = vmatprep.subr.mxu0 %v1082
      %1664 = vmatpush1.msra.mxu0 %v1081
      %1665 = vmatprep.subr.mxu0 %v1086
      %1666 = vmatpush1.msra.mxu0 %v1085
      %1667 = vmatprep.subr.mxu0 %v1090
      %1668 = vmatpush1.msra.mxu0 %v1089
      %1669 = vmatprep.subr.mxu0 %v1094
      %1670 = vmatpush1.msra.mxu0 %v1093
      %1671 = vmatprep.subr.mxu0 %v1098
      %1672 = vmatpush1.msra.mxu0 %v1097
      %1673 = vmatprep.subr.mxu0 %v1102
      %1674 = vmatpush1.msra.mxu0 %v1101
      %1675 = vmatprep.subr.mxu0 %v1106
      %1676 = vmatpush1.msra.mxu0 %v1105
      %1677 = vmatprep.subr.mxu0 %v1110
      %1678 = vmatpush1.msra.mxu0 %v1109
      %1679 = vmatprep.subr.mxu0 %v1582
      %1680 = vmatpush1.msra.mxu0 %v1579
      %1681 = vmatprep.subr.mxu0 0.0
      %1682 = vmatpush1.msra.mxu0 0.0
      %1683 = vmatprep.subr.mxu0 0.0
      %1684 = vmatpush1.msra.mxu0 0.0
      %1685 = vmatprep.subr.mxu0 0.0
      %1686 = vmatpush1.msra.mxu0 0.0
      %1687 = vmatprep.subr.mxu0 0.0
      %1688 = vmatpush1.msra.mxu0 0.0
      %1689 = vmatprep.subr.mxu0 0.0
      %1690 = vmatpush1.msra.mxu0 0.0
      %1691 = vmatprep.subr.mxu0 0.0
      %1692 = vmatpush1.msra.mxu0 0.0
      %1693 = vmatprep.subr.mxu0 0.0
      %1694 = vmatpush1.msra.mxu0 0.0
      %1695 = vmatprep.subr.mxu0 0.0
      %1696 = vmatpush1.msra.mxu0 0.0
      %1697 = vmatprep.subr.mxu0 0.0
      %1698 = vmatpush1.msra.mxu0 0.0
      %1699 = vmatprep.subr.mxu0 0.0
      %1700 = vmatpush1.msra.mxu0 0.0
      %1701 = vmatprep.subr.mxu0 0.0
      %1702 = vmatpush1.msra.mxu0 0.0
      %1703 = vmatprep.subr.mxu0 0.0
      %1704 = vmatpush1.msra.mxu0 0.0
      %1705 = vmatprep.subr.mxu0 0.0
      %1706 = vmatpush1.msra.mxu0 0.0
      %1707 = vmatprep.subr.mxu0 0.0
      %1708 = vmatpush1.msra.mxu0 0.0
      %1709 = vmatprep.subr.mxu0 0.0
      %1710 = vmatpush1.msra.mxu0 0.0
      %1711 = vmatprep.subr.mxu0 0.0
      %1712 = vmatpush1.msra.mxu0 0.0
      %1713 = vmatprep.subr.mxu0 0.0
      %1714 = vmatpush1.msra.mxu0 0.0
      %1715 = vmatprep.subr.mxu0 0.0
      %1716 = vmatpush1.msra.mxu0 0.0
      %1717 = vmatprep.subr.mxu0 0.0
      %1718 = vmatpush1.msra.mxu0 0.0
      %1719 = vmatprep.mubr.f32.mxu0 0.0
      %1720 = vmatmul.mubr.f32.gmra.mrb[0].mxu0 %v1570
      %v1721 = vpop.f32.mrb[0].mxu0
      %v1722 = vadd.f32 0.0, %v1721
      %v1723 = vpop.f32.mrb[0].mxu0
      %v1724 = vadd.f32 0.0, %v1723
      %1725 = vdwg.mxu0
      %v1730 = vcombine.low %v1651, %v1653
      %v1731 = vcombine.low %v1722, %v1724
      %v1733 = vunpack.c.l.s4 1966171168
      %v1734 = vunpack.c.0.s8 %v1733
      %v1735 = vlaneseq
      %v1736 = vshrl.u32 %v1735, 7
      %v1737 = vsub.s32 %v1734, %v1736
      %v1738 = vrot.slane %v1730, %v1737
      %v1740 = vunpack.c.l.s4 1966171168
      %v1741 = vunpack.c.0.s8 %v1740
      %v1742 = vlaneseq
      %v1743 = vshrl.u32 %v1742, 7
      %v1744 = vsub.s32 %v1741, %v1743
      %v1745 = vrot.slane %v1731, %v1744
      %v1746 = vcombine.low %v1738, %v1745
      %v1748 = vunpack.c.l.s4 1966171168
      %v1749 = vunpack.c.0.s8 %v1748
      %v1750 = vlaneseq
      %v1751 = vshrl.u32 %v1750, 7
      %v1752 = vsub.s32 %v1749, %v1751
      %v1753 = vrot.slane %v1746, %v1752
      %1755 = vst.msk [vmem:[#allocation3] ss:$4 sm:$0xf] %vm1060, %v1753
      %s1756 = scalar_lea.vmem %s249, 2080
      %v1757 = vld [vmem:[%s1756] sm:$0xff]
      %v1758 = vld [vmem:[%s1756 + $0x8] sm:$0xff]
      %v1759 = vld [vmem:[%s1756 + $0x10] sm:$0xff]
      %v1760 = vld [vmem:[%s1756 + $0x18] sm:$0xff]
      %v1761 = vld [vmem:[%s1756 + $0x20] sm:$0xff]
      %v1762 = vld [vmem:[%s1756 + $0x28] sm:$0xff]
      %v1763 = vld [vmem:[%s1756 + $0x30] sm:$0xff]
      %v1764 = vld [vmem:[%s1756 + $0x38] sm:$0xff]
      %v1765 = vld [vmem:[%s1756 + $0x40] sm:$0xff]
      %v1766 = vld [vmem:[%s1756 + $0x48] sm:$0xff]
      %v1767 = vld [vmem:[%s1756 + $0x50] sm:$0xff]
      %v1768 = vld [vmem:[%s1756 + $0x58] sm:$0xff]
      %v1769 = vld [vmem:[%s1756 + $0x60] sm:$0xff]
      %v1770 = vld [vmem:[%s1756 + $0x68] sm:$0xff]
      %v1771 = vld [vmem:[%s1756 + $0x70] sm:$0xff]
      %v1772 = vld [vmem:[%s1756 + $0x78] sm:$0xff]
      %v1773 = vld [vmem:[%s1756 + $0x80] sm:$0xff]
      %v1774 = vld [vmem:[%s1756 + $0x88] sm:$0xff]
      %v1775 = vld [vmem:[%s1756 + $0x90] sm:$0xff]
      %v1776 = vld [vmem:[%s1756 + $0x98] sm:$0xff]
      %v1777 = vld [vmem:[%s1756 + $0xa0] sm:$0xff]
      %v1778 = vld [vmem:[%s1756 + $0xa8] sm:$0xff]
      %v1779 = vld [vmem:[%s1756 + $0xb0] sm:$0xff]
      %v1780 = vld [vmem:[%s1756 + $0xb8] sm:$0xff]
      %v1781 = vld [vmem:[%s1756 + $0xc0] sm:$0xff]
      %v1782 = vld [vmem:[%s1756 + $0xc8] sm:$0xff]
      %v1783 = vld [vmem:[%s1756 + $0xd0] sm:$0xff]
      %v1784 = vld [vmem:[%s1756 + $0xd8] sm:$0xff]
      %v1785 = vld [vmem:[%s1756 + $0xe0] sm:$0xff]
      %v1786 = vld [vmem:[%s1756 + $0xe8] sm:$0xff]
      %v1787 = vld [vmem:[%s1756 + $0xf0] sm:$0xff]
      %v1788 = vld [vmem:[%s1756 + $0xf8] sm:$0xff]
      %v1789 = vld [vmem:[%s1756 + $0x100] sm:$0xff]
      %v1790 = vld [vmem:[%s1756 + $0x108] sm:$0xff]
      %v1791 = vld [vmem:[%s1756 + $0x110] sm:$0xff]
      %v1792 = vld [vmem:[%s1756 + $0x118] sm:$0xff]
      %v1793 = vld [vmem:[%s1756 + $0x120] sm:$0xff]
      %v1794 = vld [vmem:[%s1756 + $0x128] sm:$0xff]
      %v1795 = vld [vmem:[%s1756 + $0x130] sm:$0xff]
      %v1796 = vld [vmem:[%s1756 + $0x138] sm:$0xff]
      %v1797 = vld [vmem:[%s1756 + $0x140] sm:$0xff]
      %v1798 = vld [vmem:[%s1756 + $0x148] sm:$0xff]
      %v1799 = vld [vmem:[%s1756 + $0x150] sm:$0xff]
      %v1800 = vld [vmem:[%s1756 + $0x158] sm:$0xff]
      %v1801 = vld [vmem:[%s1756 + $0x160] sm:$0xff]
      %v1802 = vld [vmem:[%s1756 + $0x168] sm:$0xff]
      %v1803 = vld [vmem:[%s1756 + $0x170] sm:$0xff]
      %v1804 = vld [vmem:[%s1756 + $0x178] sm:$0xff]
      %v1805 = vld [vmem:[%s1756 + $0x180] sm:$0xf]
      %v1806 = vld [vmem:[%s1756 + $0x188] sm:$0xf]
      %v1807 = vld [vmem:[%s1756 + $0x190] sm:$0xf]
      %v1808 = vld [vmem:[%s1756 + $0x198] sm:$0xf]
      %v1809 = vpack.c.bf16 %v1761, %v1757
      %v1810 = vpack.c.bf16 %v1762, %v1758
      %v1811 = vpack.c.bf16 %v1763, %v1759
      %v1812 = vpack.c.bf16 %v1764, %v1760
      %v1813 = vpack.c.bf16 %v1769, %v1765
      %v1814 = vpack.c.bf16 %v1770, %v1766
      %v1815 = vpack.c.bf16 %v1771, %v1767
      %v1816 = vpack.c.bf16 %v1772, %v1768
      %v1817 = vpack.c.bf16 %v1777, %v1773
      %v1818 = vpack.c.bf16 %v1778, %v1774
      %v1819 = vpack.c.bf16 %v1779, %v1775
      %v1820 = vpack.c.bf16 %v1780, %v1776
      %v1821 = vpack.c.bf16 %v1785, %v1781
      %v1822 = vpack.c.bf16 %v1786, %v1782
      %v1823 = vpack.c.bf16 %v1787, %v1783
      %v1824 = vpack.c.bf16 %v1788, %v1784
      %v1825 = vpack.c.bf16 %v1793, %v1789
      %v1826 = vpack.c.bf16 %v1794, %v1790
      %v1827 = vpack.c.bf16 %v1795, %v1791
      %v1828 = vpack.c.bf16 %v1796, %v1792
      %v1829 = vpack.c.bf16 %v1801, %v1797
      %v1830 = vpack.c.bf16 %v1802, %v1798
      %v1831 = vpack.c.bf16 %v1803, %v1799
      %v1832 = vpack.c.bf16 %v1804, %v1800
      %v1833 = vpack.c.bf16 %v1805, %v1805
      %v1834 = vpack.c.bf16 %v1806, %v1806
      %v1835 = vpack.c.bf16 %v1807, %v1807
      %v1836 = vpack.c.bf16 %v1808, %v1808
      %s1837 = scalar_lea.vmem %s249, 1248
      %v1838 = vld [vmem:[%s1837] sm:$0xff]
      %v1839 = vld [vmem:[%s1837 + $0x8] sm:$0xff]
      %v1840 = vld [vmem:[%s1837 + $0x10] sm:$0xff]
      %v1841 = vld [vmem:[%s1837 + $0x18] sm:$0xff]
      %v1842 = vld [vmem:[%s1837 + $0x20] sm:$0xff]
      %v1843 = vld [vmem:[%s1837 + $0x28] sm:$0xff]
      %v1844 = vld [vmem:[%s1837 + $0x30] sm:$0xff]
      %v1845 = vld [vmem:[%s1837 + $0x38] sm:$0xff]
      %v1846 = vld [vmem:[%s1837 + $0x40] sm:$0xff]
      %v1847 = vld [vmem:[%s1837 + $0x48] sm:$0xff]
      %v1848 = vld [vmem:[%s1837 + $0x50] sm:$0xff]
      %v1849 = vld [vmem:[%s1837 + $0x58] sm:$0xff]
      %v1850 = vld [vmem:[%s1837 + $0x60] sm:$0xff]
      %v1851 = vld [vmem:[%s1837 + $0x68] sm:$0xff]
      %v1852 = vld [vmem:[%s1837 + $0x70] sm:$0xff]
      %v1853 = vld [vmem:[%s1837 + $0x78] sm:$0xff]
      %v1854 = vld [vmem:[%s1837 + $0x80] sm:$0xff]
      %v1855 = vld [vmem:[%s1837 + $0x88] sm:$0xff]
      %v1856 = vld [vmem:[%s1837 + $0x90] sm:$0xff]
      %v1857 = vld [vmem:[%s1837 + $0x98] sm:$0xff]
      %v1858 = vld [vmem:[%s1837 + $0xa0] sm:$0xff]
      %v1859 = vld [vmem:[%s1837 + $0xa8] sm:$0xff]
      %v1860 = vld [vmem:[%s1837 + $0xb0] sm:$0xff]
      %v1861 = vld [vmem:[%s1837 + $0xb8] sm:$0xff]
      %v1862 = vld [vmem:[%s1837 + $0xc0] sm:$0xff]
      %v1863 = vld [vmem:[%s1837 + $0xc8] sm:$0xff]
      %v1864 = vld [vmem:[%s1837 + $0xd0] sm:$0xff]
      %v1865 = vld [vmem:[%s1837 + $0xd8] sm:$0xff]
      %v1866 = vld [vmem:[%s1837 + $0xe0] sm:$0xff]
      %v1867 = vld [vmem:[%s1837 + $0xe8] sm:$0xff]
      %v1868 = vld [vmem:[%s1837 + $0xf0] sm:$0xff]
      %v1869 = vld [vmem:[%s1837 + $0xf8] sm:$0xff]
      %v1870 = vld [vmem:[%s1837 + $0x100] sm:$0xff]
      %v1871 = vld [vmem:[%s1837 + $0x108] sm:$0xff]
      %v1872 = vld [vmem:[%s1837 + $0x110] sm:$0xff]
      %v1873 = vld [vmem:[%s1837 + $0x118] sm:$0xff]
      %v1874 = vld [vmem:[%s1837 + $0x120] sm:$0xff]
      %v1875 = vld [vmem:[%s1837 + $0x128] sm:$0xff]
      %v1876 = vld [vmem:[%s1837 + $0x130] sm:$0xff]
      %v1877 = vld [vmem:[%s1837 + $0x138] sm:$0xff]
      %v1878 = vld [vmem:[%s1837 + $0x140] sm:$0xff]
      %v1879 = vld [vmem:[%s1837 + $0x148] sm:$0xff]
      %v1880 = vld [vmem:[%s1837 + $0x150] sm:$0xff]
      %v1881 = vld [vmem:[%s1837 + $0x158] sm:$0xff]
      %v1882 = vld [vmem:[%s1837 + $0x160] sm:$0xff]
      %v1883 = vld [vmem:[%s1837 + $0x168] sm:$0xff]
      %v1884 = vld [vmem:[%s1837 + $0x170] sm:$0xff]
      %v1885 = vld [vmem:[%s1837 + $0x178] sm:$0xff]
      %v1886 = vld [vmem:[%s1837 + $0x180] sm:$0xf]
      %v1887 = vld [vmem:[%s1837 + $0x188] sm:$0xf]
      %v1888 = vld [vmem:[%s1837 + $0x190] sm:$0xf]
      %v1889 = vld [vmem:[%s1837 + $0x198] sm:$0xf]
      %v1890 = vpack.c.bf16 %v1842, %v1838
      %v1891 = vpack.c.bf16 %v1843, %v1839
      %v1892 = vpack.c.bf16 %v1844, %v1840
      %v1893 = vpack.c.bf16 %v1845, %v1841
      %v1894 = vpack.c.bf16 %v1850, %v1846
      %v1895 = vpack.c.bf16 %v1851, %v1847
      %v1896 = vpack.c.bf16 %v1852, %v1848
      %v1897 = vpack.c.bf16 %v1853, %v1849
      %v1898 = vpack.c.bf16 %v1858, %v1854
      %v1899 = vpack.c.bf16 %v1859, %v1855
      %v1900 = vpack.c.bf16 %v1860, %v1856
      %v1901 = vpack.c.bf16 %v1861, %v1857
      %v1902 = vpack.c.bf16 %v1866, %v1862
      %v1903 = vpack.c.bf16 %v1867, %v1863
      %v1904 = vpack.c.bf16 %v1868, %v1864
      %v1905 = vpack.c.bf16 %v1869, %v1865
      %v1906 = vpack.c.bf16 %v1874, %v1870
      %v1907 = vpack.c.bf16 %v1875, %v1871
      %v1908 = vpack.c.bf16 %v1876, %v1872
      %v1909 = vpack.c.bf16 %v1877, %v1873
      %v1910 = vpack.c.bf16 %v1882, %v1878
      %v1911 = vpack.c.bf16 %v1883, %v1879
      %v1912 = vpack.c.bf16 %v1884, %v1880
      %v1913 = vpack.c.bf16 %v1885, %v1881
      %v1914 = vpack.c.bf16 %v1886, %v1886
      %v1915 = vpack.c.bf16 %v1887, %v1887
      %v1916 = vpack.c.bf16 %v1888, %v1888
      %v1917 = vpack.c.bf16 %v1889, %v1889
      %v1919 = vsel %vm417, %v1812, 0
      %v1922 = vsel %vm417, %v1816, 0
      %v1925 = vsel %vm417, %v1820, 0
      %v1928 = vsel %vm417, %v1824, 0
      %v1931 = vsel %vm417, %v1828, 0
      %v1934 = vsel %vm417, %v1832, 0
      %v1937 = vsel %vm417, %v1836, 0
      %v1940 = vsel %vm417, %v1893, 0
      %v1943 = vsel %vm417, %v1897, 0
      %v1946 = vsel %vm417, %v1901, 0
      %v1949 = vsel %vm417, %v1905, 0
      %v1952 = vsel %vm417, %v1909, 0
      %v1955 = vsel %vm417, %v1913, 0
      %v1958 = vsel %vm417, %v1917, 0
      %1960 = vmatprep.subr.bf16.mxu0 %v1891
      %1961 = vmatpush1.bf16.xpose.msra.mxu0 %v1890
      %1962 = vmatprep.subr.bf16.mxu0 %v1895
      %1963 = vmatpush1.bf16.xpose.msra.mxu0 %v1894
      %1964 = vmatprep.subr.bf16.mxu0 %v1899
      %1965 = vmatpush1.bf16.xpose.msra.mxu0 %v1898
      %1966 = vmatprep.subr.bf16.mxu0 %v1903
      %1967 = vmatpush1.bf16.xpose.msra.mxu0 %v1902
      %1968 = vmatprep.subr.bf16.mxu0 %v1907
      %1969 = vmatpush1.bf16.xpose.msra.mxu0 %v1906
      %1970 = vmatprep.subr.bf16.mxu0 %v1911
      %1971 = vmatpush1.bf16.xpose.msra.mxu0 %v1910
      %1972 = vmatprep.subr.bf16.mxu0 %v1915
      %1973 = vmatpush1.bf16.xpose.msra.mxu0 %v1914
      %1974 = vmatprep.subr.bf16.mxu0 0
      %1975 = vmatpush1.bf16.xpose.msra.mxu0 0
      %1976 = vmatprep.subr.bf16.mxu0 0
      %1977 = vmatpush1.bf16.xpose.msra.mxu0 0
      %1978 = vmatprep.subr.bf16.mxu0 0
      %1979 = vmatpush1.bf16.xpose.msra.mxu0 0
      %1980 = vmatprep.subr.bf16.mxu0 0
      %1981 = vmatpush1.bf16.xpose.msra.mxu0 0
      %1982 = vmatprep.subr.bf16.mxu0 0
      %1983 = vmatpush1.bf16.xpose.msra.mxu0 0
      %1984 = vmatprep.subr.bf16.mxu0 0
      %1985 = vmatpush1.bf16.xpose.msra.mxu0 0
      %1986 = vmatprep.subr.bf16.mxu0 0
      %1987 = vmatpush1.bf16.xpose.msra.mxu0 0
      %1988 = vmatprep.subr.bf16.mxu0 0
      %1989 = vmatpush1.bf16.xpose.msra.mxu0 0
      %1990 = vmatprep.subr.bf16.mxu0 0
      %1991 = vmatpush1.bf16.xpose.msra.mxu0 0
      %1992 = vmatprep.mubr.bf16.mxu0 %v1810
      %1993 = vmatmul.mubr.bf16.gmra.mrb[0].mxu0 %v1809
      %v1994 = vpop.f32.mrb[0].mxu0
      %v1995 = vadd.f32 0.0, %v1994
      %v1996 = vpop.f32.mrb[0].mxu0
      %v1997 = vpop.f32.mrb[0].mxu0
      %v1998 = vadd.f32 0.0, %v1997
      %v1999 = vpop.f32.mrb[0].mxu0
      %2000 = vmatprep.mubr.bf16.mxu0 %v1814
      %2001 = vmatmul.mubr.bf16.gmra.mrb[0].mxu0 %v1813
      %v2002 = vpop.f32.mrb[0].mxu0
      %v2003 = vadd.f32 0.0, %v2002
      %v2004 = vpop.f32.mrb[0].mxu0
      %v2005 = vpop.f32.mrb[0].mxu0
      %v2006 = vadd.f32 0.0, %v2005
      %v2007 = vpop.f32.mrb[0].mxu0
      %2008 = vmatprep.mubr.bf16.mxu0 %v1818
      %2009 = vmatmul.mubr.bf16.gmra.mrb[0].mxu0 %v1817
      %v2010 = vpop.f32.mrb[0].mxu0
      %v2011 = vadd.f32 0.0, %v2010
      %v2012 = vpop.f32.mrb[0].mxu0
      %v2013 = vpop.f32.mrb[0].mxu0
      %v2014 = vadd.f32 0.0, %v2013
      %v2015 = vpop.f32.mrb[0].mxu0
      %2016 = vmatprep.mubr.bf16.mxu0 %v1822
      %2017 = vmatmul.mubr.bf16.gmra.mrb[0].mxu0 %v1821
      %v2018 = vpop.f32.mrb[0].mxu0
      %v2019 = vadd.f32 0.0, %v2018
      %v2020 = vpop.f32.mrb[0].mxu0
      %v2021 = vpop.f32.mrb[0].mxu0
      %v2022 = vadd.f32 0.0, %v2021
      %v2023 = vpop.f32.mrb[0].mxu0
      %2024 = vmatprep.mubr.bf16.mxu0 %v1826
      %2025 = vmatmul.mubr.bf16.gmra.mrb[0].mxu0 %v1825
      %v2026 = vpop.f32.mrb[0].mxu0
      %v2027 = vadd.f32 0.0, %v2026
      %v2028 = vpop.f32.mrb[0].mxu0
      %v2029 = vpop.f32.mrb[0].mxu0
      %v2030 = vadd.f32 0.0, %v2029
      %v2031 = vpop.f32.mrb[0].mxu0
      %2032 = vmatprep.mubr.bf16.mxu0 %v1830
      %2033 = vmatmul.mubr.bf16.gmra.mrb[0].mxu0 %v1829
      %v2034 = vpop.f32.mrb[0].mxu0
      %v2035 = vadd.f32 0.0, %v2034
      %v2036 = vpop.f32.mrb[0].mxu0
      %v2037 = vpop.f32.mrb[0].mxu0
      %v2038 = vadd.f32 0.0, %v2037
      %v2039 = vpop.f32.mrb[0].mxu0
      %2040 = vmatprep.mubr.bf16.mxu0 %v1834
      %2041 = vmatmul.mubr.bf16.gmra.mrb[0].mxu0 %v1833
      %v2042 = vpop.f32.mrb[0].mxu0
      %v2043 = vadd.f32 0.0, %v2042
      %v2044 = vpop.f32.mrb[0].mxu0
      %v2045 = vpop.f32.mrb[0].mxu0
      %v2046 = vpop.f32.mrb[0].mxu0
      %2047 = vdwg.mxu0
      %2048 = vmatprep.subr.bf16.mxu0 %v1940
      %2049 = vmatpush1.bf16.xpose.msra.mxu0 %v1892
      %2050 = vmatprep.subr.bf16.mxu0 %v1943
      %2051 = vmatpush1.bf16.xpose.msra.mxu0 %v1896
      %2052 = vmatprep.subr.bf16.mxu0 %v1946
      %2053 = vmatpush1.bf16.xpose.msra.mxu0 %v1900
      %2054 = vmatprep.subr.bf16.mxu0 %v1949
      %2055 = vmatpush1.bf16.xpose.msra.mxu0 %v1904
      %2056 = vmatprep.subr.bf16.mxu0 %v1952
      %2057 = vmatpush1.bf16.xpose.msra.mxu0 %v1908
      %2058 = vmatprep.subr.bf16.mxu0 %v1955
      %2059 = vmatpush1.bf16.xpose.msra.mxu0 %v1912
      %2060 = vmatprep.subr.bf16.mxu0 %v1958
      %2061 = vmatpush1.bf16.xpose.msra.mxu0 %v1916
      %2062 = vmatprep.subr.bf16.mxu0 0
      %2063 = vmatpush1.bf16.xpose.msra.mxu0 0
      %2064 = vmatprep.subr.bf16.mxu0 0
      %2065 = vmatpush1.bf16.xpose.msra.mxu0 0
      %2066 = vmatprep.subr.bf16.mxu0 0
      %2067 = vmatpush1.bf16.xpose.msra.mxu0 0
      %2068 = vmatprep.subr.bf16.mxu0 0
      %2069 = vmatpush1.bf16.xpose.msra.mxu0 0
      %2070 = vmatprep.subr.bf16.mxu0 0
      %2071 = vmatpush1.bf16.xpose.msra.mxu0 0
      %2072 = vmatprep.subr.bf16.mxu0 0
      %2073 = vmatpush1.bf16.xpose.msra.mxu0 0
      %2074 = vmatprep.subr.bf16.mxu0 0
      %2075 = vmatpush1.bf16.xpose.msra.mxu0 0
      %2076 = vmatprep.subr.bf16.mxu0 0
      %2077 = vmatpush1.bf16.xpose.msra.mxu0 0
      %2078 = vmatprep.subr.bf16.mxu0 0
      %2079 = vmatpush1.bf16.xpose.msra.mxu0 0
      %2080 = vmatprep.mubr.bf16.mxu0 %v1919
      %2081 = vmatmul.mubr.bf16.gmra.mrb[0].mxu0 %v1811
      %v2082 = vpop.f32.mrb[0].mxu0
      %v2083 = vadd.f32 %v1995, %v2082
      %v2084 = vpop.f32.mrb[0].mxu0
      %v2085 = vpop.f32.mrb[0].mxu0
      %v2086 = vadd.f32 %v1998, %v2085
      %v2087 = vpop.f32.mrb[0].mxu0
      %2088 = vmatprep.mubr.bf16.mxu0 %v1922
      %2089 = vmatmul.mubr.bf16.gmra.mrb[0].mxu0 %v1815
      %v2090 = vpop.f32.mrb[0].mxu0
      %v2091 = vadd.f32 %v2003, %v2090
      %v2092 = vpop.f32.mrb[0].mxu0
      %v2093 = vpop.f32.mrb[0].mxu0
      %v2094 = vadd.f32 %v2006, %v2093
      %v2095 = vpop.f32.mrb[0].mxu0
      %2096 = vmatprep.mubr.bf16.mxu0 %v1925
      %2097 = vmatmul.mubr.bf16.gmra.mrb[0].mxu0 %v1819
      %v2098 = vpop.f32.mrb[0].mxu0
      %v2099 = vadd.f32 %v2011, %v2098
      %v2100 = vpop.f32.mrb[0].mxu0
      %v2101 = vpop.f32.mrb[0].mxu0
      %v2102 = vadd.f32 %v2014, %v2101
      %v2103 = vpop.f32.mrb[0].mxu0
      %2104 = vmatprep.mubr.bf16.mxu0 %v1928
      %2105 = vmatmul.mubr.bf16.gmra.mrb[0].mxu0 %v1823
      %v2106 = vpop.f32.mrb[0].mxu0
      %v2107 = vadd.f32 %v2019, %v2106
      %v2108 = vpop.f32.mrb[0].mxu0
      %v2109 = vpop.f32.mrb[0].mxu0
      %v2110 = vadd.f32 %v2022, %v2109
      %v2111 = vpop.f32.mrb[0].mxu0
      %2112 = vmatprep.mubr.bf16.mxu0 %v1931
      %2113 = vmatmul.mubr.bf16.gmra.mrb[0].mxu0 %v1827
      %v2114 = vpop.f32.mrb[0].mxu0
      %v2115 = vadd.f32 %v2027, %v2114
      %v2116 = vpop.f32.mrb[0].mxu0
      %v2117 = vpop.f32.mrb[0].mxu0
      %v2118 = vadd.f32 %v2030, %v2117
      %v2119 = vpop.f32.mrb[0].mxu0
      %2120 = vmatprep.mubr.bf16.mxu0 %v1934
      %2121 = vmatmul.mubr.bf16.gmra.mrb[0].mxu0 %v1831
      %v2122 = vpop.f32.mrb[0].mxu0
      %v2123 = vadd.f32 %v2035, %v2122
      %v2124 = vpop.f32.mrb[0].mxu0
      %v2125 = vpop.f32.mrb[0].mxu0
      %v2126 = vadd.f32 %v2038, %v2125
      %v2127 = vpop.f32.mrb[0].mxu0
      %2128 = vmatprep.mubr.bf16.mxu0 %v1937
      %2129 = vmatmul.mubr.bf16.gmra.mrb[0].mxu0 %v1835
      %v2130 = vpop.f32.mrb[0].mxu0
      %v2131 = vadd.f32 %v2043, %v2130
      %v2132 = vpop.f32.mrb[0].mxu0
      %v2133 = vpop.f32.mrb[0].mxu0
      %v2134 = vpop.f32.mrb[0].mxu0
      %2135 = vdwg.mxu0
      %v2136 = vmul.f32 %v2083, 0.002
      %v2137 = vmul.f32 %v2086, 0.002
      %v2138 = vmul.f32 %v2091, 0.002
      %v2139 = vmul.f32 %v2094, 0.002
      %v2140 = vmul.f32 %v2099, 0.002
      %v2141 = vmul.f32 %v2102, 0.002
      %v2142 = vmul.f32 %v2107, 0.002
      %v2143 = vmul.f32 %v2110, 0.002
      %v2144 = vmul.f32 %v2115, 0.002
      %v2145 = vmul.f32 %v2118, 0.002
      %v2146 = vmul.f32 %v2123, 0.002
      %v2147 = vmul.f32 %v2126, 0.002
      %v2148 = vmul.f32 %v2131, 0.002
      %v2149 = vsel %vm649, %v2136, -inf
      %2150 = vmax.xlane.f32.xlu0 %v2149
      %v2151 = vpop.xlane.xlu0 %2150
      %v2152 = vsel %vm649, %v2137, -inf
      %2153 = vmax.xlane.f32.xlu0 %v2152
      %v2154 = vpop.xlane.xlu0 %2153
      %v2155 = vsel %vm649, %v2138, -inf
      %2156 = vmax.xlane.f32.xlu0 %v2155
      %v2157 = vpop.xlane.xlu0 %2156
      %v2158 = vsel %vm649, %v2139, -inf
      %2159 = vmax.xlane.f32.xlu0 %v2158
      %v2160 = vpop.xlane.xlu0 %2159
      %v2161 = vsel %vm649, %v2140, -inf
      %2162 = vmax.xlane.f32.xlu0 %v2161
      %v2163 = vpop.xlane.xlu0 %2162
      %v2164 = vsel %vm649, %v2141, -inf
      %2165 = vmax.xlane.f32.xlu0 %v2164
      %v2166 = vpop.xlane.xlu0 %2165
      %v2167 = vsel %vm649, %v2142, -inf
      %2168 = vmax.xlane.f32.xlu0 %v2167
      %v2169 = vpop.xlane.xlu0 %2168
      %v2170 = vsel %vm649, %v2143, -inf
      %2171 = vmax.xlane.f32.xlu0 %v2170
      %v2172 = vpop.xlane.xlu0 %2171
      %v2173 = vsel %vm649, %v2144, -inf
      %2174 = vmax.xlane.f32.xlu0 %v2173
      %v2175 = vpop.xlane.xlu0 %2174
      %v2176 = vsel %vm649, %v2145, -inf
      %2177 = vmax.xlane.f32.xlu0 %v2176
      %v2178 = vpop.xlane.xlu0 %2177
      %v2179 = vsel %vm649, %v2146, -inf
      %2180 = vmax.xlane.f32.xlu0 %v2179
      %v2181 = vpop.xlane.xlu0 %2180
      %v2182 = vsel %vm649, %v2147, -inf
      %2183 = vmax.xlane.f32.xlu0 %v2182
      %v2184 = vpop.xlane.xlu0 %2183
      %v2185 = vsel %vm686, %v2148, -inf
      %2186 = vmax.xlane.f32.xlu0 %v2185
      %v2187 = vpop.xlane.xlu0 %2186
      %v2188 = vsub.f32 %v2136, %v2151
      %v2189 = vsub.f32 %v2137, %v2154
      %v2190 = vsub.f32 %v2138, %v2157
      %v2191 = vsub.f32 %v2139, %v2160
      %v2192 = vsub.f32 %v2140, %v2163
      %v2193 = vsub.f32 %v2141, %v2166
      %v2194 = vsub.f32 %v2142, %v2169
      %v2195 = vsub.f32 %v2143, %v2172
      %v2196 = vsub.f32 %v2144, %v2175
      %v2197 = vsub.f32 %v2145, %v2178
      %v2198 = vsub.f32 %v2146, %v2181
      %v2199 = vsub.f32 %v2147, %v2184
      %v2200 = vsub.f32 %v2148, %v2187
      %v2201 = vmul.f32 %v2188, 1.442695
      %v2202 = vpow.pop %v2201
      %v2203 = vmul.f32 %v2189, 1.442695
      %v2204 = vpow.pop %v2203
      %v2205 = vmul.f32 %v2190, 1.442695
      %v2206 = vpow.pop %v2205
      %v2207 = vmul.f32 %v2191, 1.442695
      %v2208 = vpow.pop %v2207
      %v2209 = vmul.f32 %v2192, 1.442695
      %v2210 = vpow.pop %v2209
      %v2211 = vmul.f32 %v2193, 1.442695
      %v2212 = vpow.pop %v2211
      %v2213 = vmul.f32 %v2194, 1.442695
      %v2214 = vpow.pop %v2213
      %v2215 = vmul.f32 %v2195, 1.442695
      %v2216 = vpow.pop %v2215
      %v2217 = vmul.f32 %v2196, 1.442695
      %v2218 = vpow.pop %v2217
      %v2219 = vmul.f32 %v2197, 1.442695
      %v2220 = vpow.pop %v2219
      %v2221 = vmul.f32 %v2198, 1.442695
      %v2222 = vpow.pop %v2221
      %v2223 = vmul.f32 %v2199, 1.442695
      %v2224 = vpow.pop %v2223
      %v2225 = vmul.f32 %v2200, 1.442695
      %v2226 = vpow.pop %v2225
      %v2227 = vsel %vm649, %v2202, 0.0
      %2228 = vadd.xlane.f32.xlu0 %v2227
      %v2229 = vpop.xlane.xlu0 %2228
      %v2230 = vsel %vm649, %v2204, 0.0
      %2231 = vadd.xlane.f32.xlu0 %v2230
      %v2232 = vpop.xlane.xlu0 %2231
      %v2233 = vsel %vm649, %v2206, 0.0
      %2234 = vadd.xlane.f32.xlu0 %v2233
      %v2235 = vpop.xlane.xlu0 %2234
      %v2236 = vsel %vm649, %v2208, 0.0
      %2237 = vadd.xlane.f32.xlu0 %v2236
      %v2238 = vpop.xlane.xlu0 %2237
      %v2239 = vsel %vm649, %v2210, 0.0
      %2240 = vadd.xlane.f32.xlu0 %v2239
      %v2241 = vpop.xlane.xlu0 %2240
      %v2242 = vsel %vm649, %v2212, 0.0
      %2243 = vadd.xlane.f32.xlu0 %v2242
      %v2244 = vpop.xlane.xlu0 %2243
      %v2245 = vsel %vm649, %v2214, 0.0
      %2246 = vadd.xlane.f32.xlu0 %v2245
      %v2247 = vpop.xlane.xlu0 %2246
      %v2248 = vsel %vm649, %v2216, 0.0
      %2249 = vadd.xlane.f32.xlu0 %v2248
      %v2250 = vpop.xlane.xlu0 %2249
      %v2251 = vsel %vm649, %v2218, 0.0
      %2252 = vadd.xlane.f32.xlu0 %v2251
      %v2253 = vpop.xlane.xlu0 %2252
      %v2254 = vsel %vm649, %v2220, 0.0
      %2255 = vadd.xlane.f32.xlu0 %v2254
      %v2256 = vpop.xlane.xlu0 %2255
      %v2257 = vsel %vm649, %v2222, 0.0
      %2258 = vadd.xlane.f32.xlu0 %v2257
      %v2259 = vpop.xlane.xlu0 %2258
      %v2260 = vsel %vm649, %v2224, 0.0
      %2261 = vadd.xlane.f32.xlu0 %v2260
      %v2262 = vpop.xlane.xlu0 %2261
      %v2263 = vsel %vm686, %v2226, 0.0
      %2264 = vadd.xlane.f32.xlu0 %v2263
      %v2265 = vpop.xlane.xlu0 %2264
      %v2266 = vrcp.pop %v2229
      %v2267 = vrcp.pop %v2232
      %v2268 = vrcp.pop %v2235
      %v2269 = vrcp.pop %v2238
      %v2270 = vrcp.pop %v2241
      %v2271 = vrcp.pop %v2244
      %v2272 = vrcp.pop %v2247
      %v2273 = vrcp.pop %v2250
      %v2274 = vrcp.pop %v2253
      %v2275 = vrcp.pop %v2256
      %v2276 = vrcp.pop %v2259
      %v2277 = vrcp.pop %v2262
      %v2278 = vrcp.pop %v2265
      %v2279 = vmul.f32 %v2202, %v2266
      %v2280 = vmul.f32 %v2204, %v2267
      %v2281 = vmul.f32 %v2206, %v2268
      %v2282 = vmul.f32 %v2208, %v2269
      %v2283 = vmul.f32 %v2210, %v2270
      %v2284 = vmul.f32 %v2212, %v2271
      %v2285 = vmul.f32 %v2214, %v2272
      %v2286 = vmul.f32 %v2216, %v2273
      %v2287 = vmul.f32 %v2218, %v2274
      %v2288 = vmul.f32 %v2220, %v2275
      %v2289 = vmul.f32 %v2222, %v2276
      %v2290 = vmul.f32 %v2224, %v2277
      %v2291 = vmul.f32 %v2226, %v2278
      %v2293 = vsel %vm797, %v2291, 0
      %2295 = vmatprep.subr.mxu0 0.0
      %2296 = vmatpush1.msra.mxu0 %v2279
      %2297 = vmatprep.subr.mxu0 0.0
      %2298 = vmatpush1.msra.mxu0 %v2280
      %2299 = vmatprep.subr.mxu0 0.0
      %2300 = vmatpush1.msra.mxu0 %v2281
      %2301 = vmatprep.subr.mxu0 0.0
      %2302 = vmatpush1.msra.mxu0 %v2282
      %2303 = vmatprep.subr.mxu0 0.0
      %2304 = vmatpush1.msra.mxu0 %v2283
      %2305 = vmatprep.subr.mxu0 0.0
      %2306 = vmatpush1.msra.mxu0 %v2284
      %2307 = vmatprep.subr.mxu0 0.0
      %2308 = vmatpush1.msra.mxu0 %v2285
      %2309 = vmatprep.subr.mxu0 0.0
      %2310 = vmatpush1.msra.mxu0 %v2286
      %2311 = vmatprep.subr.mxu0 0.0
      %2312 = vmatpush1.msra.mxu0 %v2287
      %2313 = vmatprep.subr.mxu0 0.0
      %2314 = vmatpush1.msra.mxu0 %v2288
      %2315 = vmatprep.subr.mxu0 0.0
      %2316 = vmatpush1.msra.mxu0 %v2289
      %2317 = vmatprep.subr.mxu0 0.0
      %2318 = vmatpush1.msra.mxu0 %v2290
      %2319 = vmatprep.subr.mxu0 0.0
      %2320 = vmatpush1.msra.mxu0 %v2293
      %2321 = vmatprep.subr.mxu0 0.0
      %2322 = vmatpush1.msra.mxu0 0.0
      %2323 = vmatprep.subr.mxu0 0.0
      %2324 = vmatpush1.msra.mxu0 0.0
      %2325 = vmatprep.subr.mxu0 0.0
      %2326 = vmatpush1.msra.mxu0 0.0
      %2327 = vmatprep.subr.mxu0 0.0
      %2328 = vmatpush1.msra.mxu0 0.0
      %2329 = vmatprep.subr.mxu0 0.0
      %2330 = vmatpush1.msra.mxu0 0.0
      %2331 = vmatprep.subr.mxu0 0.0
      %2332 = vmatpush1.msra.mxu0 0.0
      %2333 = vmatprep.subr.mxu0 0.0
      %2334 = vmatpush1.msra.mxu0 0.0
      %2335 = vmatprep.subr.mxu0 0.0
      %2336 = vmatpush1.msra.mxu0 0.0
      %2337 = vmatprep.subr.mxu0 0.0
      %2338 = vmatpush1.msra.mxu0 0.0
      %2339 = vmatprep.subr.mxu0 0.0
      %2340 = vmatpush1.msra.mxu0 0.0
      %2341 = vmatprep.subr.mxu0 0.0
      %2342 = vmatpush1.msra.mxu0 0.0
      %2343 = vmatprep.subr.mxu0 0.0
      %2344 = vmatpush1.msra.mxu0 0.0
      %2345 = vmatprep.subr.mxu0 0.0
      %2346 = vmatpush1.msra.mxu0 0.0
      %2347 = vmatprep.subr.mxu0 0.0
      %2348 = vmatpush1.msra.mxu0 0.0
      %2349 = vmatprep.subr.mxu0 0.0
      %2350 = vmatpush1.msra.mxu0 0.0
      %2351 = vmatprep.subr.mxu0 0.0
      %2352 = vmatpush1.msra.mxu0 0.0
      %2353 = vmatprep.subr.mxu0 0.0
      %2354 = vmatpush1.msra.mxu0 0.0
      %2355 = vmatprep.subr.mxu0 0.0
      %2356 = vmatpush1.msra.mxu0 0.0
      %2357 = vmatprep.subr.mxu0 0.0
      %2358 = vmatpush1.msra.mxu0 0.0
      %2359 = vmatprep.mubr.f32.mxu0 0.0
      %2360 = vmatmul.mubr.f32.gmra.mrb[0].mxu0 %v795
      %v2361 = vpop.f32.mrb[0].mxu0
      %v2362 = vadd.f32 0.0, %v2361
      %v2363 = vpop.f32.mrb[0].mxu0
      %2364 = vdwg.mxu0
      %v2366 = vsel %vm649, %v2362, 0
      %v2369 = vsel %vm797, %v1886, 0
      %v2372 = vsel %vm797, %v1887, 0
      %v2375 = vsel %vm797, %v1888, 0
      %v2378 = vsel %vm797, %v1889, 0
      %2380 = vmatprep.subr.mxu0 %v1839
      %2381 = vmatpush1.msra.mxu0 %v1838
      %2382 = vmatprep.subr.mxu0 %v1843
      %2383 = vmatpush1.msra.mxu0 %v1842
      %2384 = vmatprep.subr.mxu0 %v1847
      %2385 = vmatpush1.msra.mxu0 %v1846
      %2386 = vmatprep.subr.mxu0 %v1851
      %2387 = vmatpush1.msra.mxu0 %v1850
      %2388 = vmatprep.subr.mxu0 %v1855
      %2389 = vmatpush1.msra.mxu0 %v1854
      %2390 = vmatprep.subr.mxu0 %v1859
      %2391 = vmatpush1.msra.mxu0 %v1858
      %2392 = vmatprep.subr.mxu0 %v1863
      %2393 = vmatpush1.msra.mxu0 %v1862
      %2394 = vmatprep.subr.mxu0 %v1867
      %2395 = vmatpush1.msra.mxu0 %v1866
      %2396 = vmatprep.subr.mxu0 %v1871
      %2397 = vmatpush1.msra.mxu0 %v1870
      %2398 = vmatprep.subr.mxu0 %v1875
      %2399 = vmatpush1.msra.mxu0 %v1874
      %2400 = vmatprep.subr.mxu0 %v1879
      %2401 = vmatpush1.msra.mxu0 %v1878
      %2402 = vmatprep.subr.mxu0 %v1883
      %2403 = vmatpush1.msra.mxu0 %v1882
      %2404 = vmatprep.subr.mxu0 %v2372
      %2405 = vmatpush1.msra.mxu0 %v2369
      %2406 = vmatprep.subr.mxu0 0.0
      %2407 = vmatpush1.msra.mxu0 0.0
      %2408 = vmatprep.subr.mxu0 0.0
      %2409 = vmatpush1.msra.mxu0 0.0
      %2410 = vmatprep.subr.mxu0 0.0
      %2411 = vmatpush1.msra.mxu0 0.0
      %2412 = vmatprep.subr.mxu0 0.0
      %2413 = vmatpush1.msra.mxu0 0.0
      %2414 = vmatprep.subr.mxu0 0.0
      %2415 = vmatpush1.msra.mxu0 0.0
      %2416 = vmatprep.subr.mxu0 0.0
      %2417 = vmatpush1.msra.mxu0 0.0
      %2418 = vmatprep.subr.mxu0 0.0
      %2419 = vmatpush1.msra.mxu0 0.0
      %2420 = vmatprep.subr.mxu0 0.0
      %2421 = vmatpush1.msra.mxu0 0.0
      %2422 = vmatprep.subr.mxu0 0.0
      %2423 = vmatpush1.msra.mxu0 0.0
      %2424 = vmatprep.subr.mxu0 0.0
      %2425 = vmatpush1.msra.mxu0 0.0
      %2426 = vmatprep.subr.mxu0 0.0
      %2427 = vmatpush1.msra.mxu0 0.0
      %2428 = vmatprep.subr.mxu0 0.0
      %2429 = vmatpush1.msra.mxu0 0.0
      %2430 = vmatprep.subr.mxu0 0.0
      %2431 = vmatpush1.msra.mxu0 0.0
      %2432 = vmatprep.subr.mxu0 0.0
      %2433 = vmatpush1.msra.mxu0 0.0
      %2434 = vmatprep.subr.mxu0 0.0
      %2435 = vmatpush1.msra.mxu0 0.0
      %2436 = vmatprep.subr.mxu0 0.0
      %2437 = vmatpush1.msra.mxu0 0.0
      %2438 = vmatprep.subr.mxu0 0.0
      %2439 = vmatpush1.msra.mxu0 0.0
      %2440 = vmatprep.subr.mxu0 0.0
      %2441 = vmatpush1.msra.mxu0 0.0
      %2442 = vmatprep.subr.mxu0 0.0
      %2443 = vmatpush1.msra.mxu0 0.0
      %2444 = vmatprep.mubr.f32.mxu0 0.0
      %2445 = vmatmul.mubr.f32.gmra.mrb[0].mxu0 %v2366
      %v2446 = vpop.f32.mrb[0].mxu0
      %v2447 = vadd.f32 0.0, %v2446
      %v2448 = vpop.f32.mrb[0].mxu0
      %v2449 = vadd.f32 0.0, %v2448
      %2450 = vdwg.mxu0
      %2451 = vmatprep.subr.mxu0 %v1841
      %2452 = vmatpush1.msra.mxu0 %v1840
      %2453 = vmatprep.subr.mxu0 %v1845
      %2454 = vmatpush1.msra.mxu0 %v1844
      %2455 = vmatprep.subr.mxu0 %v1849
      %2456 = vmatpush1.msra.mxu0 %v1848
      %2457 = vmatprep.subr.mxu0 %v1853
      %2458 = vmatpush1.msra.mxu0 %v1852
      %2459 = vmatprep.subr.mxu0 %v1857
      %2460 = vmatpush1.msra.mxu0 %v1856
      %2461 = vmatprep.subr.mxu0 %v1861
      %2462 = vmatpush1.msra.mxu0 %v1860
      %2463 = vmatprep.subr.mxu0 %v1865
      %2464 = vmatpush1.msra.mxu0 %v1864
      %2465 = vmatprep.subr.mxu0 %v1869
      %2466 = vmatpush1.msra.mxu0 %v1868
      %2467 = vmatprep.subr.mxu0 %v1873
      %2468 = vmatpush1.msra.mxu0 %v1872
      %2469 = vmatprep.subr.mxu0 %v1877
      %2470 = vmatpush1.msra.mxu0 %v1876
      %2471 = vmatprep.subr.mxu0 %v1881
      %2472 = vmatpush1.msra.mxu0 %v1880
      %2473 = vmatprep.subr.mxu0 %v1885
      %2474 = vmatpush1.msra.mxu0 %v1884
      %2475 = vmatprep.subr.mxu0 %v2378
      %2476 = vmatpush1.msra.mxu0 %v2375
      %2477 = vmatprep.subr.mxu0 0.0
      %2478 = vmatpush1.msra.mxu0 0.0
      %2479 = vmatprep.subr.mxu0 0.0
      %2480 = vmatpush1.msra.mxu0 0.0
      %2481 = vmatprep.subr.mxu0 0.0
      %2482 = vmatpush1.msra.mxu0 0.0
      %2483 = vmatprep.subr.mxu0 0.0
      %2484 = vmatpush1.msra.mxu0 0.0
      %2485 = vmatprep.subr.mxu0 0.0
      %2486 = vmatpush1.msra.mxu0 0.0
      %2487 = vmatprep.subr.mxu0 0.0
      %2488 = vmatpush1.msra.mxu0 0.0
      %2489 = vmatprep.subr.mxu0 0.0
      %2490 = vmatpush1.msra.mxu0 0.0
      %2491 = vmatprep.subr.mxu0 0.0
      %2492 = vmatpush1.msra.mxu0 0.0
      %2493 = vmatprep.subr.mxu0 0.0
      %2494 = vmatpush1.msra.mxu0 0.0
      %2495 = vmatprep.subr.mxu0 0.0
      %2496 = vmatpush1.msra.mxu0 0.0
      %2497 = vmatprep.subr.mxu0 0.0
      %2498 = vmatpush1.msra.mxu0 0.0
      %2499 = vmatprep.subr.mxu0 0.0
      %2500 = vmatpush1.msra.mxu0 0.0
      %2501 = vmatprep.subr.mxu0 0.0
      %2502 = vmatpush1.msra.mxu0 0.0
      %2503 = vmatprep.subr.mxu0 0.0
      %2504 = vmatpush1.msra.mxu0 0.0
      %2505 = vmatprep.subr.mxu0 0.0
      %2506 = vmatpush1.msra.mxu0 0.0
      %2507 = vmatprep.subr.mxu0 0.0
      %2508 = vmatpush1.msra.mxu0 0.0
      %2509 = vmatprep.subr.mxu0 0.0
      %2510 = vmatpush1.msra.mxu0 0.0
      %2511 = vmatprep.subr.mxu0 0.0
      %2512 = vmatpush1.msra.mxu0 0.0
      %2513 = vmatprep.subr.mxu0 0.0
      %2514 = vmatpush1.msra.mxu0 0.0
      %2515 = vmatprep.mubr.f32.mxu0 0.0
      %2516 = vmatmul.mubr.f32.gmra.mrb[0].mxu0 %v2366
      %v2517 = vpop.f32.mrb[0].mxu0
      %v2518 = vadd.f32 0.0, %v2517
      %v2519 = vpop.f32.mrb[0].mxu0
      %v2520 = vadd.f32 0.0, %v2519
      %2521 = vdwg.mxu0
      %v2526 = vcombine.low %v2447, %v2449
      %v2527 = vcombine.low %v2518, %v2520
      %v2529 = vunpack.c.l.s4 1966171168
      %v2530 = vunpack.c.0.s8 %v2529
      %v2531 = vlaneseq
      %v2532 = vshrl.u32 %v2531, 7
      %v2533 = vsub.s32 %v2530, %v2532
      %v2534 = vrot.slane %v2526, %v2533
      %v2536 = vunpack.c.l.s4 1966171168
      %v2537 = vunpack.c.0.s8 %v2536
      %v2538 = vlaneseq
      %v2539 = vshrl.u32 %v2538, 7
      %v2540 = vsub.s32 %v2537, %v2539
      %v2541 = vrot.slane %v2527, %v2540
      %v2542 = vcombine.low %v2534, %v2541
      %v2544 = vunpack.c.l.s4 1966171168
      %v2545 = vunpack.c.0.s8 %v2544
      %v2546 = vlaneseq
      %v2547 = vshrl.u32 %v2546, 7
      %v2548 = vsub.s32 %v2545, %v2547
      %v2549 = vrot.slane %v2542, %v2548
      %s2551 = scalar_lea.vmem [#allocation2], 1
      %2552 = vst.msk [vmem:[%s2551] ss:$4 sm:$0xf] %vm1060, %v2549
      %s2553 = scalar_lea.vmem %s249, 1664
      %v2554 = vld [vmem:[%s2553] sm:$0xff]
      %v2555 = vld [vmem:[%s2553 + $0x8] sm:$0xff]
      %v2556 = vld [vmem:[%s2553 + $0x10] sm:$0xff]
      %v2557 = vld [vmem:[%s2553 + $0x18] sm:$0xff]
      %v2558 = vld [vmem:[%s2553 + $0x20] sm:$0xff]
      %v2559 = vld [vmem:[%s2553 + $0x28] sm:$0xff]
      %v2560 = vld [vmem:[%s2553 + $0x30] sm:$0xff]
      %v2561 = vld [vmem:[%s2553 + $0x38] sm:$0xff]
      %v2562 = vld [vmem:[%s2553 + $0x40] sm:$0xff]
      %v2563 = vld [vmem:[%s2553 + $0x48] sm:$0xff]
      %v2564 = vld [vmem:[%s2553 + $0x50] sm:$0xff]
      %v2565 = vld [vmem:[%s2553 + $0x58] sm:$0xff]
      %v2566 = vld [vmem:[%s2553 + $0x60] sm:$0xff]
      %v2567 = vld [vmem:[%s2553 + $0x68] sm:$0xff]
      %v2568 = vld [vmem:[%s2553 + $0x70] sm:$0xff]
      %v2569 = vld [vmem:[%s2553 + $0x78] sm:$0xff]
      %v2570 = vld [vmem:[%s2553 + $0x80] sm:$0xff]
      %v2571 = vld [vmem:[%s2553 + $0x88] sm:$0xff]
      %v2572 = vld [vmem:[%s2553 + $0x90] sm:$0xff]
      %v2573 = vld [vmem:[%s2553 + $0x98] sm:$0xff]
      %v2574 = vld [vmem:[%s2553 + $0xa0] sm:$0xff]
      %v2575 = vld [vmem:[%s2553 + $0xa8] sm:$0xff]
      %v2576 = vld [vmem:[%s2553 + $0xb0] sm:$0xff]
      %v2577 = vld [vmem:[%s2553 + $0xb8] sm:$0xff]
      %v2578 = vld [vmem:[%s2553 + $0xc0] sm:$0xff]
      %v2579 = vld [vmem:[%s2553 + $0xc8] sm:$0xff]
      %v2580 = vld [vmem:[%s2553 + $0xd0] sm:$0xff]
      %v2581 = vld [vmem:[%s2553 + $0xd8] sm:$0xff]
      %v2582 = vld [vmem:[%s2553 + $0xe0] sm:$0xff]
      %v2583 = vld [vmem:[%s2553 + $0xe8] sm:$0xff]
      %v2584 = vld [vmem:[%s2553 + $0xf0] sm:$0xff]
      %v2585 = vld [vmem:[%s2553 + $0xf8] sm:$0xff]
      %v2586 = vld [vmem:[%s2553 + $0x100] sm:$0xff]
      %v2587 = vld [vmem:[%s2553 + $0x108] sm:$0xff]
      %v2588 = vld [vmem:[%s2553 + $0x110] sm:$0xff]
      %v2589 = vld [vmem:[%s2553 + $0x118] sm:$0xff]
      %v2590 = vld [vmem:[%s2553 + $0x120] sm:$0xff]
      %v2591 = vld [vmem:[%s2553 + $0x128] sm:$0xff]
      %v2592 = vld [vmem:[%s2553 + $0x130] sm:$0xff]
      %v2593 = vld [vmem:[%s2553 + $0x138] sm:$0xff]
      %v2594 = vld [vmem:[%s2553 + $0x140] sm:$0xff]
      %v2595 = vld [vmem:[%s2553 + $0x148] sm:$0xff]
      %v2596 = vld [vmem:[%s2553 + $0x150] sm:$0xff]
      %v2597 = vld [vmem:[%s2553 + $0x158] sm:$0xff]
      %v2598 = vld [vmem:[%s2553 + $0x160] sm:$0xff]
      %v2599 = vld [vmem:[%s2553 + $0x168] sm:$0xff]
      %v2600 = vld [vmem:[%s2553 + $0x170] sm:$0xff]
      %v2601 = vld [vmem:[%s2553 + $0x178] sm:$0xff]
      %v2602 = vld [vmem:[%s2553 + $0x180] sm:$0xf]
      %v2603 = vld [vmem:[%s2553 + $0x188] sm:$0xf]
      %v2604 = vld [vmem:[%s2553 + $0x190] sm:$0xf]
      %v2605 = vld [vmem:[%s2553 + $0x198] sm:$0xf]
      %v2606 = vpack.c.bf16 %v2558, %v2554
      %v2607 = vpack.c.bf16 %v2559, %v2555
      %v2608 = vpack.c.bf16 %v2560, %v2556
      %v2609 = vpack.c.bf16 %v2561, %v2557
      %v2610 = vpack.c.bf16 %v2566, %v2562
      %v2611 = vpack.c.bf16 %v2567, %v2563
      %v2612 = vpack.c.bf16 %v2568, %v2564
      %v2613 = vpack.c.bf16 %v2569, %v2565
      %v2614 = vpack.c.bf16 %v2574, %v2570
      %v2615 = vpack.c.bf16 %v2575, %v2571
      %v2616 = vpack.c.bf16 %v2576, %v2572
      %v2617 = vpack.c.bf16 %v2577, %v2573
      %v2618 = vpack.c.bf16 %v2582, %v2578
      %v2619 = vpack.c.bf16 %v2583, %v2579
      %v2620 = vpack.c.bf16 %v2584, %v2580
      %v2621 = vpack.c.bf16 %v2585, %v2581
      %v2622 = vpack.c.bf16 %v2590, %v2586
      %v2623 = vpack.c.bf16 %v2591, %v2587
      %v2624 = vpack.c.bf16 %v2592, %v2588
      %v2625 = vpack.c.bf16 %v2593, %v2589
      %v2626 = vpack.c.bf16 %v2598, %v2594
      %v2627 = vpack.c.bf16 %v2599, %v2595
      %v2628 = vpack.c.bf16 %v2600, %v2596
      %v2629 = vpack.c.bf16 %v2601, %v2597
      %v2630 = vpack.c.bf16 %v2602, %v2602
      %v2631 = vpack.c.bf16 %v2603, %v2603
      %v2632 = vpack.c.bf16 %v2604, %v2604
      %v2633 = vpack.c.bf16 %v2605, %v2605
      %v2635 = vsel %vm417, %v2609, 0
      %v2638 = vsel %vm417, %v2613, 0
      %v2641 = vsel %vm417, %v2617, 0
      %v2644 = vsel %vm417, %v2621, 0
      %v2647 = vsel %vm417, %v2625, 0
      %v2650 = vsel %vm417, %v2629, 0
      %v2653 = vsel %vm417, %v2633, 0
      %2655 = vmatprep.subr.bf16.mxu0 %v2607
      %2656 = vmatpush1.bf16.xpose.msra.mxu0 %v2606
      %2657 = vmatprep.subr.bf16.mxu0 %v2611
      %2658 = vmatpush1.bf16.xpose.msra.mxu0 %v2610
      %2659 = vmatprep.subr.bf16.mxu0 %v2615
      %2660 = vmatpush1.bf16.xpose.msra.mxu0 %v2614
      %2661 = vmatprep.subr.bf16.mxu0 %v2619
      %2662 = vmatpush1.bf16.xpose.msra.mxu0 %v2618
      %2663 = vmatprep.subr.bf16.mxu0 %v2623
      %2664 = vmatpush1.bf16.xpose.msra.mxu0 %v2622
      %2665 = vmatprep.subr.bf16.mxu0 %v2627
      %2666 = vmatpush1.bf16.xpose.msra.mxu0 %v2626
      %2667 = vmatprep.subr.bf16.mxu0 %v2631
      %2668 = vmatpush1.bf16.xpose.msra.mxu0 %v2630
      %2669 = vmatprep.subr.bf16.mxu0 0
      %2670 = vmatpush1.bf16.xpose.msra.mxu0 0
      %2671 = vmatprep.subr.bf16.mxu0 0
      %2672 = vmatpush1.bf16.xpose.msra.mxu0 0
      %2673 = vmatprep.subr.bf16.mxu0 0
      %2674 = vmatpush1.bf16.xpose.msra.mxu0 0
      %2675 = vmatprep.subr.bf16.mxu0 0
      %2676 = vmatpush1.bf16.xpose.msra.mxu0 0
      %2677 = vmatprep.subr.bf16.mxu0 0
      %2678 = vmatpush1.bf16.xpose.msra.mxu0 0
      %2679 = vmatprep.subr.bf16.mxu0 0
      %2680 = vmatpush1.bf16.xpose.msra.mxu0 0
      %2681 = vmatprep.subr.bf16.mxu0 0
      %2682 = vmatpush1.bf16.xpose.msra.mxu0 0
      %2683 = vmatprep.subr.bf16.mxu0 0
      %2684 = vmatpush1.bf16.xpose.msra.mxu0 0
      %2685 = vmatprep.subr.bf16.mxu0 0
      %2686 = vmatpush1.bf16.xpose.msra.mxu0 0
      %2687 = vmatprep.mubr.bf16.mxu0 %v1810
      %2688 = vmatmul.mubr.bf16.gmra.mrb[0].mxu0 %v1809
      %v2689 = vpop.f32.mrb[0].mxu0
      %v2690 = vadd.f32 0.0, %v2689
      %v2691 = vpop.f32.mrb[0].mxu0
      %v2692 = vpop.f32.mrb[0].mxu0
      %v2693 = vadd.f32 0.0, %v2692
      %v2694 = vpop.f32.mrb[0].mxu0
      %2695 = vmatprep.mubr.bf16.mxu0 %v1814
      %2696 = vmatmul.mubr.bf16.gmra.mrb[0].mxu0 %v1813
      %v2697 = vpop.f32.mrb[0].mxu0
      %v2698 = vadd.f32 0.0, %v2697
      %v2699 = vpop.f32.mrb[0].mxu0
      %v2700 = vpop.f32.mrb[0].mxu0
      %v2701 = vadd.f32 0.0, %v2700
      %v2702 = vpop.f32.mrb[0].mxu0
      %2703 = vmatprep.mubr.bf16.mxu0 %v1818
      %2704 = vmatmul.mubr.bf16.gmra.mrb[0].mxu0 %v1817
      %v2705 = vpop.f32.mrb[0].mxu0
      %v2706 = vadd.f32 0.0, %v2705
      %v2707 = vpop.f32.mrb[0].mxu0
      %v2708 = vpop.f32.mrb[0].mxu0
      %v2709 = vadd.f32 0.0, %v2708
      %v2710 = vpop.f32.mrb[0].mxu0
      %2711 = vmatprep.mubr.bf16.mxu0 %v1822
      %2712 = vmatmul.mubr.bf16.gmra.mrb[0].mxu0 %v1821
      %v2713 = vpop.f32.mrb[0].mxu0
      %v2714 = vadd.f32 0.0, %v2713
      %v2715 = vpop.f32.mrb[0].mxu0
      %v2716 = vpop.f32.mrb[0].mxu0
      %v2717 = vadd.f32 0.0, %v2716
      %v2718 = vpop.f32.mrb[0].mxu0
      %2719 = vmatprep.mubr.bf16.mxu0 %v1826
      %2720 = vmatmul.mubr.bf16.gmra.mrb[0].mxu0 %v1825
      %v2721 = vpop.f32.mrb[0].mxu0
      %v2722 = vadd.f32 0.0, %v2721
      %v2723 = vpop.f32.mrb[0].mxu0
      %v2724 = vpop.f32.mrb[0].mxu0
      %v2725 = vadd.f32 0.0, %v2724
      %v2726 = vpop.f32.mrb[0].mxu0
      %2727 = vmatprep.mubr.bf16.mxu0 %v1830
      %2728 = vmatmul.mubr.bf16.gmra.mrb[0].mxu0 %v1829
      %v2729 = vpop.f32.mrb[0].mxu0
      %v2730 = vadd.f32 0.0, %v2729
      %v2731 = vpop.f32.mrb[0].mxu0
      %v2732 = vpop.f32.mrb[0].mxu0
      %v2733 = vadd.f32 0.0, %v2732
      %v2734 = vpop.f32.mrb[0].mxu0
      %2735 = vmatprep.mubr.bf16.mxu0 %v1834
      %2736 = vmatmul.mubr.bf16.gmra.mrb[0].mxu0 %v1833
      %v2737 = vpop.f32.mrb[0].mxu0
      %v2738 = vadd.f32 0.0, %v2737
      %v2739 = vpop.f32.mrb[0].mxu0
      %v2740 = vpop.f32.mrb[0].mxu0
      %v2741 = vpop.f32.mrb[0].mxu0
      %2742 = vdwg.mxu0
      %2743 = vmatprep.subr.bf16.mxu0 %v2635
      %2744 = vmatpush1.bf16.xpose.msra.mxu0 %v2608
      %2745 = vmatprep.subr.bf16.mxu0 %v2638
      %2746 = vmatpush1.bf16.xpose.msra.mxu0 %v2612
      %2747 = vmatprep.subr.bf16.mxu0 %v2641
      %2748 = vmatpush1.bf16.xpose.msra.mxu0 %v2616
      %2749 = vmatprep.subr.bf16.mxu0 %v2644
      %2750 = vmatpush1.bf16.xpose.msra.mxu0 %v2620
      %2751 = vmatprep.subr.bf16.mxu0 %v2647
      %2752 = vmatpush1.bf16.xpose.msra.mxu0 %v2624
      %2753 = vmatprep.subr.bf16.mxu0 %v2650
      %2754 = vmatpush1.bf16.xpose.msra.mxu0 %v2628
      %2755 = vmatprep.subr.bf16.mxu0 %v2653
      %2756 = vmatpush1.bf16.xpose.msra.mxu0 %v2632
      %2757 = vmatprep.subr.bf16.mxu0 0
      %2758 = vmatpush1.bf16.xpose.msra.mxu0 0
      %2759 = vmatprep.subr.bf16.mxu0 0
      %2760 = vmatpush1.bf16.xpose.msra.mxu0 0
      %2761 = vmatprep.subr.bf16.mxu0 0
      %2762 = vmatpush1.bf16.xpose.msra.mxu0 0
      %2763 = vmatprep.subr.bf16.mxu0 0
      %2764 = vmatpush1.bf16.xpose.msra.mxu0 0
      %2765 = vmatprep.subr.bf16.mxu0 0
      %2766 = vmatpush1.bf16.xpose.msra.mxu0 0
      %2767 = vmatprep.subr.bf16.mxu0 0
      %2768 = vmatpush1.bf16.xpose.msra.mxu0 0
      %2769 = vmatprep.subr.bf16.mxu0 0
      %2770 = vmatpush1.bf16.xpose.msra.mxu0 0
      %2771 = vmatprep.subr.bf16.mxu0 0
      %2772 = vmatpush1.bf16.xpose.msra.mxu0 0
      %2773 = vmatprep.subr.bf16.mxu0 0
      %2774 = vmatpush1.bf16.xpose.msra.mxu0 0
      %2775 = vmatprep.mubr.bf16.mxu0 %v1919
      %2776 = vmatmul.mubr.bf16.gmra.mrb[0].mxu0 %v1811
      %v2777 = vpop.f32.mrb[0].mxu0
      %v2778 = vadd.f32 %v2690, %v2777
      %v2779 = vpop.f32.mrb[0].mxu0
      %v2780 = vpop.f32.mrb[0].mxu0
      %v2781 = vadd.f32 %v2693, %v2780
      %v2782 = vpop.f32.mrb[0].mxu0
      %2783 = vmatprep.mubr.bf16.mxu0 %v1922
      %2784 = vmatmul.mubr.bf16.gmra.mrb[0].mxu0 %v1815
      %v2785 = vpop.f32.mrb[0].mxu0
      %v2786 = vadd.f32 %v2698, %v2785
      %v2787 = vpop.f32.mrb[0].mxu0
      %v2788 = vpop.f32.mrb[0].mxu0
      %v2789 = vadd.f32 %v2701, %v2788
      %v2790 = vpop.f32.mrb[0].mxu0
      %2791 = vmatprep.mubr.bf16.mxu0 %v1925
      %2792 = vmatmul.mubr.bf16.gmra.mrb[0].mxu0 %v1819
      %v2793 = vpop.f32.mrb[0].mxu0
      %v2794 = vadd.f32 %v2706, %v2793
      %v2795 = vpop.f32.mrb[0].mxu0
      %v2796 = vpop.f32.mrb[0].mxu0
      %v2797 = vadd.f32 %v2709, %v2796
      %v2798 = vpop.f32.mrb[0].mxu0
      %2799 = vmatprep.mubr.bf16.mxu0 %v1928
      %2800 = vmatmul.mubr.bf16.gmra.mrb[0].mxu0 %v1823
      %v2801 = vpop.f32.mrb[0].mxu0
      %v2802 = vadd.f32 %v2714, %v2801
      %v2803 = vpop.f32.mrb[0].mxu0
      %v2804 = vpop.f32.mrb[0].mxu0
      %v2805 = vadd.f32 %v2717, %v2804
      %v2806 = vpop.f32.mrb[0].mxu0
      %2807 = vmatprep.mubr.bf16.mxu0 %v1931
      %2808 = vmatmul.mubr.bf16.gmra.mrb[0].mxu0 %v1827
      %v2809 = vpop.f32.mrb[0].mxu0
      %v2810 = vadd.f32 %v2722, %v2809
      %v2811 = vpop.f32.mrb[0].mxu0
      %v2812 = vpop.f32.mrb[0].mxu0
      %v2813 = vadd.f32 %v2725, %v2812
      %v2814 = vpop.f32.mrb[0].mxu0
      %2815 = vmatprep.mubr.bf16.mxu0 %v1934
      %2816 = vmatmul.mubr.bf16.gmra.mrb[0].mxu0 %v1831
      %v2817 = vpop.f32.mrb[0].mxu0
      %v2818 = vadd.f32 %v2730, %v2817
      %v2819 = vpop.f32.mrb[0].mxu0
      %v2820 = vpop.f32.mrb[0].mxu0
      %v2821 = vadd.f32 %v2733, %v2820
      %v2822 = vpop.f32.mrb[0].mxu0
      %2823 = vmatprep.mubr.bf16.mxu0 %v1937
      %2824 = vmatmul.mubr.bf16.gmra.mrb[0].mxu0 %v1835
      %v2825 = vpop.f32.mrb[0].mxu0
      %v2826 = vadd.f32 %v2738, %v2825
      %v2827 = vpop.f32.mrb[0].mxu0
      %v2828 = vpop.f32.mrb[0].mxu0
      %v2829 = vpop.f32.mrb[0].mxu0
      %2830 = vdwg.mxu0
      %v2831 = vmul.f32 %v2778, 0.002
      %v2832 = vmul.f32 %v2781, 0.002
      %v2833 = vmul.f32 %v2786, 0.002
      %v2834 = vmul.f32 %v2789, 0.002
      %v2835 = vmul.f32 %v2794, 0.002
      %v2836 = vmul.f32 %v2797, 0.002
      %v2837 = vmul.f32 %v2802, 0.002
      %v2838 = vmul.f32 %v2805, 0.002
      %v2839 = vmul.f32 %v2810, 0.002
      %v2840 = vmul.f32 %v2813, 0.002
      %v2841 = vmul.f32 %v2818, 0.002
      %v2842 = vmul.f32 %v2821, 0.002
      %v2843 = vmul.f32 %v2826, 0.002
      %v2844 = vsel %vm649, %v2831, -inf
      %2845 = vmax.xlane.f32.xlu0 %v2844
      %v2846 = vpop.xlane.xlu0 %2845
      %v2847 = vsel %vm649, %v2832, -inf
      %2848 = vmax.xlane.f32.xlu0 %v2847
      %v2849 = vpop.xlane.xlu0 %2848
      %v2850 = vsel %vm649, %v2833, -inf
      %2851 = vmax.xlane.f32.xlu0 %v2850
      %v2852 = vpop.xlane.xlu0 %2851
      %v2853 = vsel %vm649, %v2834, -inf
      %2854 = vmax.xlane.f32.xlu0 %v2853
      %v2855 = vpop.xlane.xlu0 %2854
      %v2856 = vsel %vm649, %v2835, -inf
      %2857 = vmax.xlane.f32.xlu0 %v2856
      %v2858 = vpop.xlane.xlu0 %2857
      %v2859 = vsel %vm649, %v2836, -inf
      %2860 = vmax.xlane.f32.xlu0 %v2859
      %v2861 = vpop.xlane.xlu0 %2860
      %v2862 = vsel %vm649, %v2837, -inf
      %2863 = vmax.xlane.f32.xlu0 %v2862
      %v2864 = vpop.xlane.xlu0 %2863
      %v2865 = vsel %vm649, %v2838, -inf
      %2866 = vmax.xlane.f32.xlu0 %v2865
      %v2867 = vpop.xlane.xlu0 %2866
      %v2868 = vsel %vm649, %v2839, -inf
      %2869 = vmax.xlane.f32.xlu0 %v2868
      %v2870 = vpop.xlane.xlu0 %2869
      %v2871 = vsel %vm649, %v2840, -inf
      %2872 = vmax.xlane.f32.xlu0 %v2871
      %v2873 = vpop.xlane.xlu0 %2872
      %v2874 = vsel %vm649, %v2841, -inf
      %2875 = vmax.xlane.f32.xlu0 %v2874
      %v2876 = vpop.xlane.xlu0 %2875
      %v2877 = vsel %vm649, %v2842, -inf
      %2878 = vmax.xlane.f32.xlu0 %v2877
      %v2879 = vpop.xlane.xlu0 %2878
      %v2880 = vsel %vm686, %v2843, -inf
      %2881 = vmax.xlane.f32.xlu0 %v2880
      %v2882 = vpop.xlane.xlu0 %2881
      %v2883 = vsub.f32 %v2831, %v2846
      %v2884 = vsub.f32 %v2832, %v2849
      %v2885 = vsub.f32 %v2833, %v2852
      %v2886 = vsub.f32 %v2834, %v2855
      %v2887 = vsub.f32 %v2835, %v2858
      %v2888 = vsub.f32 %v2836, %v2861
      %v2889 = vsub.f32 %v2837, %v2864
      %v2890 = vsub.f32 %v2838, %v2867
      %v2891 = vsub.f32 %v2839, %v2870
      %v2892 = vsub.f32 %v2840, %v2873
      %v2893 = vsub.f32 %v2841, %v2876
      %v2894 = vsub.f32 %v2842, %v2879
      %v2895 = vsub.f32 %v2843, %v2882
      %v2896 = vmul.f32 %v2883, 1.442695
      %v2897 = vpow.pop %v2896
      %v2898 = vmul.f32 %v2884, 1.442695
      %v2899 = vpow.pop %v2898
      %v2900 = vmul.f32 %v2885, 1.442695
      %v2901 = vpow.pop %v2900
      %v2902 = vmul.f32 %v2886, 1.442695
      %v2903 = vpow.pop %v2902
      %v2904 = vmul.f32 %v2887, 1.442695
      %v2905 = vpow.pop %v2904
      %v2906 = vmul.f32 %v2888, 1.442695
      %v2907 = vpow.pop %v2906
      %v2908 = vmul.f32 %v2889, 1.442695
      %v2909 = vpow.pop %v2908
      %v2910 = vmul.f32 %v2890, 1.442695
      %v2911 = vpow.pop %v2910
      %v2912 = vmul.f32 %v2891, 1.442695
      %v2913 = vpow.pop %v2912
      %v2914 = vmul.f32 %v2892, 1.442695
      %v2915 = vpow.pop %v2914
      %v2916 = vmul.f32 %v2893, 1.442695
      %v2917 = vpow.pop %v2916
      %v2918 = vmul.f32 %v2894, 1.442695
      %v2919 = vpow.pop %v2918
      %v2920 = vmul.f32 %v2895, 1.442695
      %v2921 = vpow.pop %v2920
      %v2922 = vsel %vm649, %v2897, 0.0
      %2923 = vadd.xlane.f32.xlu0 %v2922
      %v2924 = vpop.xlane.xlu0 %2923
      %v2925 = vsel %vm649, %v2899, 0.0
      %2926 = vadd.xlane.f32.xlu0 %v2925
      %v2927 = vpop.xlane.xlu0 %2926
      %v2928 = vsel %vm649, %v2901, 0.0
      %2929 = vadd.xlane.f32.xlu0 %v2928
      %v2930 = vpop.xlane.xlu0 %2929
      %v2931 = vsel %vm649, %v2903, 0.0
      %2932 = vadd.xlane.f32.xlu0 %v2931
      %v2933 = vpop.xlane.xlu0 %2932
      %v2934 = vsel %vm649, %v2905, 0.0
      %2935 = vadd.xlane.f32.xlu0 %v2934
      %v2936 = vpop.xlane.xlu0 %2935
      %v2937 = vsel %vm649, %v2907, 0.0
      %2938 = vadd.xlane.f32.xlu0 %v2937
      %v2939 = vpop.xlane.xlu0 %2938
      %v2940 = vsel %vm649, %v2909, 0.0
      %2941 = vadd.xlane.f32.xlu0 %v2940
      %v2942 = vpop.xlane.xlu0 %2941
      %v2943 = vsel %vm649, %v2911, 0.0
      %2944 = vadd.xlane.f32.xlu0 %v2943
      %v2945 = vpop.xlane.xlu0 %2944
      %v2946 = vsel %vm649, %v2913, 0.0
      %2947 = vadd.xlane.f32.xlu0 %v2946
      %v2948 = vpop.xlane.xlu0 %2947
      %v2949 = vsel %vm649, %v2915, 0.0
      %2950 = vadd.xlane.f32.xlu0 %v2949
      %v2951 = vpop.xlane.xlu0 %2950
      %v2952 = vsel %vm649, %v2917, 0.0
      %2953 = vadd.xlane.f32.xlu0 %v2952
      %v2954 = vpop.xlane.xlu0 %2953
      %v2955 = vsel %vm649, %v2919, 0.0
      %2956 = vadd.xlane.f32.xlu0 %v2955
      %v2957 = vpop.xlane.xlu0 %2956
      %v2958 = vsel %vm686, %v2921, 0.0
      %2959 = vadd.xlane.f32.xlu0 %v2958
      %v2960 = vpop.xlane.xlu0 %2959
      %v2961 = vrcp.pop %v2924
      %v2962 = vrcp.pop %v2927
      %v2963 = vrcp.pop %v2930
      %v2964 = vrcp.pop %v2933
      %v2965 = vrcp.pop %v2936
      %v2966 = vrcp.pop %v2939
      %v2967 = vrcp.pop %v2942
      %v2968 = vrcp.pop %v2945
      %v2969 = vrcp.pop %v2948
      %v2970 = vrcp.pop %v2951
      %v2971 = vrcp.pop %v2954
      %v2972 = vrcp.pop %v2957
      %v2973 = vrcp.pop %v2960
      %v2974 = vmul.f32 %v2897, %v2961
      %v2975 = vmul.f32 %v2899, %v2962
      %v2976 = vmul.f32 %v2901, %v2963
      %v2977 = vmul.f32 %v2903, %v2964
      %v2978 = vmul.f32 %v2905, %v2965
      %v2979 = vmul.f32 %v2907, %v2966
      %v2980 = vmul.f32 %v2909, %v2967
      %v2981 = vmul.f32 %v2911, %v2968
      %v2982 = vmul.f32 %v2913, %v2969
      %v2983 = vmul.f32 %v2915, %v2970
      %v2984 = vmul.f32 %v2917, %v2971
      %v2985 = vmul.f32 %v2919, %v2972
      %v2986 = vmul.f32 %v2921, %v2973
      %v2988 = vsel %vm797, %v2986, 0
      %2990 = vmatprep.subr.mxu0 0.0
      %2991 = vmatpush1.msra.mxu0 %v2974
      %2992 = vmatprep.subr.mxu0 0.0
      %2993 = vmatpush1.msra.mxu0 %v2975
      %2994 = vmatprep.subr.mxu0 0.0
      %2995 = vmatpush1.msra.mxu0 %v2976
      %2996 = vmatprep.subr.mxu0 0.0
      %2997 = vmatpush1.msra.mxu0 %v2977
      %2998 = vmatprep.subr.mxu0 0.0
      %2999 = vmatpush1.msra.mxu0 %v2978
      %3000 = vmatprep.subr.mxu0 0.0
      %3001 = vmatpush1.msra.mxu0 %v2979
      %3002 = vmatprep.subr.mxu0 0.0
      %3003 = vmatpush1.msra.mxu0 %v2980
      %3004 = vmatprep.subr.mxu0 0.0
      %3005 = vmatpush1.msra.mxu0 %v2981
      %3006 = vmatprep.subr.mxu0 0.0
      %3007 = vmatpush1.msra.mxu0 %v2982
      %3008 = vmatprep.subr.mxu0 0.0
      %3009 = vmatpush1.msra.mxu0 %v2983
      %3010 = vmatprep.subr.mxu0 0.0
      %3011 = vmatpush1.msra.mxu0 %v2984
      %3012 = vmatprep.subr.mxu0 0.0
      %3013 = vmatpush1.msra.mxu0 %v2985
      %3014 = vmatprep.subr.mxu0 0.0
      %3015 = vmatpush1.msra.mxu0 %v2988
      %3016 = vmatprep.subr.mxu0 0.0
      %3017 = vmatpush1.msra.mxu0 0.0
      %3018 = vmatprep.subr.mxu0 0.0
      %3019 = vmatpush1.msra.mxu0 0.0
      %3020 = vmatprep.subr.mxu0 0.0
      %3021 = vmatpush1.msra.mxu0 0.0
      %3022 = vmatprep.subr.mxu0 0.0
      %3023 = vmatpush1.msra.mxu0 0.0
      %3024 = vmatprep.subr.mxu0 0.0
      %3025 = vmatpush1.msra.mxu0 0.0
      %3026 = vmatprep.subr.mxu0 0.0
      %3027 = vmatpush1.msra.mxu0 0.0
      %3028 = vmatprep.subr.mxu0 0.0
      %3029 = vmatpush1.msra.mxu0 0.0
      %3030 = vmatprep.subr.mxu0 0.0
      %3031 = vmatpush1.msra.mxu0 0.0
      %3032 = vmatprep.subr.mxu0 0.0
      %3033 = vmatpush1.msra.mxu0 0.0
      %3034 = vmatprep.subr.mxu0 0.0
      %3035 = vmatpush1.msra.mxu0 0.0
      %3036 = vmatprep.subr.mxu0 0.0
      %3037 = vmatpush1.msra.mxu0 0.0
      %3038 = vmatprep.subr.mxu0 0.0
      %3039 = vmatpush1.msra.mxu0 0.0
      %3040 = vmatprep.subr.mxu0 0.0
      %3041 = vmatpush1.msra.mxu0 0.0
      %3042 = vmatprep.subr.mxu0 0.0
      %3043 = vmatpush1.msra.mxu0 0.0
      %3044 = vmatprep.subr.mxu0 0.0
      %3045 = vmatpush1.msra.mxu0 0.0
      %3046 = vmatprep.subr.mxu0 0.0
      %3047 = vmatpush1.msra.mxu0 0.0
      %3048 = vmatprep.subr.mxu0 0.0
      %3049 = vmatpush1.msra.mxu0 0.0
      %3050 = vmatprep.subr.mxu0 0.0
      %3051 = vmatpush1.msra.mxu0 0.0
      %3052 = vmatprep.subr.mxu0 0.0
      %3053 = vmatpush1.msra.mxu0 0.0
      %3054 = vmatprep.mubr.f32.mxu0 0.0
      %3055 = vmatmul.mubr.f32.gmra.mrb[0].mxu0 %v795
      %v3056 = vpop.f32.mrb[0].mxu0
      %v3057 = vadd.f32 0.0, %v3056
      %v3058 = vpop.f32.mrb[0].mxu0
      %3059 = vdwg.mxu0
      %v3061 = vsel %vm649, %v3057, 0
      %v3064 = vsel %vm797, %v2602, 0
      %v3067 = vsel %vm797, %v2603, 0
      %v3070 = vsel %vm797, %v2604, 0
      %v3073 = vsel %vm797, %v2605, 0
      %3075 = vmatprep.subr.mxu0 %v2555
      %3076 = vmatpush1.msra.mxu0 %v2554
      %3077 = vmatprep.subr.mxu0 %v2559
      %3078 = vmatpush1.msra.mxu0 %v2558
      %3079 = vmatprep.subr.mxu0 %v2563
      %3080 = vmatpush1.msra.mxu0 %v2562
      %3081 = vmatprep.subr.mxu0 %v2567
      %3082 = vmatpush1.msra.mxu0 %v2566
      %3083 = vmatprep.subr.mxu0 %v2571
      %3084 = vmatpush1.msra.mxu0 %v2570
      %3085 = vmatprep.subr.mxu0 %v2575
      %3086 = vmatpush1.msra.mxu0 %v2574
      %3087 = vmatprep.subr.mxu0 %v2579
      %3088 = vmatpush1.msra.mxu0 %v2578
      %3089 = vmatprep.subr.mxu0 %v2583
      %3090 = vmatpush1.msra.mxu0 %v2582
      %3091 = vmatprep.subr.mxu0 %v2587
      %3092 = vmatpush1.msra.mxu0 %v2586
      %3093 = vmatprep.subr.mxu0 %v2591
      %3094 = vmatpush1.msra.mxu0 %v2590
      %3095 = vmatprep.subr.mxu0 %v2595
      %3096 = vmatpush1.msra.mxu0 %v2594
      %3097 = vmatprep.subr.mxu0 %v2599
      %3098 = vmatpush1.msra.mxu0 %v2598
      %3099 = vmatprep.subr.mxu0 %v3067
      %3100 = vmatpush1.msra.mxu0 %v3064
      %3101 = vmatprep.subr.mxu0 0.0
      %3102 = vmatpush1.msra.mxu0 0.0
      %3103 = vmatprep.subr.mxu0 0.0
      %3104 = vmatpush1.msra.mxu0 0.0
      %3105 = vmatprep.subr.mxu0 0.0
      %3106 = vmatpush1.msra.mxu0 0.0
      %3107 = vmatprep.subr.mxu0 0.0
      %3108 = vmatpush1.msra.mxu0 0.0
      %3109 = vmatprep.subr.mxu0 0.0
      %3110 = vmatpush1.msra.mxu0 0.0
      %3111 = vmatprep.subr.mxu0 0.0
      %3112 = vmatpush1.msra.mxu0 0.0
      %3113 = vmatprep.subr.mxu0 0.0
      %3114 = vmatpush1.msra.mxu0 0.0
      %3115 = vmatprep.subr.mxu0 0.0
      %3116 = vmatpush1.msra.mxu0 0.0
      %3117 = vmatprep.subr.mxu0 0.0
      %3118 = vmatpush1.msra.mxu0 0.0
      %3119 = vmatprep.subr.mxu0 0.0
      %3120 = vmatpush1.msra.mxu0 0.0
      %3121 = vmatprep.subr.mxu0 0.0
      %3122 = vmatpush1.msra.mxu0 0.0
      %3123 = vmatprep.subr.mxu0 0.0
      %3124 = vmatpush1.msra.mxu0 0.0
      %3125 = vmatprep.subr.mxu0 0.0
      %3126 = vmatpush1.msra.mxu0 0.0
      %3127 = vmatprep.subr.mxu0 0.0
      %3128 = vmatpush1.msra.mxu0 0.0
      %3129 = vmatprep.subr.mxu0 0.0
      %3130 = vmatpush1.msra.mxu0 0.0
      %3131 = vmatprep.subr.mxu0 0.0
      %3132 = vmatpush1.msra.mxu0 0.0
      %3133 = vmatprep.subr.mxu0 0.0
      %3134 = vmatpush1.msra.mxu0 0.0
      %3135 = vmatprep.subr.mxu0 0.0
      %3136 = vmatpush1.msra.mxu0 0.0
      %3137 = vmatprep.subr.mxu0 0.0
      %3138 = vmatpush1.msra.mxu0 0.0
      %3139 = vmatprep.mubr.f32.mxu0 0.0
      %3140 = vmatmul.mubr.f32.gmra.mrb[0].mxu0 %v3061
      %v3141 = vpop.f32.mrb[0].mxu0
      %v3142 = vadd.f32 0.0, %v3141
      %v3143 = vpop.f32.mrb[0].mxu0
      %v3144 = vadd.f32 0.0, %v3143
      %3145 = vdwg.mxu0
      %3146 = vmatprep.subr.mxu0 %v2557
      %3147 = vmatpush1.msra.mxu0 %v2556
      %3148 = vmatprep.subr.mxu0 %v2561
      %3149 = vmatpush1.msra.mxu0 %v2560
      %3150 = vmatprep.subr.mxu0 %v2565
      %3151 = vmatpush1.msra.mxu0 %v2564
      %3152 = vmatprep.subr.mxu0 %v2569
      %3153 = vmatpush1.msra.mxu0 %v2568
      %3154 = vmatprep.subr.mxu0 %v2573
      %3155 = vmatpush1.msra.mxu0 %v2572
      %3156 = vmatprep.subr.mxu0 %v2577
      %3157 = vmatpush1.msra.mxu0 %v2576
      %3158 = vmatprep.subr.mxu0 %v2581
      %3159 = vmatpush1.msra.mxu0 %v2580
      %3160 = vmatprep.subr.mxu0 %v2585
      %3161 = vmatpush1.msra.mxu0 %v2584
      %3162 = vmatprep.subr.mxu0 %v2589
      %3163 = vmatpush1.msra.mxu0 %v2588
      %3164 = vmatprep.subr.mxu0 %v2593
      %3165 = vmatpush1.msra.mxu0 %v2592
      %3166 = vmatprep.subr.mxu0 %v2597
      %3167 = vmatpush1.msra.mxu0 %v2596
      %3168 = vmatprep.subr.mxu0 %v2601
      %3169 = vmatpush1.msra.mxu0 %v2600
      %3170 = vmatprep.subr.mxu0 %v3073
      %3171 = vmatpush1.msra.mxu0 %v3070
      %3172 = vmatprep.subr.mxu0 0.0
      %3173 = vmatpush1.msra.mxu0 0.0
      %3174 = vmatprep.subr.mxu0 0.0
      %3175 = vmatpush1.msra.mxu0 0.0
      %3176 = vmatprep.subr.mxu0 0.0
      %3177 = vmatpush1.msra.mxu0 0.0
      %3178 = vmatprep.subr.mxu0 0.0
      %3179 = vmatpush1.msra.mxu0 0.0
      %3180 = vmatprep.subr.mxu0 0.0
      %3181 = vmatpush1.msra.mxu0 0.0
      %3182 = vmatprep.subr.mxu0 0.0
      %3183 = vmatpush1.msra.mxu0 0.0
      %3184 = vmatprep.subr.mxu0 0.0
      %3185 = vmatpush1.msra.mxu0 0.0
      %3186 = vmatprep.subr.mxu0 0.0
      %3187 = vmatpush1.msra.mxu0 0.0
      %3188 = vmatprep.subr.mxu0 0.0
      %3189 = vmatpush1.msra.mxu0 0.0
      %3190 = vmatprep.subr.mxu0 0.0
      %3191 = vmatpush1.msra.mxu0 0.0
      %3192 = vmatprep.subr.mxu0 0.0
      %3193 = vmatpush1.msra.mxu0 0.0
      %3194 = vmatprep.subr.mxu0 0.0
      %3195 = vmatpush1.msra.mxu0 0.0
      %3196 = vmatprep.subr.mxu0 0.0
      %3197 = vmatpush1.msra.mxu0 0.0
      %3198 = vmatprep.subr.mxu0 0.0
      %3199 = vmatpush1.msra.mxu0 0.0
      %3200 = vmatprep.subr.mxu0 0.0
      %3201 = vmatpush1.msra.mxu0 0.0
      %3202 = vmatprep.subr.mxu0 0.0
      %3203 = vmatpush1.msra.mxu0 0.0
      %3204 = vmatprep.subr.mxu0 0.0
      %3205 = vmatpush1.msra.mxu0 0.0
      %3206 = vmatprep.subr.mxu0 0.0
      %3207 = vmatpush1.msra.mxu0 0.0
      %3208 = vmatprep.subr.mxu0 0.0
      %3209 = vmatpush1.msra.mxu0 0.0
      %3210 = vmatprep.mubr.f32.mxu0 0.0
      %3211 = vmatmul.mubr.f32.gmra.mrb[0].mxu0 %v3061
      %v3212 = vpop.f32.mrb[0].mxu0
      %v3213 = vadd.f32 0.0, %v3212
      %v3214 = vpop.f32.mrb[0].mxu0
      %v3215 = vadd.f32 0.0, %v3214
      %3216 = vdwg.mxu0
      %v3221 = vcombine.low %v3142, %v3144
      %v3222 = vcombine.low %v3213, %v3215
      %v3224 = vunpack.c.l.s4 1966171168
      %v3225 = vunpack.c.0.s8 %v3224
      %v3226 = vlaneseq
      %v3227 = vshrl.u32 %v3226, 7
      %v3228 = vsub.s32 %v3225, %v3227
      %v3229 = vrot.slane %v3221, %v3228
      %v3231 = vunpack.c.l.s4 1966171168
      %v3232 = vunpack.c.0.s8 %v3231
      %v3233 = vlaneseq
      %v3234 = vshrl.u32 %v3233, 7
      %v3235 = vsub.s32 %v3232, %v3234
      %v3236 = vrot.slane %v3222, %v3235
      %v3237 = vcombine.low %v3229, %v3236
      %v3239 = vunpack.c.l.s4 1966171168
      %v3240 = vunpack.c.0.s8 %v3239
      %v3241 = vlaneseq
      %v3242 = vshrl.u32 %v3241, 7
      %v3243 = vsub.s32 %v3240, %v3242
      %v3244 = vrot.slane %v3237, %v3243
      %s3246 = scalar_lea.vmem [#allocation3], 1
      %3247 = vst.msk [vmem:[%s3246] ss:$4 sm:$0xf] %vm1060, %v3244
      %s3248 = scalar_lea.vmem %s249, 3328
      %v3249 = vld [vmem:[%s3248] sm:$0xff]
      %v3250 = vld [vmem:[%s3248 + $0x8] sm:$0xff]
      %v3251 = vld [vmem:[%s3248 + $0x10] sm:$0xff]
      %v3252 = vld [vmem:[%s3248 + $0x18] sm:$0xff]
      %v3253 = vld [vmem:[%s3248 + $0x20] sm:$0xff]
      %v3254 = vld [vmem:[%s3248 + $0x28] sm:$0xff]
      %v3255 = vld [vmem:[%s3248 + $0x30] sm:$0xff]
      %v3256 = vld [vmem:[%s3248 + $0x38] sm:$0xff]
      %v3257 = vld [vmem:[%s3248 + $0x40] sm:$0xff]
      %v3258 = vld [vmem:[%s3248 + $0x48] sm:$0xff]
      %v3259 = vld [vmem:[%s3248 + $0x50] sm:$0xff]
      %v3260 = vld [vmem:[%s3248 + $0x58] sm:$0xff]
      %v3261 = vld [vmem:[%s3248 + $0x60] sm:$0xff]
      %v3262 = vld [vmem:[%s3248 + $0x68] sm:$0xff]
      %v3263 = vld [vmem:[%s3248 + $0x70] sm:$0xff]
      %v3264 = vld [vmem:[%s3248 + $0x78] sm:$0xff]
      %v3265 = vld [vmem:[%s3248 + $0x80] sm:$0xff]
      %v3266 = vld [vmem:[%s3248 + $0x88] sm:$0xff]
      %v3267 = vld [vmem:[%s3248 + $0x90] sm:$0xff]
      %v3268 = vld [vmem:[%s3248 + $0x98] sm:$0xff]
      %v3269 = vld [vmem:[%s3248 + $0xa0] sm:$0xff]
      %v3270 = vld [vmem:[%s3248 + $0xa8] sm:$0xff]
      %v3271 = vld [vmem:[%s3248 + $0xb0] sm:$0xff]
      %v3272 = vld [vmem:[%s3248 + $0xb8] sm:$0xff]
      %v3273 = vld [vmem:[%s3248 + $0xc0] sm:$0xff]
      %v3274 = vld [vmem:[%s3248 + $0xc8] sm:$0xff]
      %v3275 = vld [vmem:[%s3248 + $0xd0] sm:$0xff]
      %v3276 = vld [vmem:[%s3248 + $0xd8] sm:$0xff]
      %v3277 = vld [vmem:[%s3248 + $0xe0] sm:$0xff]
      %v3278 = vld [vmem:[%s3248 + $0xe8] sm:$0xff]
      %v3279 = vld [vmem:[%s3248 + $0xf0] sm:$0xff]
      %v3280 = vld [vmem:[%s3248 + $0xf8] sm:$0xff]
      %v3281 = vld [vmem:[%s3248 + $0x100] sm:$0xff]
      %v3282 = vld [vmem:[%s3248 + $0x108] sm:$0xff]
      %v3283 = vld [vmem:[%s3248 + $0x110] sm:$0xff]
      %v3284 = vld [vmem:[%s3248 + $0x118] sm:$0xff]
      %v3285 = vld [vmem:[%s3248 + $0x120] sm:$0xff]
      %v3286 = vld [vmem:[%s3248 + $0x128] sm:$0xff]
      %v3287 = vld [vmem:[%s3248 + $0x130] sm:$0xff]
      %v3288 = vld [vmem:[%s3248 + $0x138] sm:$0xff]
      %v3289 = vld [vmem:[%s3248 + $0x140] sm:$0xff]
      %v3290 = vld [vmem:[%s3248 + $0x148] sm:$0xff]
      %v3291 = vld [vmem:[%s3248 + $0x150] sm:$0xff]
      %v3292 = vld [vmem:[%s3248 + $0x158] sm:$0xff]
      %v3293 = vld [vmem:[%s3248 + $0x160] sm:$0xff]
      %v3294 = vld [vmem:[%s3248 + $0x168] sm:$0xff]
      %v3295 = vld [vmem:[%s3248 + $0x170] sm:$0xff]
      %v3296 = vld [vmem:[%s3248 + $0x178] sm:$0xff]
      %v3297 = vld [vmem:[%s3248 + $0x180] sm:$0xf]
      %v3298 = vld [vmem:[%s3248 + $0x188] sm:$0xf]
      %v3299 = vld [vmem:[%s3248 + $0x190] sm:$0xf]
      %v3300 = vld [vmem:[%s3248 + $0x198] sm:$0xf]
      %v3301 = vpack.c.bf16 %v3253, %v3249
      %v3302 = vpack.c.bf16 %v3254, %v3250
      %v3303 = vpack.c.bf16 %v3255, %v3251
      %v3304 = vpack.c.bf16 %v3256, %v3252
      %v3305 = vpack.c.bf16 %v3261, %v3257
      %v3306 = vpack.c.bf16 %v3262, %v3258
      %v3307 = vpack.c.bf16 %v3263, %v3259
      %v3308 = vpack.c.bf16 %v3264, %v3260
      %v3309 = vpack.c.bf16 %v3269, %v3265
      %v3310 = vpack.c.bf16 %v3270, %v3266
      %v3311 = vpack.c.bf16 %v3271, %v3267
      %v3312 = vpack.c.bf16 %v3272, %v3268
      %v3313 = vpack.c.bf16 %v3277, %v3273
      %v3314 = vpack.c.bf16 %v3278, %v3274
      %v3315 = vpack.c.bf16 %v3279, %v3275
      %v3316 = vpack.c.bf16 %v3280, %v3276
      %v3317 = vpack.c.bf16 %v3285, %v3281
      %v3318 = vpack.c.bf16 %v3286, %v3282
      %v3319 = vpack.c.bf16 %v3287, %v3283
      %v3320 = vpack.c.bf16 %v3288, %v3284
      %v3321 = vpack.c.bf16 %v3293, %v3289
      %v3322 = vpack.c.bf16 %v3294, %v3290
      %v3323 = vpack.c.bf16 %v3295, %v3291
      %v3324 = vpack.c.bf16 %v3296, %v3292
      %v3325 = vpack.c.bf16 %v3297, %v3297
      %v3326 = vpack.c.bf16 %v3298, %v3298
      %v3327 = vpack.c.bf16 %v3299, %v3299
      %v3328 = vpack.c.bf16 %v3300, %v3300
      %s3329 = scalar_lea.vmem %s249, 2496
      %v3330 = vld [vmem:[%s3329] sm:$0xff]
      %v3331 = vld [vmem:[%s3329 + $0x8] sm:$0xff]
      %v3332 = vld [vmem:[%s3329 + $0x10] sm:$0xff]
      %v3333 = vld [vmem:[%s3329 + $0x18] sm:$0xff]
      %v3334 = vld [vmem:[%s3329 + $0x20] sm:$0xff]
      %v3335 = vld [vmem:[%s3329 + $0x28] sm:$0xff]
      %v3336 = vld [vmem:[%s3329 + $0x30] sm:$0xff]
      %v3337 = vld [vmem:[%s3329 + $0x38] sm:$0xff]
      %v3338 = vld [vmem:[%s3329 + $0x40] sm:$0xff]
      %v3339 = vld [vmem:[%s3329 + $0x48] sm:$0xff]
      %v3340 = vld [vmem:[%s3329 + $0x50] sm:$0xff]
      %v3341 = vld [vmem:[%s3329 + $0x58] sm:$0xff]
      %v3342 = vld [vmem:[%s3329 + $0x60] sm:$0xff]
      %v3343 = vld [vmem:[%s3329 + $0x68] sm:$0xff]
      %v3344 = vld [vmem:[%s3329 + $0x70] sm:$0xff]
      %v3345 = vld [vmem:[%s3329 + $0x78] sm:$0xff]
      %v3346 = vld [vmem:[%s3329 + $0x80] sm:$0xff]
      %v3347 = vld [vmem:[%s3329 + $0x88] sm:$0xff]
      %v3348 = vld [vmem:[%s3329 + $0x90] sm:$0xff]
      %v3349 = vld [vmem:[%s3329 + $0x98] sm:$0xff]
      %v3350 = vld [vmem:[%s3329 + $0xa0] sm:$0xff]
      %v3351 = vld [vmem:[%s3329 + $0xa8] sm:$0xff]
      %v3352 = vld [vmem:[%s3329 + $0xb0] sm:$0xff]
      %v3353 = vld [vmem:[%s3329 + $0xb8] sm:$0xff]
      %v3354 = vld [vmem:[%s3329 + $0xc0] sm:$0xff]
      %v3355 = vld [vmem:[%s3329 + $0xc8] sm:$0xff]
      %v3356 = vld [vmem:[%s3329 + $0xd0] sm:$0xff]
      %v3357 = vld [vmem:[%s3329 + $0xd8] sm:$0xff]
      %v3358 = vld [vmem:[%s3329 + $0xe0] sm:$0xff]
      %v3359 = vld [vmem:[%s3329 + $0xe8] sm:$0xff]
      %v3360 = vld [vmem:[%s3329 + $0xf0] sm:$0xff]
      %v3361 = vld [vmem:[%s3329 + $0xf8] sm:$0xff]
      %v3362 = vld [vmem:[%s3329 + $0x100] sm:$0xff]
      %v3363 = vld [vmem:[%s3329 + $0x108] sm:$0xff]
      %v3364 = vld [vmem:[%s3329 + $0x110] sm:$0xff]
      %v3365 = vld [vmem:[%s3329 + $0x118] sm:$0xff]
      %v3366 = vld [vmem:[%s3329 + $0x120] sm:$0xff]
      %v3367 = vld [vmem:[%s3329 + $0x128] sm:$0xff]
      %v3368 = vld [vmem:[%s3329 + $0x130] sm:$0xff]
      %v3369 = vld [vmem:[%s3329 + $0x138] sm:$0xff]
      %v3370 = vld [vmem:[%s3329 + $0x140] sm:$0xff]
      %v3371 = vld [vmem:[%s3329 + $0x148] sm:$0xff]
      %v3372 = vld [vmem:[%s3329 + $0x150] sm:$0xff]
      %v3373 = vld [vmem:[%s3329 + $0x158] sm:$0xff]
      %v3374 = vld [vmem:[%s3329 + $0x160] sm:$0xff]
      %v3375 = vld [vmem:[%s3329 + $0x168] sm:$0xff]
      %v3376 = vld [vmem:[%s3329 + $0x170] sm:$0xff]
      %v3377 = vld [vmem:[%s3329 + $0x178] sm:$0xff]
      %v3378 = vld [vmem:[%s3329 + $0x180] sm:$0xf]
      %v3379 = vld [vmem:[%s3329 + $0x188] sm:$0xf]
      %v3380 = vld [vmem:[%s3329 + $0x190] sm:$0xf]
      %v3381 = vld [vmem:[%s3329 + $0x198] sm:$0xf]
      %v3382 = vpack.c.bf16 %v3334, %v3330
      %v3383 = vpack.c.bf16 %v3335, %v3331
      %v3384 = vpack.c.bf16 %v3336, %v3332
      %v3385 = vpack.c.bf16 %v3337, %v3333
      %v3386 = vpack.c.bf16 %v3342, %v3338
      %v3387 = vpack.c.bf16 %v3343, %v3339
      %v3388 = vpack.c.bf16 %v3344, %v3340
      %v3389 = vpack.c.bf16 %v3345, %v3341
      %v3390 = vpack.c.bf16 %v3350, %v3346
      %v3391 = vpack.c.bf16 %v3351, %v3347
      %v3392 = vpack.c.bf16 %v3352, %v3348
      %v3393 = vpack.c.bf16 %v3353, %v3349
      %v3394 = vpack.c.bf16 %v3358, %v3354
      %v3395 = vpack.c.bf16 %v3359, %v3355
      %v3396 = vpack.c.bf16 %v3360, %v3356
      %v3397 = vpack.c.bf16 %v3361, %v3357
      %v3398 = vpack.c.bf16 %v3366, %v3362
      %v3399 = vpack.c.bf16 %v3367, %v3363
      %v3400 = vpack.c.bf16 %v3368, %v3364
      %v3401 = vpack.c.bf16 %v3369, %v3365
      %v3402 = vpack.c.bf16 %v3374, %v3370
      %v3403 = vpack.c.bf16 %v3375, %v3371
      %v3404 = vpack.c.bf16 %v3376, %v3372
      %v3405 = vpack.c.bf16 %v3377, %v3373
      %v3406 = vpack.c.bf16 %v3378, %v3378
      %v3407 = vpack.c.bf16 %v3379, %v3379
      %v3408 = vpack.c.bf16 %v3380, %v3380
      %v3409 = vpack.c.bf16 %v3381, %v3381
      %v3411 = vsel %vm417, %v3304, 0
      %v3414 = vsel %vm417, %v3308, 0
      %v3417 = vsel %vm417, %v3312, 0
      %v3420 = vsel %vm417, %v3316, 0
      %v3423 = vsel %vm417, %v3320, 0
      %v3426 = vsel %vm417, %v3324, 0
      %v3429 = vsel %vm417, %v3328, 0
      %v3432 = vsel %vm417, %v3385, 0
      %v3435 = vsel %vm417, %v3389, 0
      %v3438 = vsel %vm417, %v3393, 0
      %v3441 = vsel %vm417, %v3397, 0
      %v3444 = vsel %vm417, %v3401, 0
      %v3447 = vsel %vm417, %v3405, 0
      %v3450 = vsel %vm417, %v3409, 0
      %3452 = vmatprep.subr.bf16.mxu0 %v3383
      %3453 = vmatpush1.bf16.xpose.msra.mxu0 %v3382
      %3454 = vmatprep.subr.bf16.mxu0 %v3387
      %3455 = vmatpush1.bf16.xpose.msra.mxu0 %v3386
      %3456 = vmatprep.subr.bf16.mxu0 %v3391
      %3457 = vmatpush1.bf16.xpose.msra.mxu0 %v3390
      %3458 = vmatprep.subr.bf16.mxu0 %v3395
      %3459 = vmatpush1.bf16.xpose.msra.mxu0 %v3394
      %3460 = vmatprep.subr.bf16.mxu0 %v3399
      %3461 = vmatpush1.bf16.xpose.msra.mxu0 %v3398
      %3462 = vmatprep.subr.bf16.mxu0 %v3403
      %3463 = vmatpush1.bf16.xpose.msra.mxu0 %v3402
      %3464 = vmatprep.subr.bf16.mxu0 %v3407
      %3465 = vmatpush1.bf16.xpose.msra.mxu0 %v3406
      %3466 = vmatprep.subr.bf16.mxu0 0
      %3467 = vmatpush1.bf16.xpose.msra.mxu0 0
      %3468 = vmatprep.subr.bf16.mxu0 0
      %3469 = vmatpush1.bf16.xpose.msra.mxu0 0
      %3470 = vmatprep.subr.bf16.mxu0 0
      %3471 = vmatpush1.bf16.xpose.msra.mxu0 0
      %3472 = vmatprep.subr.bf16.mxu0 0
      %3473 = vmatpush1.bf16.xpose.msra.mxu0 0
      %3474 = vmatprep.subr.bf16.mxu0 0
      %3475 = vmatpush1.bf16.xpose.msra.mxu0 0
      %3476 = vmatprep.subr.bf16.mxu0 0
      %3477 = vmatpush1.bf16.xpose.msra.mxu0 0
      %3478 = vmatprep.subr.bf16.mxu0 0
      %3479 = vmatpush1.bf16.xpose.msra.mxu0 0
      %3480 = vmatprep.subr.bf16.mxu0 0
      %3481 = vmatpush1.bf16.xpose.msra.mxu0 0
      %3482 = vmatprep.subr.bf16.mxu0 0
      %3483 = vmatpush1.bf16.xpose.msra.mxu0 0
      %3484 = vmatprep.mubr.bf16.mxu0 %v3302
      %3485 = vmatmul.mubr.bf16.gmra.mrb[0].mxu0 %v3301
      %v3486 = vpop.f32.mrb[0].mxu0
      %v3487 = vadd.f32 0.0, %v3486
      %v3488 = vpop.f32.mrb[0].mxu0
      %v3489 = vpop.f32.mrb[0].mxu0
      %v3490 = vadd.f32 0.0, %v3489
      %v3491 = vpop.f32.mrb[0].mxu0
      %3492 = vmatprep.mubr.bf16.mxu0 %v3306
      %3493 = vmatmul.mubr.bf16.gmra.mrb[0].mxu0 %v3305
      %v3494 = vpop.f32.mrb[0].mxu0
      %v3495 = vadd.f32 0.0, %v3494
      %v3496 = vpop.f32.mrb[0].mxu0
      %v3497 = vpop.f32.mrb[0].mxu0
      %v3498 = vadd.f32 0.0, %v3497
      %v3499 = vpop.f32.mrb[0].mxu0
      %3500 = vmatprep.mubr.bf16.mxu0 %v3310
      %3501 = vmatmul.mubr.bf16.gmra.mrb[0].mxu0 %v3309
      %v3502 = vpop.f32.mrb[0].mxu0
      %v3503 = vadd.f32 0.0, %v3502
      %v3504 = vpop.f32.mrb[0].mxu0
      %v3505 = vpop.f32.mrb[0].mxu0
      %v3506 = vadd.f32 0.0, %v3505
      %v3507 = vpop.f32.mrb[0].mxu0
      %3508 = vmatprep.mubr.bf16.mxu0 %v3314
      %3509 = vmatmul.mubr.bf16.gmra.mrb[0].mxu0 %v3313
      %v3510 = vpop.f32.mrb[0].mxu0
      %v3511 = vadd.f32 0.0, %v3510
      %v3512 = vpop.f32.mrb[0].mxu0
      %v3513 = vpop.f32.mrb[0].mxu0
      %v3514 = vadd.f32 0.0, %v3513
      %v3515 = vpop.f32.mrb[0].mxu0
      %3516 = vmatprep.mubr.bf16.mxu0 %v3318
      %3517 = vmatmul.mubr.bf16.gmra.mrb[0].mxu0 %v3317
      %v3518 = vpop.f32.mrb[0].mxu0
      %v3519 = vadd.f32 0.0, %v3518
      %v3520 = vpop.f32.mrb[0].mxu0
      %v3521 = vpop.f32.mrb[0].mxu0
      %v3522 = vadd.f32 0.0, %v3521
      %v3523 = vpop.f32.mrb[0].mxu0
      %3524 = vmatprep.mubr.bf16.mxu0 %v3322
      %3525 = vmatmul.mubr.bf16.gmra.mrb[0].mxu0 %v3321
      %v3526 = vpop.f32.mrb[0].mxu0
      %v3527 = vadd.f32 0.0, %v3526
      %v3528 = vpop.f32.mrb[0].mxu0
      %v3529 = vpop.f32.mrb[0].mxu0
      %v3530 = vadd.f32 0.0, %v3529
      %v3531 = vpop.f32.mrb[0].mxu0
      %3532 = vmatprep.mubr.bf16.mxu0 %v3326
      %3533 = vmatmul.mubr.bf16.gmra.mrb[0].mxu0 %v3325
      %v3534 = vpop.f32.mrb[0].mxu0
      %v3535 = vadd.f32 0.0, %v3534
      %v3536 = vpop.f32.mrb[0].mxu0
      %v3537 = vpop.f32.mrb[0].mxu0
      %v3538 = vpop.f32.mrb[0].mxu0
      %3539 = vdwg.mxu0
      %3540 = vmatprep.subr.bf16.mxu0 %v3432
      %3541 = vmatpush1.bf16.xpose.msra.mxu0 %v3384
      %3542 = vmatprep.subr.bf16.mxu0 %v3435
      %3543 = vmatpush1.bf16.xpose.msra.mxu0 %v3388
      %3544 = vmatprep.subr.bf16.mxu0 %v3438
      %3545 = vmatpush1.bf16.xpose.msra.mxu0 %v3392
      %3546 = vmatprep.subr.bf16.mxu0 %v3441
      %3547 = vmatpush1.bf16.xpose.msra.mxu0 %v3396
      %3548 = vmatprep.subr.bf16.mxu0 %v3444
      %3549 = vmatpush1.bf16.xpose.msra.mxu0 %v3400
      %3550 = vmatprep.subr.bf16.mxu0 %v3447
      %3551 = vmatpush1.bf16.xpose.msra.mxu0 %v3404
      %3552 = vmatprep.subr.bf16.mxu0 %v3450
      %3553 = vmatpush1.bf16.xpose.msra.mxu0 %v3408
      %3554 = vmatprep.subr.bf16.mxu0 0
      %3555 = vmatpush1.bf16.xpose.msra.mxu0 0
      %3556 = vmatprep.subr.bf16.mxu0 0
      %3557 = vmatpush1.bf16.xpose.msra.mxu0 0
      %3558 = vmatprep.subr.bf16.mxu0 0
      %3559 = vmatpush1.bf16.xpose.msra.mxu0 0
      %3560 = vmatprep.subr.bf16.mxu0 0
      %3561 = vmatpush1.bf16.xpose.msra.mxu0 0
      %3562 = vmatprep.subr.bf16.mxu0 0
      %3563 = vmatpush1.bf16.xpose.msra.mxu0 0
      %3564 = vmatprep.subr.bf16.mxu0 0
      %3565 = vmatpush1.bf16.xpose.msra.mxu0 0
      %3566 = vmatprep.subr.bf16.mxu0 0
      %3567 = vmatpush1.bf16.xpose.msra.mxu0 0
      %3568 = vmatprep.subr.bf16.mxu0 0
      %3569 = vmatpush1.bf16.xpose.msra.mxu0 0
      %3570 = vmatprep.subr.bf16.mxu0 0
      %3571 = vmatpush1.bf16.xpose.msra.mxu0 0
      %3572 = vmatprep.mubr.bf16.mxu0 %v3411
      %3573 = vmatmul.mubr.bf16.gmra.mrb[0].mxu0 %v3303
      %v3574 = vpop.f32.mrb[0].mxu0
      %v3575 = vadd.f32 %v3487, %v3574
      %v3576 = vpop.f32.mrb[0].mxu0
      %v3577 = vpop.f32.mrb[0].mxu0
      %v3578 = vadd.f32 %v3490, %v3577
      %v3579 = vpop.f32.mrb[0].mxu0
      %3580 = vmatprep.mubr.bf16.mxu0 %v3414
      %3581 = vmatmul.mubr.bf16.gmra.mrb[0].mxu0 %v3307
      %v3582 = vpop.f32.mrb[0].mxu0
      %v3583 = vadd.f32 %v3495, %v3582
      %v3584 = vpop.f32.mrb[0].mxu0
      %v3585 = vpop.f32.mrb[0].mxu0
      %v3586 = vadd.f32 %v3498, %v3585
      %v3587 = vpop.f32.mrb[0].mxu0
      %3588 = vmatprep.mubr.bf16.mxu0 %v3417
      %3589 = vmatmul.mubr.bf16.gmra.mrb[0].mxu0 %v3311
      %v3590 = vpop.f32.mrb[0].mxu0
      %v3591 = vadd.f32 %v3503, %v3590
      %v3592 = vpop.f32.mrb[0].mxu0
      %v3593 = vpop.f32.mrb[0].mxu0
      %v3594 = vadd.f32 %v3506, %v3593
      %v3595 = vpop.f32.mrb[0].mxu0
      %3596 = vmatprep.mubr.bf16.mxu0 %v3420
      %3597 = vmatmul.mubr.bf16.gmra.mrb[0].mxu0 %v3315
      %v3598 = vpop.f32.mrb[0].mxu0
      %v3599 = vadd.f32 %v3511, %v3598
      %v3600 = vpop.f32.mrb[0].mxu0
      %v3601 = vpop.f32.mrb[0].mxu0
      %v3602 = vadd.f32 %v3514, %v3601
      %v3603 = vpop.f32.mrb[0].mxu0
      %3604 = vmatprep.mubr.bf16.mxu0 %v3423
      %3605 = vmatmul.mubr.bf16.gmra.mrb[0].mxu0 %v3319
      %v3606 = vpop.f32.mrb[0].mxu0
      %v3607 = vadd.f32 %v3519, %v3606
      %v3608 = vpop.f32.mrb[0].mxu0
      %v3609 = vpop.f32.mrb[0].mxu0
      %v3610 = vadd.f32 %v3522, %v3609
      %v3611 = vpop.f32.mrb[0].mxu0
      %3612 = vmatprep.mubr.bf16.mxu0 %v3426
      %3613 = vmatmul.mubr.bf16.gmra.mrb[0].mxu0 %v3323
      %v3614 = vpop.f32.mrb[0].mxu0
      %v3615 = vadd.f32 %v3527, %v3614
      %v3616 = vpop.f32.mrb[0].mxu0
      %v3617 = vpop.f32.mrb[0].mxu0
      %v3618 = vadd.f32 %v3530, %v3617
      %v3619 = vpop.f32.mrb[0].mxu0
      %3620 = vmatprep.mubr.bf16.mxu0 %v3429
      %3621 = vmatmul.mubr.bf16.gmra.mrb[0].mxu0 %v3327
      %v3622 = vpop.f32.mrb[0].mxu0
      %v3623 = vadd.f32 %v3535, %v3622
      %v3624 = vpop.f32.mrb[0].mxu0
      %v3625 = vpop.f32.mrb[0].mxu0
      %v3626 = vpop.f32.mrb[0].mxu0
      %3627 = vdwg.mxu0
      %v3628 = vmul.f32 %v3575, 0.002
      %v3629 = vmul.f32 %v3578, 0.002
      %v3630 = vmul.f32 %v3583, 0.002
      %v3631 = vmul.f32 %v3586, 0.002
      %v3632 = vmul.f32 %v3591, 0.002
      %v3633 = vmul.f32 %v3594, 0.002
      %v3634 = vmul.f32 %v3599, 0.002
      %v3635 = vmul.f32 %v3602, 0.002
      %v3636 = vmul.f32 %v3607, 0.002
      %v3637 = vmul.f32 %v3610, 0.002
      %v3638 = vmul.f32 %v3615, 0.002
      %v3639 = vmul.f32 %v3618, 0.002
      %v3640 = vmul.f32 %v3623, 0.002
      %v3641 = vsel %vm649, %v3628, -inf
      %3642 = vmax.xlane.f32.xlu0 %v3641
      %v3643 = vpop.xlane.xlu0 %3642
      %v3644 = vsel %vm649, %v3629, -inf
      %3645 = vmax.xlane.f32.xlu0 %v3644
      %v3646 = vpop.xlane.xlu0 %3645
      %v3647 = vsel %vm649, %v3630, -inf
      %3648 = vmax.xlane.f32.xlu0 %v3647
      %v3649 = vpop.xlane.xlu0 %3648
      %v3650 = vsel %vm649, %v3631, -inf
      %3651 = vmax.xlane.f32.xlu0 %v3650
      %v3652 = vpop.xlane.xlu0 %3651
      %v3653 = vsel %vm649, %v3632, -inf
      %3654 = vmax.xlane.f32.xlu0 %v3653
      %v3655 = vpop.xlane.xlu0 %3654
      %v3656 = vsel %vm649, %v3633, -inf
      %3657 = vmax.xlane.f32.xlu0 %v3656
      %v3658 = vpop.xlane.xlu0 %3657
      %v3659 = vsel %vm649, %v3634, -inf
      %3660 = vmax.xlane.f32.xlu0 %v3659
      %v3661 = vpop.xlane.xlu0 %3660
      %v3662 = vsel %vm649, %v3635, -inf
      %3663 = vmax.xlane.f32.xlu0 %v3662
      %v3664 = vpop.xlane.xlu0 %3663
      %v3665 = vsel %vm649, %v3636, -inf
      %3666 = vmax.xlane.f32.xlu0 %v3665
      %v3667 = vpop.xlane.xlu0 %3666
      %v3668 = vsel %vm649, %v3637, -inf
      %3669 = vmax.xlane.f32.xlu0 %v3668
      %v3670 = vpop.xlane.xlu0 %3669
      %v3671 = vsel %vm649, %v3638, -inf
      %3672 = vmax.xlane.f32.xlu0 %v3671
      %v3673 = vpop.xlane.xlu0 %3672
      %v3674 = vsel %vm649, %v3639, -inf
      %3675 = vmax.xlane.f32.xlu0 %v3674
      %v3676 = vpop.xlane.xlu0 %3675
      %v3677 = vsel %vm686, %v3640, -inf
      %3678 = vmax.xlane.f32.xlu0 %v3677
      %v3679 = vpop.xlane.xlu0 %3678
      %v3680 = vsub.f32 %v3628, %v3643
      %v3681 = vsub.f32 %v3629, %v3646
      %v3682 = vsub.f32 %v3630, %v3649
      %v3683 = vsub.f32 %v3631, %v3652
      %v3684 = vsub.f32 %v3632, %v3655
      %v3685 = vsub.f32 %v3633, %v3658
      %v3686 = vsub.f32 %v3634, %v3661
      %v3687 = vsub.f32 %v3635, %v3664
      %v3688 = vsub.f32 %v3636, %v3667
      %v3689 = vsub.f32 %v3637, %v3670
      %v3690 = vsub.f32 %v3638, %v3673
      %v3691 = vsub.f32 %v3639, %v3676
      %v3692 = vsub.f32 %v3640, %v3679
      %v3693 = vmul.f32 %v3680, 1.442695
      %v3694 = vpow.pop %v3693
      %v3695 = vmul.f32 %v3681, 1.442695
      %v3696 = vpow.pop %v3695
      %v3697 = vmul.f32 %v3682, 1.442695
      %v3698 = vpow.pop %v3697
      %v3699 = vmul.f32 %v3683, 1.442695
      %v3700 = vpow.pop %v3699
      %v3701 = vmul.f32 %v3684, 1.442695
      %v3702 = vpow.pop %v3701
      %v3703 = vmul.f32 %v3685, 1.442695
      %v3704 = vpow.pop %v3703
      %v3705 = vmul.f32 %v3686, 1.442695
      %v3706 = vpow.pop %v3705
      %v3707 = vmul.f32 %v3687, 1.442695
      %v3708 = vpow.pop %v3707
      %v3709 = vmul.f32 %v3688, 1.442695
      %v3710 = vpow.pop %v3709
      %v3711 = vmul.f32 %v3689, 1.442695
      %v3712 = vpow.pop %v3711
      %v3713 = vmul.f32 %v3690, 1.442695
      %v3714 = vpow.pop %v3713
      %v3715 = vmul.f32 %v3691, 1.442695
      %v3716 = vpow.pop %v3715
      %v3717 = vmul.f32 %v3692, 1.442695
      %v3718 = vpow.pop %v3717
      %v3719 = vsel %vm649, %v3694, 0.0
      %3720 = vadd.xlane.f32.xlu0 %v3719
      %v3721 = vpop.xlane.xlu0 %3720
      %v3722 = vsel %vm649, %v3696, 0.0
      %3723 = vadd.xlane.f32.xlu0 %v3722
      %v3724 = vpop.xlane.xlu0 %3723
      %v3725 = vsel %vm649, %v3698, 0.0
      %3726 = vadd.xlane.f32.xlu0 %v3725
      %v3727 = vpop.xlane.xlu0 %3726
      %v3728 = vsel %vm649, %v3700, 0.0
      %3729 = vadd.xlane.f32.xlu0 %v3728
      %v3730 = vpop.xlane.xlu0 %3729
      %v3731 = vsel %vm649, %v3702, 0.0
      %3732 = vadd.xlane.f32.xlu0 %v3731
      %v3733 = vpop.xlane.xlu0 %3732
      %v3734 = vsel %vm649, %v3704, 0.0
      %3735 = vadd.xlane.f32.xlu0 %v3734
      %v3736 = vpop.xlane.xlu0 %3735
      %v3737 = vsel %vm649, %v3706, 0.0
      %3738 = vadd.xlane.f32.xlu0 %v3737
      %v3739 = vpop.xlane.xlu0 %3738
      %v3740 = vsel %vm649, %v3708, 0.0
      %3741 = vadd.xlane.f32.xlu0 %v3740
      %v3742 = vpop.xlane.xlu0 %3741
      %v3743 = vsel %vm649, %v3710, 0.0
      %3744 = vadd.xlane.f32.xlu0 %v3743
      %v3745 = vpop.xlane.xlu0 %3744
      %v3746 = vsel %vm649, %v3712, 0.0
      %3747 = vadd.xlane.f32.xlu0 %v3746
      %v3748 = vpop.xlane.xlu0 %3747
      %v3749 = vsel %vm649, %v3714, 0.0
      %3750 = vadd.xlane.f32.xlu0 %v3749
      %v3751 = vpop.xlane.xlu0 %3750
      %v3752 = vsel %vm649, %v3716, 0.0
      %3753 = vadd.xlane.f32.xlu0 %v3752
      %v3754 = vpop.xlane.xlu0 %3753
      %v3755 = vsel %vm686, %v3718, 0.0
      %3756 = vadd.xlane.f32.xlu0 %v3755
      %v3757 = vpop.xlane.xlu0 %3756
      %v3758 = vrcp.pop %v3721
      %v3759 = vrcp.pop %v3724
      %v3760 = vrcp.pop %v3727
      %v3761 = vrcp.pop %v3730
      %v3762 = vrcp.pop %v3733
      %v3763 = vrcp.pop %v3736
      %v3764 = vrcp.pop %v3739
      %v3765 = vrcp.pop %v3742
      %v3766 = vrcp.pop %v3745
      %v3767 = vrcp.pop %v3748
      %v3768 = vrcp.pop %v3751
      %v3769 = vrcp.pop %v3754
      %v3770 = vrcp.pop %v3757
      %v3771 = vmul.f32 %v3694, %v3758
      %v3772 = vmul.f32 %v3696, %v3759
      %v3773 = vmul.f32 %v3698, %v3760
      %v3774 = vmul.f32 %v3700, %v3761
      %v3775 = vmul.f32 %v3702, %v3762
      %v3776 = vmul.f32 %v3704, %v3763
      %v3777 = vmul.f32 %v3706, %v3764
      %v3778 = vmul.f32 %v3708, %v3765
      %v3779 = vmul.f32 %v3710, %v3766
      %v3780 = vmul.f32 %v3712, %v3767
      %v3781 = vmul.f32 %v3714, %v3768
      %v3782 = vmul.f32 %v3716, %v3769
      %v3783 = vmul.f32 %v3718, %v3770
      %v3785 = vsel %vm797, %v3783, 0
      %3787 = vmatprep.subr.mxu0 0.0
      %3788 = vmatpush1.msra.mxu0 %v3771
      %3789 = vmatprep.subr.mxu0 0.0
      %3790 = vmatpush1.msra.mxu0 %v3772
      %3791 = vmatprep.subr.mxu0 0.0
      %3792 = vmatpush1.msra.mxu0 %v3773
      %3793 = vmatprep.subr.mxu0 0.0
      %3794 = vmatpush1.msra.mxu0 %v3774
      %3795 = vmatprep.subr.mxu0 0.0
      %3796 = vmatpush1.msra.mxu0 %v3775
      %3797 = vmatprep.subr.mxu0 0.0
      %3798 = vmatpush1.msra.mxu0 %v3776
      %3799 = vmatprep.subr.mxu0 0.0
      %3800 = vmatpush1.msra.mxu0 %v3777
      %3801 = vmatprep.subr.mxu0 0.0
      %3802 = vmatpush1.msra.mxu0 %v3778
      %3803 = vmatprep.subr.mxu0 0.0
      %3804 = vmatpush1.msra.mxu0 %v3779
      %3805 = vmatprep.subr.mxu0 0.0
      %3806 = vmatpush1.msra.mxu0 %v3780
      %3807 = vmatprep.subr.mxu0 0.0
      %3808 = vmatpush1.msra.mxu0 %v3781
      %3809 = vmatprep.subr.mxu0 0.0
      %3810 = vmatpush1.msra.mxu0 %v3782
      %3811 = vmatprep.subr.mxu0 0.0
      %3812 = vmatpush1.msra.mxu0 %v3785
      %3813 = vmatprep.subr.mxu0 0.0
      %3814 = vmatpush1.msra.mxu0 0.0
      %3815 = vmatprep.subr.mxu0 0.0
      %3816 = vmatpush1.msra.mxu0 0.0
      %3817 = vmatprep.subr.mxu0 0.0
      %3818 = vmatpush1.msra.mxu0 0.0
      %3819 = vmatprep.subr.mxu0 0.0
      %3820 = vmatpush1.msra.mxu0 0.0
      %3821 = vmatprep.subr.mxu0 0.0
      %3822 = vmatpush1.msra.mxu0 0.0
      %3823 = vmatprep.subr.mxu0 0.0
      %3824 = vmatpush1.msra.mxu0 0.0
      %3825 = vmatprep.subr.mxu0 0.0
      %3826 = vmatpush1.msra.mxu0 0.0
      %3827 = vmatprep.subr.mxu0 0.0
      %3828 = vmatpush1.msra.mxu0 0.0
      %3829 = vmatprep.subr.mxu0 0.0
      %3830 = vmatpush1.msra.mxu0 0.0
      %3831 = vmatprep.subr.mxu0 0.0
      %3832 = vmatpush1.msra.mxu0 0.0
      %3833 = vmatprep.subr.mxu0 0.0
      %3834 = vmatpush1.msra.mxu0 0.0
      %3835 = vmatprep.subr.mxu0 0.0
      %3836 = vmatpush1.msra.mxu0 0.0
      %3837 = vmatprep.subr.mxu0 0.0
      %3838 = vmatpush1.msra.mxu0 0.0
      %3839 = vmatprep.subr.mxu0 0.0
      %3840 = vmatpush1.msra.mxu0 0.0
      %3841 = vmatprep.subr.mxu0 0.0
      %3842 = vmatpush1.msra.mxu0 0.0
      %3843 = vmatprep.subr.mxu0 0.0
      %3844 = vmatpush1.msra.mxu0 0.0
      %3845 = vmatprep.subr.mxu0 0.0
      %3846 = vmatpush1.msra.mxu0 0.0
      %3847 = vmatprep.subr.mxu0 0.0
      %3848 = vmatpush1.msra.mxu0 0.0
      %3849 = vmatprep.subr.mxu0 0.0
      %3850 = vmatpush1.msra.mxu0 0.0
      %3851 = vmatprep.mubr.f32.mxu0 0.0
      %3852 = vmatmul.mubr.f32.gmra.mrb[0].mxu0 %v795
      %v3853 = vpop.f32.mrb[0].mxu0
      %v3854 = vadd.f32 0.0, %v3853
      %v3855 = vpop.f32.mrb[0].mxu0
      %3856 = vdwg.mxu0
      %v3858 = vsel %vm649, %v3854, 0
      %v3861 = vsel %vm797, %v3378, 0
      %v3864 = vsel %vm797, %v3379, 0
      %v3867 = vsel %vm797, %v3380, 0
      %v3870 = vsel %vm797, %v3381, 0
      %3872 = vmatprep.subr.mxu0 %v3331
      %3873 = vmatpush1.msra.mxu0 %v3330
      %3874 = vmatprep.subr.mxu0 %v3335
      %3875 = vmatpush1.msra.mxu0 %v3334
      %3876 = vmatprep.subr.mxu0 %v3339
      %3877 = vmatpush1.msra.mxu0 %v3338
      %3878 = vmatprep.subr.mxu0 %v3343
      %3879 = vmatpush1.msra.mxu0 %v3342
      %3880 = vmatprep.subr.mxu0 %v3347
      %3881 = vmatpush1.msra.mxu0 %v3346
      %3882 = vmatprep.subr.mxu0 %v3351
      %3883 = vmatpush1.msra.mxu0 %v3350
      %3884 = vmatprep.subr.mxu0 %v3355
      %3885 = vmatpush1.msra.mxu0 %v3354
      %3886 = vmatprep.subr.mxu0 %v3359
      %3887 = vmatpush1.msra.mxu0 %v3358
      %3888 = vmatprep.subr.mxu0 %v3363
      %3889 = vmatpush1.msra.mxu0 %v3362
      %3890 = vmatprep.subr.mxu0 %v3367
      %3891 = vmatpush1.msra.mxu0 %v3366
      %3892 = vmatprep.subr.mxu0 %v3371
      %3893 = vmatpush1.msra.mxu0 %v3370
      %3894 = vmatprep.subr.mxu0 %v3375
      %3895 = vmatpush1.msra.mxu0 %v3374
      %3896 = vmatprep.subr.mxu0 %v3864
      %3897 = vmatpush1.msra.mxu0 %v3861
      %3898 = vmatprep.subr.mxu0 0.0
      %3899 = vmatpush1.msra.mxu0 0.0
      %3900 = vmatprep.subr.mxu0 0.0
      %3901 = vmatpush1.msra.mxu0 0.0
      %3902 = vmatprep.subr.mxu0 0.0
      %3903 = vmatpush1.msra.mxu0 0.0
      %3904 = vmatprep.subr.mxu0 0.0
      %3905 = vmatpush1.msra.mxu0 0.0
      %3906 = vmatprep.subr.mxu0 0.0
      %3907 = vmatpush1.msra.mxu0 0.0
      %3908 = vmatprep.subr.mxu0 0.0
      %3909 = vmatpush1.msra.mxu0 0.0
      %3910 = vmatprep.subr.mxu0 0.0
      %3911 = vmatpush1.msra.mxu0 0.0
      %3912 = vmatprep.subr.mxu0 0.0
      %3913 = vmatpush1.msra.mxu0 0.0
      %3914 = vmatprep.subr.mxu0 0.0
      %3915 = vmatpush1.msra.mxu0 0.0
      %3916 = vmatprep.subr.mxu0 0.0
      %3917 = vmatpush1.msra.mxu0 0.0
      %3918 = vmatprep.subr.mxu0 0.0
      %3919 = vmatpush1.msra.mxu0 0.0
      %3920 = vmatprep.subr.mxu0 0.0
      %3921 = vmatpush1.msra.mxu0 0.0
      %3922 = vmatprep.subr.mxu0 0.0
      %3923 = vmatpush1.msra.mxu0 0.0
      %3924 = vmatprep.subr.mxu0 0.0
      %3925 = vmatpush1.msra.mxu0 0.0
      %3926 = vmatprep.subr.mxu0 0.0
      %3927 = vmatpush1.msra.mxu0 0.0
      %3928 = vmatprep.subr.mxu0 0.0
      %3929 = vmatpush1.msra.mxu0 0.0
      %3930 = vmatprep.subr.mxu0 0.0
      %3931 = vmatpush1.msra.mxu0 0.0
      %3932 = vmatprep.subr.mxu0 0.0
      %3933 = vmatpush1.msra.mxu0 0.0
      %3934 = vmatprep.subr.mxu0 0.0
      %3935 = vmatpush1.msra.mxu0 0.0
      %3936 = vmatprep.mubr.f32.mxu0 0.0
      %3937 = vmatmul.mubr.f32.gmra.mrb[0].mxu0 %v3858
      %v3938 = vpop.f32.mrb[0].mxu0
      %v3939 = vadd.f32 0.0, %v3938
      %v3940 = vpop.f32.mrb[0].mxu0
      %v3941 = vadd.f32 0.0, %v3940
      %3942 = vdwg.mxu0
      %3943 = vmatprep.subr.mxu0 %v3333
      %3944 = vmatpush1.msra.mxu0 %v3332
      %3945 = vmatprep.subr.mxu0 %v3337
      %3946 = vmatpush1.msra.mxu0 %v3336
      %3947 = vmatprep.subr.mxu0 %v3341
      %3948 = vmatpush1.msra.mxu0 %v3340
      %3949 = vmatprep.subr.mxu0 %v3345
      %3950 = vmatpush1.msra.mxu0 %v3344
      %3951 = vmatprep.subr.mxu0 %v3349
      %3952 = vmatpush1.msra.mxu0 %v3348
      %3953 = vmatprep.subr.mxu0 %v3353
      %3954 = vmatpush1.msra.mxu0 %v3352
      %3955 = vmatprep.subr.mxu0 %v3357
      %3956 = vmatpush1.msra.mxu0 %v3356
      %3957 = vmatprep.subr.mxu0 %v3361
      %3958 = vmatpush1.msra.mxu0 %v3360
      %3959 = vmatprep.subr.mxu0 %v3365
      %3960 = vmatpush1.msra.mxu0 %v3364
      %3961 = vmatprep.subr.mxu0 %v3369
      %3962 = vmatpush1.msra.mxu0 %v3368
      %3963 = vmatprep.subr.mxu0 %v3373
      %3964 = vmatpush1.msra.mxu0 %v3372
      %3965 = vmatprep.subr.mxu0 %v3377
      %3966 = vmatpush1.msra.mxu0 %v3376
      %3967 = vmatprep.subr.mxu0 %v3870
      %3968 = vmatpush1.msra.mxu0 %v3867
      %3969 = vmatprep.subr.mxu0 0.0
      %3970 = vmatpush1.msra.mxu0 0.0
      %3971 = vmatprep.subr.mxu0 0.0
      %3972 = vmatpush1.msra.mxu0 0.0
      %3973 = vmatprep.subr.mxu0 0.0
      %3974 = vmatpush1.msra.mxu0 0.0
      %3975 = vmatprep.subr.mxu0 0.0
      %3976 = vmatpush1.msra.mxu0 0.0
      %3977 = vmatprep.subr.mxu0 0.0
      %3978 = vmatpush1.msra.mxu0 0.0
      %3979 = vmatprep.subr.mxu0 0.0
      %3980 = vmatpush1.msra.mxu0 0.0
      %3981 = vmatprep.subr.mxu0 0.0
      %3982 = vmatpush1.msra.mxu0 0.0
      %3983 = vmatprep.subr.mxu0 0.0
      %3984 = vmatpush1.msra.mxu0 0.0
      %3985 = vmatprep.subr.mxu0 0.0
      %3986 = vmatpush1.msra.mxu0 0.0
      %3987 = vmatprep.subr.mxu0 0.0
      %3988 = vmatpush1.msra.mxu0 0.0
      %3989 = vmatprep.subr.mxu0 0.0
      %3990 = vmatpush1.msra.mxu0 0.0
      %3991 = vmatprep.subr.mxu0 0.0
      %3992 = vmatpush1.msra.mxu0 0.0
      %3993 = vmatprep.subr.mxu0 0.0
      %3994 = vmatpush1.msra.mxu0 0.0
      %3995 = vmatprep.subr.mxu0 0.0
      %3996 = vmatpush1.msra.mxu0 0.0
      %3997 = vmatprep.subr.mxu0 0.0
      %3998 = vmatpush1.msra.mxu0 0.0
      %3999 = vmatprep.subr.mxu0 0.0
      %4000 = vmatpush1.msra.mxu0 0.0
      %4001 = vmatprep.subr.mxu0 0.0
      %4002 = vmatpush1.msra.mxu0 0.0
      %4003 = vmatprep.subr.mxu0 0.0
      %4004 = vmatpush1.msra.mxu0 0.0
      %4005 = vmatprep.subr.mxu0 0.0
      %4006 = vmatpush1.msra.mxu0 0.0
      %4007 = vmatprep.mubr.f32.mxu0 0.0
      %4008 = vmatmul.mubr.f32.gmra.mrb[0].mxu0 %v3858
      %v4009 = vpop.f32.mrb[0].mxu0
      %v4010 = vadd.f32 0.0, %v4009
      %v4011 = vpop.f32.mrb[0].mxu0
      %v4012 = vadd.f32 0.0, %v4011
      %4013 = vdwg.mxu0
      %v4018 = vcombine.low %v3939, %v3941
      %v4019 = vcombine.low %v4010, %v4012
      %v4021 = vunpack.c.l.s4 1966171168
      %v4022 = vunpack.c.0.s8 %v4021
      %v4023 = vlaneseq
      %v4024 = vshrl.u32 %v4023, 7
      %v4025 = vsub.s32 %v4022, %v4024
      %v4026 = vrot.slane %v4018, %v4025
      %v4028 = vunpack.c.l.s4 1966171168
      %v4029 = vunpack.c.0.s8 %v4028
      %v4030 = vlaneseq
      %v4031 = vshrl.u32 %v4030, 7
      %v4032 = vsub.s32 %v4029, %v4031
      %v4033 = vrot.slane %v4019, %v4032
      %v4034 = vcombine.low %v4026, %v4033
      %v4036 = vunpack.c.l.s4 1966171168
      %v4037 = vunpack.c.0.s8 %v4036
      %v4038 = vlaneseq
      %v4039 = vshrl.u32 %v4038, 7
      %v4040 = vsub.s32 %v4037, %v4039
      %v4041 = vrot.slane %v4034, %v4040
      %s4043 = scalar_lea.vmem [#allocation2], 2
      %4044 = vst.msk [vmem:[%s4043] ss:$4 sm:$0xf] %vm1060, %v4041
      %s4045 = scalar_lea.vmem %s249, 2912
      %v4046 = vld [vmem:[%s4045] sm:$0xff]
      %v4047 = vld [vmem:[%s4045 + $0x8] sm:$0xff]
      %v4048 = vld [vmem:[%s4045 + $0x10] sm:$0xff]
      %v4049 = vld [vmem:[%s4045 + $0x18] sm:$0xff]
      %v4050 = vld [vmem:[%s4045 + $0x20] sm:$0xff]
      %v4051 = vld [vmem:[%s4045 + $0x28] sm:$0xff]
      %v4052 = vld [vmem:[%s4045 + $0x30] sm:$0xff]
      %v4053 = vld [vmem:[%s4045 + $0x38] sm:$0xff]
      %v4054 = vld [vmem:[%s4045 + $0x40] sm:$0xff]
      %v4055 = vld [vmem:[%s4045 + $0x48] sm:$0xff]
      %v4056 = vld [vmem:[%s4045 + $0x50] sm:$0xff]
      %v4057 = vld [vmem:[%s4045 + $0x58] sm:$0xff]
      %v4058 = vld [vmem:[%s4045 + $0x60] sm:$0xff]
      %v4059 = vld [vmem:[%s4045 + $0x68] sm:$0xff]
      %v4060 = vld [vmem:[%s4045 + $0x70] sm:$0xff]
      %v4061 = vld [vmem:[%s4045 + $0x78] sm:$0xff]
      %v4062 = vld [vmem:[%s4045 + $0x80] sm:$0xff]
      %v4063 = vld [vmem:[%s4045 + $0x88] sm:$0xff]
      %v4064 = vld [vmem:[%s4045 + $0x90] sm:$0xff]
      %v4065 = vld [vmem:[%s4045 + $0x98] sm:$0xff]
      %v4066 = vld [vmem:[%s4045 + $0xa0] sm:$0xff]
      %v4067 = vld [vmem:[%s4045 + $0xa8] sm:$0xff]
      %v4068 = vld [vmem:[%s4045 + $0xb0] sm:$0xff]
      %v4069 = vld [vmem:[%s4045 + $0xb8] sm:$0xff]
      %v4070 = vld [vmem:[%s4045 + $0xc0] sm:$0xff]
      %v4071 = vld [vmem:[%s4045 + $0xc8] sm:$0xff]
      %v4072 = vld [vmem:[%s4045 + $0xd0] sm:$0xff]
      %v4073 = vld [vmem:[%s4045 + $0xd8] sm:$0xff]
      %v4074 = vld [vmem:[%s4045 + $0xe0] sm:$0xff]
      %v4075 = vld [vmem:[%s4045 + $0xe8] sm:$0xff]
      %v4076 = vld [vmem:[%s4045 + $0xf0] sm:$0xff]
      %v4077 = vld [vmem:[%s4045 + $0xf8] sm:$0xff]
      %v4078 = vld [vmem:[%s4045 + $0x100] sm:$0xff]
      %v4079 = vld [vmem:[%s4045 + $0x108] sm:$0xff]
      %v4080 = vld [vmem:[%s4045 + $0x110] sm:$0xff]
      %v4081 = vld [vmem:[%s4045 + $0x118] sm:$0xff]
      %v4082 = vld [vmem:[%s4045 + $0x120] sm:$0xff]
      %v4083 = vld [vmem:[%s4045 + $0x128] sm:$0xff]
      %v4084 = vld [vmem:[%s4045 + $0x130] sm:$0xff]
      %v4085 = vld [vmem:[%s4045 + $0x138] sm:$0xff]
      %v4086 = vld [vmem:[%s4045 + $0x140] sm:$0xff]
      %v4087 = vld [vmem:[%s4045 + $0x148] sm:$0xff]
      %v4088 = vld [vmem:[%s4045 + $0x150] sm:$0xff]
      %v4089 = vld [vmem:[%s4045 + $0x158] sm:$0xff]
      %v4090 = vld [vmem:[%s4045 + $0x160] sm:$0xff]
      %v4091 = vld [vmem:[%s4045 + $0x168] sm:$0xff]
      %v4092 = vld [vmem:[%s4045 + $0x170] sm:$0xff]
      %v4093 = vld [vmem:[%s4045 + $0x178] sm:$0xff]
      %v4094 = vld [vmem:[%s4045 + $0x180] sm:$0xf]
      %v4095 = vld [vmem:[%s4045 + $0x188] sm:$0xf]
      %v4096 = vld [vmem:[%s4045 + $0x190] sm:$0xf]
      %v4097 = vld [vmem:[%s4045 + $0x198] sm:$0xf]
      %v4098 = vpack.c.bf16 %v4050, %v4046
      %v4099 = vpack.c.bf16 %v4051, %v4047
      %v4100 = vpack.c.bf16 %v4052, %v4048
      %v4101 = vpack.c.bf16 %v4053, %v4049
      %v4102 = vpack.c.bf16 %v4058, %v4054
      %v4103 = vpack.c.bf16 %v4059, %v4055
      %v4104 = vpack.c.bf16 %v4060, %v4056
      %v4105 = vpack.c.bf16 %v4061, %v4057
      %v4106 = vpack.c.bf16 %v4066, %v4062
      %v4107 = vpack.c.bf16 %v4067, %v4063
      %v4108 = vpack.c.bf16 %v4068, %v4064
      %v4109 = vpack.c.bf16 %v4069, %v4065
      %v4110 = vpack.c.bf16 %v4074, %v4070
      %v4111 = vpack.c.bf16 %v4075, %v4071
      %v4112 = vpack.c.bf16 %v4076, %v4072
      %v4113 = vpack.c.bf16 %v4077, %v4073
      %v4114 = vpack.c.bf16 %v4082, %v4078
      %v4115 = vpack.c.bf16 %v4083, %v4079
      %v4116 = vpack.c.bf16 %v4084, %v4080
      %v4117 = vpack.c.bf16 %v4085, %v4081
      %v4118 = vpack.c.bf16 %v4090, %v4086
      %v4119 = vpack.c.bf16 %v4091, %v4087
      %v4120 = vpack.c.bf16 %v4092, %v4088
      %v4121 = vpack.c.bf16 %v4093, %v4089
      %v4122 = vpack.c.bf16 %v4094, %v4094
      %v4123 = vpack.c.bf16 %v4095, %v4095
      %v4124 = vpack.c.bf16 %v4096, %v4096
      %v4125 = vpack.c.bf16 %v4097, %v4097
      %v4127 = vsel %vm417, %v4101, 0
      %v4130 = vsel %vm417, %v4105, 0
      %v4133 = vsel %vm417, %v4109, 0
      %v4136 = vsel %vm417, %v4113, 0
      %v4139 = vsel %vm417, %v4117, 0
      %v4142 = vsel %vm417, %v4121, 0
      %v4145 = vsel %vm417, %v4125, 0
      %4147 = vmatprep.subr.bf16.mxu0 %v4099
      %4148 = vmatpush1.bf16.xpose.msra.mxu0 %v4098
      %4149 = vmatprep.subr.bf16.mxu0 %v4103
      %4150 = vmatpush1.bf16.xpose.msra.mxu0 %v4102
      %4151 = vmatprep.subr.bf16.mxu0 %v4107
      %4152 = vmatpush1.bf16.xpose.msra.mxu0 %v4106
      %4153 = vmatprep.subr.bf16.mxu0 %v4111
      %4154 = vmatpush1.bf16.xpose.msra.mxu0 %v4110
      %4155 = vmatprep.subr.bf16.mxu0 %v4115
      %4156 = vmatpush1.bf16.xpose.msra.mxu0 %v4114
      %4157 = vmatprep.subr.bf16.mxu0 %v4119
      %4158 = vmatpush1.bf16.xpose.msra.mxu0 %v4118
      %4159 = vmatprep.subr.bf16.mxu0 %v4123
      %4160 = vmatpush1.bf16.xpose.msra.mxu0 %v4122
      %4161 = vmatprep.subr.bf16.mxu0 0
      %4162 = vmatpush1.bf16.xpose.msra.mxu0 0
      %4163 = vmatprep.subr.bf16.mxu0 0
      %4164 = vmatpush1.bf16.xpose.msra.mxu0 0
      %4165 = vmatprep.subr.bf16.mxu0 0
      %4166 = vmatpush1.bf16.xpose.msra.mxu0 0
      %4167 = vmatprep.subr.bf16.mxu0 0
      %4168 = vmatpush1.bf16.xpose.msra.mxu0 0
      %4169 = vmatprep.subr.bf16.mxu0 0
      %4170 = vmatpush1.bf16.xpose.msra.mxu0 0
      %4171 = vmatprep.subr.bf16.mxu0 0
      %4172 = vmatpush1.bf16.xpose.msra.mxu0 0
      %4173 = vmatprep.subr.bf16.mxu0 0
      %4174 = vmatpush1.bf16.xpose.msra.mxu0 0
      %4175 = vmatprep.subr.bf16.mxu0 0
      %4176 = vmatpush1.bf16.xpose.msra.mxu0 0
      %4177 = vmatprep.subr.bf16.mxu0 0
      %4178 = vmatpush1.bf16.xpose.msra.mxu0 0
      %4179 = vmatprep.mubr.bf16.mxu0 %v3302
      %4180 = vmatmul.mubr.bf16.gmra.mrb[0].mxu0 %v3301
      %v4181 = vpop.f32.mrb[0].mxu0
      %v4182 = vadd.f32 0.0, %v4181
      %v4183 = vpop.f32.mrb[0].mxu0
      %v4184 = vpop.f32.mrb[0].mxu0
      %v4185 = vadd.f32 0.0, %v4184
      %v4186 = vpop.f32.mrb[0].mxu0
      %4187 = vmatprep.mubr.bf16.mxu0 %v3306
      %4188 = vmatmul.mubr.bf16.gmra.mrb[0].mxu0 %v3305
      %v4189 = vpop.f32.mrb[0].mxu0
      %v4190 = vadd.f32 0.0, %v4189
      %v4191 = vpop.f32.mrb[0].mxu0
      %v4192 = vpop.f32.mrb[0].mxu0
      %v4193 = vadd.f32 0.0, %v4192
      %v4194 = vpop.f32.mrb[0].mxu0
      %4195 = vmatprep.mubr.bf16.mxu0 %v3310
      %4196 = vmatmul.mubr.bf16.gmra.mrb[0].mxu0 %v3309
      %v4197 = vpop.f32.mrb[0].mxu0
      %v4198 = vadd.f32 0.0, %v4197
      %v4199 = vpop.f32.mrb[0].mxu0
      %v4200 = vpop.f32.mrb[0].mxu0
      %v4201 = vadd.f32 0.0, %v4200
      %v4202 = vpop.f32.mrb[0].mxu0
      %4203 = vmatprep.mubr.bf16.mxu0 %v3314
      %4204 = vmatmul.mubr.bf16.gmra.mrb[0].mxu0 %v3313
      %v4205 = vpop.f32.mrb[0].mxu0
      %v4206 = vadd.f32 0.0, %v4205
      %v4207 = vpop.f32.mrb[0].mxu0
      %v4208 = vpop.f32.mrb[0].mxu0
      %v4209 = vadd.f32 0.0, %v4208
      %v4210 = vpop.f32.mrb[0].mxu0
      %4211 = vmatprep.mubr.bf16.mxu0 %v3318
      %4212 = vmatmul.mubr.bf16.gmra.mrb[0].mxu0 %v3317
      %v4213 = vpop.f32.mrb[0].mxu0
      %v4214 = vadd.f32 0.0, %v4213
      %v4215 = vpop.f32.mrb[0].mxu0
      %v4216 = vpop.f32.mrb[0].mxu0
      %v4217 = vadd.f32 0.0, %v4216
      %v4218 = vpop.f32.mrb[0].mxu0
      %4219 = vmatprep.mubr.bf16.mxu0 %v3322
      %4220 = vmatmul.mubr.bf16.gmra.mrb[0].mxu0 %v3321
      %v4221 = vpop.f32.mrb[0].mxu0
      %v4222 = vadd.f32 0.0, %v4221
      %v4223 = vpop.f32.mrb[0].mxu0
      %v4224 = vpop.f32.mrb[0].mxu0
      %v4225 = vadd.f32 0.0, %v4224
      %v4226 = vpop.f32.mrb[0].mxu0
      %4227 = vmatprep.mubr.bf16.mxu0 %v3326
      %4228 = vmatmul.mubr.bf16.gmra.mrb[0].mxu0 %v3325
      %v4229 = vpop.f32.mrb[0].mxu0
      %v4230 = vadd.f32 0.0, %v4229
      %v4231 = vpop.f32.mrb[0].mxu0
      %v4232 = vpop.f32.mrb[0].mxu0
      %v4233 = vpop.f32.mrb[0].mxu0
      %4234 = vdwg.mxu0
      %4235 = vmatprep.subr.bf16.mxu0 %v4127
      %4236 = vmatpush1.bf16.xpose.msra.mxu0 %v4100
      %4237 = vmatprep.subr.bf16.mxu0 %v4130
      %4238 = vmatpush1.bf16.xpose.msra.mxu0 %v4104
      %4239 = vmatprep.subr.bf16.mxu0 %v4133
      %4240 = vmatpush1.bf16.xpose.msra.mxu0 %v4108
      %4241 = vmatprep.subr.bf16.mxu0 %v4136
      %4242 = vmatpush1.bf16.xpose.msra.mxu0 %v4112
      %4243 = vmatprep.subr.bf16.mxu0 %v4139
      %4244 = vmatpush1.bf16.xpose.msra.mxu0 %v4116
      %4245 = vmatprep.subr.bf16.mxu0 %v4142
      %4246 = vmatpush1.bf16.xpose.msra.mxu0 %v4120
      %4247 = vmatprep.subr.bf16.mxu0 %v4145
      %4248 = vmatpush1.bf16.xpose.msra.mxu0 %v4124
      %4249 = vmatprep.subr.bf16.mxu0 0
      %4250 = vmatpush1.bf16.xpose.msra.mxu0 0
      %4251 = vmatprep.subr.bf16.mxu0 0
      %4252 = vmatpush1.bf16.xpose.msra.mxu0 0
      %4253 = vmatprep.subr.bf16.mxu0 0
      %4254 = vmatpush1.bf16.xpose.msra.mxu0 0
      %4255 = vmatprep.subr.bf16.mxu0 0
      %4256 = vmatpush1.bf16.xpose.msra.mxu0 0
      %4257 = vmatprep.subr.bf16.mxu0 0
      %4258 = vmatpush1.bf16.xpose.msra.mxu0 0
      %4259 = vmatprep.subr.bf16.mxu0 0
      %4260 = vmatpush1.bf16.xpose.msra.mxu0 0
      %4261 = vmatprep.subr.bf16.mxu0 0
      %4262 = vmatpush1.bf16.xpose.msra.mxu0 0
      %4263 = vmatprep.subr.bf16.mxu0 0
      %4264 = vmatpush1.bf16.xpose.msra.mxu0 0
      %4265 = vmatprep.subr.bf16.mxu0 0
      %4266 = vmatpush1.bf16.xpose.msra.mxu0 0
      %4267 = vmatprep.mubr.bf16.mxu0 %v3411
      %4268 = vmatmul.mubr.bf16.gmra.mrb[0].mxu0 %v3303
      %v4269 = vpop.f32.mrb[0].mxu0
      %v4270 = vadd.f32 %v4182, %v4269
      %v4271 = vpop.f32.mrb[0].mxu0
      %v4272 = vpop.f32.mrb[0].mxu0
      %v4273 = vadd.f32 %v4185, %v4272
      %v4274 = vpop.f32.mrb[0].mxu0
      %4275 = vmatprep.mubr.bf16.mxu0 %v3414
      %4276 = vmatmul.mubr.bf16.gmra.mrb[0].mxu0 %v3307
      %v4277 = vpop.f32.mrb[0].mxu0
      %v4278 = vadd.f32 %v4190, %v4277
      %v4279 = vpop.f32.mrb[0].mxu0
      %v4280 = vpop.f32.mrb[0].mxu0
      %v4281 = vadd.f32 %v4193, %v4280
      %v4282 = vpop.f32.mrb[0].mxu0
      %4283 = vmatprep.mubr.bf16.mxu0 %v3417
      %4284 = vmatmul.mubr.bf16.gmra.mrb[0].mxu0 %v3311
      %v4285 = vpop.f32.mrb[0].mxu0
      %v4286 = vadd.f32 %v4198, %v4285
      %v4287 = vpop.f32.mrb[0].mxu0
      %v4288 = vpop.f32.mrb[0].mxu0
      %v4289 = vadd.f32 %v4201, %v4288
      %v4290 = vpop.f32.mrb[0].mxu0
      %4291 = vmatprep.mubr.bf16.mxu0 %v3420
      %4292 = vmatmul.mubr.bf16.gmra.mrb[0].mxu0 %v3315
      %v4293 = vpop.f32.mrb[0].mxu0
      %v4294 = vadd.f32 %v4206, %v4293
      %v4295 = vpop.f32.mrb[0].mxu0
      %v4296 = vpop.f32.mrb[0].mxu0
      %v4297 = vadd.f32 %v4209, %v4296
      %v4298 = vpop.f32.mrb[0].mxu0
      %4299 = vmatprep.mubr.bf16.mxu0 %v3423
      %4300 = vmatmul.mubr.bf16.gmra.mrb[0].mxu0 %v3319
      %v4301 = vpop.f32.mrb[0].mxu0
      %v4302 = vadd.f32 %v4214, %v4301
      %v4303 = vpop.f32.mrb[0].mxu0
      %v4304 = vpop.f32.mrb[0].mxu0
      %v4305 = vadd.f32 %v4217, %v4304
      %v4306 = vpop.f32.mrb[0].mxu0
      %4307 = vmatprep.mubr.bf16.mxu0 %v3426
      %4308 = vmatmul.mubr.bf16.gmra.mrb[0].mxu0 %v3323
      %v4309 = vpop.f32.mrb[0].mxu0
      %v4310 = vadd.f32 %v4222, %v4309
      %v4311 = vpop.f32.mrb[0].mxu0
      %v4312 = vpop.f32.mrb[0].mxu0
      %v4313 = vadd.f32 %v4225, %v4312
      %v4314 = vpop.f32.mrb[0].mxu0
      %4315 = vmatprep.mubr.bf16.mxu0 %v3429
      %4316 = vmatmul.mubr.bf16.gmra.mrb[0].mxu0 %v3327
      %v4317 = vpop.f32.mrb[0].mxu0
      %v4318 = vadd.f32 %v4230, %v4317
      %v4319 = vpop.f32.mrb[0].mxu0
      %v4320 = vpop.f32.mrb[0].mxu0
      %v4321 = vpop.f32.mrb[0].mxu0
      %4322 = vdwg.mxu0
      %v4323 = vmul.f32 %v4270, 0.002
      %v4324 = vmul.f32 %v4273, 0.002
      %v4325 = vmul.f32 %v4278, 0.002
      %v4326 = vmul.f32 %v4281, 0.002
      %v4327 = vmul.f32 %v4286, 0.002
      %v4328 = vmul.f32 %v4289, 0.002
      %v4329 = vmul.f32 %v4294, 0.002
      %v4330 = vmul.f32 %v4297, 0.002
      %v4331 = vmul.f32 %v4302, 0.002
      %v4332 = vmul.f32 %v4305, 0.002
      %v4333 = vmul.f32 %v4310, 0.002
      %v4334 = vmul.f32 %v4313, 0.002
      %v4335 = vmul.f32 %v4318, 0.002
      %v4336 = vsel %vm649, %v4323, -inf
      %4337 = vmax.xlane.f32.xlu0 %v4336
      %v4338 = vpop.xlane.xlu0 %4337
      %v4339 = vsel %vm649, %v4324, -inf
      %4340 = vmax.xlane.f32.xlu0 %v4339
      %v4341 = vpop.xlane.xlu0 %4340
      %v4342 = vsel %vm649, %v4325, -inf
      %4343 = vmax.xlane.f32.xlu0 %v4342
      %v4344 = vpop.xlane.xlu0 %4343
      %v4345 = vsel %vm649, %v4326, -inf
      %4346 = vmax.xlane.f32.xlu0 %v4345
      %v4347 = vpop.xlane.xlu0 %4346
      %v4348 = vsel %vm649, %v4327, -inf
      %4349 = vmax.xlane.f32.xlu0 %v4348
      %v4350 = vpop.xlane.xlu0 %4349
      %v4351 = vsel %vm649, %v4328, -inf
      %4352 = vmax.xlane.f32.xlu0 %v4351
      %v4353 = vpop.xlane.xlu0 %4352
      %v4354 = vsel %vm649, %v4329, -inf
      %4355 = vmax.xlane.f32.xlu0 %v4354
      %v4356 = vpop.xlane.xlu0 %4355
      %v4357 = vsel %vm649, %v4330, -inf
      %4358 = vmax.xlane.f32.xlu0 %v4357
      %v4359 = vpop.xlane.xlu0 %4358
      %v4360 = vsel %vm649, %v4331, -inf
      %4361 = vmax.xlane.f32.xlu0 %v4360
      %v4362 = vpop.xlane.xlu0 %4361
      %v4363 = vsel %vm649, %v4332, -inf
      %4364 = vmax.xlane.f32.xlu0 %v4363
      %v4365 = vpop.xlane.xlu0 %4364
      %v4366 = vsel %vm649, %v4333, -inf
      %4367 = vmax.xlane.f32.xlu0 %v4366
      %v4368 = vpop.xlane.xlu0 %4367
      %v4369 = vsel %vm649, %v4334, -inf
      %4370 = vmax.xlane.f32.xlu0 %v4369
      %v4371 = vpop.xlane.xlu0 %4370
      %v4372 = vsel %vm686, %v4335, -inf
      %4373 = vmax.xlane.f32.xlu0 %v4372
      %v4374 = vpop.xlane.xlu0 %4373
      %v4375 = vsub.f32 %v4323, %v4338
      %v4376 = vsub.f32 %v4324, %v4341
      %v4377 = vsub.f32 %v4325, %v4344
      %v4378 = vsub.f32 %v4326, %v4347
      %v4379 = vsub.f32 %v4327, %v4350
      %v4380 = vsub.f32 %v4328, %v4353
      %v4381 = vsub.f32 %v4329, %v4356
      %v4382 = vsub.f32 %v4330, %v4359
      %v4383 = vsub.f32 %v4331, %v4362
      %v4384 = vsub.f32 %v4332, %v4365
      %v4385 = vsub.f32 %v4333, %v4368
      %v4386 = vsub.f32 %v4334, %v4371
      %v4387 = vsub.f32 %v4335, %v4374
      %v4388 = vmul.f32 %v4375, 1.442695
      %v4389 = vpow.pop %v4388
      %v4390 = vmul.f32 %v4376, 1.442695
      %v4391 = vpow.pop %v4390
      %v4392 = vmul.f32 %v4377, 1.442695
      %v4393 = vpow.pop %v4392
      %v4394 = vmul.f32 %v4378, 1.442695
      %v4395 = vpow.pop %v4394
      %v4396 = vmul.f32 %v4379, 1.442695
      %v4397 = vpow.pop %v4396
      %v4398 = vmul.f32 %v4380, 1.442695
      %v4399 = vpow.pop %v4398
      %v4400 = vmul.f32 %v4381, 1.442695
      %v4401 = vpow.pop %v4400
      %v4402 = vmul.f32 %v4382, 1.442695
      %v4403 = vpow.pop %v4402
      %v4404 = vmul.f32 %v4383, 1.442695
      %v4405 = vpow.pop %v4404
      %v4406 = vmul.f32 %v4384, 1.442695
      %v4407 = vpow.pop %v4406
      %v4408 = vmul.f32 %v4385, 1.442695
      %v4409 = vpow.pop %v4408
      %v4410 = vmul.f32 %v4386, 1.442695
      %v4411 = vpow.pop %v4410
      %v4412 = vmul.f32 %v4387, 1.442695
      %v4413 = vpow.pop %v4412
      %v4414 = vsel %vm649, %v4389, 0.0
      %4415 = vadd.xlane.f32.xlu0 %v4414
      %v4416 = vpop.xlane.xlu0 %4415
      %v4417 = vsel %vm649, %v4391, 0.0
      %4418 = vadd.xlane.f32.xlu0 %v4417
      %v4419 = vpop.xlane.xlu0 %4418
      %v4420 = vsel %vm649, %v4393, 0.0
      %4421 = vadd.xlane.f32.xlu0 %v4420
      %v4422 = vpop.xlane.xlu0 %4421
      %v4423 = vsel %vm649, %v4395, 0.0
      %4424 = vadd.xlane.f32.xlu0 %v4423
      %v4425 = vpop.xlane.xlu0 %4424
      %v4426 = vsel %vm649, %v4397, 0.0
      %4427 = vadd.xlane.f32.xlu0 %v4426
      %v4428 = vpop.xlane.xlu0 %4427
      %v4429 = vsel %vm649, %v4399, 0.0
      %4430 = vadd.xlane.f32.xlu0 %v4429
      %v4431 = vpop.xlane.xlu0 %4430
      %v4432 = vsel %vm649, %v4401, 0.0
      %4433 = vadd.xlane.f32.xlu0 %v4432
      %v4434 = vpop.xlane.xlu0 %4433
      %v4435 = vsel %vm649, %v4403, 0.0
      %4436 = vadd.xlane.f32.xlu0 %v4435
      %v4437 = vpop.xlane.xlu0 %4436
      %v4438 = vsel %vm649, %v4405, 0.0
      %4439 = vadd.xlane.f32.xlu0 %v4438
      %v4440 = vpop.xlane.xlu0 %4439
      %v4441 = vsel %vm649, %v4407, 0.0
      %4442 = vadd.xlane.f32.xlu0 %v4441
      %v4443 = vpop.xlane.xlu0 %4442
      %v4444 = vsel %vm649, %v4409, 0.0
      %4445 = vadd.xlane.f32.xlu0 %v4444
      %v4446 = vpop.xlane.xlu0 %4445
      %v4447 = vsel %vm649, %v4411, 0.0
      %4448 = vadd.xlane.f32.xlu0 %v4447
      %v4449 = vpop.xlane.xlu0 %4448
      %v4450 = vsel %vm686, %v4413, 0.0
      %4451 = vadd.xlane.f32.xlu0 %v4450
      %v4452 = vpop.xlane.xlu0 %4451
      %v4453 = vrcp.pop %v4416
      %v4454 = vrcp.pop %v4419
      %v4455 = vrcp.pop %v4422
      %v4456 = vrcp.pop %v4425
      %v4457 = vrcp.pop %v4428
      %v4458 = vrcp.pop %v4431
      %v4459 = vrcp.pop %v4434
      %v4460 = vrcp.pop %v4437
      %v4461 = vrcp.pop %v4440
      %v4462 = vrcp.pop %v4443
      %v4463 = vrcp.pop %v4446
      %v4464 = vrcp.pop %v4449
      %v4465 = vrcp.pop %v4452
      %v4466 = vmul.f32 %v4389, %v4453
      %v4467 = vmul.f32 %v4391, %v4454
      %v4468 = vmul.f32 %v4393, %v4455
      %v4469 = vmul.f32 %v4395, %v4456
      %v4470 = vmul.f32 %v4397, %v4457
      %v4471 = vmul.f32 %v4399, %v4458
      %v4472 = vmul.f32 %v4401, %v4459
      %v4473 = vmul.f32 %v4403, %v4460
      %v4474 = vmul.f32 %v4405, %v4461
      %v4475 = vmul.f32 %v4407, %v4462
      %v4476 = vmul.f32 %v4409, %v4463
      %v4477 = vmul.f32 %v4411, %v4464
      %v4478 = vmul.f32 %v4413, %v4465
      %v4480 = vsel %vm797, %v4478, 0
      %4482 = vmatprep.subr.mxu0 0.0
      %4483 = vmatpush1.msra.mxu0 %v4466
      %4484 = vmatprep.subr.mxu0 0.0
      %4485 = vmatpush1.msra.mxu0 %v4467
      %4486 = vmatprep.subr.mxu0 0.0
      %4487 = vmatpush1.msra.mxu0 %v4468
      %4488 = vmatprep.subr.mxu0 0.0
      %4489 = vmatpush1.msra.mxu0 %v4469
      %4490 = vmatprep.subr.mxu0 0.0
      %4491 = vmatpush1.msra.mxu0 %v4470
      %4492 = vmatprep.subr.mxu0 0.0
      %4493 = vmatpush1.msra.mxu0 %v4471
      %4494 = vmatprep.subr.mxu0 0.0
      %4495 = vmatpush1.msra.mxu0 %v4472
      %4496 = vmatprep.subr.mxu0 0.0
      %4497 = vmatpush1.msra.mxu0 %v4473
      %4498 = vmatprep.subr.mxu0 0.0
      %4499 = vmatpush1.msra.mxu0 %v4474
      %4500 = vmatprep.subr.mxu0 0.0
      %4501 = vmatpush1.msra.mxu0 %v4475
      %4502 = vmatprep.subr.mxu0 0.0
      %4503 = vmatpush1.msra.mxu0 %v4476
      %4504 = vmatprep.subr.mxu0 0.0
      %4505 = vmatpush1.msra.mxu0 %v4477
      %4506 = vmatprep.subr.mxu0 0.0
      %4507 = vmatpush1.msra.mxu0 %v4480
      %4508 = vmatprep.subr.mxu0 0.0
      %4509 = vmatpush1.msra.mxu0 0.0
      %4510 = vmatprep.subr.mxu0 0.0
      %4511 = vmatpush1.msra.mxu0 0.0
      %4512 = vmatprep.subr.mxu0 0.0
      %4513 = vmatpush1.msra.mxu0 0.0
      %4514 = vmatprep.subr.mxu0 0.0
      %4515 = vmatpush1.msra.mxu0 0.0
      %4516 = vmatprep.subr.mxu0 0.0
      %4517 = vmatpush1.msra.mxu0 0.0
      %4518 = vmatprep.subr.mxu0 0.0
      %4519 = vmatpush1.msra.mxu0 0.0
      %4520 = vmatprep.subr.mxu0 0.0
      %4521 = vmatpush1.msra.mxu0 0.0
      %4522 = vmatprep.subr.mxu0 0.0
      %4523 = vmatpush1.msra.mxu0 0.0
      %4524 = vmatprep.subr.mxu0 0.0
      %4525 = vmatpush1.msra.mxu0 0.0
      %4526 = vmatprep.subr.mxu0 0.0
      %4527 = vmatpush1.msra.mxu0 0.0
      %4528 = vmatprep.subr.mxu0 0.0
      %4529 = vmatpush1.msra.mxu0 0.0
      %4530 = vmatprep.subr.mxu0 0.0
      %4531 = vmatpush1.msra.mxu0 0.0
      %4532 = vmatprep.subr.mxu0 0.0
      %4533 = vmatpush1.msra.mxu0 0.0
      %4534 = vmatprep.subr.mxu0 0.0
      %4535 = vmatpush1.msra.mxu0 0.0
      %4536 = vmatprep.subr.mxu0 0.0
      %4537 = vmatpush1.msra.mxu0 0.0
      %4538 = vmatprep.subr.mxu0 0.0
      %4539 = vmatpush1.msra.mxu0 0.0
      %4540 = vmatprep.subr.mxu0 0.0
      %4541 = vmatpush1.msra.mxu0 0.0
      %4542 = vmatprep.subr.mxu0 0.0
      %4543 = vmatpush1.msra.mxu0 0.0
      %4544 = vmatprep.subr.mxu0 0.0
      %4545 = vmatpush1.msra.mxu0 0.0
      %4546 = vmatprep.mubr.f32.mxu0 0.0
      %4547 = vmatmul.mubr.f32.gmra.mrb[0].mxu0 %v795
      %v4548 = vpop.f32.mrb[0].mxu0
      %v4549 = vadd.f32 0.0, %v4548
      %v4550 = vpop.f32.mrb[0].mxu0
      %4551 = vdwg.mxu0
      %v4553 = vsel %vm649, %v4549, 0
      %v4556 = vsel %vm797, %v4094, 0
      %v4559 = vsel %vm797, %v4095, 0
      %v4562 = vsel %vm797, %v4096, 0
      %v4565 = vsel %vm797, %v4097, 0
      %4567 = vmatprep.subr.mxu0 %v4047
      %4568 = vmatpush1.msra.mxu0 %v4046
      %4569 = vmatprep.subr.mxu0 %v4051
      %4570 = vmatpush1.msra.mxu0 %v4050
      %4571 = vmatprep.subr.mxu0 %v4055
      %4572 = vmatpush1.msra.mxu0 %v4054
      %4573 = vmatprep.subr.mxu0 %v4059
      %4574 = vmatpush1.msra.mxu0 %v4058
      %4575 = vmatprep.subr.mxu0 %v4063
      %4576 = vmatpush1.msra.mxu0 %v4062
      %4577 = vmatprep.subr.mxu0 %v4067
      %4578 = vmatpush1.msra.mxu0 %v4066
      %4579 = vmatprep.subr.mxu0 %v4071
      %4580 = vmatpush1.msra.mxu0 %v4070
      %4581 = vmatprep.subr.mxu0 %v4075
      %4582 = vmatpush1.msra.mxu0 %v4074
      %4583 = vmatprep.subr.mxu0 %v4079
      %4584 = vmatpush1.msra.mxu0 %v4078
      %4585 = vmatprep.subr.mxu0 %v4083
      %4586 = vmatpush1.msra.mxu0 %v4082
      %4587 = vmatprep.subr.mxu0 %v4087
      %4588 = vmatpush1.msra.mxu0 %v4086
      %4589 = vmatprep.subr.mxu0 %v4091
      %4590 = vmatpush1.msra.mxu0 %v4090
      %4591 = vmatprep.subr.mxu0 %v4559
      %4592 = vmatpush1.msra.mxu0 %v4556
      %4593 = vmatprep.subr.mxu0 0.0
      %4594 = vmatpush1.msra.mxu0 0.0
      %4595 = vmatprep.subr.mxu0 0.0
      %4596 = vmatpush1.msra.mxu0 0.0
      %4597 = vmatprep.subr.mxu0 0.0
      %4598 = vmatpush1.msra.mxu0 0.0
      %4599 = vmatprep.subr.mxu0 0.0
      %4600 = vmatpush1.msra.mxu0 0.0
      %4601 = vmatprep.subr.mxu0 0.0
      %4602 = vmatpush1.msra.mxu0 0.0
      %4603 = vmatprep.subr.mxu0 0.0
      %4604 = vmatpush1.msra.mxu0 0.0
      %4605 = vmatprep.subr.mxu0 0.0
      %4606 = vmatpush1.msra.mxu0 0.0
      %4607 = vmatprep.subr.mxu0 0.0
      %4608 = vmatpush1.msra.mxu0 0.0
      %4609 = vmatprep.subr.mxu0 0.0
      %4610 = vmatpush1.msra.mxu0 0.0
      %4611 = vmatprep.subr.mxu0 0.0
      %4612 = vmatpush1.msra.mxu0 0.0
      %4613 = vmatprep.subr.mxu0 0.0
      %4614 = vmatpush1.msra.mxu0 0.0
      %4615 = vmatprep.subr.mxu0 0.0
      %4616 = vmatpush1.msra.mxu0 0.0
      %4617 = vmatprep.subr.mxu0 0.0
      %4618 = vmatpush1.msra.mxu0 0.0
      %4619 = vmatprep.subr.mxu0 0.0
      %4620 = vmatpush1.msra.mxu0 0.0
      %4621 = vmatprep.subr.mxu0 0.0
      %4622 = vmatpush1.msra.mxu0 0.0
      %4623 = vmatprep.subr.mxu0 0.0
      %4624 = vmatpush1.msra.mxu0 0.0
      %4625 = vmatprep.subr.mxu0 0.0
      %4626 = vmatpush1.msra.mxu0 0.0
      %4627 = vmatprep.subr.mxu0 0.0
      %4628 = vmatpush1.msra.mxu0 0.0
      %4629 = vmatprep.subr.mxu0 0.0
      %4630 = vmatpush1.msra.mxu0 0.0
      %4631 = vmatprep.mubr.f32.mxu0 0.0
      %4632 = vmatmul.mubr.f32.gmra.mrb[0].mxu0 %v4553
      %v4633 = vpop.f32.mrb[0].mxu0
      %v4634 = vadd.f32 0.0, %v4633
      %v4635 = vpop.f32.mrb[0].mxu0
      %v4636 = vadd.f32 0.0, %v4635
      %4637 = vdwg.mxu0
      %4638 = vmatprep.subr.mxu0 %v4049
      %4639 = vmatpush1.msra.mxu0 %v4048
      %4640 = vmatprep.subr.mxu0 %v4053
      %4641 = vmatpush1.msra.mxu0 %v4052
      %4642 = vmatprep.subr.mxu0 %v4057
      %4643 = vmatpush1.msra.mxu0 %v4056
      %4644 = vmatprep.subr.mxu0 %v4061
      %4645 = vmatpush1.msra.mxu0 %v4060
      %4646 = vmatprep.subr.mxu0 %v4065
      %4647 = vmatpush1.msra.mxu0 %v4064
      %4648 = vmatprep.subr.mxu0 %v4069
      %4649 = vmatpush1.msra.mxu0 %v4068
      %4650 = vmatprep.subr.mxu0 %v4073
      %4651 = vmatpush1.msra.mxu0 %v4072
      %4652 = vmatprep.subr.mxu0 %v4077
      %4653 = vmatpush1.msra.mxu0 %v4076
      %4654 = vmatprep.subr.mxu0 %v4081
      %4655 = vmatpush1.msra.mxu0 %v4080
      %4656 = vmatprep.subr.mxu0 %v4085
      %4657 = vmatpush1.msra.mxu0 %v4084
      %4658 = vmatprep.subr.mxu0 %v4089
      %4659 = vmatpush1.msra.mxu0 %v4088
      %4660 = vmatprep.subr.mxu0 %v4093
      %4661 = vmatpush1.msra.mxu0 %v4092
      %4662 = vmatprep.subr.mxu0 %v4565
      %4663 = vmatpush1.msra.mxu0 %v4562
      %4664 = vmatprep.subr.mxu0 0.0
      %4665 = vmatpush1.msra.mxu0 0.0
      %4666 = vmatprep.subr.mxu0 0.0
      %4667 = vmatpush1.msra.mxu0 0.0
      %4668 = vmatprep.subr.mxu0 0.0
      %4669 = vmatpush1.msra.mxu0 0.0
      %4670 = vmatprep.subr.mxu0 0.0
      %4671 = vmatpush1.msra.mxu0 0.0
      %4672 = vmatprep.subr.mxu0 0.0
      %4673 = vmatpush1.msra.mxu0 0.0
      %4674 = vmatprep.subr.mxu0 0.0
      %4675 = vmatpush1.msra.mxu0 0.0
      %4676 = vmatprep.subr.mxu0 0.0
      %4677 = vmatpush1.msra.mxu0 0.0
      %4678 = vmatprep.subr.mxu0 0.0
      %4679 = vmatpush1.msra.mxu0 0.0
      %4680 = vmatprep.subr.mxu0 0.0
      %4681 = vmatpush1.msra.mxu0 0.0
      %4682 = vmatprep.subr.mxu0 0.0
      %4683 = vmatpush1.msra.mxu0 0.0
      %4684 = vmatprep.subr.mxu0 0.0
      %4685 = vmatpush1.msra.mxu0 0.0
      %4686 = vmatprep.subr.mxu0 0.0
      %4687 = vmatpush1.msra.mxu0 0.0
      %4688 = vmatprep.subr.mxu0 0.0
      %4689 = vmatpush1.msra.mxu0 0.0
      %4690 = vmatprep.subr.mxu0 0.0
      %4691 = vmatpush1.msra.mxu0 0.0
      %4692 = vmatprep.subr.mxu0 0.0
      %4693 = vmatpush1.msra.mxu0 0.0
      %4694 = vmatprep.subr.mxu0 0.0
      %4695 = vmatpush1.msra.mxu0 0.0
      %4696 = vmatprep.subr.mxu0 0.0
      %4697 = vmatpush1.msra.mxu0 0.0
      %4698 = vmatprep.subr.mxu0 0.0
      %4699 = vmatpush1.msra.mxu0 0.0
      %4700 = vmatprep.subr.mxu0 0.0
      %4701 = vmatpush1.msra.mxu0 0.0
      %4702 = vmatprep.mubr.f32.mxu0 0.0
      %4703 = vmatmul.mubr.f32.gmra.mrb[0].mxu0 %v4553
      %v4704 = vpop.f32.mrb[0].mxu0
      %v4705 = vadd.f32 0.0, %v4704
      %v4706 = vpop.f32.mrb[0].mxu0
      %v4707 = vadd.f32 0.0, %v4706
      %4708 = vdwg.mxu0
      %v4713 = vcombine.low %v4634, %v4636
      %v4714 = vcombine.low %v4705, %v4707
      %v4716 = vunpack.c.l.s4 1966171168
      %v4717 = vunpack.c.0.s8 %v4716
      %v4718 = vlaneseq
      %v4719 = vshrl.u32 %v4718, 7
      %v4720 = vsub.s32 %v4717, %v4719
      %v4721 = vrot.slane %v4713, %v4720
      %v4723 = vunpack.c.l.s4 1966171168
      %v4724 = vunpack.c.0.s8 %v4723
      %v4725 = vlaneseq
      %v4726 = vshrl.u32 %v4725, 7
      %v4727 = vsub.s32 %v4724, %v4726
      %v4728 = vrot.slane %v4714, %v4727
      %v4729 = vcombine.low %v4721, %v4728
      %v4731 = vunpack.c.l.s4 1966171168
      %v4732 = vunpack.c.0.s8 %v4731
      %v4733 = vlaneseq
      %v4734 = vshrl.u32 %v4733, 7
      %v4735 = vsub.s32 %v4732, %v4734
      %v4736 = vrot.slane %v4729, %v4735
      %s4738 = scalar_lea.vmem [#allocation3], 2
      %4739 = vst.msk [vmem:[%s4738] ss:$4 sm:$0xf] %vm1060, %v4736
      %s4740 = scalar_lea.vmem %s249, 4576
      %v4741 = vld [vmem:[%s4740] sm:$0xff]
      %v4742 = vld [vmem:[%s4740 + $0x8] sm:$0xff]
      %v4743 = vld [vmem:[%s4740 + $0x10] sm:$0xff]
      %v4744 = vld [vmem:[%s4740 + $0x18] sm:$0xff]
      %v4745 = vld [vmem:[%s4740 + $0x20] sm:$0xff]
      %v4746 = vld [vmem:[%s4740 + $0x28] sm:$0xff]
      %v4747 = vld [vmem:[%s4740 + $0x30] sm:$0xff]
      %v4748 = vld [vmem:[%s4740 + $0x38] sm:$0xff]
      %v4749 = vld [vmem:[%s4740 + $0x40] sm:$0xff]
      %v4750 = vld [vmem:[%s4740 + $0x48] sm:$0xff]
      %v4751 = vld [vmem:[%s4740 + $0x50] sm:$0xff]
      %v4752 = vld [vmem:[%s4740 + $0x58] sm:$0xff]
      %v4753 = vld [vmem:[%s4740 + $0x60] sm:$0xff]
      %v4754 = vld [vmem:[%s4740 + $0x68] sm:$0xff]
      %v4755 = vld [vmem:[%s4740 + $0x70] sm:$0xff]
      %v4756 = vld [vmem:[%s4740 + $0x78] sm:$0xff]
      %v4757 = vld [vmem:[%s4740 + $0x80] sm:$0xff]
      %v4758 = vld [vmem:[%s4740 + $0x88] sm:$0xff]
      %v4759 = vld [vmem:[%s4740 + $0x90] sm:$0xff]
      %v4760 = vld [vmem:[%s4740 + $0x98] sm:$0xff]
      %v4761 = vld [vmem:[%s4740 + $0xa0] sm:$0xff]
      %v4762 = vld [vmem:[%s4740 + $0xa8] sm:$0xff]
      %v4763 = vld [vmem:[%s4740 + $0xb0] sm:$0xff]
      %v4764 = vld [vmem:[%s4740 + $0xb8] sm:$0xff]
      %v4765 = vld [vmem:[%s4740 + $0xc0] sm:$0xff]
      %v4766 = vld [vmem:[%s4740 + $0xc8] sm:$0xff]
      %v4767 = vld [vmem:[%s4740 + $0xd0] sm:$0xff]
      %v4768 = vld [vmem:[%s4740 + $0xd8] sm:$0xff]
      %v4769 = vld [vmem:[%s4740 + $0xe0] sm:$0xff]
      %v4770 = vld [vmem:[%s4740 + $0xe8] sm:$0xff]
      %v4771 = vld [vmem:[%s4740 + $0xf0] sm:$0xff]
      %v4772 = vld [vmem:[%s4740 + $0xf8] sm:$0xff]
      %v4773 = vld [vmem:[%s4740 + $0x100] sm:$0xff]
      %v4774 = vld [vmem:[%s4740 + $0x108] sm:$0xff]
      %v4775 = vld [vmem:[%s4740 + $0x110] sm:$0xff]
      %v4776 = vld [vmem:[%s4740 + $0x118] sm:$0xff]
      %v4777 = vld [vmem:[%s4740 + $0x120] sm:$0xff]
      %v4778 = vld [vmem:[%s4740 + $0x128] sm:$0xff]
      %v4779 = vld [vmem:[%s4740 + $0x130] sm:$0xff]
      %v4780 = vld [vmem:[%s4740 + $0x138] sm:$0xff]
      %v4781 = vld [vmem:[%s4740 + $0x140] sm:$0xff]
      %v4782 = vld [vmem:[%s4740 + $0x148] sm:$0xff]
      %v4783 = vld [vmem:[%s4740 + $0x150] sm:$0xff]
      %v4784 = vld [vmem:[%s4740 + $0x158] sm:$0xff]
      %v4785 = vld [vmem:[%s4740 + $0x160] sm:$0xff]
      %v4786 = vld [vmem:[%s4740 + $0x168] sm:$0xff]
      %v4787 = vld [vmem:[%s4740 + $0x170] sm:$0xff]
      %v4788 = vld [vmem:[%s4740 + $0x178] sm:$0xff]
      %v4789 = vld [vmem:[%s4740 + $0x180] sm:$0xf]
      %v4790 = vld [vmem:[%s4740 + $0x188] sm:$0xf]
      %v4791 = vld [vmem:[%s4740 + $0x190] sm:$0xf]
      %v4792 = vld [vmem:[%s4740 + $0x198] sm:$0xf]
      %v4793 = vpack.c.bf16 %v4745, %v4741
      %v4794 = vpack.c.bf16 %v4746, %v4742
      %v4795 = vpack.c.bf16 %v4747, %v4743
      %v4796 = vpack.c.bf16 %v4748, %v4744
      %v4797 = vpack.c.bf16 %v4753, %v4749
      %v4798 = vpack.c.bf16 %v4754, %v4750
      %v4799 = vpack.c.bf16 %v4755, %v4751
      %v4800 = vpack.c.bf16 %v4756, %v4752
      %v4801 = vpack.c.bf16 %v4761, %v4757
      %v4802 = vpack.c.bf16 %v4762, %v4758
      %v4803 = vpack.c.bf16 %v4763, %v4759
      %v4804 = vpack.c.bf16 %v4764, %v4760
      %v4805 = vpack.c.bf16 %v4769, %v4765
      %v4806 = vpack.c.bf16 %v4770, %v4766
      %v4807 = vpack.c.bf16 %v4771, %v4767
      %v4808 = vpack.c.bf16 %v4772, %v4768
      %v4809 = vpack.c.bf16 %v4777, %v4773
      %v4810 = vpack.c.bf16 %v4778, %v4774
      %v4811 = vpack.c.bf16 %v4779, %v4775
      %v4812 = vpack.c.bf16 %v4780, %v4776
      %v4813 = vpack.c.bf16 %v4785, %v4781
      %v4814 = vpack.c.bf16 %v4786, %v4782
      %v4815 = vpack.c.bf16 %v4787, %v4783
      %v4816 = vpack.c.bf16 %v4788, %v4784
      %v4817 = vpack.c.bf16 %v4789, %v4789
      %v4818 = vpack.c.bf16 %v4790, %v4790
      %v4819 = vpack.c.bf16 %v4791, %v4791
      %v4820 = vpack.c.bf16 %v4792, %v4792
      %s4821 = scalar_lea.vmem %s249, 3744
      %v4822 = vld [vmem:[%s4821] sm:$0xff]
      %v4823 = vld [vmem:[%s4821 + $0x8] sm:$0xff]
      %v4824 = vld [vmem:[%s4821 + $0x10] sm:$0xff]
      %v4825 = vld [vmem:[%s4821 + $0x18] sm:$0xff]
      %v4826 = vld [vmem:[%s4821 + $0x20] sm:$0xff]
      %v4827 = vld [vmem:[%s4821 + $0x28] sm:$0xff]
      %v4828 = vld [vmem:[%s4821 + $0x30] sm:$0xff]
      %v4829 = vld [vmem:[%s4821 + $0x38] sm:$0xff]
      %v4830 = vld [vmem:[%s4821 + $0x40] sm:$0xff]
      %v4831 = vld [vmem:[%s4821 + $0x48] sm:$0xff]
      %v4832 = vld [vmem:[%s4821 + $0x50] sm:$0xff]
      %v4833 = vld [vmem:[%s4821 + $0x58] sm:$0xff]
      %v4834 = vld [vmem:[%s4821 + $0x60] sm:$0xff]
      %v4835 = vld [vmem:[%s4821 + $0x68] sm:$0xff]
      %v4836 = vld [vmem:[%s4821 + $0x70] sm:$0xff]
      %v4837 = vld [vmem:[%s4821 + $0x78] sm:$0xff]
      %v4838 = vld [vmem:[%s4821 + $0x80] sm:$0xff]
      %v4839 = vld [vmem:[%s4821 + $0x88] sm:$0xff]
      %v4840 = vld [vmem:[%s4821 + $0x90] sm:$0xff]
      %v4841 = vld [vmem:[%s4821 + $0x98] sm:$0xff]
      %v4842 = vld [vmem:[%s4821 + $0xa0] sm:$0xff]
      %v4843 = vld [vmem:[%s4821 + $0xa8] sm:$0xff]
      %v4844 = vld [vmem:[%s4821 + $0xb0] sm:$0xff]
      %v4845 = vld [vmem:[%s4821 + $0xb8] sm:$0xff]
      %v4846 = vld [vmem:[%s4821 + $0xc0] sm:$0xff]
      %v4847 = vld [vmem:[%s4821 + $0xc8] sm:$0xff]
      %v4848 = vld [vmem:[%s4821 + $0xd0] sm:$0xff]
      %v4849 = vld [vmem:[%s4821 + $0xd8] sm:$0xff]
      %v4850 = vld [vmem:[%s4821 + $0xe0] sm:$0xff]
      %v4851 = vld [vmem:[%s4821 + $0xe8] sm:$0xff]
      %v4852 = vld [vmem:[%s4821 + $0xf0] sm:$0xff]
      %v4853 = vld [vmem:[%s4821 + $0xf8] sm:$0xff]
      %v4854 = vld [vmem:[%s4821 + $0x100] sm:$0xff]
      %v4855 = vld [vmem:[%s4821 + $0x108] sm:$0xff]
      %v4856 = vld [vmem:[%s4821 + $0x110] sm:$0xff]
      %v4857 = vld [vmem:[%s4821 + $0x118] sm:$0xff]
      %v4858 = vld [vmem:[%s4821 + $0x120] sm:$0xff]
      %v4859 = vld [vmem:[%s4821 + $0x128] sm:$0xff]
      %v4860 = vld [vmem:[%s4821 + $0x130] sm:$0xff]
      %v4861 = vld [vmem:[%s4821 + $0x138] sm:$0xff]
      %v4862 = vld [vmem:[%s4821 + $0x140] sm:$0xff]
      %v4863 = vld [vmem:[%s4821 + $0x148] sm:$0xff]
      %v4864 = vld [vmem:[%s4821 + $0x150] sm:$0xff]
      %v4865 = vld [vmem:[%s4821 + $0x158] sm:$0xff]
      %v4866 = vld [vmem:[%s4821 + $0x160] sm:$0xff]
      %v4867 = vld [vmem:[%s4821 + $0x168] sm:$0xff]
      %v4868 = vld [vmem:[%s4821 + $0x170] sm:$0xff]
      %v4869 = vld [vmem:[%s4821 + $0x178] sm:$0xff]
      %v4870 = vld [vmem:[%s4821 + $0x180] sm:$0xf]
      %v4871 = vld [vmem:[%s4821 + $0x188] sm:$0xf]
      %v4872 = vld [vmem:[%s4821 + $0x190] sm:$0xf]
      %v4873 = vld [vmem:[%s4821 + $0x198] sm:$0xf]
      %v4874 = vpack.c.bf16 %v4826, %v4822
      %v4875 = vpack.c.bf16 %v4827, %v4823
      %v4876 = vpack.c.bf16 %v4828, %v4824
      %v4877 = vpack.c.bf16 %v4829, %v4825
      %v4878 = vpack.c.bf16 %v4834, %v4830
      %v4879 = vpack.c.bf16 %v4835, %v4831
      %v4880 = vpack.c.bf16 %v4836, %v4832
      %v4881 = vpack.c.bf16 %v4837, %v4833
      %v4882 = vpack.c.bf16 %v4842, %v4838
      %v4883 = vpack.c.bf16 %v4843, %v4839
      %v4884 = vpack.c.bf16 %v4844, %v4840
      %v4885 = vpack.c.bf16 %v4845, %v4841
      %v4886 = vpack.c.bf16 %v4850, %v4846
      %v4887 = vpack.c.bf16 %v4851, %v4847
      %v4888 = vpack.c.bf16 %v4852, %v4848
      %v4889 = vpack.c.bf16 %v4853, %v4849
      %v4890 = vpack.c.bf16 %v4858, %v4854
      %v4891 = vpack.c.bf16 %v4859, %v4855
      %v4892 = vpack.c.bf16 %v4860, %v4856
      %v4893 = vpack.c.bf16 %v4861, %v4857
      %v4894 = vpack.c.bf16 %v4866, %v4862
      %v4895 = vpack.c.bf16 %v4867, %v4863
      %v4896 = vpack.c.bf16 %v4868, %v4864
      %v4897 = vpack.c.bf16 %v4869, %v4865
      %v4898 = vpack.c.bf16 %v4870, %v4870
      %v4899 = vpack.c.bf16 %v4871, %v4871
      %v4900 = vpack.c.bf16 %v4872, %v4872
      %v4901 = vpack.c.bf16 %v4873, %v4873
      %v4903 = vsel %vm417, %v4796, 0
      %v4906 = vsel %vm417, %v4800, 0
      %v4909 = vsel %vm417, %v4804, 0
      %v4912 = vsel %vm417, %v4808, 0
      %v4915 = vsel %vm417, %v4812, 0
      %v4918 = vsel %vm417, %v4816, 0
      %v4921 = vsel %vm417, %v4820, 0
      %v4924 = vsel %vm417, %v4877, 0
      %v4927 = vsel %vm417, %v4881, 0
      %v4930 = vsel %vm417, %v4885, 0
      %v4933 = vsel %vm417, %v4889, 0
      %v4936 = vsel %vm417, %v4893, 0
      %v4939 = vsel %vm417, %v4897, 0
      %v4942 = vsel %vm417, %v4901, 0
      %4944 = vmatprep.subr.bf16.mxu0 %v4875
      %4945 = vmatpush1.bf16.xpose.msra.mxu0 %v4874
      %4946 = vmatprep.subr.bf16.mxu0 %v4879
      %4947 = vmatpush1.bf16.xpose.msra.mxu0 %v4878
      %4948 = vmatprep.subr.bf16.mxu0 %v4883
      %4949 = vmatpush1.bf16.xpose.msra.mxu0 %v4882
      %4950 = vmatprep.subr.bf16.mxu0 %v4887
      %4951 = vmatpush1.bf16.xpose.msra.mxu0 %v4886
      %4952 = vmatprep.subr.bf16.mxu0 %v4891
      %4953 = vmatpush1.bf16.xpose.msra.mxu0 %v4890
      %4954 = vmatprep.subr.bf16.mxu0 %v4895
      %4955 = vmatpush1.bf16.xpose.msra.mxu0 %v4894
      %4956 = vmatprep.subr.bf16.mxu0 %v4899
      %4957 = vmatpush1.bf16.xpose.msra.mxu0 %v4898
      %4958 = vmatprep.subr.bf16.mxu0 0
      %4959 = vmatpush1.bf16.xpose.msra.mxu0 0
      %4960 = vmatprep.subr.bf16.mxu0 0
      %4961 = vmatpush1.bf16.xpose.msra.mxu0 0
      %4962 = vmatprep.subr.bf16.mxu0 0
      %4963 = vmatpush1.bf16.xpose.msra.mxu0 0
      %4964 = vmatprep.subr.bf16.mxu0 0
      %4965 = vmatpush1.bf16.xpose.msra.mxu0 0
      %4966 = vmatprep.subr.bf16.mxu0 0
      %4967 = vmatpush1.bf16.xpose.msra.mxu0 0
      %4968 = vmatprep.subr.bf16.mxu0 0
      %4969 = vmatpush1.bf16.xpose.msra.mxu0 0
      %4970 = vmatprep.subr.bf16.mxu0 0
      %4971 = vmatpush1.bf16.xpose.msra.mxu0 0
      %4972 = vmatprep.subr.bf16.mxu0 0
      %4973 = vmatpush1.bf16.xpose.msra.mxu0 0
      %4974 = vmatprep.subr.bf16.mxu0 0
      %4975 = vmatpush1.bf16.xpose.msra.mxu0 0
      %4976 = vmatprep.mubr.bf16.mxu0 %v4794
      %4977 = vmatmul.mubr.bf16.gmra.mrb[0].mxu0 %v4793
      %v4978 = vpop.f32.mrb[0].mxu0
      %v4979 = vadd.f32 0.0, %v4978
      %v4980 = vpop.f32.mrb[0].mxu0
      %v4981 = vpop.f32.mrb[0].mxu0
      %v4982 = vadd.f32 0.0, %v4981
      %v4983 = vpop.f32.mrb[0].mxu0
      %4984 = vmatprep.mubr.bf16.mxu0 %v4798
      %4985 = vmatmul.mubr.bf16.gmra.mrb[0].mxu0 %v4797
      %v4986 = vpop.f32.mrb[0].mxu0
      %v4987 = vadd.f32 0.0, %v4986
      %v4988 = vpop.f32.mrb[0].mxu0
      %v4989 = vpop.f32.mrb[0].mxu0
      %v4990 = vadd.f32 0.0, %v4989
      %v4991 = vpop.f32.mrb[0].mxu0
      %4992 = vmatprep.mubr.bf16.mxu0 %v4802
      %4993 = vmatmul.mubr.bf16.gmra.mrb[0].mxu0 %v4801
      %v4994 = vpop.f32.mrb[0].mxu0
      %v4995 = vadd.f32 0.0, %v4994
      %v4996 = vpop.f32.mrb[0].mxu0
      %v4997 = vpop.f32.mrb[0].mxu0
      %v4998 = vadd.f32 0.0, %v4997
      %v4999 = vpop.f32.mrb[0].mxu0
      %5000 = vmatprep.mubr.bf16.mxu0 %v4806
      %5001 = vmatmul.mubr.bf16.gmra.mrb[0].mxu0 %v4805
      %v5002 = vpop.f32.mrb[0].mxu0
      %v5003 = vadd.f32 0.0, %v5002
      %v5004 = vpop.f32.mrb[0].mxu0
      %v5005 = vpop.f32.mrb[0].mxu0
      %v5006 = vadd.f32 0.0, %v5005
      %v5007 = vpop.f32.mrb[0].mxu0
      %5008 = vmatprep.mubr.bf16.mxu0 %v4810
      %5009 = vmatmul.mubr.bf16.gmra.mrb[0].mxu0 %v4809
      %v5010 = vpop.f32.mrb[0].mxu0
      %v5011 = vadd.f32 0.0, %v5010
      %v5012 = vpop.f32.mrb[0].mxu0
      %v5013 = vpop.f32.mrb[0].mxu0
      %v5014 = vadd.f32 0.0, %v5013
      %v5015 = vpop.f32.mrb[0].mxu0
      %5016 = vmatprep.mubr.bf16.mxu0 %v4814
      %5017 = vmatmul.mubr.bf16.gmra.mrb[0].mxu0 %v4813
      %v5018 = vpop.f32.mrb[0].mxu0
      %v5019 = vadd.f32 0.0, %v5018
      %v5020 = vpop.f32.mrb[0].mxu0
      %v5021 = vpop.f32.mrb[0].mxu0
      %v5022 = vadd.f32 0.0, %v5021
      %v5023 = vpop.f32.mrb[0].mxu0
      %5024 = vmatprep.mubr.bf16.mxu0 %v4818
      %5025 = vmatmul.mubr.bf16.gmra.mrb[0].mxu0 %v4817
      %v5026 = vpop.f32.mrb[0].mxu0
      %v5027 = vadd.f32 0.0, %v5026
      %v5028 = vpop.f32.mrb[0].mxu0
      %v5029 = vpop.f32.mrb[0].mxu0
      %v5030 = vpop.f32.mrb[0].mxu0
      %5031 = vdwg.mxu0
      %5032 = vmatprep.subr.bf16.mxu0 %v4924
      %5033 = vmatpush1.bf16.xpose.msra.mxu0 %v4876
      %5034 = vmatprep.subr.bf16.mxu0 %v4927
      %5035 = vmatpush1.bf16.xpose.msra.mxu0 %v4880
      %5036 = vmatprep.subr.bf16.mxu0 %v4930
      %5037 = vmatpush1.bf16.xpose.msra.mxu0 %v4884
      %5038 = vmatprep.subr.bf16.mxu0 %v4933
      %5039 = vmatpush1.bf16.xpose.msra.mxu0 %v4888
      %5040 = vmatprep.subr.bf16.mxu0 %v4936
      %5041 = vmatpush1.bf16.xpose.msra.mxu0 %v4892
      %5042 = vmatprep.subr.bf16.mxu0 %v4939
      %5043 = vmatpush1.bf16.xpose.msra.mxu0 %v4896
      %5044 = vmatprep.subr.bf16.mxu0 %v4942
      %5045 = vmatpush1.bf16.xpose.msra.mxu0 %v4900
      %5046 = vmatprep.subr.bf16.mxu0 0
      %5047 = vmatpush1.bf16.xpose.msra.mxu0 0
      %5048 = vmatprep.subr.bf16.mxu0 0
      %5049 = vmatpush1.bf16.xpose.msra.mxu0 0
      %5050 = vmatprep.subr.bf16.mxu0 0
      %5051 = vmatpush1.bf16.xpose.msra.mxu0 0
      %5052 = vmatprep.subr.bf16.mxu0 0
      %5053 = vmatpush1.bf16.xpose.msra.mxu0 0
      %5054 = vmatprep.subr.bf16.mxu0 0
      %5055 = vmatpush1.bf16.xpose.msra.mxu0 0
      %5056 = vmatprep.subr.bf16.mxu0 0
      %5057 = vmatpush1.bf16.xpose.msra.mxu0 0
      %5058 = vmatprep.subr.bf16.mxu0 0
      %5059 = vmatpush1.bf16.xpose.msra.mxu0 0
      %5060 = vmatprep.subr.bf16.mxu0 0
      %5061 = vmatpush1.bf16.xpose.msra.mxu0 0
      %5062 = vmatprep.subr.bf16.mxu0 0
      %5063 = vmatpush1.bf16.xpose.msra.mxu0 0
      %5064 = vmatprep.mubr.bf16.mxu0 %v4903
      %5065 = vmatmul.mubr.bf16.gmra.mrb[0].mxu0 %v4795
      %v5066 = vpop.f32.mrb[0].mxu0
      %v5067 = vadd.f32 %v4979, %v5066
      %v5068 = vpop.f32.mrb[0].mxu0
      %v5069 = vpop.f32.mrb[0].mxu0
      %v5070 = vadd.f32 %v4982, %v5069
      %v5071 = vpop.f32.mrb[0].mxu0
      %5072 = vmatprep.mubr.bf16.mxu0 %v4906
      %5073 = vmatmul.mubr.bf16.gmra.mrb[0].mxu0 %v4799
      %v5074 = vpop.f32.mrb[0].mxu0
      %v5075 = vadd.f32 %v4987, %v5074
      %v5076 = vpop.f32.mrb[0].mxu0
      %v5077 = vpop.f32.mrb[0].mxu0
      %v5078 = vadd.f32 %v4990, %v5077
      %v5079 = vpop.f32.mrb[0].mxu0
      %5080 = vmatprep.mubr.bf16.mxu0 %v4909
      %5081 = vmatmul.mubr.bf16.gmra.mrb[0].mxu0 %v4803
      %v5082 = vpop.f32.mrb[0].mxu0
      %v5083 = vadd.f32 %v4995, %v5082
      %v5084 = vpop.f32.mrb[0].mxu0
      %v5085 = vpop.f32.mrb[0].mxu0
      %v5086 = vadd.f32 %v4998, %v5085
      %v5087 = vpop.f32.mrb[0].mxu0
      %5088 = vmatprep.mubr.bf16.mxu0 %v4912
      %5089 = vmatmul.mubr.bf16.gmra.mrb[0].mxu0 %v4807
      %v5090 = vpop.f32.mrb[0].mxu0
      %v5091 = vadd.f32 %v5003, %v5090
      %v5092 = vpop.f32.mrb[0].mxu0
      %v5093 = vpop.f32.mrb[0].mxu0
      %v5094 = vadd.f32 %v5006, %v5093
      %v5095 = vpop.f32.mrb[0].mxu0
      %5096 = vmatprep.mubr.bf16.mxu0 %v4915
      %5097 = vmatmul.mubr.bf16.gmra.mrb[0].mxu0 %v4811
      %v5098 = vpop.f32.mrb[0].mxu0
      %v5099 = vadd.f32 %v5011, %v5098
      %v5100 = vpop.f32.mrb[0].mxu0
      %v5101 = vpop.f32.mrb[0].mxu0
      %v5102 = vadd.f32 %v5014, %v5101
      %v5103 = vpop.f32.mrb[0].mxu0
      %5104 = vmatprep.mubr.bf16.mxu0 %v4918
      %5105 = vmatmul.mubr.bf16.gmra.mrb[0].mxu0 %v4815
      %v5106 = vpop.f32.mrb[0].mxu0
      %v5107 = vadd.f32 %v5019, %v5106
      %v5108 = vpop.f32.mrb[0].mxu0
      %v5109 = vpop.f32.mrb[0].mxu0
      %v5110 = vadd.f32 %v5022, %v5109
      %v5111 = vpop.f32.mrb[0].mxu0
      %5112 = vmatprep.mubr.bf16.mxu0 %v4921
      %5113 = vmatmul.mubr.bf16.gmra.mrb[0].mxu0 %v4819
      %v5114 = vpop.f32.mrb[0].mxu0
      %v5115 = vadd.f32 %v5027, %v5114
      %v5116 = vpop.f32.mrb[0].mxu0
      %v5117 = vpop.f32.mrb[0].mxu0
      %v5118 = vpop.f32.mrb[0].mxu0
      %5119 = vdwg.mxu0
      %v5120 = vmul.f32 %v5067, 0.002
      %v5121 = vmul.f32 %v5070, 0.002
      %v5122 = vmul.f32 %v5075, 0.002
      %v5123 = vmul.f32 %v5078, 0.002
      %v5124 = vmul.f32 %v5083, 0.002
      %v5125 = vmul.f32 %v5086, 0.002
      %v5126 = vmul.f32 %v5091, 0.002
      %v5127 = vmul.f32 %v5094, 0.002
      %v5128 = vmul.f32 %v5099, 0.002
      %v5129 = vmul.f32 %v5102, 0.002
      %v5130 = vmul.f32 %v5107, 0.002
      %v5131 = vmul.f32 %v5110, 0.002
      %v5132 = vmul.f32 %v5115, 0.002
      %v5133 = vsel %vm649, %v5120, -inf
      %5134 = vmax.xlane.f32.xlu0 %v5133
      %v5135 = vpop.xlane.xlu0 %5134
      %v5136 = vsel %vm649, %v5121, -inf
      %5137 = vmax.xlane.f32.xlu0 %v5136
      %v5138 = vpop.xlane.xlu0 %5137
      %v5139 = vsel %vm649, %v5122, -inf
      %5140 = vmax.xlane.f32.xlu0 %v5139
      %v5141 = vpop.xlane.xlu0 %5140
      %v5142 = vsel %vm649, %v5123, -inf
      %5143 = vmax.xlane.f32.xlu0 %v5142
      %v5144 = vpop.xlane.xlu0 %5143
      %v5145 = vsel %vm649, %v5124, -inf
      %5146 = vmax.xlane.f32.xlu0 %v5145
      %v5147 = vpop.xlane.xlu0 %5146
      %v5148 = vsel %vm649, %v5125, -inf
      %5149 = vmax.xlane.f32.xlu0 %v5148
      %v5150 = vpop.xlane.xlu0 %5149
      %v5151 = vsel %vm649, %v5126, -inf
      %5152 = vmax.xlane.f32.xlu0 %v5151
      %v5153 = vpop.xlane.xlu0 %5152
      %v5154 = vsel %vm649, %v5127, -inf
      %5155 = vmax.xlane.f32.xlu0 %v5154
      %v5156 = vpop.xlane.xlu0 %5155
      %v5157 = vsel %vm649, %v5128, -inf
      %5158 = vmax.xlane.f32.xlu0 %v5157
      %v5159 = vpop.xlane.xlu0 %5158
      %v5160 = vsel %vm649, %v5129, -inf
      %5161 = vmax.xlane.f32.xlu0 %v5160
      %v5162 = vpop.xlane.xlu0 %5161
      %v5163 = vsel %vm649, %v5130, -inf
      %5164 = vmax.xlane.f32.xlu0 %v5163
      %v5165 = vpop.xlane.xlu0 %5164
      %v5166 = vsel %vm649, %v5131, -inf
      %5167 = vmax.xlane.f32.xlu0 %v5166
      %v5168 = vpop.xlane.xlu0 %5167
      %v5169 = vsel %vm686, %v5132, -inf
      %5170 = vmax.xlane.f32.xlu0 %v5169
      %v5171 = vpop.xlane.xlu0 %5170
      %v5172 = vsub.f32 %v5120, %v5135
      %v5173 = vsub.f32 %v5121, %v5138
      %v5174 = vsub.f32 %v5122, %v5141
      %v5175 = vsub.f32 %v5123, %v5144
      %v5176 = vsub.f32 %v5124, %v5147
      %v5177 = vsub.f32 %v5125, %v5150
      %v5178 = vsub.f32 %v5126, %v5153
      %v5179 = vsub.f32 %v5127, %v5156
      %v5180 = vsub.f32 %v5128, %v5159
      %v5181 = vsub.f32 %v5129, %v5162
      %v5182 = vsub.f32 %v5130, %v5165
      %v5183 = vsub.f32 %v5131, %v5168
      %v5184 = vsub.f32 %v5132, %v5171
      %v5185 = vmul.f32 %v5172, 1.442695
      %v5186 = vpow.pop %v5185
      %v5187 = vmul.f32 %v5173, 1.442695
      %v5188 = vpow.pop %v5187
      %v5189 = vmul.f32 %v5174, 1.442695
      %v5190 = vpow.pop %v5189
      %v5191 = vmul.f32 %v5175, 1.442695
      %v5192 = vpow.pop %v5191
      %v5193 = vmul.f32 %v5176, 1.442695
      %v5194 = vpow.pop %v5193
      %v5195 = vmul.f32 %v5177, 1.442695
      %v5196 = vpow.pop %v5195
      %v5197 = vmul.f32 %v5178, 1.442695
      %v5198 = vpow.pop %v5197
      %v5199 = vmul.f32 %v5179, 1.442695
      %v5200 = vpow.pop %v5199
      %v5201 = vmul.f32 %v5180, 1.442695
      %v5202 = vpow.pop %v5201
      %v5203 = vmul.f32 %v5181, 1.442695
      %v5204 = vpow.pop %v5203
      %v5205 = vmul.f32 %v5182, 1.442695
      %v5206 = vpow.pop %v5205
      %v5207 = vmul.f32 %v5183, 1.442695
      %v5208 = vpow.pop %v5207
      %v5209 = vmul.f32 %v5184, 1.442695
      %v5210 = vpow.pop %v5209
      %v5211 = vsel %vm649, %v5186, 0.0
      %5212 = vadd.xlane.f32.xlu0 %v5211
      %v5213 = vpop.xlane.xlu0 %5212
      %v5214 = vsel %vm649, %v5188, 0.0
      %5215 = vadd.xlane.f32.xlu0 %v5214
      %v5216 = vpop.xlane.xlu0 %5215
      %v5217 = vsel %vm649, %v5190, 0.0
      %5218 = vadd.xlane.f32.xlu0 %v5217
      %v5219 = vpop.xlane.xlu0 %5218
      %v5220 = vsel %vm649, %v5192, 0.0
      %5221 = vadd.xlane.f32.xlu0 %v5220
      %v5222 = vpop.xlane.xlu0 %5221
      %v5223 = vsel %vm649, %v5194, 0.0
      %5224 = vadd.xlane.f32.xlu0 %v5223
      %v5225 = vpop.xlane.xlu0 %5224
      %v5226 = vsel %vm649, %v5196, 0.0
      %5227 = vadd.xlane.f32.xlu0 %v5226
      %v5228 = vpop.xlane.xlu0 %5227
      %v5229 = vsel %vm649, %v5198, 0.0
      %5230 = vadd.xlane.f32.xlu0 %v5229
      %v5231 = vpop.xlane.xlu0 %5230
      %v5232 = vsel %vm649, %v5200, 0.0
      %5233 = vadd.xlane.f32.xlu0 %v5232
      %v5234 = vpop.xlane.xlu0 %5233
      %v5235 = vsel %vm649, %v5202, 0.0
      %5236 = vadd.xlane.f32.xlu0 %v5235
      %v5237 = vpop.xlane.xlu0 %5236
      %v5238 = vsel %vm649, %v5204, 0.0
      %5239 = vadd.xlane.f32.xlu0 %v5238
      %v5240 = vpop.xlane.xlu0 %5239
      %v5241 = vsel %vm649, %v5206, 0.0
      %5242 = vadd.xlane.f32.xlu0 %v5241
      %v5243 = vpop.xlane.xlu0 %5242
      %v5244 = vsel %vm649, %v5208, 0.0
      %5245 = vadd.xlane.f32.xlu0 %v5244
      %v5246 = vpop.xlane.xlu0 %5245
      %v5247 = vsel %vm686, %v5210, 0.0
      %5248 = vadd.xlane.f32.xlu0 %v5247
      %v5249 = vpop.xlane.xlu0 %5248
      %v5250 = vrcp.pop %v5213
      %v5251 = vrcp.pop %v5216
      %v5252 = vrcp.pop %v5219
      %v5253 = vrcp.pop %v5222
      %v5254 = vrcp.pop %v5225
      %v5255 = vrcp.pop %v5228
      %v5256 = vrcp.pop %v5231
      %v5257 = vrcp.pop %v5234
      %v5258 = vrcp.pop %v5237
      %v5259 = vrcp.pop %v5240
      %v5260 = vrcp.pop %v5243
      %v5261 = vrcp.pop %v5246
      %v5262 = vrcp.pop %v5249
      %v5263 = vmul.f32 %v5186, %v5250
      %v5264 = vmul.f32 %v5188, %v5251
      %v5265 = vmul.f32 %v5190, %v5252
      %v5266 = vmul.f32 %v5192, %v5253
      %v5267 = vmul.f32 %v5194, %v5254
      %v5268 = vmul.f32 %v5196, %v5255
      %v5269 = vmul.f32 %v5198, %v5256
      %v5270 = vmul.f32 %v5200, %v5257
      %v5271 = vmul.f32 %v5202, %v5258
      %v5272 = vmul.f32 %v5204, %v5259
      %v5273 = vmul.f32 %v5206, %v5260
      %v5274 = vmul.f32 %v5208, %v5261
      %v5275 = vmul.f32 %v5210, %v5262
      %v5277 = vsel %vm797, %v5275, 0
      %5279 = vmatprep.subr.mxu0 0.0
      %5280 = vmatpush1.msra.mxu0 %v5263
      %5281 = vmatprep.subr.mxu0 0.0
      %5282 = vmatpush1.msra.mxu0 %v5264
      %5283 = vmatprep.subr.mxu0 0.0
      %5284 = vmatpush1.msra.mxu0 %v5265
      %5285 = vmatprep.subr.mxu0 0.0
      %5286 = vmatpush1.msra.mxu0 %v5266
      %5287 = vmatprep.subr.mxu0 0.0
      %5288 = vmatpush1.msra.mxu0 %v5267
      %5289 = vmatprep.subr.mxu0 0.0
      %5290 = vmatpush1.msra.mxu0 %v5268
      %5291 = vmatprep.subr.mxu0 0.0
      %5292 = vmatpush1.msra.mxu0 %v5269
      %5293 = vmatprep.subr.mxu0 0.0
      %5294 = vmatpush1.msra.mxu0 %v5270
      %5295 = vmatprep.subr.mxu0 0.0
      %5296 = vmatpush1.msra.mxu0 %v5271
      %5297 = vmatprep.subr.mxu0 0.0
      %5298 = vmatpush1.msra.mxu0 %v5272
      %5299 = vmatprep.subr.mxu0 0.0
      %5300 = vmatpush1.msra.mxu0 %v5273
      %5301 = vmatprep.subr.mxu0 0.0
      %5302 = vmatpush1.msra.mxu0 %v5274
      %5303 = vmatprep.subr.mxu0 0.0
      %5304 = vmatpush1.msra.mxu0 %v5277
      %5305 = vmatprep.subr.mxu0 0.0
      %5306 = vmatpush1.msra.mxu0 0.0
      %5307 = vmatprep.subr.mxu0 0.0
      %5308 = vmatpush1.msra.mxu0 0.0
      %5309 = vmatprep.subr.mxu0 0.0
      %5310 = vmatpush1.msra.mxu0 0.0
      %5311 = vmatprep.subr.mxu0 0.0
      %5312 = vmatpush1.msra.mxu0 0.0
      %5313 = vmatprep.subr.mxu0 0.0
      %5314 = vmatpush1.msra.mxu0 0.0
      %5315 = vmatprep.subr.mxu0 0.0
      %5316 = vmatpush1.msra.mxu0 0.0
      %5317 = vmatprep.subr.mxu0 0.0
      %5318 = vmatpush1.msra.mxu0 0.0
      %5319 = vmatprep.subr.mxu0 0.0
      %5320 = vmatpush1.msra.mxu0 0.0
      %5321 = vmatprep.subr.mxu0 0.0
      %5322 = vmatpush1.msra.mxu0 0.0
      %5323 = vmatprep.subr.mxu0 0.0
      %5324 = vmatpush1.msra.mxu0 0.0
      %5325 = vmatprep.subr.mxu0 0.0
      %5326 = vmatpush1.msra.mxu0 0.0
      %5327 = vmatprep.subr.mxu0 0.0
      %5328 = vmatpush1.msra.mxu0 0.0
      %5329 = vmatprep.subr.mxu0 0.0
      %5330 = vmatpush1.msra.mxu0 0.0
      %5331 = vmatprep.subr.mxu0 0.0
      %5332 = vmatpush1.msra.mxu0 0.0
      %5333 = vmatprep.subr.mxu0 0.0
      %5334 = vmatpush1.msra.mxu0 0.0
      %5335 = vmatprep.subr.mxu0 0.0
      %5336 = vmatpush1.msra.mxu0 0.0
      %5337 = vmatprep.subr.mxu0 0.0
      %5338 = vmatpush1.msra.mxu0 0.0
      %5339 = vmatprep.subr.mxu0 0.0
      %5340 = vmatpush1.msra.mxu0 0.0
      %5341 = vmatprep.subr.mxu0 0.0
      %5342 = vmatpush1.msra.mxu0 0.0
      %5343 = vmatprep.mubr.f32.mxu0 0.0
      %5344 = vmatmul.mubr.f32.gmra.mrb[0].mxu0 %v795
      %v5345 = vpop.f32.mrb[0].mxu0
      %v5346 = vadd.f32 0.0, %v5345
      %v5347 = vpop.f32.mrb[0].mxu0
      %5348 = vdwg.mxu0
      %v5350 = vsel %vm649, %v5346, 0
      %v5353 = vsel %vm797, %v4870, 0
      %v5356 = vsel %vm797, %v4871, 0
      %v5359 = vsel %vm797, %v4872, 0
      %v5362 = vsel %vm797, %v4873, 0
      %5364 = vmatprep.subr.mxu0 %v4823
      %5365 = vmatpush1.msra.mxu0 %v4822
      %5366 = vmatprep.subr.mxu0 %v4827
      %5367 = vmatpush1.msra.mxu0 %v4826
      %5368 = vmatprep.subr.mxu0 %v4831
      %5369 = vmatpush1.msra.mxu0 %v4830
      %5370 = vmatprep.subr.mxu0 %v4835
      %5371 = vmatpush1.msra.mxu0 %v4834
      %5372 = vmatprep.subr.mxu0 %v4839
      %5373 = vmatpush1.msra.mxu0 %v4838
      %5374 = vmatprep.subr.mxu0 %v4843
      %5375 = vmatpush1.msra.mxu0 %v4842
      %5376 = vmatprep.subr.mxu0 %v4847
      %5377 = vmatpush1.msra.mxu0 %v4846
      %5378 = vmatprep.subr.mxu0 %v4851
      %5379 = vmatpush1.msra.mxu0 %v4850
      %5380 = vmatprep.subr.mxu0 %v4855
      %5381 = vmatpush1.msra.mxu0 %v4854
      %5382 = vmatprep.subr.mxu0 %v4859
      %5383 = vmatpush1.msra.mxu0 %v4858
      %5384 = vmatprep.subr.mxu0 %v4863
      %5385 = vmatpush1.msra.mxu0 %v4862
      %5386 = vmatprep.subr.mxu0 %v4867
      %5387 = vmatpush1.msra.mxu0 %v4866
      %5388 = vmatprep.subr.mxu0 %v5356
      %5389 = vmatpush1.msra.mxu0 %v5353
      %5390 = vmatprep.subr.mxu0 0.0
      %5391 = vmatpush1.msra.mxu0 0.0
      %5392 = vmatprep.subr.mxu0 0.0
      %5393 = vmatpush1.msra.mxu0 0.0
      %5394 = vmatprep.subr.mxu0 0.0
      %5395 = vmatpush1.msra.mxu0 0.0
      %5396 = vmatprep.subr.mxu0 0.0
      %5397 = vmatpush1.msra.mxu0 0.0
      %5398 = vmatprep.subr.mxu0 0.0
      %5399 = vmatpush1.msra.mxu0 0.0
      %5400 = vmatprep.subr.mxu0 0.0
      %5401 = vmatpush1.msra.mxu0 0.0
      %5402 = vmatprep.subr.mxu0 0.0
      %5403 = vmatpush1.msra.mxu0 0.0
      %5404 = vmatprep.subr.mxu0 0.0
      %5405 = vmatpush1.msra.mxu0 0.0
      %5406 = vmatprep.subr.mxu0 0.0
      %5407 = vmatpush1.msra.mxu0 0.0
      %5408 = vmatprep.subr.mxu0 0.0
      %5409 = vmatpush1.msra.mxu0 0.0
      %5410 = vmatprep.subr.mxu0 0.0
      %5411 = vmatpush1.msra.mxu0 0.0
      %5412 = vmatprep.subr.mxu0 0.0
      %5413 = vmatpush1.msra.mxu0 0.0
      %5414 = vmatprep.subr.mxu0 0.0
      %5415 = vmatpush1.msra.mxu0 0.0
      %5416 = vmatprep.subr.mxu0 0.0
      %5417 = vmatpush1.msra.mxu0 0.0
      %5418 = vmatprep.subr.mxu0 0.0
      %5419 = vmatpush1.msra.mxu0 0.0
      %5420 = vmatprep.subr.mxu0 0.0
      %5421 = vmatpush1.msra.mxu0 0.0
      %5422 = vmatprep.subr.mxu0 0.0
      %5423 = vmatpush1.msra.mxu0 0.0
      %5424 = vmatprep.subr.mxu0 0.0
      %5425 = vmatpush1.msra.mxu0 0.0
      %5426 = vmatprep.subr.mxu0 0.0
      %5427 = vmatpush1.msra.mxu0 0.0
      %5428 = vmatprep.mubr.f32.mxu0 0.0
      %5429 = vmatmul.mubr.f32.gmra.mrb[0].mxu0 %v5350
      %v5430 = vpop.f32.mrb[0].mxu0
      %v5431 = vadd.f32 0.0, %v5430
      %v5432 = vpop.f32.mrb[0].mxu0
      %v5433 = vadd.f32 0.0, %v5432
      %5434 = vdwg.mxu0
      %5435 = vmatprep.subr.mxu0 %v4825
      %5436 = vmatpush1.msra.mxu0 %v4824
      %5437 = vmatprep.subr.mxu0 %v4829
      %5438 = vmatpush1.msra.mxu0 %v4828
      %5439 = vmatprep.subr.mxu0 %v4833
      %5440 = vmatpush1.msra.mxu0 %v4832
      %5441 = vmatprep.subr.mxu0 %v4837
      %5442 = vmatpush1.msra.mxu0 %v4836
      %5443 = vmatprep.subr.mxu0 %v4841
      %5444 = vmatpush1.msra.mxu0 %v4840
      %5445 = vmatprep.subr.mxu0 %v4845
      %5446 = vmatpush1.msra.mxu0 %v4844
      %5447 = vmatprep.subr.mxu0 %v4849
      %5448 = vmatpush1.msra.mxu0 %v4848
      %5449 = vmatprep.subr.mxu0 %v4853
      %5450 = vmatpush1.msra.mxu0 %v4852
      %5451 = vmatprep.subr.mxu0 %v4857
      %5452 = vmatpush1.msra.mxu0 %v4856
      %5453 = vmatprep.subr.mxu0 %v4861
      %5454 = vmatpush1.msra.mxu0 %v4860
      %5455 = vmatprep.subr.mxu0 %v4865
      %5456 = vmatpush1.msra.mxu0 %v4864
      %5457 = vmatprep.subr.mxu0 %v4869
      %5458 = vmatpush1.msra.mxu0 %v4868
      %5459 = vmatprep.subr.mxu0 %v5362
      %5460 = vmatpush1.msra.mxu0 %v5359
      %5461 = vmatprep.subr.mxu0 0.0
      %5462 = vmatpush1.msra.mxu0 0.0
      %5463 = vmatprep.subr.mxu0 0.0
      %5464 = vmatpush1.msra.mxu0 0.0
      %5465 = vmatprep.subr.mxu0 0.0
      %5466 = vmatpush1.msra.mxu0 0.0
      %5467 = vmatprep.subr.mxu0 0.0
      %5468 = vmatpush1.msra.mxu0 0.0
      %5469 = vmatprep.subr.mxu0 0.0
      %5470 = vmatpush1.msra.mxu0 0.0
      %5471 = vmatprep.subr.mxu0 0.0
      %5472 = vmatpush1.msra.mxu0 0.0
      %5473 = vmatprep.subr.mxu0 0.0
      %5474 = vmatpush1.msra.mxu0 0.0
      %5475 = vmatprep.subr.mxu0 0.0
      %5476 = vmatpush1.msra.mxu0 0.0
      %5477 = vmatprep.subr.mxu0 0.0
      %5478 = vmatpush1.msra.mxu0 0.0
      %5479 = vmatprep.subr.mxu0 0.0
      %5480 = vmatpush1.msra.mxu0 0.0
      %5481 = vmatprep.subr.mxu0 0.0
      %5482 = vmatpush1.msra.mxu0 0.0
      %5483 = vmatprep.subr.mxu0 0.0
      %5484 = vmatpush1.msra.mxu0 0.0
      %5485 = vmatprep.subr.mxu0 0.0
      %5486 = vmatpush1.msra.mxu0 0.0
      %5487 = vmatprep.subr.mxu0 0.0
      %5488 = vmatpush1.msra.mxu0 0.0
      %5489 = vmatprep.subr.mxu0 0.0
      %5490 = vmatpush1.msra.mxu0 0.0
      %5491 = vmatprep.subr.mxu0 0.0
      %5492 = vmatpush1.msra.mxu0 0.0
      %5493 = vmatprep.subr.mxu0 0.0
      %5494 = vmatpush1.msra.mxu0 0.0
      %5495 = vmatprep.subr.mxu0 0.0
      %5496 = vmatpush1.msra.mxu0 0.0
      %5497 = vmatprep.subr.mxu0 0.0
      %5498 = vmatpush1.msra.mxu0 0.0
      %5499 = vmatprep.mubr.f32.mxu0 0.0
      %5500 = vmatmul.mubr.f32.gmra.mrb[0].mxu0 %v5350
      %v5501 = vpop.f32.mrb[0].mxu0
      %v5502 = vadd.f32 0.0, %v5501
      %v5503 = vpop.f32.mrb[0].mxu0
      %v5504 = vadd.f32 0.0, %v5503
      %5505 = vdwg.mxu0
      %v5510 = vcombine.low %v5431, %v5433
      %v5511 = vcombine.low %v5502, %v5504
      %v5513 = vunpack.c.l.s4 1966171168
      %v5514 = vunpack.c.0.s8 %v5513
      %v5515 = vlaneseq
      %v5516 = vshrl.u32 %v5515, 7
      %v5517 = vsub.s32 %v5514, %v5516
      %v5518 = vrot.slane %v5510, %v5517
      %v5520 = vunpack.c.l.s4 1966171168
      %v5521 = vunpack.c.0.s8 %v5520
      %v5522 = vlaneseq
      %v5523 = vshrl.u32 %v5522, 7
      %v5524 = vsub.s32 %v5521, %v5523
      %v5525 = vrot.slane %v5511, %v5524
      %v5526 = vcombine.low %v5518, %v5525
      %v5528 = vunpack.c.l.s4 1966171168
      %v5529 = vunpack.c.0.s8 %v5528
      %v5530 = vlaneseq
      %v5531 = vshrl.u32 %v5530, 7
      %v5532 = vsub.s32 %v5529, %v5531
      %v5533 = vrot.slane %v5526, %v5532
      %s5535 = scalar_lea.vmem [#allocation2], 3
      %5536 = vst.msk [vmem:[%s5535] ss:$4 sm:$0xf] %vm1060, %v5533
      %s5537 = scalar_lea.vmem %s249, 4160
      %v5538 = vld [vmem:[%s5537] sm:$0xff]
      %v5539 = vld [vmem:[%s5537 + $0x8] sm:$0xff]
      %v5540 = vld [vmem:[%s5537 + $0x10] sm:$0xff]
      %v5541 = vld [vmem:[%s5537 + $0x18] sm:$0xff]
      %v5542 = vld [vmem:[%s5537 + $0x20] sm:$0xff]
      %v5543 = vld [vmem:[%s5537 + $0x28] sm:$0xff]
      %v5544 = vld [vmem:[%s5537 + $0x30] sm:$0xff]
      %v5545 = vld [vmem:[%s5537 + $0x38] sm:$0xff]
      %v5546 = vld [vmem:[%s5537 + $0x40] sm:$0xff]
      %v5547 = vld [vmem:[%s5537 + $0x48] sm:$0xff]
      %v5548 = vld [vmem:[%s5537 + $0x50] sm:$0xff]
      %v5549 = vld [vmem:[%s5537 + $0x58] sm:$0xff]
      %v5550 = vld [vmem:[%s5537 + $0x60] sm:$0xff]
      %v5551 = vld [vmem:[%s5537 + $0x68] sm:$0xff]
      %v5552 = vld [vmem:[%s5537 + $0x70] sm:$0xff]
      %v5553 = vld [vmem:[%s5537 + $0x78] sm:$0xff]
      %v5554 = vld [vmem:[%s5537 + $0x80] sm:$0xff]
      %v5555 = vld [vmem:[%s5537 + $0x88] sm:$0xff]
      %v5556 = vld [vmem:[%s5537 + $0x90] sm:$0xff]
      %v5557 = vld [vmem:[%s5537 + $0x98] sm:$0xff]
      %v5558 = vld [vmem:[%s5537 + $0xa0] sm:$0xff]
      %v5559 = vld [vmem:[%s5537 + $0xa8] sm:$0xff]
      %v5560 = vld [vmem:[%s5537 + $0xb0] sm:$0xff]
      %v5561 = vld [vmem:[%s5537 + $0xb8] sm:$0xff]
      %v5562 = vld [vmem:[%s5537 + $0xc0] sm:$0xff]
      %v5563 = vld [vmem:[%s5537 + $0xc8] sm:$0xff]
      %v5564 = vld [vmem:[%s5537 + $0xd0] sm:$0xff]
      %v5565 = vld [vmem:[%s5537 + $0xd8] sm:$0xff]
      %v5566 = vld [vmem:[%s5537 + $0xe0] sm:$0xff]
      %v5567 = vld [vmem:[%s5537 + $0xe8] sm:$0xff]
      %v5568 = vld [vmem:[%s5537 + $0xf0] sm:$0xff]
      %v5569 = vld [vmem:[%s5537 + $0xf8] sm:$0xff]
      %v5570 = vld [vmem:[%s5537 + $0x100] sm:$0xff]
      %v5571 = vld [vmem:[%s5537 + $0x108] sm:$0xff]
      %v5572 = vld [vmem:[%s5537 + $0x110] sm:$0xff]
      %v5573 = vld [vmem:[%s5537 + $0x118] sm:$0xff]
      %v5574 = vld [vmem:[%s5537 + $0x120] sm:$0xff]
      %v5575 = vld [vmem:[%s5537 + $0x128] sm:$0xff]
      %v5576 = vld [vmem:[%s5537 + $0x130] sm:$0xff]
      %v5577 = vld [vmem:[%s5537 + $0x138] sm:$0xff]
      %v5578 = vld [vmem:[%s5537 + $0x140] sm:$0xff]
      %v5579 = vld [vmem:[%s5537 + $0x148] sm:$0xff]
      %v5580 = vld [vmem:[%s5537 + $0x150] sm:$0xff]
      %v5581 = vld [vmem:[%s5537 + $0x158] sm:$0xff]
      %v5582 = vld [vmem:[%s5537 + $0x160] sm:$0xff]
      %v5583 = vld [vmem:[%s5537 + $0x168] sm:$0xff]
      %v5584 = vld [vmem:[%s5537 + $0x170] sm:$0xff]
      %v5585 = vld [vmem:[%s5537 + $0x178] sm:$0xff]
      %v5586 = vld [vmem:[%s5537 + $0x180] sm:$0xf]
      %v5587 = vld [vmem:[%s5537 + $0x188] sm:$0xf]
      %v5588 = vld [vmem:[%s5537 + $0x190] sm:$0xf]
      %v5589 = vld [vmem:[%s5537 + $0x198] sm:$0xf]
      %v5590 = vpack.c.bf16 %v5542, %v5538
      %v5591 = vpack.c.bf16 %v5543, %v5539
      %v5592 = vpack.c.bf16 %v5544, %v5540
      %v5593 = vpack.c.bf16 %v5545, %v5541
      %v5594 = vpack.c.bf16 %v5550, %v5546
      %v5595 = vpack.c.bf16 %v5551, %v5547
      %v5596 = vpack.c.bf16 %v5552, %v5548
      %v5597 = vpack.c.bf16 %v5553, %v5549
      %v5598 = vpack.c.bf16 %v5558, %v5554
      %v5599 = vpack.c.bf16 %v5559, %v5555
      %v5600 = vpack.c.bf16 %v5560, %v5556
      %v5601 = vpack.c.bf16 %v5561, %v5557
      %v5602 = vpack.c.bf16 %v5566, %v5562
      %v5603 = vpack.c.bf16 %v5567, %v5563
      %v5604 = vpack.c.bf16 %v5568, %v5564
      %v5605 = vpack.c.bf16 %v5569, %v5565
      %v5606 = vpack.c.bf16 %v5574, %v5570
      %v5607 = vpack.c.bf16 %v5575, %v5571
      %v5608 = vpack.c.bf16 %v5576, %v5572
      %v5609 = vpack.c.bf16 %v5577, %v5573
      %v5610 = vpack.c.bf16 %v5582, %v5578
      %v5611 = vpack.c.bf16 %v5583, %v5579
      %v5612 = vpack.c.bf16 %v5584, %v5580
      %v5613 = vpack.c.bf16 %v5585, %v5581
      %v5614 = vpack.c.bf16 %v5586, %v5586
      %v5615 = vpack.c.bf16 %v5587, %v5587
      %v5616 = vpack.c.bf16 %v5588, %v5588
      %v5617 = vpack.c.bf16 %v5589, %v5589
      %v5619 = vsel %vm417, %v5593, 0
      %v5622 = vsel %vm417, %v5597, 0
      %v5625 = vsel %vm417, %v5601, 0
      %v5628 = vsel %vm417, %v5605, 0
      %v5631 = vsel %vm417, %v5609, 0
      %v5634 = vsel %vm417, %v5613, 0
      %v5637 = vsel %vm417, %v5617, 0
      %5639 = vmatprep.subr.bf16.mxu0 %v5591
      %5640 = vmatpush1.bf16.xpose.msra.mxu0 %v5590
      %5641 = vmatprep.subr.bf16.mxu0 %v5595
      %5642 = vmatpush1.bf16.xpose.msra.mxu0 %v5594
      %5643 = vmatprep.subr.bf16.mxu0 %v5599
      %5644 = vmatpush1.bf16.xpose.msra.mxu0 %v5598
      %5645 = vmatprep.subr.bf16.mxu0 %v5603
      %5646 = vmatpush1.bf16.xpose.msra.mxu0 %v5602
      %5647 = vmatprep.subr.bf16.mxu0 %v5607
      %5648 = vmatpush1.bf16.xpose.msra.mxu0 %v5606
      %5649 = vmatprep.subr.bf16.mxu0 %v5611
      %5650 = vmatpush1.bf16.xpose.msra.mxu0 %v5610
      %5651 = vmatprep.subr.bf16.mxu0 %v5615
      %5652 = vmatpush1.bf16.xpose.msra.mxu0 %v5614
      %5653 = vmatprep.subr.bf16.mxu0 0
      %5654 = vmatpush1.bf16.xpose.msra.mxu0 0
      %5655 = vmatprep.subr.bf16.mxu0 0
      %5656 = vmatpush1.bf16.xpose.msra.mxu0 0
      %5657 = vmatprep.subr.bf16.mxu0 0
      %5658 = vmatpush1.bf16.xpose.msra.mxu0 0
      %5659 = vmatprep.subr.bf16.mxu0 0
      %5660 = vmatpush1.bf16.xpose.msra.mxu0 0
      %5661 = vmatprep.subr.bf16.mxu0 0
      %5662 = vmatpush1.bf16.xpose.msra.mxu0 0
      %5663 = vmatprep.subr.bf16.mxu0 0
      %5664 = vmatpush1.bf16.xpose.msra.mxu0 0
      %5665 = vmatprep.subr.bf16.mxu0 0
      %5666 = vmatpush1.bf16.xpose.msra.mxu0 0
      %5667 = vmatprep.subr.bf16.mxu0 0
      %5668 = vmatpush1.bf16.xpose.msra.mxu0 0
      %5669 = vmatprep.subr.bf16.mxu0 0
      %5670 = vmatpush1.bf16.xpose.msra.mxu0 0
      %5671 = vmatprep.mubr.bf16.mxu0 %v4794
      %5672 = vmatmul.mubr.bf16.gmra.mrb[0].mxu0 %v4793
      %v5673 = vpop.f32.mrb[0].mxu0
      %v5674 = vadd.f32 0.0, %v5673
      %v5675 = vpop.f32.mrb[0].mxu0
      %v5676 = vpop.f32.mrb[0].mxu0
      %v5677 = vadd.f32 0.0, %v5676
      %v5678 = vpop.f32.mrb[0].mxu0
      %5679 = vmatprep.mubr.bf16.mxu0 %v4798
      %5680 = vmatmul.mubr.bf16.gmra.mrb[0].mxu0 %v4797
      %v5681 = vpop.f32.mrb[0].mxu0
      %v5682 = vadd.f32 0.0, %v5681
      %v5683 = vpop.f32.mrb[0].mxu0
      %v5684 = vpop.f32.mrb[0].mxu0
      %v5685 = vadd.f32 0.0, %v5684
      %v5686 = vpop.f32.mrb[0].mxu0
      %5687 = vmatprep.mubr.bf16.mxu0 %v4802
      %5688 = vmatmul.mubr.bf16.gmra.mrb[0].mxu0 %v4801
      %v5689 = vpop.f32.mrb[0].mxu0
      %v5690 = vadd.f32 0.0, %v5689
      %v5691 = vpop.f32.mrb[0].mxu0
      %v5692 = vpop.f32.mrb[0].mxu0
      %v5693 = vadd.f32 0.0, %v5692
      %v5694 = vpop.f32.mrb[0].mxu0
      %5695 = vmatprep.mubr.bf16.mxu0 %v4806
      %5696 = vmatmul.mubr.bf16.gmra.mrb[0].mxu0 %v4805
      %v5697 = vpop.f32.mrb[0].mxu0
      %v5698 = vadd.f32 0.0, %v5697
      %v5699 = vpop.f32.mrb[0].mxu0
      %v5700 = vpop.f32.mrb[0].mxu0
      %v5701 = vadd.f32 0.0, %v5700
      %v5702 = vpop.f32.mrb[0].mxu0
      %5703 = vmatprep.mubr.bf16.mxu0 %v4810
      %5704 = vmatmul.mubr.bf16.gmra.mrb[0].mxu0 %v4809
      %v5705 = vpop.f32.mrb[0].mxu0
      %v5706 = vadd.f32 0.0, %v5705
      %v5707 = vpop.f32.mrb[0].mxu0
      %v5708 = vpop.f32.mrb[0].mxu0
      %v5709 = vadd.f32 0.0, %v5708
      %v5710 = vpop.f32.mrb[0].mxu0
      %5711 = vmatprep.mubr.bf16.mxu0 %v4814
      %5712 = vmatmul.mubr.bf16.gmra.mrb[0].mxu0 %v4813
      %v5713 = vpop.f32.mrb[0].mxu0
      %v5714 = vadd.f32 0.0, %v5713
      %v5715 = vpop.f32.mrb[0].mxu0
      %v5716 = vpop.f32.mrb[0].mxu0
      %v5717 = vadd.f32 0.0, %v5716
      %v5718 = vpop.f32.mrb[0].mxu0
      %5719 = vmatprep.mubr.bf16.mxu0 %v4818
      %5720 = vmatmul.mubr.bf16.gmra.mrb[0].mxu0 %v4817
      %v5721 = vpop.f32.mrb[0].mxu0
      %v5722 = vadd.f32 0.0, %v5721
      %v5723 = vpop.f32.mrb[0].mxu0
      %v5724 = vpop.f32.mrb[0].mxu0
      %v5725 = vpop.f32.mrb[0].mxu0
      %5726 = vdwg.mxu0
      %5727 = vmatprep.subr.bf16.mxu0 %v5619
      %5728 = vmatpush1.bf16.xpose.msra.mxu0 %v5592
      %5729 = vmatprep.subr.bf16.mxu0 %v5622
      %5730 = vmatpush1.bf16.xpose.msra.mxu0 %v5596
      %5731 = vmatprep.subr.bf16.mxu0 %v5625
      %5732 = vmatpush1.bf16.xpose.msra.mxu0 %v5600
      %5733 = vmatprep.subr.bf16.mxu0 %v5628
      %5734 = vmatpush1.bf16.xpose.msra.mxu0 %v5604
      %5735 = vmatprep.subr.bf16.mxu0 %v5631
      %5736 = vmatpush1.bf16.xpose.msra.mxu0 %v5608
      %5737 = vmatprep.subr.bf16.mxu0 %v5634
      %5738 = vmatpush1.bf16.xpose.msra.mxu0 %v5612
      %5739 = vmatprep.subr.bf16.mxu0 %v5637
      %5740 = vmatpush1.bf16.xpose.msra.mxu0 %v5616
      %5741 = vmatprep.subr.bf16.mxu0 0
      %5742 = vmatpush1.bf16.xpose.msra.mxu0 0
      %5743 = vmatprep.subr.bf16.mxu0 0
      %5744 = vmatpush1.bf16.xpose.msra.mxu0 0
      %5745 = vmatprep.subr.bf16.mxu0 0
      %5746 = vmatpush1.bf16.xpose.msra.mxu0 0
      %5747 = vmatprep.subr.bf16.mxu0 0
      %5748 = vmatpush1.bf16.xpose.msra.mxu0 0
      %5749 = vmatprep.subr.bf16.mxu0 0
      %5750 = vmatpush1.bf16.xpose.msra.mxu0 0
      %5751 = vmatprep.subr.bf16.mxu0 0
      %5752 = vmatpush1.bf16.xpose.msra.mxu0 0
      %5753 = vmatprep.subr.bf16.mxu0 0
      %5754 = vmatpush1.bf16.xpose.msra.mxu0 0
      %5755 = vmatprep.subr.bf16.mxu0 0
      %5756 = vmatpush1.bf16.xpose.msra.mxu0 0
      %5757 = vmatprep.subr.bf16.mxu0 0
      %5758 = vmatpush1.bf16.xpose.msra.mxu0 0
      %5759 = vmatprep.mubr.bf16.mxu0 %v4903
      %5760 = vmatmul.mubr.bf16.gmra.mrb[0].mxu0 %v4795
      %v5761 = vpop.f32.mrb[0].mxu0
      %v5762 = vadd.f32 %v5674, %v5761
      %v5763 = vpop.f32.mrb[0].mxu0
      %v5764 = vpop.f32.mrb[0].mxu0
      %v5765 = vadd.f32 %v5677, %v5764
      %v5766 = vpop.f32.mrb[0].mxu0
      %5767 = vmatprep.mubr.bf16.mxu0 %v4906
      %5768 = vmatmul.mubr.bf16.gmra.mrb[0].mxu0 %v4799
      %v5769 = vpop.f32.mrb[0].mxu0
      %v5770 = vadd.f32 %v5682, %v5769
      %v5771 = vpop.f32.mrb[0].mxu0
      %v5772 = vpop.f32.mrb[0].mxu0
      %v5773 = vadd.f32 %v5685, %v5772
      %v5774 = vpop.f32.mrb[0].mxu0
      %5775 = vmatprep.mubr.bf16.mxu0 %v4909
      %5776 = vmatmul.mubr.bf16.gmra.mrb[0].mxu0 %v4803
      %v5777 = vpop.f32.mrb[0].mxu0
      %v5778 = vadd.f32 %v5690, %v5777
      %v5779 = vpop.f32.mrb[0].mxu0
      %v5780 = vpop.f32.mrb[0].mxu0
      %v5781 = vadd.f32 %v5693, %v5780
      %v5782 = vpop.f32.mrb[0].mxu0
      %5783 = vmatprep.mubr.bf16.mxu0 %v4912
      %5784 = vmatmul.mubr.bf16.gmra.mrb[0].mxu0 %v4807
      %v5785 = vpop.f32.mrb[0].mxu0
      %v5786 = vadd.f32 %v5698, %v5785
      %v5787 = vpop.f32.mrb[0].mxu0
      %v5788 = vpop.f32.mrb[0].mxu0
      %v5789 = vadd.f32 %v5701, %v5788
      %v5790 = vpop.f32.mrb[0].mxu0
      %5791 = vmatprep.mubr.bf16.mxu0 %v4915
      %5792 = vmatmul.mubr.bf16.gmra.mrb[0].mxu0 %v4811
      %v5793 = vpop.f32.mrb[0].mxu0
      %v5794 = vadd.f32 %v5706, %v5793
      %v5795 = vpop.f32.mrb[0].mxu0
      %v5796 = vpop.f32.mrb[0].mxu0
      %v5797 = vadd.f32 %v5709, %v5796
      %v5798 = vpop.f32.mrb[0].mxu0
      %5799 = vmatprep.mubr.bf16.mxu0 %v4918
      %5800 = vmatmul.mubr.bf16.gmra.mrb[0].mxu0 %v4815
      %v5801 = vpop.f32.mrb[0].mxu0
      %v5802 = vadd.f32 %v5714, %v5801
      %v5803 = vpop.f32.mrb[0].mxu0
      %v5804 = vpop.f32.mrb[0].mxu0
      %v5805 = vadd.f32 %v5717, %v5804
      %v5806 = vpop.f32.mrb[0].mxu0
      %5807 = vmatprep.mubr.bf16.mxu0 %v4921
      %5808 = vmatmul.mubr.bf16.gmra.mrb[0].mxu0 %v4819
      %v5809 = vpop.f32.mrb[0].mxu0
      %v5810 = vadd.f32 %v5722, %v5809
      %v5811 = vpop.f32.mrb[0].mxu0
      %v5812 = vpop.f32.mrb[0].mxu0
      %v5813 = vpop.f32.mrb[0].mxu0
      %5814 = vdwg.mxu0
      %v5815 = vmul.f32 %v5762, 0.002
      %v5816 = vmul.f32 %v5765, 0.002
      %v5817 = vmul.f32 %v5770, 0.002
      %v5818 = vmul.f32 %v5773, 0.002
      %v5819 = vmul.f32 %v5778, 0.002
      %v5820 = vmul.f32 %v5781, 0.002
      %v5821 = vmul.f32 %v5786, 0.002
      %v5822 = vmul.f32 %v5789, 0.002
      %v5823 = vmul.f32 %v5794, 0.002
      %v5824 = vmul.f32 %v5797, 0.002
      %v5825 = vmul.f32 %v5802, 0.002
      %v5826 = vmul.f32 %v5805, 0.002
      %v5827 = vmul.f32 %v5810, 0.002
      %v5828 = vsel %vm649, %v5815, -inf
      %5829 = vmax.xlane.f32.xlu0 %v5828
      %v5830 = vpop.xlane.xlu0 %5829
      %v5831 = vsel %vm649, %v5816, -inf
      %5832 = vmax.xlane.f32.xlu0 %v5831
      %v5833 = vpop.xlane.xlu0 %5832
      %v5834 = vsel %vm649, %v5817, -inf
      %5835 = vmax.xlane.f32.xlu0 %v5834
      %v5836 = vpop.xlane.xlu0 %5835
      %v5837 = vsel %vm649, %v5818, -inf
      %5838 = vmax.xlane.f32.xlu0 %v5837
      %v5839 = vpop.xlane.xlu0 %5838
      %v5840 = vsel %vm649, %v5819, -inf
      %5841 = vmax.xlane.f32.xlu0 %v5840
      %v5842 = vpop.xlane.xlu0 %5841
      %v5843 = vsel %vm649, %v5820, -inf
      %5844 = vmax.xlane.f32.xlu0 %v5843
      %v5845 = vpop.xlane.xlu0 %5844
      %v5846 = vsel %vm649, %v5821, -inf
      %5847 = vmax.xlane.f32.xlu0 %v5846
      %v5848 = vpop.xlane.xlu0 %5847
      %v5849 = vsel %vm649, %v5822, -inf
      %5850 = vmax.xlane.f32.xlu0 %v5849
      %v5851 = vpop.xlane.xlu0 %5850
      %v5852 = vsel %vm649, %v5823, -inf
      %5853 = vmax.xlane.f32.xlu0 %v5852
      %v5854 = vpop.xlane.xlu0 %5853
      %v5855 = vsel %vm649, %v5824, -inf
      %5856 = vmax.xlane.f32.xlu0 %v5855
      %v5857 = vpop.xlane.xlu0 %5856
      %v5858 = vsel %vm649, %v5825, -inf
      %5859 = vmax.xlane.f32.xlu0 %v5858
      %v5860 = vpop.xlane.xlu0 %5859
      %v5861 = vsel %vm649, %v5826, -inf
      %5862 = vmax.xlane.f32.xlu0 %v5861
      %v5863 = vpop.xlane.xlu0 %5862
      %v5864 = vsel %vm686, %v5827, -inf
      %5865 = vmax.xlane.f32.xlu0 %v5864
      %v5866 = vpop.xlane.xlu0 %5865
      %v5867 = vsub.f32 %v5815, %v5830
      %v5868 = vsub.f32 %v5816, %v5833
      %v5869 = vsub.f32 %v5817, %v5836
      %v5870 = vsub.f32 %v5818, %v5839
      %v5871 = vsub.f32 %v5819, %v5842
      %v5872 = vsub.f32 %v5820, %v5845
      %v5873 = vsub.f32 %v5821, %v5848
      %v5874 = vsub.f32 %v5822, %v5851
      %v5875 = vsub.f32 %v5823, %v5854
      %v5876 = vsub.f32 %v5824, %v5857
      %v5877 = vsub.f32 %v5825, %v5860
      %v5878 = vsub.f32 %v5826, %v5863
      %v5879 = vsub.f32 %v5827, %v5866
      %v5880 = vmul.f32 %v5867, 1.442695
      %v5881 = vpow.pop %v5880
      %v5882 = vmul.f32 %v5868, 1.442695
      %v5883 = vpow.pop %v5882
      %v5884 = vmul.f32 %v5869, 1.442695
      %v5885 = vpow.pop %v5884
      %v5886 = vmul.f32 %v5870, 1.442695
      %v5887 = vpow.pop %v5886
      %v5888 = vmul.f32 %v5871, 1.442695
      %v5889 = vpow.pop %v5888
      %v5890 = vmul.f32 %v5872, 1.442695
      %v5891 = vpow.pop %v5890
      %v5892 = vmul.f32 %v5873, 1.442695
      %v5893 = vpow.pop %v5892
      %v5894 = vmul.f32 %v5874, 1.442695
      %v5895 = vpow.pop %v5894
      %v5896 = vmul.f32 %v5875, 1.442695
      %v5897 = vpow.pop %v5896
      %v5898 = vmul.f32 %v5876, 1.442695
      %v5899 = vpow.pop %v5898
      %v5900 = vmul.f32 %v5877, 1.442695
      %v5901 = vpow.pop %v5900
      %v5902 = vmul.f32 %v5878, 1.442695
      %v5903 = vpow.pop %v5902
      %v5904 = vmul.f32 %v5879, 1.442695
      %v5905 = vpow.pop %v5904
      %v5906 = vsel %vm649, %v5881, 0.0
      %5907 = vadd.xlane.f32.xlu0 %v5906
      %v5908 = vpop.xlane.xlu0 %5907
      %v5909 = vsel %vm649, %v5883, 0.0
      %5910 = vadd.xlane.f32.xlu0 %v5909
      %v5911 = vpop.xlane.xlu0 %5910
      %v5912 = vsel %vm649, %v5885, 0.0
      %5913 = vadd.xlane.f32.xlu0 %v5912
      %v5914 = vpop.xlane.xlu0 %5913
      %v5915 = vsel %vm649, %v5887, 0.0
      %5916 = vadd.xlane.f32.xlu0 %v5915
      %v5917 = vpop.xlane.xlu0 %5916
      %v5918 = vsel %vm649, %v5889, 0.0
      %5919 = vadd.xlane.f32.xlu0 %v5918
      %v5920 = vpop.xlane.xlu0 %5919
      %v5921 = vsel %vm649, %v5891, 0.0
      %5922 = vadd.xlane.f32.xlu0 %v5921
      %v5923 = vpop.xlane.xlu0 %5922
      %v5924 = vsel %vm649, %v5893, 0.0
      %5925 = vadd.xlane.f32.xlu0 %v5924
      %v5926 = vpop.xlane.xlu0 %5925
      %v5927 = vsel %vm649, %v5895, 0.0
      %5928 = vadd.xlane.f32.xlu0 %v5927
      %v5929 = vpop.xlane.xlu0 %5928
      %v5930 = vsel %vm649, %v5897, 0.0
      %5931 = vadd.xlane.f32.xlu0 %v5930
      %v5932 = vpop.xlane.xlu0 %5931
      %v5933 = vsel %vm649, %v5899, 0.0
      %5934 = vadd.xlane.f32.xlu0 %v5933
      %v5935 = vpop.xlane.xlu0 %5934
      %v5936 = vsel %vm649, %v5901, 0.0
      %5937 = vadd.xlane.f32.xlu0 %v5936
      %v5938 = vpop.xlane.xlu0 %5937
      %v5939 = vsel %vm649, %v5903, 0.0
      %5940 = vadd.xlane.f32.xlu0 %v5939
      %v5941 = vpop.xlane.xlu0 %5940
      %v5942 = vsel %vm686, %v5905, 0.0
      %5943 = vadd.xlane.f32.xlu0 %v5942
      %v5944 = vpop.xlane.xlu0 %5943
      %v5945 = vrcp.pop %v5908
      %v5946 = vrcp.pop %v5911
      %v5947 = vrcp.pop %v5914
      %v5948 = vrcp.pop %v5917
      %v5949 = vrcp.pop %v5920
      %v5950 = vrcp.pop %v5923
      %v5951 = vrcp.pop %v5926
      %v5952 = vrcp.pop %v5929
      %v5953 = vrcp.pop %v5932
      %v5954 = vrcp.pop %v5935
      %v5955 = vrcp.pop %v5938
      %v5956 = vrcp.pop %v5941
      %v5957 = vrcp.pop %v5944
      %v5958 = vmul.f32 %v5881, %v5945
      %v5959 = vmul.f32 %v5883, %v5946
      %v5960 = vmul.f32 %v5885, %v5947
      %v5961 = vmul.f32 %v5887, %v5948
      %v5962 = vmul.f32 %v5889, %v5949
      %v5963 = vmul.f32 %v5891, %v5950
      %v5964 = vmul.f32 %v5893, %v5951
      %v5965 = vmul.f32 %v5895, %v5952
      %v5966 = vmul.f32 %v5897, %v5953
      %v5967 = vmul.f32 %v5899, %v5954
      %v5968 = vmul.f32 %v5901, %v5955
      %v5969 = vmul.f32 %v5903, %v5956
      %v5970 = vmul.f32 %v5905, %v5957
      %v5972 = vsel %vm797, %v5970, 0
      %5974 = vmatprep.subr.mxu0 0.0
      %5975 = vmatpush1.msra.mxu0 %v5958
      %5976 = vmatprep.subr.mxu0 0.0
      %5977 = vmatpush1.msra.mxu0 %v5959
      %5978 = vmatprep.subr.mxu0 0.0
      %5979 = vmatpush1.msra.mxu0 %v5960
      %5980 = vmatprep.subr.mxu0 0.0
      %5981 = vmatpush1.msra.mxu0 %v5961
      %5982 = vmatprep.subr.mxu0 0.0
      %5983 = vmatpush1.msra.mxu0 %v5962
      %5984 = vmatprep.subr.mxu0 0.0
      %5985 = vmatpush1.msra.mxu0 %v5963
      %5986 = vmatprep.subr.mxu0 0.0
      %5987 = vmatpush1.msra.mxu0 %v5964
      %5988 = vmatprep.subr.mxu0 0.0
      %5989 = vmatpush1.msra.mxu0 %v5965
      %5990 = vmatprep.subr.mxu0 0.0
      %5991 = vmatpush1.msra.mxu0 %v5966
      %5992 = vmatprep.subr.mxu0 0.0
      %5993 = vmatpush1.msra.mxu0 %v5967
      %5994 = vmatprep.subr.mxu0 0.0
      %5995 = vmatpush1.msra.mxu0 %v5968
      %5996 = vmatprep.subr.mxu0 0.0
      %5997 = vmatpush1.msra.mxu0 %v5969
      %5998 = vmatprep.subr.mxu0 0.0
      %5999 = vmatpush1.msra.mxu0 %v5972
      %6000 = vmatprep.subr.mxu0 0.0
      %6001 = vmatpush1.msra.mxu0 0.0
      %6002 = vmatprep.subr.mxu0 0.0
      %6003 = vmatpush1.msra.mxu0 0.0
      %6004 = vmatprep.subr.mxu0 0.0
      %6005 = vmatpush1.msra.mxu0 0.0
      %6006 = vmatprep.subr.mxu0 0.0
      %6007 = vmatpush1.msra.mxu0 0.0
      %6008 = vmatprep.subr.mxu0 0.0
      %6009 = vmatpush1.msra.mxu0 0.0
      %6010 = vmatprep.subr.mxu0 0.0
      %6011 = vmatpush1.msra.mxu0 0.0
      %6012 = vmatprep.subr.mxu0 0.0
      %6013 = vmatpush1.msra.mxu0 0.0
      %6014 = vmatprep.subr.mxu0 0.0
      %6015 = vmatpush1.msra.mxu0 0.0
      %6016 = vmatprep.subr.mxu0 0.0
      %6017 = vmatpush1.msra.mxu0 0.0
      %6018 = vmatprep.subr.mxu0 0.0
      %6019 = vmatpush1.msra.mxu0 0.0
      %6020 = vmatprep.subr.mxu0 0.0
      %6021 = vmatpush1.msra.mxu0 0.0
      %6022 = vmatprep.subr.mxu0 0.0
      %6023 = vmatpush1.msra.mxu0 0.0
      %6024 = vmatprep.subr.mxu0 0.0
      %6025 = vmatpush1.msra.mxu0 0.0
      %6026 = vmatprep.subr.mxu0 0.0
      %6027 = vmatpush1.msra.mxu0 0.0
      %6028 = vmatprep.subr.mxu0 0.0
      %6029 = vmatpush1.msra.mxu0 0.0
      %6030 = vmatprep.subr.mxu0 0.0
      %6031 = vmatpush1.msra.mxu0 0.0
      %6032 = vmatprep.subr.mxu0 0.0
      %6033 = vmatpush1.msra.mxu0 0.0
      %6034 = vmatprep.subr.mxu0 0.0
      %6035 = vmatpush1.msra.mxu0 0.0
      %6036 = vmatprep.subr.mxu0 0.0
      %6037 = vmatpush1.msra.mxu0 0.0
      %6038 = vmatprep.mubr.f32.mxu0 0.0
      %6039 = vmatmul.mubr.f32.gmra.mrb[0].mxu0 %v795
      %v6040 = vpop.f32.mrb[0].mxu0
      %v6041 = vadd.f32 0.0, %v6040
      %v6042 = vpop.f32.mrb[0].mxu0
      %6043 = vdwg.mxu0
      %v6045 = vsel %vm649, %v6041, 0
      %v6048 = vsel %vm797, %v5586, 0
      %v6051 = vsel %vm797, %v5587, 0
      %v6054 = vsel %vm797, %v5588, 0
      %v6057 = vsel %vm797, %v5589, 0
      %6059 = vmatprep.subr.mxu0 %v5539
      %6060 = vmatpush1.msra.mxu0 %v5538
      %6061 = vmatprep.subr.mxu0 %v5543
      %6062 = vmatpush1.msra.mxu0 %v5542
      %6063 = vmatprep.subr.mxu0 %v5547
      %6064 = vmatpush1.msra.mxu0 %v5546
      %6065 = vmatprep.subr.mxu0 %v5551
      %6066 = vmatpush1.msra.mxu0 %v5550
      %6067 = vmatprep.subr.mxu0 %v5555
      %6068 = vmatpush1.msra.mxu0 %v5554
      %6069 = vmatprep.subr.mxu0 %v5559
      %6070 = vmatpush1.msra.mxu0 %v5558
      %6071 = vmatprep.subr.mxu0 %v5563
      %6072 = vmatpush1.msra.mxu0 %v5562
      %6073 = vmatprep.subr.mxu0 %v5567
      %6074 = vmatpush1.msra.mxu0 %v5566
      %6075 = vmatprep.subr.mxu0 %v5571
      %6076 = vmatpush1.msra.mxu0 %v5570
      %6077 = vmatprep.subr.mxu0 %v5575
      %6078 = vmatpush1.msra.mxu0 %v5574
      %6079 = vmatprep.subr.mxu0 %v5579
      %6080 = vmatpush1.msra.mxu0 %v5578
      %6081 = vmatprep.subr.mxu0 %v5583
      %6082 = vmatpush1.msra.mxu0 %v5582
      %6083 = vmatprep.subr.mxu0 %v6051
      %6084 = vmatpush1.msra.mxu0 %v6048
      %6085 = vmatprep.subr.mxu0 0.0
      %6086 = vmatpush1.msra.mxu0 0.0
      %6087 = vmatprep.subr.mxu0 0.0
      %6088 = vmatpush1.msra.mxu0 0.0
      %6089 = vmatprep.subr.mxu0 0.0
      %6090 = vmatpush1.msra.mxu0 0.0
      %6091 = vmatprep.subr.mxu0 0.0
      %6092 = vmatpush1.msra.mxu0 0.0
      %6093 = vmatprep.subr.mxu0 0.0
      %6094 = vmatpush1.msra.mxu0 0.0
      %6095 = vmatprep.subr.mxu0 0.0
      %6096 = vmatpush1.msra.mxu0 0.0
      %6097 = vmatprep.subr.mxu0 0.0
      %6098 = vmatpush1.msra.mxu0 0.0
      %6099 = vmatprep.subr.mxu0 0.0
      %6100 = vmatpush1.msra.mxu0 0.0
      %6101 = vmatprep.subr.mxu0 0.0
      %6102 = vmatpush1.msra.mxu0 0.0
      %6103 = vmatprep.subr.mxu0 0.0
      %6104 = vmatpush1.msra.mxu0 0.0
      %6105 = vmatprep.subr.mxu0 0.0
      %6106 = vmatpush1.msra.mxu0 0.0
      %6107 = vmatprep.subr.mxu0 0.0
      %6108 = vmatpush1.msra.mxu0 0.0
      %6109 = vmatprep.subr.mxu0 0.0
      %6110 = vmatpush1.msra.mxu0 0.0
      %6111 = vmatprep.subr.mxu0 0.0
      %6112 = vmatpush1.msra.mxu0 0.0
      %6113 = vmatprep.subr.mxu0 0.0
      %6114 = vmatpush1.msra.mxu0 0.0
      %6115 = vmatprep.subr.mxu0 0.0
      %6116 = vmatpush1.msra.mxu0 0.0
      %6117 = vmatprep.subr.mxu0 0.0
      %6118 = vmatpush1.msra.mxu0 0.0
      %6119 = vmatprep.subr.mxu0 0.0
      %6120 = vmatpush1.msra.mxu0 0.0
      %6121 = vmatprep.subr.mxu0 0.0
      %6122 = vmatpush1.msra.mxu0 0.0
      %6123 = vmatprep.mubr.f32.mxu0 0.0
      %6124 = vmatmul.mubr.f32.gmra.mrb[0].mxu0 %v6045
      %v6125 = vpop.f32.mrb[0].mxu0
      %v6126 = vadd.f32 0.0, %v6125
      %v6127 = vpop.f32.mrb[0].mxu0
      %v6128 = vadd.f32 0.0, %v6127
      %6129 = vdwg.mxu0
      %6130 = vmatprep.subr.mxu0 %v5541
      %6131 = vmatpush1.msra.mxu0 %v5540
      %6132 = vmatprep.subr.mxu0 %v5545
      %6133 = vmatpush1.msra.mxu0 %v5544
      %6134 = vmatprep.subr.mxu0 %v5549
      %6135 = vmatpush1.msra.mxu0 %v5548
      %6136 = vmatprep.subr.mxu0 %v5553
      %6137 = vmatpush1.msra.mxu0 %v5552
      %6138 = vmatprep.subr.mxu0 %v5557
      %6139 = vmatpush1.msra.mxu0 %v5556
      %6140 = vmatprep.subr.mxu0 %v5561
      %6141 = vmatpush1.msra.mxu0 %v5560
      %6142 = vmatprep.subr.mxu0 %v5565
      %6143 = vmatpush1.msra.mxu0 %v5564
      %6144 = vmatprep.subr.mxu0 %v5569
      %6145 = vmatpush1.msra.mxu0 %v5568
      %6146 = vmatprep.subr.mxu0 %v5573
      %6147 = vmatpush1.msra.mxu0 %v5572
      %6148 = vmatprep.subr.mxu0 %v5577
      %6149 = vmatpush1.msra.mxu0 %v5576
      %6150 = vmatprep.subr.mxu0 %v5581
      %6151 = vmatpush1.msra.mxu0 %v5580
      %6152 = vmatprep.subr.mxu0 %v5585
      %6153 = vmatpush1.msra.mxu0 %v5584
      %6154 = vmatprep.subr.mxu0 %v6057
      %6155 = vmatpush1.msra.mxu0 %v6054
      %6156 = vmatprep.subr.mxu0 0.0
      %6157 = vmatpush1.msra.mxu0 0.0
      %6158 = vmatprep.subr.mxu0 0.0
      %6159 = vmatpush1.msra.mxu0 0.0
      %6160 = vmatprep.subr.mxu0 0.0
      %6161 = vmatpush1.msra.mxu0 0.0
      %6162 = vmatprep.subr.mxu0 0.0
      %6163 = vmatpush1.msra.mxu0 0.0
      %6164 = vmatprep.subr.mxu0 0.0
      %6165 = vmatpush1.msra.mxu0 0.0
      %6166 = vmatprep.subr.mxu0 0.0
      %6167 = vmatpush1.msra.mxu0 0.0
      %6168 = vmatprep.subr.mxu0 0.0
      %6169 = vmatpush1.msra.mxu0 0.0
      %6170 = vmatprep.subr.mxu0 0.0
      %6171 = vmatpush1.msra.mxu0 0.0
      %6172 = vmatprep.subr.mxu0 0.0
      %6173 = vmatpush1.msra.mxu0 0.0
      %6174 = vmatprep.subr.mxu0 0.0
      %6175 = vmatpush1.msra.mxu0 0.0
      %6176 = vmatprep.subr.mxu0 0.0
      %6177 = vmatpush1.msra.mxu0 0.0
      %6178 = vmatprep.subr.mxu0 0.0
      %6179 = vmatpush1.msra.mxu0 0.0
      %6180 = vmatprep.subr.mxu0 0.0
      %6181 = vmatpush1.msra.mxu0 0.0
      %6182 = vmatprep.subr.mxu0 0.0
      %6183 = vmatpush1.msra.mxu0 0.0
      %6184 = vmatprep.subr.mxu0 0.0
      %6185 = vmatpush1.msra.mxu0 0.0
      %6186 = vmatprep.subr.mxu0 0.0
      %6187 = vmatpush1.msra.mxu0 0.0
      %6188 = vmatprep.subr.mxu0 0.0
      %6189 = vmatpush1.msra.mxu0 0.0
      %6190 = vmatprep.subr.mxu0 0.0
      %6191 = vmatpush1.msra.mxu0 0.0
      %6192 = vmatprep.subr.mxu0 0.0
      %6193 = vmatpush1.msra.mxu0 0.0
      %6194 = vmatprep.mubr.f32.mxu0 0.0
      %6195 = vmatmul.mubr.f32.gmra.mrb[0].mxu0 %v6045
      %v6196 = vpop.f32.mrb[0].mxu0
      %v6197 = vadd.f32 0.0, %v6196
      %v6198 = vpop.f32.mrb[0].mxu0
      %v6199 = vadd.f32 0.0, %v6198
      %6200 = vdwg.mxu0
      %v6205 = vcombine.low %v6126, %v6128
      %v6206 = vcombine.low %v6197, %v6199
      %v6208 = vunpack.c.l.s4 1966171168
      %v6209 = vunpack.c.0.s8 %v6208
      %v6210 = vlaneseq
      %v6211 = vshrl.u32 %v6210, 7
      %v6212 = vsub.s32 %v6209, %v6211
      %v6213 = vrot.slane %v6205, %v6212
      %v6215 = vunpack.c.l.s4 1966171168
      %v6216 = vunpack.c.0.s8 %v6215
      %v6217 = vlaneseq
      %v6218 = vshrl.u32 %v6217, 7
      %v6219 = vsub.s32 %v6216, %v6218
      %v6220 = vrot.slane %v6206, %v6219
      %v6221 = vcombine.low %v6213, %v6220
      %v6223 = vunpack.c.l.s4 1966171168
      %v6224 = vunpack.c.0.s8 %v6223
      %v6225 = vlaneseq
      %v6226 = vshrl.u32 %v6225, 7
      %v6227 = vsub.s32 %v6224, %v6226
      %v6228 = vrot.slane %v6221, %v6227
      %s6230 = scalar_lea.vmem [#allocation3], 3
      %6231 = vst.msk [vmem:[%s6230] ss:$4 sm:$0xf] %vm1060, %v6228
      %v6232 = vld [vmem:[#allocation2] sm:$0xff]
      %v6233 = vld [vmem:[#allocation2 + $0x8] sm:$0xff]
      %v6234 = vld [vmem:[%s1] sm:$0xff]
      %v6235 = vld [vmem:[%s1 + $0x8] sm:$0xff]
      %v6236 = vld [vmem:[%s1 + $0x10] sm:$0xff]
      %v6237 = vld [vmem:[%s1 + $0x18] sm:$0xff]
      %v6238 = vld [vmem:[%s1 + $0x20] sm:$0xff]
      %v6239 = vld [vmem:[%s1 + $0x28] sm:$0xff]
      %v6240 = vld [vmem:[%s1 + $0x30] sm:$0xff]
      %v6241 = vld [vmem:[%s1 + $0x38] sm:$0xff]
      %v6242 = vld [vmem:[%s1 + $0x40] sm:$0xff]
      %v6243 = vld [vmem:[%s1 + $0x48] sm:$0xff]
      %v6244 = vld [vmem:[%s1 + $0x50] sm:$0xff]
      %v6245 = vld [vmem:[%s1 + $0x58] sm:$0xff]
      %v6246 = vld [vmem:[%s1 + $0x60] sm:$0xff]
      %v6247 = vld [vmem:[%s1 + $0x68] sm:$0xff]
      %v6248 = vld [vmem:[%s1 + $0x70] sm:$0xff]
      %v6249 = vld [vmem:[%s1 + $0x78] sm:$0xff]
      %v6250 = vld [vmem:[%s1 + $0x80] sm:$0xff]
      %v6251 = vld [vmem:[%s1 + $0x88] sm:$0xff]
      %v6252 = vld [vmem:[%s1 + $0x90] sm:$0xff]
      %v6253 = vld [vmem:[%s1 + $0x98] sm:$0xff]
      %v6254 = vld [vmem:[%s1 + $0xa0] sm:$0xff]
      %v6255 = vld [vmem:[%s1 + $0xa8] sm:$0xff]
      %v6256 = vld [vmem:[%s1 + $0xb0] sm:$0xff]
      %v6257 = vld [vmem:[%s1 + $0xb8] sm:$0xff]
      %v6258 = vld [vmem:[%s1 + $0xc0] sm:$0xff]
      %v6259 = vld [vmem:[%s1 + $0xc8] sm:$0xff]
      %v6260 = vld [vmem:[%s1 + $0xd0] sm:$0xff]
      %v6261 = vld [vmem:[%s1 + $0xd8] sm:$0xff]
      %v6262 = vld [vmem:[%s1 + $0xe0] sm:$0xff]
      %v6263 = vld [vmem:[%s1 + $0xe8] sm:$0xff]
      %v6264 = vld [vmem:[%s1 + $0xf0] sm:$0xff]
      %v6265 = vld [vmem:[%s1 + $0xf8] sm:$0xff]
      %v6266 = vld [vmem:[%s1 + $0x100] sm:$0xff]
      %v6267 = vld [vmem:[%s1 + $0x108] sm:$0xff]
      %v6268 = vld [vmem:[%s1 + $0x110] sm:$0xff]
      %v6269 = vld [vmem:[%s1 + $0x118] sm:$0xff]
      %v6270 = vld [vmem:[%s1 + $0x120] sm:$0xff]
      %v6271 = vld [vmem:[%s1 + $0x128] sm:$0xff]
      %v6272 = vld [vmem:[%s1 + $0x130] sm:$0xff]
      %v6273 = vld [vmem:[%s1 + $0x138] sm:$0xff]
      %v6274 = vld [vmem:[%s1 + $0x140] sm:$0xff]
      %v6275 = vld [vmem:[%s1 + $0x148] sm:$0xff]
      %v6276 = vld [vmem:[%s1 + $0x150] sm:$0xff]
      %v6277 = vld [vmem:[%s1 + $0x158] sm:$0xff]
      %v6278 = vld [vmem:[%s1 + $0x160] sm:$0xff]
      %v6279 = vld [vmem:[%s1 + $0x168] sm:$0xff]
      %v6280 = vld [vmem:[%s1 + $0x170] sm:$0xff]
      %v6281 = vld [vmem:[%s1 + $0x178] sm:$0xff]
      %v6282 = vld [vmem:[%s1 + $0x180] sm:$0xff]
      %v6283 = vld [vmem:[%s1 + $0x188] sm:$0xff]
      %v6284 = vld [vmem:[%s1 + $0x190] sm:$0xff]
      %v6285 = vld [vmem:[%s1 + $0x198] sm:$0xff]
      %v6286 = vld [vmem:[%s1 + $0x1a0] sm:$0xff]
      %v6287 = vld [vmem:[%s1 + $0x1a8] sm:$0xff]
      %v6288 = vld [vmem:[%s1 + $0x1b0] sm:$0xff]
      %v6289 = vld [vmem:[%s1 + $0x1b8] sm:$0xff]
      %v6290 = vld [vmem:[%s1 + $0x1c0] sm:$0xff]
      %v6291 = vld [vmem:[%s1 + $0x1c8] sm:$0xff]
      %v6292 = vld [vmem:[%s1 + $0x1d0] sm:$0xff]
      %v6293 = vld [vmem:[%s1 + $0x1d8] sm:$0xff]
      %v6294 = vld [vmem:[%s1 + $0x1e0] sm:$0xff]
      %v6295 = vld [vmem:[%s1 + $0x1e8] sm:$0xff]
      %v6296 = vld [vmem:[%s1 + $0x1f0] sm:$0xff]
      %v6297 = vld [vmem:[%s1 + $0x1f8] sm:$0xff]
      %v6298 = vld [vmem:[%s1 + $0x200] sm:$0xff]
      %v6299 = vld [vmem:[%s1 + $0x208] sm:$0xff]
      %v6300 = vld [vmem:[%s1 + $0x210] sm:$0xff]
      %v6301 = vld [vmem:[%s1 + $0x218] sm:$0xff]
      %v6302 = vld [vmem:[%s1 + $0x220] sm:$0xff]
      %v6303 = vld [vmem:[%s1 + $0x228] sm:$0xff]
      %v6304 = vld [vmem:[%s1 + $0x230] sm:$0xff]
      %v6305 = vld [vmem:[%s1 + $0x238] sm:$0xff]
      %v6306 = vld [vmem:[%s1 + $0x240] sm:$0xff]
      %v6307 = vld [vmem:[%s1 + $0x248] sm:$0xff]
      %v6308 = vld [vmem:[%s1 + $0x250] sm:$0xff]
      %v6309 = vld [vmem:[%s1 + $0x258] sm:$0xff]
      %v6310 = vld [vmem:[%s1 + $0x260] sm:$0xff]
      %v6311 = vld [vmem:[%s1 + $0x268] sm:$0xff]
      %v6312 = vld [vmem:[%s1 + $0x270] sm:$0xff]
      %v6313 = vld [vmem:[%s1 + $0x278] sm:$0xff]
      %v6314 = vld [vmem:[%s1 + $0x280] sm:$0xff]
      %v6315 = vld [vmem:[%s1 + $0x288] sm:$0xff]
      %v6316 = vld [vmem:[%s1 + $0x290] sm:$0xff]
      %v6317 = vld [vmem:[%s1 + $0x298] sm:$0xff]
      %v6318 = vld [vmem:[%s1 + $0x2a0] sm:$0xff]
      %v6319 = vld [vmem:[%s1 + $0x2a8] sm:$0xff]
      %v6320 = vld [vmem:[%s1 + $0x2b0] sm:$0xff]
      %v6321 = vld [vmem:[%s1 + $0x2b8] sm:$0xff]
      %v6322 = vld [vmem:[%s1 + $0x2c0] sm:$0xff]
      %v6323 = vld [vmem:[%s1 + $0x2c8] sm:$0xff]
      %v6324 = vld [vmem:[%s1 + $0x2d0] sm:$0xff]
      %v6325 = vld [vmem:[%s1 + $0x2d8] sm:$0xff]
      %v6326 = vld [vmem:[%s1 + $0x2e0] sm:$0xff]
      %v6327 = vld [vmem:[%s1 + $0x2e8] sm:$0xff]
      %v6328 = vld [vmem:[%s1 + $0x2f0] sm:$0xff]
      %v6329 = vld [vmem:[%s1 + $0x2f8] sm:$0xff]
      %v6330 = vld [vmem:[%s1 + $0x300] sm:$0xff]
      %v6331 = vld [vmem:[%s1 + $0x308] sm:$0xff]
      %v6332 = vld [vmem:[%s1 + $0x310] sm:$0xff]
      %v6333 = vld [vmem:[%s1 + $0x318] sm:$0xff]
      %v6334 = vld [vmem:[%s1 + $0x320] sm:$0xff]
      %v6335 = vld [vmem:[%s1 + $0x328] sm:$0xff]
      %v6336 = vld [vmem:[%s1 + $0x330] sm:$0xff]
      %v6337 = vld [vmem:[%s1 + $0x338] sm:$0xff]
      %v6338 = vld [vmem:[%s1 + $0x340] sm:$0xff]
      %v6339 = vld [vmem:[%s1 + $0x348] sm:$0xff]
      %v6340 = vld [vmem:[%s1 + $0x350] sm:$0xff]
      %v6341 = vld [vmem:[%s1 + $0x358] sm:$0xff]
      %v6342 = vld [vmem:[%s1 + $0x360] sm:$0xff]
      %v6343 = vld [vmem:[%s1 + $0x368] sm:$0xff]
      %v6344 = vld [vmem:[%s1 + $0x370] sm:$0xff]
      %v6345 = vld [vmem:[%s1 + $0x378] sm:$0xff]
      %v6346 = vld [vmem:[%s1 + $0x380] sm:$0xff]
      %v6347 = vld [vmem:[%s1 + $0x388] sm:$0xff]
      %v6348 = vld [vmem:[%s1 + $0x390] sm:$0xff]
      %v6349 = vld [vmem:[%s1 + $0x398] sm:$0xff]
      %v6350 = vld [vmem:[%s1 + $0x3a0] sm:$0xff]
      %v6351 = vld [vmem:[%s1 + $0x3a8] sm:$0xff]
      %v6352 = vld [vmem:[%s1 + $0x3b0] sm:$0xff]
      %v6353 = vld [vmem:[%s1 + $0x3b8] sm:$0xff]
      %v6354 = vld [vmem:[%s1 + $0x3c0] sm:$0xff]
      %v6355 = vld [vmem:[%s1 + $0x3c8] sm:$0xff]
      %v6356 = vld [vmem:[%s1 + $0x3d0] sm:$0xff]
      %v6357 = vld [vmem:[%s1 + $0x3d8] sm:$0xff]
      %v6358 = vld [vmem:[%s1 + $0x3e0] sm:$0xf]
      %v6359 = vld [vmem:[%s1 + $0x3e8] sm:$0xf]
      %v6360 = vld [vmem:[#allocation3] sm:$0xff]
      %v6361 = vld [vmem:[#allocation3 + $0x8] sm:$0xff]
      %v6362 = vld [vmem:[%s2] sm:$0xff]
      %v6363 = vld [vmem:[%s2 + $0x8] sm:$0xff]
      %v6364 = vld [vmem:[%s2 + $0x10] sm:$0xff]
      %v6365 = vld [vmem:[%s2 + $0x18] sm:$0xff]
      %v6366 = vld [vmem:[%s2 + $0x20] sm:$0xff]
      %v6367 = vld [vmem:[%s2 + $0x28] sm:$0xff]
      %v6368 = vld [vmem:[%s2 + $0x30] sm:$0xff]
      %v6369 = vld [vmem:[%s2 + $0x38] sm:$0xff]
      %v6370 = vld [vmem:[%s2 + $0x40] sm:$0xff]
      %v6371 = vld [vmem:[%s2 + $0x48] sm:$0xff]
      %v6372 = vld [vmem:[%s2 + $0x50] sm:$0xff]
      %v6373 = vld [vmem:[%s2 + $0x58] sm:$0xff]
      %v6374 = vld [vmem:[%s2 + $0x60] sm:$0xff]
      %v6375 = vld [vmem:[%s2 + $0x68] sm:$0xff]
      %v6376 = vld [vmem:[%s2 + $0x70] sm:$0xff]
      %v6377 = vld [vmem:[%s2 + $0x78] sm:$0xff]
      %v6378 = vld [vmem:[%s2 + $0x80] sm:$0xff]
      %v6379 = vld [vmem:[%s2 + $0x88] sm:$0xff]
      %v6380 = vld [vmem:[%s2 + $0x90] sm:$0xff]
      %v6381 = vld [vmem:[%s2 + $0x98] sm:$0xff]
      %v6382 = vld [vmem:[%s2 + $0xa0] sm:$0xff]
      %v6383 = vld [vmem:[%s2 + $0xa8] sm:$0xff]
      %v6384 = vld [vmem:[%s2 + $0xb0] sm:$0xff]
      %v6385 = vld [vmem:[%s2 + $0xb8] sm:$0xff]
      %v6386 = vld [vmem:[%s2 + $0xc0] sm:$0xff]
      %v6387 = vld [vmem:[%s2 + $0xc8] sm:$0xff]
      %v6388 = vld [vmem:[%s2 + $0xd0] sm:$0xff]
      %v6389 = vld [vmem:[%s2 + $0xd8] sm:$0xff]
      %v6390 = vld [vmem:[%s2 + $0xe0] sm:$0xff]
      %v6391 = vld [vmem:[%s2 + $0xe8] sm:$0xff]
      %v6392 = vld [vmem:[%s2 + $0xf0] sm:$0xff]
      %v6393 = vld [vmem:[%s2 + $0xf8] sm:$0xff]
      %v6394 = vld [vmem:[%s2 + $0x100] sm:$0xff]
      %v6395 = vld [vmem:[%s2 + $0x108] sm:$0xff]
      %v6396 = vld [vmem:[%s2 + $0x110] sm:$0xff]
      %v6397 = vld [vmem:[%s2 + $0x118] sm:$0xff]
      %v6398 = vld [vmem:[%s2 + $0x120] sm:$0xff]
      %v6399 = vld [vmem:[%s2 + $0x128] sm:$0xff]
      %v6400 = vld [vmem:[%s2 + $0x130] sm:$0xff]
      %v6401 = vld [vmem:[%s2 + $0x138] sm:$0xff]
      %v6402 = vld [vmem:[%s2 + $0x140] sm:$0xff]
      %v6403 = vld [vmem:[%s2 + $0x148] sm:$0xff]
      %v6404 = vld [vmem:[%s2 + $0x150] sm:$0xff]
      %v6405 = vld [vmem:[%s2 + $0x158] sm:$0xff]
      %v6406 = vld [vmem:[%s2 + $0x160] sm:$0xff]
      %v6407 = vld [vmem:[%s2 + $0x168] sm:$0xff]
      %v6408 = vld [vmem:[%s2 + $0x170] sm:$0xff]
      %v6409 = vld [vmem:[%s2 + $0x178] sm:$0xff]
      %v6410 = vld [vmem:[%s2 + $0x180] sm:$0xff]
      %v6411 = vld [vmem:[%s2 + $0x188] sm:$0xff]
      %v6412 = vld [vmem:[%s2 + $0x190] sm:$0xff]
      %v6413 = vld [vmem:[%s2 + $0x198] sm:$0xff]
      %v6414 = vld [vmem:[%s2 + $0x1a0] sm:$0xff]
      %v6415 = vld [vmem:[%s2 + $0x1a8] sm:$0xff]
      %v6416 = vld [vmem:[%s2 + $0x1b0] sm:$0xff]
      %v6417 = vld [vmem:[%s2 + $0x1b8] sm:$0xff]
      %v6418 = vld [vmem:[%s2 + $0x1c0] sm:$0xff]
      %v6419 = vld [vmem:[%s2 + $0x1c8] sm:$0xff]
      %v6420 = vld [vmem:[%s2 + $0x1d0] sm:$0xff]
      %v6421 = vld [vmem:[%s2 + $0x1d8] sm:$0xff]
      %v6422 = vld [vmem:[%s2 + $0x1e0] sm:$0xff]
      %v6423 = vld [vmem:[%s2 + $0x1e8] sm:$0xff]
      %v6424 = vld [vmem:[%s2 + $0x1f0] sm:$0xff]
      %v6425 = vld [vmem:[%s2 + $0x1f8] sm:$0xff]
      %v6426 = vld [vmem:[%s2 + $0x200] sm:$0xff]
      %v6427 = vld [vmem:[%s2 + $0x208] sm:$0xff]
      %v6428 = vld [vmem:[%s2 + $0x210] sm:$0xff]
      %v6429 = vld [vmem:[%s2 + $0x218] sm:$0xff]
      %v6430 = vld [vmem:[%s2 + $0x220] sm:$0xff]
      %v6431 = vld [vmem:[%s2 + $0x228] sm:$0xff]
      %v6432 = vld [vmem:[%s2 + $0x230] sm:$0xff]
      %v6433 = vld [vmem:[%s2 + $0x238] sm:$0xff]
      %v6434 = vld [vmem:[%s2 + $0x240] sm:$0xff]
      %v6435 = vld [vmem:[%s2 + $0x248] sm:$0xff]
      %v6436 = vld [vmem:[%s2 + $0x250] sm:$0xff]
      %v6437 = vld [vmem:[%s2 + $0x258] sm:$0xff]
      %v6438 = vld [vmem:[%s2 + $0x260] sm:$0xff]
      %v6439 = vld [vmem:[%s2 + $0x268] sm:$0xff]
      %v6440 = vld [vmem:[%s2 + $0x270] sm:$0xff]
      %v6441 = vld [vmem:[%s2 + $0x278] sm:$0xff]
      %v6442 = vld [vmem:[%s2 + $0x280] sm:$0xff]
      %v6443 = vld [vmem:[%s2 + $0x288] sm:$0xff]
      %v6444 = vld [vmem:[%s2 + $0x290] sm:$0xff]
      %v6445 = vld [vmem:[%s2 + $0x298] sm:$0xff]
      %v6446 = vld [vmem:[%s2 + $0x2a0] sm:$0xff]
      %v6447 = vld [vmem:[%s2 + $0x2a8] sm:$0xff]
      %v6448 = vld [vmem:[%s2 + $0x2b0] sm:$0xff]
      %v6449 = vld [vmem:[%s2 + $0x2b8] sm:$0xff]
      %v6450 = vld [vmem:[%s2 + $0x2c0] sm:$0xff]
      %v6451 = vld [vmem:[%s2 + $0x2c8] sm:$0xff]
      %v6452 = vld [vmem:[%s2 + $0x2d0] sm:$0xff]
      %v6453 = vld [vmem:[%s2 + $0x2d8] sm:$0xff]
      %v6454 = vld [vmem:[%s2 + $0x2e0] sm:$0xff]
      %v6455 = vld [vmem:[%s2 + $0x2e8] sm:$0xff]
      %v6456 = vld [vmem:[%s2 + $0x2f0] sm:$0xff]
      %v6457 = vld [vmem:[%s2 + $0x2f8] sm:$0xff]
      %v6458 = vld [vmem:[%s2 + $0x300] sm:$0xff]
      %v6459 = vld [vmem:[%s2 + $0x308] sm:$0xff]
      %v6460 = vld [vmem:[%s2 + $0x310] sm:$0xff]
      %v6461 = vld [vmem:[%s2 + $0x318] sm:$0xff]
      %v6462 = vld [vmem:[%s2 + $0x320] sm:$0xff]
      %v6463 = vld [vmem:[%s2 + $0x328] sm:$0xff]
      %v6464 = vld [vmem:[%s2 + $0x330] sm:$0xff]
      %v6465 = vld [vmem:[%s2 + $0x338] sm:$0xff]
      %v6466 = vld [vmem:[%s2 + $0x340] sm:$0xff]
      %v6467 = vld [vmem:[%s2 + $0x348] sm:$0xff]
      %v6468 = vld [vmem:[%s2 + $0x350] sm:$0xff]
      %v6469 = vld [vmem:[%s2 + $0x358] sm:$0xff]
      %v6470 = vld [vmem:[%s2 + $0x360] sm:$0xff]
      %v6471 = vld [vmem:[%s2 + $0x368] sm:$0xff]
      %v6472 = vld [vmem:[%s2 + $0x370] sm:$0xff]
      %v6473 = vld [vmem:[%s2 + $0x378] sm:$0xff]
      %v6474 = vld [vmem:[%s2 + $0x380] sm:$0xff]
      %v6475 = vld [vmem:[%s2 + $0x388] sm:$0xff]
      %v6476 = vld [vmem:[%s2 + $0x390] sm:$0xff]
      %v6477 = vld [vmem:[%s2 + $0x398] sm:$0xff]
      %v6478 = vld [vmem:[%s2 + $0x3a0] sm:$0xff]
      %v6479 = vld [vmem:[%s2 + $0x3a8] sm:$0xff]
      %v6480 = vld [vmem:[%s2 + $0x3b0] sm:$0xff]
      %v6481 = vld [vmem:[%s2 + $0x3b8] sm:$0xff]
      %v6482 = vld [vmem:[%s2 + $0x3c0] sm:$0xff]
      %v6483 = vld [vmem:[%s2 + $0x3c8] sm:$0xff]
      %v6484 = vld [vmem:[%s2 + $0x3d0] sm:$0xff]
      %v6485 = vld [vmem:[%s2 + $0x3d8] sm:$0xff]
      %v6486 = vld [vmem:[%s2 + $0x3e0] sm:$0xf]
      %v6487 = vld [vmem:[%s2 + $0x3e8] sm:$0xf]
      %v6490 = vcombine.high %v6360, %v6360
      %v6491 = vcombine.high %v6361, %v6361
      %v6493 = vsel %vm417, %v6491, 0
      %v6496 = vsel %vm797, %v6486, 0
      %v6499 = vsel %vm797, %v6487, 0
      %6501 = vmatprep.subr.mxu0 %v6363
      %6502 = vmatpush1.msra.mxu0 %v6362
      %6503 = vmatprep.subr.mxu0 %v6365
      %6504 = vmatpush1.msra.mxu0 %v6364
      %6505 = vmatprep.subr.mxu0 %v6367
      %6506 = vmatpush1.msra.mxu0 %v6366
      %6507 = vmatprep.subr.mxu0 %v6369
      %6508 = vmatpush1.msra.mxu0 %v6368
      %6509 = vmatprep.subr.mxu0 %v6371
      %6510 = vmatpush1.msra.mxu0 %v6370
      %6511 = vmatprep.subr.mxu0 %v6373
      %6512 = vmatpush1.msra.mxu0 %v6372
      %6513 = vmatprep.subr.mxu0 %v6375
      %6514 = vmatpush1.msra.mxu0 %v6374
      %6515 = vmatprep.subr.mxu0 %v6377
      %6516 = vmatpush1.msra.mxu0 %v6376
      %6517 = vmatprep.subr.mxu0 %v6379
      %6518 = vmatpush1.msra.mxu0 %v6378
      %6519 = vmatprep.subr.mxu0 %v6381
      %6520 = vmatpush1.msra.mxu0 %v6380
      %6521 = vmatprep.subr.mxu0 %v6383
      %6522 = vmatpush1.msra.mxu0 %v6382
      %6523 = vmatprep.subr.mxu0 %v6385
      %6524 = vmatpush1.msra.mxu0 %v6384
      %6525 = vmatprep.subr.mxu0 %v6387
      %6526 = vmatpush1.msra.mxu0 %v6386
      %6527 = vmatprep.subr.mxu0 %v6389
      %6528 = vmatpush1.msra.mxu0 %v6388
      %6529 = vmatprep.subr.mxu0 %v6391
      %6530 = vmatpush1.msra.mxu0 %v6390
      %6531 = vmatprep.subr.mxu0 %v6393
      %6532 = vmatpush1.msra.mxu0 %v6392
      %6533 = vmatprep.subr.mxu0 %v6395
      %6534 = vmatpush1.msra.mxu0 %v6394
      %6535 = vmatprep.subr.mxu0 %v6397
      %6536 = vmatpush1.msra.mxu0 %v6396
      %6537 = vmatprep.subr.mxu0 %v6399
      %6538 = vmatpush1.msra.mxu0 %v6398
      %6539 = vmatprep.subr.mxu0 %v6401
      %6540 = vmatpush1.msra.mxu0 %v6400
      %6541 = vmatprep.subr.mxu0 %v6403
      %6542 = vmatpush1.msra.mxu0 %v6402
      %6543 = vmatprep.subr.mxu0 %v6405
      %6544 = vmatpush1.msra.mxu0 %v6404
      %6545 = vmatprep.subr.mxu0 %v6407
      %6546 = vmatpush1.msra.mxu0 %v6406
      %6547 = vmatprep.subr.mxu0 %v6409
      %6548 = vmatpush1.msra.mxu0 %v6408
      %6549 = vmatprep.subr.mxu0 %v6411
      %6550 = vmatpush1.msra.mxu0 %v6410
      %6551 = vmatprep.subr.mxu0 %v6413
      %6552 = vmatpush1.msra.mxu0 %v6412
      %6553 = vmatprep.subr.mxu0 %v6415
      %6554 = vmatpush1.msra.mxu0 %v6414
      %6555 = vmatprep.subr.mxu0 %v6417
      %6556 = vmatpush1.msra.mxu0 %v6416
      %6557 = vmatprep.subr.mxu0 %v6419
      %6558 = vmatpush1.msra.mxu0 %v6418
      %6559 = vmatprep.subr.mxu0 %v6421
      %6560 = vmatpush1.msra.mxu0 %v6420
      %6561 = vmatprep.subr.mxu0 %v6423
      %6562 = vmatpush1.msra.mxu0 %v6422
      %6563 = vmatprep.subr.mxu0 %v6425
      %6564 = vmatpush1.msra.mxu0 %v6424
      %6565 = vmatprep.mubr.f32.mxu0 %v6490
      %6566 = vmatmul.mubr.f32.gmra.mrb[0].mxu0 %v6360
      %v6567 = vpop.f32.mrb[0].mxu0
      %v6568 = vadd.f32 0.0, %v6567
      %v6569 = vpop.f32.mrb[0].mxu0
      %v6570 = vadd.f32 0.0, %v6569
      %6571 = vdwg.mxu0
      %6572 = vmatprep.subr.mxu0 %v6427
      %6573 = vmatpush1.msra.mxu0 %v6426
      %6574 = vmatprep.subr.mxu0 %v6429
      %6575 = vmatpush1.msra.mxu0 %v6428
      %6576 = vmatprep.subr.mxu0 %v6431
      %6577 = vmatpush1.msra.mxu0 %v6430
      %6578 = vmatprep.subr.mxu0 %v6433
      %6579 = vmatpush1.msra.mxu0 %v6432
      %6580 = vmatprep.subr.mxu0 %v6435
      %6581 = vmatpush1.msra.mxu0 %v6434
      %6582 = vmatprep.subr.mxu0 %v6437
      %6583 = vmatpush1.msra.mxu0 %v6436
      %6584 = vmatprep.subr.mxu0 %v6439
      %6585 = vmatpush1.msra.mxu0 %v6438
      %6586 = vmatprep.subr.mxu0 %v6441
      %6587 = vmatpush1.msra.mxu0 %v6440
      %6588 = vmatprep.subr.mxu0 %v6443
      %6589 = vmatpush1.msra.mxu0 %v6442
      %6590 = vmatprep.subr.mxu0 %v6445
      %6591 = vmatpush1.msra.mxu0 %v6444
      %6592 = vmatprep.subr.mxu0 %v6447
      %6593 = vmatpush1.msra.mxu0 %v6446
      %6594 = vmatprep.subr.mxu0 %v6449
      %6595 = vmatpush1.msra.mxu0 %v6448
      %6596 = vmatprep.subr.mxu0 %v6451
      %6597 = vmatpush1.msra.mxu0 %v6450
      %6598 = vmatprep.subr.mxu0 %v6453
      %6599 = vmatpush1.msra.mxu0 %v6452
      %6600 = vmatprep.subr.mxu0 %v6455
      %6601 = vmatpush1.msra.mxu0 %v6454
      %6602 = vmatprep.subr.mxu0 %v6457
      %6603 = vmatpush1.msra.mxu0 %v6456
      %6604 = vmatprep.subr.mxu0 %v6459
      %6605 = vmatpush1.msra.mxu0 %v6458
      %6606 = vmatprep.subr.mxu0 %v6461
      %6607 = vmatpush1.msra.mxu0 %v6460
      %6608 = vmatprep.subr.mxu0 %v6463
      %6609 = vmatpush1.msra.mxu0 %v6462
      %6610 = vmatprep.subr.mxu0 %v6465
      %6611 = vmatpush1.msra.mxu0 %v6464
      %6612 = vmatprep.subr.mxu0 %v6467
      %6613 = vmatpush1.msra.mxu0 %v6466
      %6614 = vmatprep.subr.mxu0 %v6469
      %6615 = vmatpush1.msra.mxu0 %v6468
      %6616 = vmatprep.subr.mxu0 %v6471
      %6617 = vmatpush1.msra.mxu0 %v6470
      %6618 = vmatprep.subr.mxu0 %v6473
      %6619 = vmatpush1.msra.mxu0 %v6472
      %6620 = vmatprep.subr.mxu0 %v6475
      %6621 = vmatpush1.msra.mxu0 %v6474
      %6622 = vmatprep.subr.mxu0 %v6477
      %6623 = vmatpush1.msra.mxu0 %v6476
      %6624 = vmatprep.subr.mxu0 %v6479
      %6625 = vmatpush1.msra.mxu0 %v6478
      %6626 = vmatprep.subr.mxu0 %v6481
      %6627 = vmatpush1.msra.mxu0 %v6480
      %6628 = vmatprep.subr.mxu0 %v6483
      %6629 = vmatpush1.msra.mxu0 %v6482
      %6630 = vmatprep.subr.mxu0 %v6485
      %6631 = vmatpush1.msra.mxu0 %v6484
      %6632 = vmatprep.subr.mxu0 %v6499
      %6633 = vmatpush1.msra.mxu0 %v6496
      %6634 = vmatprep.subr.mxu0 0.0
      %6635 = vmatpush1.msra.mxu0 0.0
      %6636 = vmatprep.mubr.f32.mxu0 %v6493
      %6637 = vmatmul.mubr.f32.gmra.mrb[0].mxu0 %v6361
      %v6638 = vpop.f32.mrb[0].mxu0
      %v6639 = vadd.f32 %v6568, %v6638
      %v6640 = vpop.f32.mrb[0].mxu0
      %v6641 = vadd.f32 %v6570, %v6640
      %6642 = vdwg.mxu0
      %v6645 = vcombine.high %v6232, %v6232
      %v6646 = vcombine.high %v6233, %v6233
      %v6648 = vsel %vm417, %v6646, 0
      %v6651 = vsel %vm797, %v6358, 0
      %v6654 = vsel %vm797, %v6359, 0
      %6656 = vmatprep.subr.mxu0 %v6235
      %6657 = vmatpush1.msra.mxu0 %v6234
      %6658 = vmatprep.subr.mxu0 %v6237
      %6659 = vmatpush1.msra.mxu0 %v6236
      %6660 = vmatprep.subr.mxu0 %v6239
      %6661 = vmatpush1.msra.mxu0 %v6238
      %6662 = vmatprep.subr.mxu0 %v6241
      %6663 = vmatpush1.msra.mxu0 %v6240
      %6664 = vmatprep.subr.mxu0 %v6243
      %6665 = vmatpush1.msra.mxu0 %v6242
      %6666 = vmatprep.subr.mxu0 %v6245
      %6667 = vmatpush1.msra.mxu0 %v6244
      %6668 = vmatprep.subr.mxu0 %v6247
      %6669 = vmatpush1.msra.mxu0 %v6246
      %6670 = vmatprep.subr.mxu0 %v6249
      %6671 = vmatpush1.msra.mxu0 %v6248
      %6672 = vmatprep.subr.mxu0 %v6251
      %6673 = vmatpush1.msra.mxu0 %v6250
      %6674 = vmatprep.subr.mxu0 %v6253
      %6675 = vmatpush1.msra.mxu0 %v6252
      %6676 = vmatprep.subr.mxu0 %v6255
      %6677 = vmatpush1.msra.mxu0 %v6254
      %6678 = vmatprep.subr.mxu0 %v6257
      %6679 = vmatpush1.msra.mxu0 %v6256
      %6680 = vmatprep.subr.mxu0 %v6259
      %6681 = vmatpush1.msra.mxu0 %v6258
      %6682 = vmatprep.subr.mxu0 %v6261
      %6683 = vmatpush1.msra.mxu0 %v6260
      %6684 = vmatprep.subr.mxu0 %v6263
      %6685 = vmatpush1.msra.mxu0 %v6262
      %6686 = vmatprep.subr.mxu0 %v6265
      %6687 = vmatpush1.msra.mxu0 %v6264
      %6688 = vmatprep.subr.mxu0 %v6267
      %6689 = vmatpush1.msra.mxu0 %v6266
      %6690 = vmatprep.subr.mxu0 %v6269
      %6691 = vmatpush1.msra.mxu0 %v6268
      %6692 = vmatprep.subr.mxu0 %v6271
      %6693 = vmatpush1.msra.mxu0 %v6270
      %6694 = vmatprep.subr.mxu0 %v6273
      %6695 = vmatpush1.msra.mxu0 %v6272
      %6696 = vmatprep.subr.mxu0 %v6275
      %6697 = vmatpush1.msra.mxu0 %v6274
      %6698 = vmatprep.subr.mxu0 %v6277
      %6699 = vmatpush1.msra.mxu0 %v6276
      %6700 = vmatprep.subr.mxu0 %v6279
      %6701 = vmatpush1.msra.mxu0 %v6278
      %6702 = vmatprep.subr.mxu0 %v6281
      %6703 = vmatpush1.msra.mxu0 %v6280
      %6704 = vmatprep.subr.mxu0 %v6283
      %6705 = vmatpush1.msra.mxu0 %v6282
      %6706 = vmatprep.subr.mxu0 %v6285
      %6707 = vmatpush1.msra.mxu0 %v6284
      %6708 = vmatprep.subr.mxu0 %v6287
      %6709 = vmatpush1.msra.mxu0 %v6286
      %6710 = vmatprep.subr.mxu0 %v6289
      %6711 = vmatpush1.msra.mxu0 %v6288
      %6712 = vmatprep.subr.mxu0 %v6291
      %6713 = vmatpush1.msra.mxu0 %v6290
      %6714 = vmatprep.subr.mxu0 %v6293
      %6715 = vmatpush1.msra.mxu0 %v6292
      %6716 = vmatprep.subr.mxu0 %v6295
      %6717 = vmatpush1.msra.mxu0 %v6294
      %6718 = vmatprep.subr.mxu0 %v6297
      %6719 = vmatpush1.msra.mxu0 %v6296
      %6720 = vmatprep.mubr.f32.mxu0 %v6645
      %6721 = vmatmul.mubr.f32.gmra.mrb[0].mxu0 %v6232
      %v6722 = vpop.f32.mrb[0].mxu0
      %v6723 = vadd.f32 %v6639, %v6722
      %v6724 = vpop.f32.mrb[0].mxu0
      %v6725 = vadd.f32 %v6641, %v6724
      %6726 = vdwg.mxu0
      %6727 = vmatprep.subr.mxu0 %v6299
      %6728 = vmatpush1.msra.mxu0 %v6298
      %6729 = vmatprep.subr.mxu0 %v6301
      %6730 = vmatpush1.msra.mxu0 %v6300
      %6731 = vmatprep.subr.mxu0 %v6303
      %6732 = vmatpush1.msra.mxu0 %v6302
      %6733 = vmatprep.subr.mxu0 %v6305
      %6734 = vmatpush1.msra.mxu0 %v6304
      %6735 = vmatprep.subr.mxu0 %v6307
      %6736 = vmatpush1.msra.mxu0 %v6306
      %6737 = vmatprep.subr.mxu0 %v6309
      %6738 = vmatpush1.msra.mxu0 %v6308
      %6739 = vmatprep.subr.mxu0 %v6311
      %6740 = vmatpush1.msra.mxu0 %v6310
      %6741 = vmatprep.subr.mxu0 %v6313
      %6742 = vmatpush1.msra.mxu0 %v6312
      %6743 = vmatprep.subr.mxu0 %v6315
      %6744 = vmatpush1.msra.mxu0 %v6314
      %6745 = vmatprep.subr.mxu0 %v6317
      %6746 = vmatpush1.msra.mxu0 %v6316
      %6747 = vmatprep.subr.mxu0 %v6319
      %6748 = vmatpush1.msra.mxu0 %v6318
      %6749 = vmatprep.subr.mxu0 %v6321
      %6750 = vmatpush1.msra.mxu0 %v6320
      %6751 = vmatprep.subr.mxu0 %v6323
      %6752 = vmatpush1.msra.mxu0 %v6322
      %6753 = vmatprep.subr.mxu0 %v6325
      %6754 = vmatpush1.msra.mxu0 %v6324
      %6755 = vmatprep.subr.mxu0 %v6327
      %6756 = vmatpush1.msra.mxu0 %v6326
      %6757 = vmatprep.subr.mxu0 %v6329
      %6758 = vmatpush1.msra.mxu0 %v6328
      %6759 = vmatprep.subr.mxu0 %v6331
      %6760 = vmatpush1.msra.mxu0 %v6330
      %6761 = vmatprep.subr.mxu0 %v6333
      %6762 = vmatpush1.msra.mxu0 %v6332
      %6763 = vmatprep.subr.mxu0 %v6335
      %6764 = vmatpush1.msra.mxu0 %v6334
      %6765 = vmatprep.subr.mxu0 %v6337
      %6766 = vmatpush1.msra.mxu0 %v6336
      %6767 = vmatprep.subr.mxu0 %v6339
      %6768 = vmatpush1.msra.mxu0 %v6338
      %6769 = vmatprep.subr.mxu0 %v6341
      %6770 = vmatpush1.msra.mxu0 %v6340
      %6771 = vmatprep.subr.mxu0 %v6343
      %6772 = vmatpush1.msra.mxu0 %v6342
      %6773 = vmatprep.subr.mxu0 %v6345
      %6774 = vmatpush1.msra.mxu0 %v6344
      %6775 = vmatprep.subr.mxu0 %v6347
      %6776 = vmatpush1.msra.mxu0 %v6346
      %6777 = vmatprep.subr.mxu0 %v6349
      %6778 = vmatpush1.msra.mxu0 %v6348
      %6779 = vmatprep.subr.mxu0 %v6351
      %6780 = vmatpush1.msra.mxu0 %v6350
      %6781 = vmatprep.subr.mxu0 %v6353
      %6782 = vmatpush1.msra.mxu0 %v6352
      %6783 = vmatprep.subr.mxu0 %v6355
      %6784 = vmatpush1.msra.mxu0 %v6354
      %6785 = vmatprep.subr.mxu0 %v6357
      %6786 = vmatpush1.msra.mxu0 %v6356
      %6787 = vmatprep.subr.mxu0 %v6654
      %6788 = vmatpush1.msra.mxu0 %v6651
      %6789 = vmatprep.subr.mxu0 0.0
      %6790 = vmatpush1.msra.mxu0 0.0
      %6791 = vmatprep.mubr.f32.mxu0 %v6648
      %6792 = vmatmul.mubr.f32.gmra.mrb[0].mxu0 %v6233
      %v6793 = vpop.f32.mrb[0].mxu0
      %v6794 = vadd.f32 %v6723, %v6793
      %v6795 = vpop.f32.mrb[0].mxu0
      %v6796 = vadd.f32 %v6725, %v6795
      %6797 = vdwg.mxu0
      %v6798 = vld [vmem:[%s3] sm:$0x3]
      %v6800 = vlaneseq
      %v6801 = vshrl.u32 %v6800, 7
      %v6802 = vsub.s32 0, %v6801
      %v6803 = vrot.slane %v6798, %v6802
      %v6804 = vlaneseq
      %v6805 = vshrl.u32 %v6804, 7
      %v6806 = vsub.s32 1, %v6805
      %v6807 = vrot.slane %v6798, %v6806
      %v6810 = vadd.f32 %v6794, %v6803
      %v6811 = vadd.f32 %v6796, %v6807
      %vm6812 = vcmp.gt.f32.partialorder %v6810, 0.0
      %vm6813 = vcmp.gt.f32.partialorder %v6811, 0.0
      %v6814 = vmul.f32 %v6810, 0.01
      %v6815 = vmul.f32 %v6811, 0.01
      %v6816 = vsel %vm6812, %v6810, %v6814
      %v6817 = vsel %vm6813, %v6811, %v6815
      %v6818 = vld [vmem:[%s4] sm:$0xff]
      %v6819 = vld [vmem:[%s4 + $0x8] sm:$0xff]
      %v6820 = vld [vmem:[%s4 + $0x10] sm:$0xff]
      %v6821 = vld [vmem:[%s4 + $0x18] sm:$0xff]
      %v6822 = vld [vmem:[%s4 + $0x20] sm:$0xff]
      %v6823 = vld [vmem:[%s4 + $0x28] sm:$0xff]
      %v6824 = vld [vmem:[%s4 + $0x30] sm:$0xff]
      %v6825 = vld [vmem:[%s4 + $0x38] sm:$0xff]
      %v6826 = vld [vmem:[%s4 + $0x40] sm:$0xff]
      %v6827 = vld [vmem:[%s4 + $0x48] sm:$0xff]
      %v6828 = vld [vmem:[%s4 + $0x50] sm:$0xff]
      %v6829 = vld [vmem:[%s4 + $0x58] sm:$0xff]
      %v6830 = vld [vmem:[%s4 + $0x60] sm:$0xff]
      %v6831 = vld [vmem:[%s4 + $0x68] sm:$0xff]
      %v6832 = vld [vmem:[%s4 + $0x70] sm:$0xff]
      %v6833 = vld [vmem:[%s4 + $0x78] sm:$0xff]
      %v6834 = vld [vmem:[%s4 + $0x80] sm:$0xff]
      %v6835 = vld [vmem:[%s4 + $0x88] sm:$0xff]
      %v6836 = vld [vmem:[%s4 + $0x90] sm:$0xff]
      %v6837 = vld [vmem:[%s4 + $0x98] sm:$0xff]
      %v6838 = vld [vmem:[%s4 + $0xa0] sm:$0xff]
      %v6839 = vld [vmem:[%s4 + $0xa8] sm:$0xff]
      %v6840 = vld [vmem:[%s4 + $0xb0] sm:$0xff]
      %v6841 = vld [vmem:[%s4 + $0xb8] sm:$0xff]
      %v6842 = vld [vmem:[%s4 + $0xc0] sm:$0xff]
      %v6843 = vld [vmem:[%s4 + $0xc8] sm:$0xff]
      %v6844 = vld [vmem:[%s4 + $0xd0] sm:$0xff]
      %v6845 = vld [vmem:[%s4 + $0xd8] sm:$0xff]
      %v6846 = vld [vmem:[%s4 + $0xe0] sm:$0xff]
      %v6847 = vld [vmem:[%s4 + $0xe8] sm:$0xff]
      %v6848 = vld [vmem:[%s4 + $0xf0] sm:$0xff]
      %v6849 = vld [vmem:[%s4 + $0xf8] sm:$0xff]
      %v6850 = vld [vmem:[%s5] sm:$0x1]
      %v6852 = vlaneseq
      %v6853 = vshrl.u32 %v6852, 7
      %v6854 = vsub.s32 0, %v6853
      %v6855 = vrot.slane %v6850, %v6854
      %6857 = vmatprep.subr.mxu0 0.0
      %6858 = vmatpush1.msra.mxu0 %v6818
      %6859 = vmatprep.subr.mxu0 0.0
      %6860 = vmatpush1.msra.mxu0 %v6819
      %6861 = vmatprep.subr.mxu0 0.0
      %6862 = vmatpush1.msra.mxu0 %v6820
      %6863 = vmatprep.subr.mxu0 0.0
      %6864 = vmatpush1.msra.mxu0 %v6821
      %6865 = vmatprep.subr.mxu0 0.0
      %6866 = vmatpush1.msra.mxu0 %v6822
      %6867 = vmatprep.subr.mxu0 0.0
      %6868 = vmatpush1.msra.mxu0 %v6823
      %6869 = vmatprep.subr.mxu0 0.0
      %6870 = vmatpush1.msra.mxu0 %v6824
      %6871 = vmatprep.subr.mxu0 0.0
      %6872 = vmatpush1.msra.mxu0 %v6825
      %6873 = vmatprep.subr.mxu0 0.0
      %6874 = vmatpush1.msra.mxu0 %v6826
      %6875 = vmatprep.subr.mxu0 0.0
      %6876 = vmatpush1.msra.mxu0 %v6827
      %6877 = vmatprep.subr.mxu0 0.0
      %6878 = vmatpush1.msra.mxu0 %v6828
      %6879 = vmatprep.subr.mxu0 0.0
      %6880 = vmatpush1.msra.mxu0 %v6829
      %6881 = vmatprep.subr.mxu0 0.0
      %6882 = vmatpush1.msra.mxu0 %v6830
      %6883 = vmatprep.subr.mxu0 0.0
      %6884 = vmatpush1.msra.mxu0 %v6831
      %6885 = vmatprep.subr.mxu0 0.0
      %6886 = vmatpush1.msra.mxu0 %v6832
      %6887 = vmatprep.subr.mxu0 0.0
      %6888 = vmatpush1.msra.mxu0 %v6833
      %6889 = vmatprep.subr.mxu0 0.0
      %6890 = vmatpush1.msra.mxu0 %v6834
      %6891 = vmatprep.subr.mxu0 0.0
      %6892 = vmatpush1.msra.mxu0 %v6835
      %6893 = vmatprep.subr.mxu0 0.0
      %6894 = vmatpush1.msra.mxu0 %v6836
      %6895 = vmatprep.subr.mxu0 0.0
      %6896 = vmatpush1.msra.mxu0 %v6837
      %6897 = vmatprep.subr.mxu0 0.0
      %6898 = vmatpush1.msra.mxu0 %v6838
      %6899 = vmatprep.subr.mxu0 0.0
      %6900 = vmatpush1.msra.mxu0 %v6839
      %6901 = vmatprep.subr.mxu0 0.0
      %6902 = vmatpush1.msra.mxu0 %v6840
      %6903 = vmatprep.subr.mxu0 0.0
      %6904 = vmatpush1.msra.mxu0 %v6841
      %6905 = vmatprep.subr.mxu0 0.0
      %6906 = vmatpush1.msra.mxu0 %v6842
      %6907 = vmatprep.subr.mxu0 0.0
      %6908 = vmatpush1.msra.mxu0 %v6843
      %6909 = vmatprep.subr.mxu0 0.0
      %6910 = vmatpush1.msra.mxu0 %v6844
      %6911 = vmatprep.subr.mxu0 0.0
      %6912 = vmatpush1.msra.mxu0 %v6845
      %6913 = vmatprep.subr.mxu0 0.0
      %6914 = vmatpush1.msra.mxu0 %v6846
      %6915 = vmatprep.subr.mxu0 0.0
      %6916 = vmatpush1.msra.mxu0 %v6847
      %6917 = vmatprep.subr.mxu0 0.0
      %6918 = vmatpush1.msra.mxu0 %v6848
      %6919 = vmatprep.subr.mxu0 0.0
      %6920 = vmatpush1.msra.mxu0 %v6849
      %6921 = vmatprep.mubr.f32.mxu0 %v6817
      %6922 = vmatmul.mubr.f32.gmra.mrb[0].mxu0 %v6816
      %v6923 = vpop.f32.mrb[0].mxu0
      %v6924 = vadd.f32 %v6855, %v6923
      %v6925 = vpop.f32.mrb[0].mxu0
      %6926 = vdwg.mxu0
      %6927 = vst [vmem:[%s254] sm:$0xf] %v6924
      %p6928 = scmp.lt.s32.totalorder %s17, 1
      %s6929 = scalar_select %p6928, %s17, 1
      %s6930 = smul.addr %s6929, 4
      %s6931 = scalar_lea.vmem %s6, %s6930
      // Predicated region
      $region45: #{forward.1} parent=43 // pred_check
        %p6932 = pneg %p166
      $region46: #{forward.1} parent=43 // pred_check_branch
        %6934 = sbr.rel (%p6932) target = $region48
      $region47: #{forward.1} parent=43 // pred_region
        _
      $region48: #{forward.1} parent=43 // pred_fallthru
        _
    $region44: #{forward.1} parent=5 // pred_fallthru
      _
    %p6935 = scmp.le.s32.totalorder 2, %s12
    // Predicated region
    $region49: #{forward.1} parent=5 // pred_check
      %p6936 = pneg %p6935
    $region50: #{forward.1} parent=5 // pred_check_branch
      %6938 = sbr.rel (%p6936) target = $region52
    $region51: #{forward.1} parent=5 // pred_region
      %s6939 = ssub.s32 %s12, 2
      // Predicated region
      $region53: #{forward.1} parent=51 // pred_check
        %p6940 = pneg %p172
      $region54: #{forward.1} parent=51 // pred_check_branch
        %6942 = sbr.rel (%p6940) target = $region56
      $region55: #{forward.1} parent=51 // pred_region
        %p6943 = scmp.lt.s32.totalorder %s18, 1
        %s6944 = scalar_select %p6943, %s18, 1
        %s6945 = smul.addr %s6944, 4
        %s6946 = scalar_lea.vmem %s6, %s6945
      $region56: #{forward.1} parent=51 // pred_fallthru
        _
    $region52: #{forward.1} parent=5 // pred_fallthru
      _
  $region6: #{forward.1} parent=0 // loop_footer
    %s16 = sadd.s32 1, %s12
  $region7: #{forward.1} parent=0 // loop_footer_branch
    %11 = sbr.rel target = $region3
  $region8: #{forward.1} parent=0 // loop_exit
    _

</llo_original>
